<compile_context>
chip_gen: v7x
topology: tpu7x:2x2x1
jax: 0.10.0
libtpu: 0.0.40
codegen_flags: <defaults>
</compile_context>

<pallas_src>
import functools

import jax
import jax.numpy as jnp
import numpy as np
from jax import lax
from jax.experimental import pallas as pl
from jax.experimental.pallas import tpu as pltpu

LANE = 128


def _round_up(v, m):
    return ((v + m - 1) // m) * m


def _lrelu(x, slope=0.1):
    return jnp.where(x > 0, x, slope * x)


def _vmem_limit_bytes(P_pad, Cin_p, Cmid_p, MARGIN):
    """Conservative VMEM budget: double-buffered blocks + scratch + temporaries."""
    blk_io = P_pad * Cin_p * 4                                   # x / o f32 block
    weights = (Cin_p * Cmid_p + 9 * Cmid_p * Cin_p) * 2          # bf16
    biases = 8 * (Cmid_p + Cin_p) * 4
    ym = (P_pad + 2 * MARGIN) * Cmid_p * 2                       # bf16 scratch
    acc = P_pad * Cin_p * 4                                      # f32 scratch
    temps = P_pad * (Cin_p * 4 + Cmid_p * 4 + Cin_p * 4)         # x / y1 / z values
    need = 2 * (2 * blk_io + weights + biases) + ym + acc + temps
    # Floor at 32 MiB (>= default scoped limit everywhere), cap below v5e/v6e
    # physical VMEM.  On v7x large shapes additionally need the strip tiling TODO.
    return int(min(max(need + (8 << 20), 32 << 20), 96 << 20))


def res_layer_kernel(x_ref, w1_ref, w2_ref, b1_ref, b2_ref, o_ref,
                     ym_ref, acc_ref, *, P_pad, Wp, H, W, MARGIN, Cmid_p):
    """One grid step == one image of the batch.

    x_ref  : (1, P_pad, Cin_p)  f32   zero-padded image, NHWC flattened
    w1_ref : (Cin_p, Cmid_p)    bf16  1x1 conv weight, BN scale folded in
    w2_ref : (9*Cmid_p, Cin_p)  bf16  3x3 conv weight, tap-major rows, BN scale folded
    b1_ref : (1, Cmid_p)        f32   BN bias of layer1
    b2_ref : (1, Cin_p)         f32   BN bias of layer2
    o_ref  : (1, P_pad, Cin_p)  f32   residual output (pad-ring rows are garbage;
                                      the wrapper slices them off)
    ym_ref : (P_pad + 2*MARGIN, Cmid_p) bf16  layer1 output with an uninitialised
                                      top/bottom halo so every tap shift is an
                                      in-bounds static 2-D row slice
    acc_ref: (P_pad, Cin_p)     f32   conv2 accumulator
    """
    # ---- layer1: 1x1 conv (BN scale folded into w1) + bias -> LeakyReLU(0.1)
    xb = x_ref[0].astype(jnp.bfloat16)                           # (P_pad, Cin_p)
    y1 = jnp.dot(xb, w1_ref[...], preferred_element_type=jnp.float32)
    y1 = _lrelu(y1 + b1_ref[...])                                # (P_pad, Cmid_p)

    # Interior mask: 1 on real pixels, 0 on the spatial pad ring and tail rows.
    # Needed so the flattened row-shift tap trick sees exact zeros at pad
    # positions (SAME-padding semantics of the 3x3 conv).  Float floor-division
    # is exact here: |error| << 0.5/Wp for realistic image sizes.
    r = lax.broadcasted_iota(jnp.int32, (P_pad, 1), 0).astype(jnp.float32)
    h = jnp.floor((r + 0.5) * (1.0 / Wp))
    w = r - h * Wp
    interior = (h >= 1) & (h <= H) & (w >= 1) & (w <= W)
    y1 = y1 * interior.astype(jnp.float32)

    # Interior write is sublane/bf16-tile aligned (MARGIN % 16 == 0, P_pad % 16 == 0).
    # The MARGIN halo rows are intentionally left uninitialised (see header note).
    ym_ref[MARGIN:MARGIN + P_pad, :] = y1.astype(jnp.bfloat16)

    # ---- layer2: 3x3 conv as 9 accumulated MXU matmuls on shifted views.
    for k in range(9):
        dh, dw = divmod(k, 3)
        off = MARGIN + (dh - 1) * Wp + (dw - 1)
        contrib = jnp.dot(ym_ref[off:off + P_pad, :],
                          w2_ref[k * Cmid_p:(k + 1) * Cmid_p, :],
                          preferred_element_type=jnp.float32)
        if k == 0:
            acc_ref[...] = contrib
        else:
            acc_ref[...] += contrib

    z = _lrelu(acc_ref[...] + b2_ref[...])                       # (P_pad, Cin_p)

    # ---- residual add (f32, exact)
    o_ref[0] = x_ref[0] + z


def res_layer_forward(x_nchw, params):
    """Pallas-backed ResLayer.forward.  x_nchw: (N, C, H, W) float32."""
    w1, s1, b1, w2, s2, b2 = params
    N, Cin, H, W = x_nchw.shape
    Cmid = w1.shape[-1]

    Cin_p = _round_up(Cin, LANE)          # no extra bias channel -> Cin_p == C when C%128==0
    Cmid_p = _round_up(Cmid, LANE)
    Hp, Wp = H + 2, W + 2
    P = Hp * Wp
    P_pad = _round_up(P, 16)              # aligned, unmasked vector stores
    MARGIN = _round_up(Wp + 1, 16)        # halo so every tap slice is in-bounds

    # ---- layout glue: NCHW -> spatially padded NHWC, lane-padded channels, flat rows
    x_nhwc = jnp.transpose(x_nchw, (0, 2, 3, 1)).astype(jnp.float32)
    x_pad = jnp.pad(x_nhwc, ((0, 0), (1, 1), (1, 1), (0, Cin_p - Cin)))
    x_flat = x_pad.reshape(N, P, Cin_p)
    if P_pad > P:
        x_flat = jnp.pad(x_flat, ((0, 0), (0, P_pad - P), (0, 0)))

    # ---- fold BN scale (eval mode) into conv weights; BN biases stay separate
    w1_p = jnp.zeros((Cin_p, Cmid_p), jnp.float32).at[:Cin, :Cmid].set(w1 * s1)
    w1_p = w1_p.astype(jnp.bfloat16)
    b1_p = jnp.zeros((1, Cmid_p), jnp.float32).at[:, :Cmid].set(b1)

    w2_p = jnp.zeros((3, 3, Cmid_p, Cin_p), jnp.float32)
    w2_p = w2_p.at[:, :, :Cmid, :Cin].set(w2 * s2.reshape(1, 1, 1, Cin))
    w2_p = w2_p.reshape(9 * Cmid_p, Cin_p).astype(jnp.bfloat16)  # tap-major rows
    b2_p = jnp.zeros((1, Cin_p), jnp.float32).at[:, :Cin].set(b2)

    kernel = functools.partial(res_layer_kernel, P_pad=P_pad, Wp=Wp, H=H, W=W,
                               MARGIN=MARGIN, Cmid_p=Cmid_p)

    out_flat = pl.pallas_call(
        kernel,
        out_shape=jax.ShapeDtypeStruct((N, P_pad, Cin_p), jnp.float32),
        grid_spec=pltpu.PrefetchScalarGridSpec(
            num_scalar_prefetch=0,
            grid=(N,),
            in_specs=[
                pl.BlockSpec((1, P_pad, Cin_p), lambda n: (n, 0, 0)),
                pl.BlockSpec((Cin_p, Cmid_p), lambda n: (0, 0)),
                pl.BlockSpec((9 * Cmid_p, Cin_p), lambda n: (0, 0)),
                pl.BlockSpec((1, Cmid_p), lambda n: (0, 0)),
                pl.BlockSpec((1, Cin_p), lambda n: (0, 0)),
            ],
            out_specs=pl.BlockSpec((1, P_pad, Cin_p), lambda n: (n, 0, 0)),
            scratch_shapes=[
                pltpu.VMEM((P_pad + 2 * MARGIN, Cmid_p), jnp.bfloat16),  # ym + halo
                pltpu.VMEM((P_pad, Cin_p), jnp.float32),                 # conv2 acc
            ]),
        # Batch axis is fully independent -> shardable across v7x's 2 TensorCores.
        compiler_params=pltpu.CompilerParams(
            dimension_semantics=("parallel",),
            vmem_limit_bytes=_vmem_limit_bytes(P_pad, Cin_p, Cmid_p, MARGIN)),
    )(x_flat, w1_p, w2_p, b1_p, b2_p)

    # padded-flat -> NHWC interior -> NCHW (pad-ring rows / padded channels dropped)
    out = out_flat[:, :P, :Cin].reshape(N, Hp, Wp, Cin)[:, 1:H + 1, 1:W + 1, :]
    return jnp.transpose(out, (0, 3, 1, 2))


def _folded_bn(c, offset):
    """Deterministic eval-mode BatchNorm folded into (scale, bias), shape (1, c)."""
    eps = 1e-5
    r = jnp.arange(c, dtype=jnp.float32)
    gamma = 1.0 + 0.10 * r + offset
    beta = 0.05 * r - 0.02 * offset
    mean = 0.01 * r + 0.03 * offset
    var = 1.0 + 0.20 * r
    scale = gamma * lax.rsqrt(var + eps)
    bias = beta - mean * scale
    return scale.reshape(1, c), bias.reshape(1, c)


def init_params(key, in_channels):
    mid = in_channels // 2
    k1, k2 = jax.random.split(key, 2)
    w1 = 0.2 * jax.random.normal(k1, (in_channels, mid), jnp.float32)        # 1x1 conv
    w2 = 0.2 * jax.random.normal(k2, (3, 3, mid, in_channels), jnp.float32)  # 3x3, HWIO
    s1, b1 = _folded_bn(mid, 0.1)
    s2, b2 = _folded_bn(in_channels, 0.2)
    return (w1, s1, b1, w2, s2, b2)


def ref_forward(x_nchw, params):
    """Pure-JAX reference (lax convs, f32) with identical semantics."""
    w1, s1, b1, w2, s2, b2 = params
    x = jnp.transpose(x_nchw, (0, 2, 3, 1))  # NHWC
    Cin = x.shape[-1]

    y = lax.conv_general_dilated(x, w1.reshape(1, 1, Cin, -1), (1, 1), 'SAME',
                                 dimension_numbers=('NHWC', 'HWIO', 'NHWC'))
    y = y * s1.reshape(1, 1, 1, -1) + b1.reshape(1, 1, 1, -1)
    y = jnp.where(y > 0, y, 0.1 * y)

    z = lax.conv_general_dilated(y, w2, (1, 1), 'SAME',
                                 dimension_numbers=('NHWC', 'HWIO', 'NHWC'))
    z = z * s2.reshape(1, 1, 1, -1) + b2.reshape(1, 1, 1, -1)
    z = jnp.where(z > 0, z, 0.1 * z)

    out = x + z
    return jnp.transpose(out, (0, 3, 1, 2))


if __name__ == "__main__":
    N, C, H, W = 2, 4, 16, 16
    key = jax.random.PRNGKey(0)
    kx, kp = jax.random.split(key)

    x = jax.random.normal(kx, (N, C, H, W), jnp.float32)
    params = init_params(kp, C)

    out = jax.block_until_ready(res_layer_forward(x, params))
    ref = jax.block_until_ready(ref_forward(x, params))

    # bf16 MXU inputs (f32 accumulation) -> tolerance looser than the pure-f32 ref.
    np.testing.assert_allclose(np.asarray(out), np.asarray(ref),
                               rtol=3e-2, atol=3e-2)
    print("KERNEL_OK")
</pallas_src>

<mosaic_0001>
module attributes {stable_mosaic.version = 11 : i64} {
  func.func @res_layer_kernel(%arg0: i32, %arg1: memref<1x336x128xf32, #tpu.memory_space<vmem>>, %arg2: memref<128x128xbf16, #tpu.memory_space<vmem>>, %arg3: memref<1152x128xbf16, #tpu.memory_space<vmem>>, %arg4: memref<1x128xf32, #tpu.memory_space<vmem>>, %arg5: memref<1x128xf32, #tpu.memory_space<vmem>>, %arg6: memref<1x336x128xf32, #tpu.memory_space<vmem>>, %arg7: memref<400x128xbf16, #tpu.memory_space<vmem>>, %arg8: memref<336x128xf32, #tpu.memory_space<vmem>>) attributes {dimension_semantics = [#tpu.dimension_semantics<parallel>], iteration_bounds = array<i64: 2>, scalar_prefetch = 0 : i64, scratch_operands = 2 : i64, tpu.core_type = #tpu.core_type<tc>, window_params = [{transform_indices = @transform_0, window_bounds = array<i64: 1, 336, 128>}, {pipeline_mode = #tpu.pipeline_mode<synchronous>, transform_indices = @transform_1, window_bounds = array<i64: 128, 128>}, {pipeline_mode = #tpu.pipeline_mode<synchronous>, transform_indices = @transform_2, window_bounds = array<i64: 1152, 128>}, {pipeline_mode = #tpu.pipeline_mode<synchronous>, transform_indices = @transform_3, window_bounds = array<i64: 1, 128>}, {pipeline_mode = #tpu.pipeline_mode<synchronous>, transform_indices = @transform_4, window_bounds = array<i64: 1, 128>}, {transform_indices = @transform_5, window_bounds = array<i64: 1, 336, 128>}]} {
    %c0 = arith.constant 0 : index
    %c0_0 = arith.constant 0 : index
    %c0_1 = arith.constant 0 : index
    %0 = vector.load %arg1[%c0, %c0_0, %c0_1] : memref<1x336x128xf32, #tpu.memory_space<vmem>>, vector<1x336x128xf32>
    %1 = vector.shape_cast %0 : vector<1x336x128xf32> to vector<336x128xf32>
    %2 = arith.truncf %1 : vector<336x128xf32> to vector<336x128xbf16>
    %c0_2 = arith.constant 0 : index
    %c0_3 = arith.constant 0 : index
    %3 = vector.load %arg2[%c0_2, %c0_3] : memref<128x128xbf16, #tpu.memory_space<vmem>>, vector<128x128xbf16>
    %cst = arith.constant dense<0.000000e+00> : vector<336x128xf32>
    %4 = tpu.matmul %2, %3, %cst {dimension_numbers = #tpu.dot_dimension_numbers<[1], [0], [0], [1], [0, 0, 1, 1], [], []>} : vector<336x128xbf16>, vector<128x128xbf16>, vector<336x128xf32> -> vector<336x128xf32>
    %c0_4 = arith.constant 0 : index
    %c0_5 = arith.constant 0 : index
    %5 = vector.load %arg4[%c0_4, %c0_5] : memref<1x128xf32, #tpu.memory_space<vmem>>, vector<1x128xf32>
    %6 = vector.broadcast %5 : vector<1x128xf32> to vector<336x128xf32>
    %7 = arith.addf %4, %6 : vector<336x128xf32>
    %cst_6 = arith.constant 0.000000e+00 : f32
    %8 = vector.broadcast %cst_6 : f32 to vector<336x128xf32>
    %9 = arith.cmpf ogt, %7, %8 : vector<336x128xf32>
    %cst_7 = arith.constant 1.000000e-01 : f32
    %10 = vector.broadcast %cst_7 : f32 to vector<336x128xf32>
    %11 = arith.mulf %10, %7 : vector<336x128xf32>
    %12 = arith.select %9, %7, %11 : vector<336x128xi1>, vector<336x128xf32>
    %13 = tpu.iota {dimensions = array<i32: 0>} : vector<336x1xi32>
    %14 = arith.sitofp %13 : vector<336x1xi32> to vector<336x1xf32>
    %cst_8 = arith.constant 5.000000e-01 : f32
    %15 = vector.broadcast %cst_8 : f32 to vector<336x1xf32>
    %16 = arith.addf %14, %15 : vector<336x1xf32>
    %cst_9 = arith.constant 0.055555556 : f32
    %17 = vector.broadcast %cst_9 : f32 to vector<336x1xf32>
    %18 = arith.mulf %16, %17 : vector<336x1xf32>
    %19 = math.floor %18 : vector<336x1xf32>
    %cst_10 = arith.constant 1.800000e+01 : f32
    %20 = vector.broadcast %cst_10 : f32 to vector<336x1xf32>
    %21 = arith.mulf %19, %20 : vector<336x1xf32>
    %22 = arith.subf %14, %21 : vector<336x1xf32>
    %cst_11 = arith.constant 1.000000e+00 : f32
    %23 = vector.broadcast %cst_11 : f32 to vector<336x1xf32>
    %24 = arith.cmpf oge, %19, %23 : vector<336x1xf32>
    %cst_12 = arith.constant 1.600000e+01 : f32
    %25 = vector.broadcast %cst_12 : f32 to vector<336x1xf32>
    %26 = arith.cmpf ole, %19, %25 : vector<336x1xf32>
    %27 = arith.andi %24, %26 : vector<336x1xi1>
    %cst_13 = arith.constant 1.000000e+00 : f32
    %28 = vector.broadcast %cst_13 : f32 to vector<336x1xf32>
    %29 = arith.cmpf oge, %22, %28 : vector<336x1xf32>
    %30 = arith.andi %27, %29 : vector<336x1xi1>
    %cst_14 = arith.constant 1.600000e+01 : f32
    %31 = vector.broadcast %cst_14 : f32 to vector<336x1xf32>
    %32 = arith.cmpf ole, %22, %31 : vector<336x1xf32>
    %33 = arith.andi %30, %32 : vector<336x1xi1>
    %34 = arith.extui %33 : vector<336x1xi1> to vector<336x1xi32>
    %35 = arith.sitofp %34 : vector<336x1xi32> to vector<336x1xf32>
    %36 = vector.broadcast %35 : vector<336x1xf32> to vector<336x128xf32>
    %37 = arith.mulf %12, %36 : vector<336x128xf32>
    %38 = arith.truncf %37 : vector<336x128xf32> to vector<336x128xbf16>
    %c32 = arith.constant 32 : index
    %c0_15 = arith.constant 0 : index
    %39 = vector.load %arg7[%c32, %c0_15] : memref<400x128xbf16, #tpu.memory_space<vmem>>, vector<336x128xbf16>
    tpu.vector_store %arg7[%c32, %c0_15], %38 {strides = array<i32>} : memref<400x128xbf16, #tpu.memory_space<vmem>>, vector<336x128xbf16>,
    %c13 = arith.constant 13 : index
    %c0_16 = arith.constant 0 : index
    %40 = vector.load %arg7[%c13, %c0_16] : memref<400x128xbf16, #tpu.memory_space<vmem>>, vector<336x128xbf16>
    %c0_17 = arith.constant 0 : index
    %c0_18 = arith.constant 0 : index
    %41 = vector.load %arg3[%c0_17, %c0_18] : memref<1152x128xbf16, #tpu.memory_space<vmem>>, vector<128x128xbf16>
    %cst_19 = arith.constant dense<0.000000e+00> : vector<336x128xf32>
    %42 = tpu.matmul %40, %41, %cst_19 {dimension_numbers = #tpu.dot_dimension_numbers<[1], [0], [0], [1], [0, 0, 1, 1], [], []>} : vector<336x128xbf16>, vector<128x128xbf16>, vector<336x128xf32> -> vector<336x128xf32>
    %c0_20 = arith.constant 0 : index
    %c0_21 = arith.constant 0 : index
    %43 = vector.load %arg8[%c0_20, %c0_21] : memref<336x128xf32, #tpu.memory_space<vmem>>, vector<336x128xf32>
    tpu.vector_store %arg8[%c0_20, %c0_21], %42 {strides = array<i32>} : memref<336x128xf32, #tpu.memory_space<vmem>>, vector<336x128xf32>,
    %c14 = arith.constant 14 : index
    %c0_22 = arith.constant 0 : index
    %44 = vector.load %arg7[%c14, %c0_22] : memref<400x128xbf16, #tpu.memory_space<vmem>>, vector<336x128xbf16>
    %c128 = arith.constant 128 : index
    %c0_23 = arith.constant 0 : index
    %45 = vector.load %arg3[%c128, %c0_23] : memref<1152x128xbf16, #tpu.memory_space<vmem>>, vector<128x128xbf16>
    %cst_24 = arith.constant dense<0.000000e+00> : vector<336x128xf32>
    %46 = tpu.matmul %44, %45, %cst_24 {dimension_numbers = #tpu.dot_dimension_numbers<[1], [0], [0], [1], [0, 0, 1, 1], [], []>} : vector<336x128xbf16>, vector<128x128xbf16>, vector<336x128xf32> -> vector<336x128xf32>
    %c0_25 = arith.constant 0 : index
    %c0_26 = arith.constant 0 : index
    %47 = vector.load %arg8[%c0_25, %c0_26] : memref<336x128xf32, #tpu.memory_space<vmem>>, vector<336x128xf32>
    %48 = arith.addf %47, %46 : vector<336x128xf32>
    %c0_27 = arith.constant 0 : index
    %c0_28 = arith.constant 0 : index
    %49 = vector.load %arg8[%c0_27, %c0_28] : memref<336x128xf32, #tpu.memory_space<vmem>>, vector<336x128xf32>
    tpu.vector_store %arg8[%c0_27, %c0_28], %48 {strides = array<i32>} : memref<336x128xf32, #tpu.memory_space<vmem>>, vector<336x128xf32>,
    %c15 = arith.constant 15 : index
    %c0_29 = arith.constant 0 : index
    %50 = vector.load %arg7[%c15, %c0_29] : memref<400x128xbf16, #tpu.memory_space<vmem>>, vector<336x128xbf16>
    %c256 = arith.constant 256 : index
    %c0_30 = arith.constant 0 : index
    %51 = vector.load %arg3[%c256, %c0_30] : memref<1152x128xbf16, #tpu.memory_space<vmem>>, vector<128x128xbf16>
    %cst_31 = arith.constant dense<0.000000e+00> : vector<336x128xf32>
    %52 = tpu.matmul %50, %51, %cst_31 {dimension_numbers = #tpu.dot_dimension_numbers<[1], [0], [0], [1], [0, 0, 1, 1], [], []>} : vector<336x128xbf16>, vector<128x128xbf16>, vector<336x128xf32> -> vector<336x128xf32>
    %c0_32 = arith.constant 0 : index
    %c0_33 = arith.constant 0 : index
    %53 = vector.load %arg8[%c0_32, %c0_33] : memref<336x128xf32, #tpu.memory_space<vmem>>, vector<336x128xf32>
    %54 = arith.addf %53, %52 : vector<336x128xf32>
    %c0_34 = arith.constant 0 : index
    %c0_35 = arith.constant 0 : index
    %55 = vector.load %arg8[%c0_34, %c0_35] : memref<336x128xf32, #tpu.memory_space<vmem>>, vector<336x128xf32>
    tpu.vector_store %arg8[%c0_34, %c0_35], %54 {strides = array<i32>} : memref<336x128xf32, #tpu.memory_space<vmem>>, vector<336x128xf32>,
    %c31 = arith.constant 31 : index
    %c0_36 = arith.constant 0 : index
    %56 = vector.load %arg7[%c31, %c0_36] : memref<400x128xbf16, #tpu.memory_space<vmem>>, vector<336x128xbf16>
    %c384 = arith.constant 384 : index
    %c0_37 = arith.constant 0 : index
    %57 = vector.load %arg3[%c384, %c0_37] : memref<1152x128xbf16, #tpu.memory_space<vmem>>, vector<128x128xbf16>
    %cst_38 = arith.constant dense<0.000000e+00> : vector<336x128xf32>
    %58 = tpu.matmul %56, %57, %cst_38 {dimension_numbers = #tpu.dot_dimension_numbers<[1], [0], [0], [1], [0, 0, 1, 1], [], []>} : vector<336x128xbf16>, vector<128x128xbf16>, vector<336x128xf32> -> vector<336x128xf32>
    %c0_39 = arith.constant 0 : index
    %c0_40 = arith.constant 0 : index
    %59 = vector.load %arg8[%c0_39, %c0_40] : memref<336x128xf32, #tpu.memory_space<vmem>>, vector<336x128xf32>
    %60 = arith.addf %59, %58 : vector<336x128xf32>
    %c0_41 = arith.constant 0 : index
    %c0_42 = arith.constant 0 : index
    %61 = vector.load %arg8[%c0_41, %c0_42] : memref<336x128xf32, #tpu.memory_space<vmem>>, vector<336x128xf32>
    tpu.vector_store %arg8[%c0_41, %c0_42], %60 {strides = array<i32>} : memref<336x128xf32, #tpu.memory_space<vmem>>, vector<336x128xf32>,
    %c32_43 = arith.constant 32 : index
    %c0_44 = arith.constant 0 : index
    %62 = vector.load %arg7[%c32_43, %c0_44] : memref<400x128xbf16, #tpu.memory_space<vmem>>, vector<336x128xbf16>
    %c512 = arith.constant 512 : index
    %c0_45 = arith.constant 0 : index
    %63 = vector.load %arg3[%c512, %c0_45] : memref<1152x128xbf16, #tpu.memory_space<vmem>>, vector<128x128xbf16>
    %cst_46 = arith.constant dense<0.000000e+00> : vector<336x128xf32>
    %64 = tpu.matmul %62, %63, %cst_46 {dimension_numbers = #tpu.dot_dimension_numbers<[1], [0], [0], [1], [0, 0, 1, 1], [], []>} : vector<336x128xbf16>, vector<128x128xbf16>, vector<336x128xf32> -> vector<336x128xf32>
    %c0_47 = arith.constant 0 : index
    %c0_48 = arith.constant 0 : index
    %65 = vector.load %arg8[%c0_47, %c0_48] : memref<336x128xf32, #tpu.memory_space<vmem>>, vector<336x128xf32>
    %66 = arith.addf %65, %64 : vector<336x128xf32>
    %c0_49 = arith.constant 0 : index
    %c0_50 = arith.constant 0 : index
    %67 = vector.load %arg8[%c0_49, %c0_50] : memref<336x128xf32, #tpu.memory_space<vmem>>, vector<336x128xf32>
    tpu.vector_store %arg8[%c0_49, %c0_50], %66 {strides = array<i32>} : memref<336x128xf32, #tpu.memory_space<vmem>>, vector<336x128xf32>,
    %c33 = arith.constant 33 : index
    %c0_51 = arith.constant 0 : index
    %68 = vector.load %arg7[%c33, %c0_51] : memref<400x128xbf16, #tpu.memory_space<vmem>>, vector<336x128xbf16>
    %c640 = arith.constant 640 : index
    %c0_52 = arith.constant 0 : index
    %69 = vector.load %arg3[%c640, %c0_52] : memref<1152x128xbf16, #tpu.memory_space<vmem>>, vector<128x128xbf16>
    %cst_53 = arith.constant dense<0.000000e+00> : vector<336x128xf32>
    %70 = tpu.matmul %68, %69, %cst_53 {dimension_numbers = #tpu.dot_dimension_numbers<[1], [0], [0], [1], [0, 0, 1, 1], [], []>} : vector<336x128xbf16>, vector<128x128xbf16>, vector<336x128xf32> -> vector<336x128xf32>
    %c0_54 = arith.constant 0 : index
    %c0_55 = arith.constant 0 : index
    %71 = vector.load %arg8[%c0_54, %c0_55] : memref<336x128xf32, #tpu.memory_space<vmem>>, vector<336x128xf32>
    %72 = arith.addf %71, %70 : vector<336x128xf32>
    %c0_56 = arith.constant 0 : index
    %c0_57 = arith.constant 0 : index
    %73 = vector.load %arg8[%c0_56, %c0_57] : memref<336x128xf32, #tpu.memory_space<vmem>>, vector<336x128xf32>
    tpu.vector_store %arg8[%c0_56, %c0_57], %72 {strides = array<i32>} : memref<336x128xf32, #tpu.memory_space<vmem>>, vector<336x128xf32>,
    %c49 = arith.constant 49 : index
    %c0_58 = arith.constant 0 : index
    %74 = vector.load %arg7[%c49, %c0_58] : memref<400x128xbf16, #tpu.memory_space<vmem>>, vector<336x128xbf16>
    %c768 = arith.constant 768 : index
    %c0_59 = arith.constant 0 : index
    %75 = vector.load %arg3[%c768, %c0_59] : memref<1152x128xbf16, #tpu.memory_space<vmem>>, vector<128x128xbf16>
    %cst_60 = arith.constant dense<0.000000e+00> : vector<336x128xf32>
    %76 = tpu.matmul %74, %75, %cst_60 {dimension_numbers = #tpu.dot_dimension_numbers<[1], [0], [0], [1], [0, 0, 1, 1], [], []>} : vector<336x128xbf16>, vector<128x128xbf16>, vector<336x128xf32> -> vector<336x128xf32>
    %c0_61 = arith.constant 0 : index
    %c0_62 = arith.constant 0 : index
    %77 = vector.load %arg8[%c0_61, %c0_62] : memref<336x128xf32, #tpu.memory_space<vmem>>, vector<336x128xf32>
    %78 = arith.addf %77, %76 : vector<336x128xf32>
    %c0_63 = arith.constant 0 : index
    %c0_64 = arith.constant 0 : index
    %79 = vector.load %arg8[%c0_63, %c0_64] : memref<336x128xf32, #tpu.memory_space<vmem>>, vector<336x128xf32>
    tpu.vector_store %arg8[%c0_63, %c0_64], %78 {strides = array<i32>} : memref<336x128xf32, #tpu.memory_space<vmem>>, vector<336x128xf32>,
    %c50 = arith.constant 50 : index
    %c0_65 = arith.constant 0 : index
    %80 = vector.load %arg7[%c50, %c0_65] : memref<400x128xbf16, #tpu.memory_space<vmem>>, vector<336x128xbf16>
    %c896 = arith.constant 896 : index
    %c0_66 = arith.constant 0 : index
    %81 = vector.load %arg3[%c896, %c0_66] : memref<1152x128xbf16, #tpu.memory_space<vmem>>, vector<128x128xbf16>
    %cst_67 = arith.constant dense<0.000000e+00> : vector<336x128xf32>
    %82 = tpu.matmul %80, %81, %cst_67 {dimension_numbers = #tpu.dot_dimension_numbers<[1], [0], [0], [1], [0, 0, 1, 1], [], []>} : vector<336x128xbf16>, vector<128x128xbf16>, vector<336x128xf32> -> vector<336x128xf32>
    %c0_68 = arith.constant 0 : index
    %c0_69 = arith.constant 0 : index
    %83 = vector.load %arg8[%c0_68, %c0_69] : memref<336x128xf32, #tpu.memory_space<vmem>>, vector<336x128xf32>
    %84 = arith.addf %83, %82 : vector<336x128xf32>
    %c0_70 = arith.constant 0 : index
    %c0_71 = arith.constant 0 : index
    %85 = vector.load %arg8[%c0_70, %c0_71] : memref<336x128xf32, #tpu.memory_space<vmem>>, vector<336x128xf32>
    tpu.vector_store %arg8[%c0_70, %c0_71], %84 {strides = array<i32>} : memref<336x128xf32, #tpu.memory_space<vmem>>, vector<336x128xf32>,
    %c51 = arith.constant 51 : index
    %c0_72 = arith.constant 0 : index
    %86 = vector.load %arg7[%c51, %c0_72] : memref<400x128xbf16, #tpu.memory_space<vmem>>, vector<336x128xbf16>
    %c1024 = arith.constant 1024 : index
    %c0_73 = arith.constant 0 : index
    %87 = vector.load %arg3[%c1024, %c0_73] : memref<1152x128xbf16, #tpu.memory_space<vmem>>, vector<128x128xbf16>
    %cst_74 = arith.constant dense<0.000000e+00> : vector<336x128xf32>
    %88 = tpu.matmul %86, %87, %cst_74 {dimension_numbers = #tpu.dot_dimension_numbers<[1], [0], [0], [1], [0, 0, 1, 1], [], []>} : vector<336x128xbf16>, vector<128x128xbf16>, vector<336x128xf32> -> vector<336x128xf32>
    %c0_75 = arith.constant 0 : index
    %c0_76 = arith.constant 0 : index
    %89 = vector.load %arg8[%c0_75, %c0_76] : memref<336x128xf32, #tpu.memory_space<vmem>>, vector<336x128xf32>
    %90 = arith.addf %89, %88 : vector<336x128xf32>
    %c0_77 = arith.constant 0 : index
    %c0_78 = arith.constant 0 : index
    %91 = vector.load %arg8[%c0_77, %c0_78] : memref<336x128xf32, #tpu.memory_space<vmem>>, vector<336x128xf32>
    tpu.vector_store %arg8[%c0_77, %c0_78], %90 {strides = array<i32>} : memref<336x128xf32, #tpu.memory_space<vmem>>, vector<336x128xf32>,
    %c0_79 = arith.constant 0 : index
    %c0_80 = arith.constant 0 : index
    %92 = vector.load %arg8[%c0_79, %c0_80] : memref<336x128xf32, #tpu.memory_space<vmem>>, vector<336x128xf32>
    %c0_81 = arith.constant 0 : index
    %c0_82 = arith.constant 0 : index
    %93 = vector.load %arg5[%c0_81, %c0_82] : memref<1x128xf32, #tpu.memory_space<vmem>>, vector<1x128xf32>
    %94 = vector.broadcast %93 : vector<1x128xf32> to vector<336x128xf32>
    %95 = arith.addf %92, %94 : vector<336x128xf32>
    %cst_83 = arith.constant 0.000000e+00 : f32
    %96 = vector.broadcast %cst_83 : f32 to vector<336x128xf32>
    %97 = arith.cmpf ogt, %95, %96 : vector<336x128xf32>
    %cst_84 = arith.constant 1.000000e-01 : f32
    %98 = vector.broadcast %cst_84 : f32 to vector<336x128xf32>
    %99 = arith.mulf %98, %95 : vector<336x128xf32>
    %100 = arith.select %97, %95, %99 : vector<336x128xi1>, vector<336x128xf32>
    %c0_85 = arith.constant 0 : index
    %c0_86 = arith.constant 0 : index
    %c0_87 = arith.constant 0 : index
    %101 = vector.load %arg1[%c0_85, %c0_86, %c0_87] : memref<1x336x128xf32, #tpu.memory_space<vmem>>, vector<1x336x128xf32>
    %102 = vector.shape_cast %101 : vector<1x336x128xf32> to vector<336x128xf32>
    %103 = arith.addf %102, %100 : vector<336x128xf32>
    %c0_88 = arith.constant 0 : index
    %c0_89 = arith.constant 0 : index
    %c0_90 = arith.constant 0 : index
    %104 = vector.load %arg6[%c0_88, %c0_89, %c0_90] : memref<1x336x128xf32, #tpu.memory_space<vmem>>, vector<1x336x128xf32>
    %105 = vector.shape_cast %104 : vector<1x336x128xf32> to vector<336x128xf32>
    %106 = vector.shape_cast %103 : vector<336x128xf32> to vector<1x336x128xf32>
    tpu.vector_store %arg6[%c0_88, %c0_89, %c0_90], %106 {strides = array<i32>} : memref<1x336x128xf32, #tpu.memory_space<vmem>>, vector<1x336x128xf32>,
    return
  }
  func.func @transform_0(%arg0: i32) -> (i32, i32, i32) {
    %c0_i32 = arith.constant 0 : i32
    %c0_i32_0 = arith.constant 0 : i32
    %c0_i32_1 = arith.constant 0 : i32
    return %arg0, %c0_i32, %c0_i32_0 : i32, i32, i32
  }
  func.func @transform_1(%arg0: i32) -> (i32, i32) {
    %c0_i32 = arith.constant 0 : i32
    %c0_i32_0 = arith.constant 0 : i32
    %c0_i32_1 = arith.constant 0 : i32
    return %c0_i32, %c0_i32_0 : i32, i32
  }
  func.func @transform_2(%arg0: i32) -> (i32, i32) {
    %c0_i32 = arith.constant 0 : i32
    %c0_i32_0 = arith.constant 0 : i32
    %c0_i32_1 = arith.constant 0 : i32
    return %c0_i32, %c0_i32_0 : i32, i32
  }
  func.func @transform_3(%arg0: i32) -> (i32, i32) {
    %c0_i32 = arith.constant 0 : i32
    %c0_i32_0 = arith.constant 0 : i32
    %c0_i32_1 = arith.constant 0 : i32
    return %c0_i32, %c0_i32_0 : i32, i32
  }
  func.func @transform_4(%arg0: i32) -> (i32, i32) {
    %c0_i32 = arith.constant 0 : i32
    %c0_i32_0 = arith.constant 0 : i32
    %c0_i32_1 = arith.constant 0 : i32
    return %c0_i32, %c0_i32_0 : i32, i32
  }
  func.func @transform_5(%arg0: i32) -> (i32, i32, i32) {
    %c0_i32 = arith.constant 0 : i32
    %c0_i32_0 = arith.constant 0 : i32
    %c0_i32_1 = arith.constant 0 : i32
    return %arg0, %c0_i32, %c0_i32_0 : i32, i32, i32
  }
}

</mosaic_0001>

<llo_original>
// kernel: tpu_custom_call.1
$region0: #{tpu_custom_call.1}
  #allocation0 [shape = 'u32[]', space=smem, size = 0x4, offset = 0x4, fixed_abs, tag = 'smem constant byte address 0x4 - core index']
  #allocation1 [shape = 'u32[144,128]{1,0:T(1,128)}', space=vmem, size = 0x12000, scoped, tag = 'internal scratch']
  #allocation2 [shape = 'bf16[400,128]{1,0:T(16,128)(2,1)}', space=vmem, size = 0x19000, scoped, tag = 'scratch operand']
  #allocation3 [shape = 'f32[336,128]{1,0:T(8,128)}', space=vmem, size = 0x2a000, scoped, tag = 'scratch operand']
  %s0 = inlined_call_operand.hbm [shape: f32[2,336,128], index: 0, kind: input, shape index: {}]
  %s1 = inlined_call_operand.hbm [shape: bf16[128,128], index: 1, kind: input, shape index: {}]
  %s2 = inlined_call_operand.hbm [shape: bf16[1152,128], index: 2, kind: input, shape index: {}]
  %s3 = inlined_call_operand.vmem [shape: f32[1,128], index: 3, kind: input, shape index: {}]
  %s4 = inlined_call_operand.vmem [shape: f32[1,128], index: 4, kind: input, shape index: {}]
  %s5 = inlined_call_operand.hbm [shape: f32[2,336,128], index: 5, kind: output, shape index: {}]
  %s6 = sld [smem:[#allocation0]]
  $region65: #{tpu_custom_call.1} parent=0
    _
  %s8 = ssub.s32 1, %s6
  %s9 = scalar_select 0, %s8, %s6
  $region1: #{tpu_custom_call.1} parent=0
    #allocation4 [shape = 'u8[344064]{0}', space=vmem, size = 0x54000, scoped, tag = 'input window, operand 0']
    #allocation5 [shape = 's32[2]{0}', space=sflag, size = 0x8, scoped, tag = 'scoped memory for tpu_custom_call.1']
    #allocation6 [shape = 's32[2]{0}', space=sflag, size = 0x8, scoped, tag = 'scoped memory for tpu_custom_call.1']
    #allocation7 [shape = 'u8[32768]{0}', space=vmem, size = 0x8000, scoped, tag = 'input window, operand 1, single buffered']
    #allocation8 [shape = 's32[1]{0}', space=sflag, size = 0x4, scoped, tag = 'scoped memory for tpu_custom_call.1']
    #allocation9 [shape = 'u8[294912]{0}', space=vmem, size = 0x48000, scoped, tag = 'input window, operand 2, single buffered']
    #allocation10 [shape = 'u8[344064]{0}', space=vmem, size = 0x54000, scoped, tag = 'output window, operand 0']
    %10 = vsyncpa [#allocation5], 0
    %s11 = scalar_lea.sflag [#allocation5], 1
    %12 = vsyncpa %s11, 0
    %13 = vsyncpa [#allocation8], 0
    %14 = vsyncpa [#allocation6], 0
    %s15 = scalar_lea.sflag [#allocation6], 1
    %16 = vsyncpa %s15, 0
    loop: start=0, step=1, limit=4
    $region2: #{tpu_custom_call.1} parent=1 // loop_pre_header
      _
    $region3: #{tpu_custom_call.1} parent=1 // loop_header
      %s18 = sphi 0, %s22
      %p19 = scmp.ge.s32.totalorder %s18, 4
      %s28 = sphi 0, %s30
      %s31 = sphi 0, %s28
      %s32 = sphi 0, %s31
      %s48 = sphi 0, %s32
      %s52 = sphi 0, %s52
      %s54 = sphi 0, %s52
      %s55 = sphi 0, %s54
      %s69 = sphi 0, %s55
      %s73 = sphi 0, %s73
      %s75 = sphi 0, %s73
      %s76 = sphi 0, %s75
      %s90 = sphi 0, %s76
      %s94 = sphi 0, %s94
      %s96 = sphi 0, %s94
      %s97 = sphi 0, %s96
      %s111 = sphi 0, %s97
      %s115 = sphi 0, %s115
      %s117 = sphi 0, %s115
      %s118 = sphi 0, %s117
      %s132 = sphi 0, %s118
      %s138 = sphi 0, %s140
      %s141 = sphi 0, %s138
      %s142 = sphi 0, %s141
      %s158 = sphi 0, %s142
    $region4: #{tpu_custom_call.1} parent=1 // loop_header_branch
      %21 = sbr.rel (%p19) target = $region8
    $region5: #{tpu_custom_call.1} parent=1 // loop_body
      %s23 = ssub.s32 %s18, 1
      %s24 = ssub.s32 %s18, 2
      %s25 = sadd.s32 %s18, 1
      %s26 = ssub.s32 %s18, %s25
      %p27 = scmp.eq.s32.totalorder %s26, 0
      %s29 = sadd.s32 %s28, 1
      %s30 = scalar_select %p27, %s28, %s29
      %p33 = pneg %p27
      %p34 = scmp.eq.s32.totalorder %s18, 1
      %p35 = por %p33, %p34
      %p36 = scmp.ne.s32.totalorder %s28, %s31
      %p37 = scmp.eq.s32.totalorder %s18, 0
      %p38 = por %p36, %p37
      %p39 = scmp.ne.s32.totalorder %s28, %s31
      %p40 = scmp.eq.s32.totalorder %s23, 1
      %p41 = por %p39, %p40
      %p42 = scmp.ne.s32.totalorder %s31, %s32
      %p43 = scmp.eq.s32.totalorder %s23, 0
      %p44 = por %p42, %p43
      %p45 = scmp.ne.s32.totalorder %s31, %s32
      %p46 = scmp.eq.s32.totalorder %s24, 1
      %p47 = por %p45, %p46
      %p49 = scmp.ne.s32.totalorder %s32, %s48
      %p50 = scmp.eq.s32.totalorder %s24, 0
      %p51 = por %p49, %p50
      %s53 = sadd.s32 %s52, 1
      %p56 = scmp.eq.s32.totalorder %s18, 1
      %p57 = scmp.ne.s32.totalorder %s52, %s54
      %p58 = scmp.eq.s32.totalorder %s18, 0
      %p59 = por %p57, %p58
      %p60 = scmp.ne.s32.totalorder %s52, %s54
      %p61 = scmp.eq.s32.totalorder %s23, 1
      %p62 = por %p60, %p61
      %p63 = scmp.ne.s32.totalorder %s54, %s55
      %p64 = scmp.eq.s32.totalorder %s23, 0
      %p65 = por %p63, %p64
      %p66 = scmp.ne.s32.totalorder %s54, %s55
      %p67 = scmp.eq.s32.totalorder %s24, 1
      %p68 = por %p66, %p67
      %p70 = scmp.ne.s32.totalorder %s55, %s69
      %p71 = scmp.eq.s32.totalorder %s24, 0
      %p72 = por %p70, %p71
      %s74 = sadd.s32 %s73, 1
      %p77 = scmp.eq.s32.totalorder %s18, 1
      %p78 = scmp.ne.s32.totalorder %s73, %s75
      %p79 = scmp.eq.s32.totalorder %s18, 0
      %p80 = por %p78, %p79
      %p81 = scmp.ne.s32.totalorder %s73, %s75
      %p82 = scmp.eq.s32.totalorder %s23, 1
      %p83 = por %p81, %p82
      %p84 = scmp.ne.s32.totalorder %s75, %s76
      %p85 = scmp.eq.s32.totalorder %s23, 0
      %p86 = por %p84, %p85
      %p87 = scmp.ne.s32.totalorder %s75, %s76
      %p88 = scmp.eq.s32.totalorder %s24, 1
      %p89 = por %p87, %p88
      %p91 = scmp.ne.s32.totalorder %s76, %s90
      %p92 = scmp.eq.s32.totalorder %s24, 0
      %p93 = por %p91, %p92
      %s95 = sadd.s32 %s94, 1
      %p98 = scmp.eq.s32.totalorder %s18, 1
      %p99 = scmp.ne.s32.totalorder %s94, %s96
      %p100 = scmp.eq.s32.totalorder %s18, 0
      %p101 = por %p99, %p100
      %p102 = scmp.ne.s32.totalorder %s94, %s96
      %p103 = scmp.eq.s32.totalorder %s23, 1
      %p104 = por %p102, %p103
      %p105 = scmp.ne.s32.totalorder %s96, %s97
      %p106 = scmp.eq.s32.totalorder %s23, 0
      %p107 = por %p105, %p106
      %p108 = scmp.ne.s32.totalorder %s96, %s97
      %p109 = scmp.eq.s32.totalorder %s24, 1
      %p110 = por %p108, %p109
      %p112 = scmp.ne.s32.totalorder %s97, %s111
      %p113 = scmp.eq.s32.totalorder %s24, 0
      %p114 = por %p112, %p113
      %s116 = sadd.s32 %s115, 1
      %p119 = scmp.eq.s32.totalorder %s18, 1
      %p120 = scmp.ne.s32.totalorder %s115, %s117
      %p121 = scmp.eq.s32.totalorder %s18, 0
      %p122 = por %p120, %p121
      %p123 = scmp.ne.s32.totalorder %s115, %s117
      %p124 = scmp.eq.s32.totalorder %s23, 1
      %p125 = por %p123, %p124
      %p126 = scmp.ne.s32.totalorder %s117, %s118
      %p127 = scmp.eq.s32.totalorder %s23, 0
      %p128 = por %p126, %p127
      %p129 = scmp.ne.s32.totalorder %s117, %s118
      %p130 = scmp.eq.s32.totalorder %s24, 1
      %p131 = por %p129, %p130
      %p133 = scmp.ne.s32.totalorder %s118, %s132
      %p134 = scmp.eq.s32.totalorder %s24, 0
      %p135 = por %p133, %p134
      %s136 = ssub.s32 %s18, %s25
      %p137 = scmp.eq.s32.totalorder %s136, 0
      %s139 = sadd.s32 %s138, 1
      %s140 = scalar_select %p137, %s138, %s139
      %p143 = pneg %p137
      %p144 = scmp.eq.s32.totalorder %s18, 1
      %p145 = por %p143, %p144
      %p146 = scmp.ne.s32.totalorder %s138, %s141
      %p147 = scmp.eq.s32.totalorder %s18, 0
      %p148 = por %p146, %p147
      %p149 = scmp.ne.s32.totalorder %s138, %s141
      %p150 = scmp.eq.s32.totalorder %s23, 1
      %p151 = por %p149, %p150
      %p152 = scmp.ne.s32.totalorder %s141, %s142
      %p153 = scmp.eq.s32.totalorder %s23, 0
      %p154 = por %p152, %p153
      %p155 = scmp.ne.s32.totalorder %s141, %s142
      %p156 = scmp.eq.s32.totalorder %s24, 1
      %p157 = por %p155, %p156
      %p159 = scmp.ne.s32.totalorder %s142, %s158
      %p160 = scmp.eq.s32.totalorder %s24, 0
      %p161 = por %p159, %p160
      %p162 = scmp.le.s32.totalorder 1, %s18
      %p163 = scmp.lt.s32.totalorder %s18, 3
      %p164 = pnand %p162, %p163
      %p165 = pneg %p164
      // Predicated region
      $region9: #{tpu_custom_call.1} parent=5 // pred_check
        _
      $region10: #{tpu_custom_call.1} parent=5 // pred_check_branch
        %167 = sbr.rel (%p164) target = $region12
      $region11: #{tpu_custom_call.1} parent=5 // pred_region
        %s168 = ssub.s32 %s18, 1
        // Predicated region
        $region13: #{tpu_custom_call.1} parent=11 // pred_check
          %p169 = pneg %p65
        $region14: #{tpu_custom_call.1} parent=11 // pred_check_branch
          %171 = sbr.rel (%p169) target = $region16
        $region15: #{tpu_custom_call.1} parent=11 // pred_region
          %s173 = ssub.s32 1024, 1024
          %174 = vsyncadd [#allocation8], %s173
          %s175 = sshll.u32 [#allocation7], 4
          %s176 = int_to_ptr.vmem [resolvable:$true] %s175
          %181 = dma.hbm_to_vmem [thread:$0]  %s1, 1024, %s176, [#allocation8], 64, 64, 4
        $region16: #{tpu_custom_call.1} parent=11 // pred_fallthru
          _
        // Predicated region
        $region17: #{tpu_custom_call.1} parent=11 // pred_check
          %p182 = pneg %p86
        $region18: #{tpu_custom_call.1} parent=11 // pred_check_branch
          %184 = sbr.rel (%p182) target = $region20
        $region19: #{tpu_custom_call.1} parent=11 // pred_region
          %s186 = ssub.s32 9216, 9216
          %187 = vsyncadd [#allocation8], %s186
          %s188 = sshll.u32 [#allocation9], 4
          %s189 = int_to_ptr.vmem [resolvable:$true] %s188
          %194 = dma.hbm_to_vmem [thread:$0]  %s2, 9216, %s189, [#allocation8], 64, 64, 4
        $region20: #{tpu_custom_call.1} parent=11 // pred_fallthru
          _
        // Predicated region
        $region21: #{tpu_custom_call.1} parent=11 // pred_check
          %p195 = pneg %p107
        $region22: #{tpu_custom_call.1} parent=11 // pred_check_branch
          %197 = sbr.rel (%p195) target = $region24
        $region23: #{tpu_custom_call.1} parent=11 // pred_region
          _
        $region24: #{tpu_custom_call.1} parent=11 // pred_fallthru
          _
        // Predicated region
        $region25: #{tpu_custom_call.1} parent=11 // pred_check
          %p198 = pneg %p128
        $region26: #{tpu_custom_call.1} parent=11 // pred_check_branch
          %200 = sbr.rel (%p198) target = $region28
        $region27: #{tpu_custom_call.1} parent=11 // pred_region
          _
        $region28: #{tpu_custom_call.1} parent=11 // pred_fallthru
          _
      $region12: #{tpu_custom_call.1} parent=5 // pred_fallthru
        _
      %p201 = scmp.lt.s32.totalorder %s18, 2
      // Predicated region
      $region29: #{tpu_custom_call.1} parent=5 // pred_check
        %p202 = pneg %p201
      $region30: #{tpu_custom_call.1} parent=5 // pred_check_branch
        %204 = sbr.rel (%p202) target = $region32
      $region31: #{tpu_custom_call.1} parent=5 // pred_region
        // Predicated region
        $region33: #{tpu_custom_call.1} parent=31 // pred_check
          %p205 = pneg %p38
        $region34: #{tpu_custom_call.1} parent=31 // pred_check_branch
          %207 = sbr.rel (%p205) target = $region36
        $region35: #{tpu_custom_call.1} parent=31 // pred_region
          %s208 = sand.u32 %s28, 1
          %s209 = scalar_lea.sflag [#allocation5], %s208
          %s210 = sand.u32 %s28, 1
          %s211 = smul.addr %s210, 336
          %s212 = scalar_lea.vmem [#allocation4], %s211
          %s214 = ssub.s32 5376, 5376
          %215 = vsyncadd %s209, %s214
          %s216 = smul.addr %s18, 42
          %s217 = smul.addr %s216, 128
          %s218 = scalar_lea.hbm %s0, %s217
          %s219 = sshll.u32 %s212, 4
          %s220 = int_to_ptr.vmem [resolvable:$true] %s219
          %225 = dma.hbm_to_vmem [thread:$0]  %s218, 5376, %s220, %s209, 128, 128, 8
        $region36: #{tpu_custom_call.1} parent=31 // pred_fallthru
          _
      $region32: #{tpu_custom_call.1} parent=5 // pred_fallthru
        _
      %p226 = scmp.le.s32.totalorder 1, %s18
      %p227 = scmp.lt.s32.totalorder %s18, 3
      %p228 = pnand %p226, %p227
      %p229 = pneg %p228
      // Predicated region
      $region37: #{tpu_custom_call.1} parent=5 // pred_check
        _
      $region38: #{tpu_custom_call.1} parent=5 // pred_check_branch
        %231 = sbr.rel (%p228) target = $region40
      $region39: #{tpu_custom_call.1} parent=5 // pred_region
        %s232 = ssub.s32 %s18, 1
        %s233 = sand.u32 %s31, 1
        %s234 = scalar_lea.sflag [#allocation5], %s233
        %s235 = sand.u32 %s31, 1
        %s236 = smul.addr %s235, 336
        %s237 = scalar_lea.vmem [#allocation4], %s236
        // Predicated region
        $region41: #{tpu_custom_call.1} parent=39 // pred_check
          %p238 = pneg %p44
        $region42: #{tpu_custom_call.1} parent=39 // pred_check_branch
          %240 = sbr.rel (%p238) target = $region44
        $region43: #{tpu_custom_call.1} parent=39 // pred_region
          %241 = dma.done %s234, 5376
        $region44: #{tpu_custom_call.1} parent=39 // pred_fallthru
          _
        // Predicated region
        $region45: #{tpu_custom_call.1} parent=39 // pred_check
          %p242 = pneg %p65
        $region46: #{tpu_custom_call.1} parent=39 // pred_check_branch
          %244 = sbr.rel (%p242) target = $region48
        $region47: #{tpu_custom_call.1} parent=39 // pred_region
          %245 = dma.done [#allocation8], 1024
        $region48: #{tpu_custom_call.1} parent=39 // pred_fallthru
          _
        // Predicated region
        $region49: #{tpu_custom_call.1} parent=39 // pred_check
          %p246 = pneg %p86
        $region50: #{tpu_custom_call.1} parent=39 // pred_check_branch
          %248 = sbr.rel (%p246) target = $region52
        $region51: #{tpu_custom_call.1} parent=39 // pred_region
          %249 = dma.done [#allocation8], 9216
        $region52: #{tpu_custom_call.1} parent=39 // pred_fallthru
          _
        %s250 = sand.u32 %s31, 1
        %s251 = scalar_lea.sflag [#allocation5], %s250
        %s252 = sand.u32 %s31, 1
        %s253 = smul.addr %s252, 336
        %s254 = scalar_lea.vmem [#allocation4], %s253
        %p255 = pneg %p44
        %p256 = pneg %p41
        %p257 = pneg %p65
        %p258 = pneg %p62
        %p259 = pneg %p86
        %p260 = pneg %p83
        %p261 = pneg %p107
        %p262 = pneg %p104
        %p263 = pneg %p128
        %p264 = pneg %p125
        %p265 = pneg %p154
        %p266 = pneg %p151
        %s267 = sand.u32 %s141, 1
        %s268 = scalar_lea.sflag [#allocation6], %s267
        %s269 = sand.u32 %s141, 1
        %s270 = smul.addr %s269, 336
        %s271 = scalar_lea.vmem [#allocation10], %s270
        %v273 = vld [vmem:[%s237] sm:$0xff]
        %v274 = vld [vmem:[%s237 + $0x8] sm:$0xff]
        %v275 = vld [vmem:[%s237 + $0x10] sm:$0xff]
        %v276 = vld [vmem:[%s237 + $0x18] sm:$0xff]
        %v277 = vld [vmem:[%s237 + $0x20] sm:$0xff]
        %v278 = vld [vmem:[%s237 + $0x28] sm:$0xff]
        %v279 = vld [vmem:[%s237 + $0x30] sm:$0xff]
        %v280 = vld [vmem:[%s237 + $0x38] sm:$0xff]
        %v281 = vld [vmem:[%s237 + $0x40] sm:$0xff]
        %v282 = vld [vmem:[%s237 + $0x48] sm:$0xff]
        %v283 = vld [vmem:[%s237 + $0x50] sm:$0xff]
        %v284 = vld [vmem:[%s237 + $0x58] sm:$0xff]
        %v285 = vld [vmem:[%s237 + $0x60] sm:$0xff]
        %v286 = vld [vmem:[%s237 + $0x68] sm:$0xff]
        %v287 = vld [vmem:[%s237 + $0x70] sm:$0xff]
        %v288 = vld [vmem:[%s237 + $0x78] sm:$0xff]
        %v289 = vld [vmem:[%s237 + $0x80] sm:$0xff]
        %v290 = vld [vmem:[%s237 + $0x88] sm:$0xff]
        %v291 = vld [vmem:[%s237 + $0x90] sm:$0xff]
        %v292 = vld [vmem:[%s237 + $0x98] sm:$0xff]
        %v293 = vld [vmem:[%s237 + $0xa0] sm:$0xff]
        %v294 = vld [vmem:[%s237 + $0xa8] sm:$0xff]
        %v295 = vld [vmem:[%s237 + $0xb0] sm:$0xff]
        %v296 = vld [vmem:[%s237 + $0xb8] sm:$0xff]
        %v297 = vld [vmem:[%s237 + $0xc0] sm:$0xff]
        %v298 = vld [vmem:[%s237 + $0xc8] sm:$0xff]
        %v299 = vld [vmem:[%s237 + $0xd0] sm:$0xff]
        %v300 = vld [vmem:[%s237 + $0xd8] sm:$0xff]
        %v301 = vld [vmem:[%s237 + $0xe0] sm:$0xff]
        %v302 = vld [vmem:[%s237 + $0xe8] sm:$0xff]
        %v303 = vld [vmem:[%s237 + $0xf0] sm:$0xff]
        %v304 = vld [vmem:[%s237 + $0xf8] sm:$0xff]
        %v305 = vld [vmem:[%s237 + $0x100] sm:$0xff]
        %v306 = vld [vmem:[%s237 + $0x108] sm:$0xff]
        %v307 = vld [vmem:[%s237 + $0x110] sm:$0xff]
        %v308 = vld [vmem:[%s237 + $0x118] sm:$0xff]
        %v309 = vld [vmem:[%s237 + $0x120] sm:$0xff]
        %v310 = vld [vmem:[%s237 + $0x128] sm:$0xff]
        %v311 = vld [vmem:[%s237 + $0x130] sm:$0xff]
        %v312 = vld [vmem:[%s237 + $0x138] sm:$0xff]
        %v313 = vld [vmem:[%s237 + $0x140] sm:$0xff]
        %v314 = vld [vmem:[%s237 + $0x148] sm:$0xff]
        %v315 = vpack.c.bf16 %v274, %v273
        %v316 = vpack.c.bf16 %v276, %v275
        %v317 = vpack.c.bf16 %v278, %v277
        %v318 = vpack.c.bf16 %v280, %v279
        %v319 = vpack.c.bf16 %v282, %v281
        %v320 = vpack.c.bf16 %v284, %v283
        %v321 = vpack.c.bf16 %v286, %v285
        %v322 = vpack.c.bf16 %v288, %v287
        %v323 = vpack.c.bf16 %v290, %v289
        %v324 = vpack.c.bf16 %v292, %v291
        %v325 = vpack.c.bf16 %v294, %v293
        %v326 = vpack.c.bf16 %v296, %v295
        %v327 = vpack.c.bf16 %v298, %v297
        %v328 = vpack.c.bf16 %v300, %v299
        %v329 = vpack.c.bf16 %v302, %v301
        %v330 = vpack.c.bf16 %v304, %v303
        %v331 = vpack.c.bf16 %v306, %v305
        %v332 = vpack.c.bf16 %v308, %v307
        %v333 = vpack.c.bf16 %v310, %v309
        %v334 = vpack.c.bf16 %v312, %v311
        %v335 = vpack.c.bf16 %v314, %v313
        %v336 = vld [vmem:[#allocation7] sm:$0xf]
        %v337 = vld [vmem:[#allocation7 + $0x4] sm:$0xf]
        %v338 = vld [vmem:[#allocation7 + $0x8] sm:$0xf]
        %v339 = vld [vmem:[#allocation7 + $0xc] sm:$0xf]
        %v340 = vld [vmem:[#allocation7 + $0x10] sm:$0xf]
        %v341 = vld [vmem:[#allocation7 + $0x14] sm:$0xf]
        %v342 = vld [vmem:[#allocation7 + $0x18] sm:$0xf]
        %v343 = vld [vmem:[#allocation7 + $0x1c] sm:$0xf]
        %v344 = vld [vmem:[#allocation7 + $0x20] sm:$0xf]
        %v345 = vld [vmem:[#allocation7 + $0x24] sm:$0xf]
        %v346 = vld [vmem:[#allocation7 + $0x28] sm:$0xf]
        %v347 = vld [vmem:[#allocation7 + $0x2c] sm:$0xf]
        %v348 = vld [vmem:[#allocation7 + $0x30] sm:$0xf]
        %v349 = vld [vmem:[#allocation7 + $0x34] sm:$0xf]
        %v350 = vld [vmem:[#allocation7 + $0x38] sm:$0xf]
        %v351 = vld [vmem:[#allocation7 + $0x3c] sm:$0xf]
        %v352 = vld [vmem:[%s3] sm:$0x1]
        %v354 = vlaneseq
        %v355 = vshrl.u32 %v354, 7
        %v356 = vsub.s32 0, %v355
        %v357 = vrot.slane %v352, %v356
        %v375 = vunpack.c.l.b16 %v336
        %v376 = vunpack.c.l.b16 %v337
        %v377 = vunpack.c.l.b16 %v338
        %v378 = vunpack.c.l.b16 %v339
        %v379 = vunpack.c.l.b16 %v340
        %v380 = vunpack.c.l.b16 %v341
        %v381 = vunpack.c.l.b16 %v342
        %v382 = vunpack.c.l.b16 %v343
        %v383 = vunpack.c.l.b16 %v344
        %v384 = vunpack.c.l.b16 %v345
        %v385 = vunpack.c.l.b16 %v346
        %v386 = vunpack.c.l.b16 %v347
        %v387 = vunpack.c.l.b16 %v348
        %v388 = vunpack.c.l.b16 %v349
        %v389 = vunpack.c.l.b16 %v350
        %v390 = vunpack.c.l.b16 %v351
        %v391 = vpack.c.b16 %v376, %v375
        %v392 = vpack.c.b16 %v378, %v377
        %v393 = vpack.c.b16 %v380, %v379
        %v394 = vpack.c.b16 %v382, %v381
        %v395 = vpack.c.b16 %v384, %v383
        %v396 = vpack.c.b16 %v386, %v385
        %v397 = vpack.c.b16 %v388, %v387
        %v398 = vpack.c.b16 %v390, %v389
        %407 = vmatprep.subr.bf16.mxu0 0
        %408 = vmatpush1.bf16.msra.mxu0 %v391
        %409 = vmatprep.subr.bf16.mxu0 0
        %410 = vmatpush1.bf16.msra.mxu0 %v392
        %411 = vmatprep.subr.bf16.mxu0 0
        %412 = vmatpush1.bf16.msra.mxu0 %v393
        %413 = vmatprep.subr.bf16.mxu0 0
        %414 = vmatpush1.bf16.msra.mxu0 %v394
        %415 = vmatprep.subr.bf16.mxu0 0
        %416 = vmatpush1.bf16.msra.mxu0 %v395
        %417 = vmatprep.subr.bf16.mxu0 0
        %418 = vmatpush1.bf16.msra.mxu0 %v396
        %419 = vmatprep.subr.bf16.mxu0 0
        %420 = vmatpush1.bf16.msra.mxu0 %v397
        %421 = vmatprep.subr.bf16.mxu0 0
        %422 = vmatpush1.bf16.msra.mxu0 %v398
        %423 = vmatprep.subr.bf16.mxu0 0
        %424 = vmatpush1.bf16.msra.mxu0 0
        %425 = vmatprep.subr.bf16.mxu0 0
        %426 = vmatpush1.bf16.msra.mxu0 0
        %427 = vmatprep.subr.bf16.mxu0 0
        %428 = vmatpush1.bf16.msra.mxu0 0
        %429 = vmatprep.subr.bf16.mxu0 0
        %430 = vmatpush1.bf16.msra.mxu0 0
        %431 = vmatprep.subr.bf16.mxu0 0
        %432 = vmatpush1.bf16.msra.mxu0 0
        %433 = vmatprep.subr.bf16.mxu0 0
        %434 = vmatpush1.bf16.msra.mxu0 0
        %435 = vmatprep.subr.bf16.mxu0 0
        %436 = vmatpush1.bf16.msra.mxu0 0
        %437 = vmatprep.subr.bf16.mxu0 0
        %438 = vmatpush1.bf16.msra.mxu0 0
        %439 = vmatprep.mubr.bf16.mxu0 0
        %440 = vmatmul.mubr.bf16.gmra.mrb[0].mxu0 %v315
        %v441 = vpop.f32.mrb[0].mxu0
        %v442 = vadd.f32 %v357, %v441
        %v443 = vpop.f32.mrb[0].mxu0
        %v444 = vpop.f32.mrb[0].mxu0
        %v445 = vadd.f32 %v357, %v444
        %v446 = vpop.f32.mrb[0].mxu0
        %447 = vmatprep.mubr.bf16.mxu0 0
        %448 = vmatmul.mubr.bf16.gmra.mrb[0].mxu0 %v316
        %v449 = vpop.f32.mrb[0].mxu0
        %v450 = vadd.f32 %v357, %v449
        %v451 = vpop.f32.mrb[0].mxu0
        %v452 = vpop.f32.mrb[0].mxu0
        %v453 = vadd.f32 %v357, %v452
        %v454 = vpop.f32.mrb[0].mxu0
        %455 = vmatprep.mubr.bf16.mxu0 0
        %456 = vmatmul.mubr.bf16.gmra.mrb[0].mxu0 %v317
        %v457 = vpop.f32.mrb[0].mxu0
        %v458 = vadd.f32 %v357, %v457
        %v459 = vpop.f32.mrb[0].mxu0
        %v460 = vpop.f32.mrb[0].mxu0
        %v461 = vadd.f32 %v357, %v460
        %v462 = vpop.f32.mrb[0].mxu0
        %463 = vmatprep.mubr.bf16.mxu0 0
        %464 = vmatmul.mubr.bf16.gmra.mrb[0].mxu0 %v318
        %v465 = vpop.f32.mrb[0].mxu0
        %v466 = vadd.f32 %v357, %v465
        %v467 = vpop.f32.mrb[0].mxu0
        %v468 = vpop.f32.mrb[0].mxu0
        %v469 = vadd.f32 %v357, %v468
        %v470 = vpop.f32.mrb[0].mxu0
        %471 = vmatprep.mubr.bf16.mxu0 0
        %472 = vmatmul.mubr.bf16.gmra.mrb[0].mxu0 %v319
        %v473 = vpop.f32.mrb[0].mxu0
        %v474 = vadd.f32 %v357, %v473
        %v475 = vpop.f32.mrb[0].mxu0
        %v476 = vpop.f32.mrb[0].mxu0
        %v477 = vadd.f32 %v357, %v476
        %v478 = vpop.f32.mrb[0].mxu0
        %479 = vmatprep.mubr.bf16.mxu0 0
        %480 = vmatmul.mubr.bf16.gmra.mrb[0].mxu0 %v320
        %v481 = vpop.f32.mrb[0].mxu0
        %v482 = vadd.f32 %v357, %v481
        %v483 = vpop.f32.mrb[0].mxu0
        %v484 = vpop.f32.mrb[0].mxu0
        %v485 = vadd.f32 %v357, %v484
        %v486 = vpop.f32.mrb[0].mxu0
        %487 = vmatprep.mubr.bf16.mxu0 0
        %488 = vmatmul.mubr.bf16.gmra.mrb[0].mxu0 %v321
        %v489 = vpop.f32.mrb[0].mxu0
        %v490 = vadd.f32 %v357, %v489
        %v491 = vpop.f32.mrb[0].mxu0
        %v492 = vpop.f32.mrb[0].mxu0
        %v493 = vadd.f32 %v357, %v492
        %v494 = vpop.f32.mrb[0].mxu0
        %495 = vmatprep.mubr.bf16.mxu0 0
        %496 = vmatmul.mubr.bf16.gmra.mrb[0].mxu0 %v322
        %v497 = vpop.f32.mrb[0].mxu0
        %v498 = vadd.f32 %v357, %v497
        %v499 = vpop.f32.mrb[0].mxu0
        %v500 = vpop.f32.mrb[0].mxu0
        %v501 = vadd.f32 %v357, %v500
        %v502 = vpop.f32.mrb[0].mxu0
        %503 = vmatprep.mubr.bf16.mxu0 0
        %504 = vmatmul.mubr.bf16.gmra.mrb[0].mxu0 %v323
        %v505 = vpop.f32.mrb[0].mxu0
        %v506 = vadd.f32 %v357, %v505
        %v507 = vpop.f32.mrb[0].mxu0
        %v508 = vpop.f32.mrb[0].mxu0
        %v509 = vadd.f32 %v357, %v508
        %v510 = vpop.f32.mrb[0].mxu0
        %511 = vmatprep.mubr.bf16.mxu0 0
        %512 = vmatmul.mubr.bf16.gmra.mrb[0].mxu0 %v324
        %v513 = vpop.f32.mrb[0].mxu0
        %v514 = vadd.f32 %v357, %v513
        %v515 = vpop.f32.mrb[0].mxu0
        %v516 = vpop.f32.mrb[0].mxu0
        %v517 = vadd.f32 %v357, %v516
        %v518 = vpop.f32.mrb[0].mxu0
        %519 = vmatprep.mubr.bf16.mxu0 0
        %520 = vmatmul.mubr.bf16.gmra.mrb[0].mxu0 %v325
        %v521 = vpop.f32.mrb[0].mxu0
        %v522 = vadd.f32 %v357, %v521
        %v523 = vpop.f32.mrb[0].mxu0
        %v524 = vpop.f32.mrb[0].mxu0
        %v525 = vadd.f32 %v357, %v524
        %v526 = vpop.f32.mrb[0].mxu0
        %527 = vmatprep.mubr.bf16.mxu0 0
        %528 = vmatmul.mubr.bf16.gmra.mrb[0].mxu0 %v326
        %v529 = vpop.f32.mrb[0].mxu0
        %v530 = vadd.f32 %v357, %v529
        %v531 = vpop.f32.mrb[0].mxu0
        %v532 = vpop.f32.mrb[0].mxu0
        %v533 = vadd.f32 %v357, %v532
        %v534 = vpop.f32.mrb[0].mxu0
        %535 = vmatprep.mubr.bf16.mxu0 0
        %536 = vmatmul.mubr.bf16.gmra.mrb[0].mxu0 %v327
        %v537 = vpop.f32.mrb[0].mxu0
        %v538 = vadd.f32 %v357, %v537
        %v539 = vpop.f32.mrb[0].mxu0
        %v540 = vpop.f32.mrb[0].mxu0
        %v541 = vadd.f32 %v357, %v540
        %v542 = vpop.f32.mrb[0].mxu0
        %543 = vmatprep.mubr.bf16.mxu0 0
        %544 = vmatmul.mubr.bf16.gmra.mrb[0].mxu0 %v328
        %v545 = vpop.f32.mrb[0].mxu0
        %v546 = vadd.f32 %v357, %v545
        %v547 = vpop.f32.mrb[0].mxu0
        %v548 = vpop.f32.mrb[0].mxu0
        %v549 = vadd.f32 %v357, %v548
        %v550 = vpop.f32.mrb[0].mxu0
        %551 = vmatprep.mubr.bf16.mxu0 0
        %552 = vmatmul.mubr.bf16.gmra.mrb[0].mxu0 %v329
        %v553 = vpop.f32.mrb[0].mxu0
        %v554 = vadd.f32 %v357, %v553
        %v555 = vpop.f32.mrb[0].mxu0
        %v556 = vpop.f32.mrb[0].mxu0
        %v557 = vadd.f32 %v357, %v556
        %v558 = vpop.f32.mrb[0].mxu0
        %559 = vmatprep.mubr.bf16.mxu0 0
        %560 = vmatmul.mubr.bf16.gmra.mrb[0].mxu0 %v330
        %v561 = vpop.f32.mrb[0].mxu0
        %v562 = vadd.f32 %v357, %v561
        %v563 = vpop.f32.mrb[0].mxu0
        %v564 = vpop.f32.mrb[0].mxu0
        %v565 = vadd.f32 %v357, %v564
        %v566 = vpop.f32.mrb[0].mxu0
        %567 = vmatprep.mubr.bf16.mxu0 0
        %568 = vmatmul.mubr.bf16.gmra.mrb[0].mxu0 %v331
        %v569 = vpop.f32.mrb[0].mxu0
        %v570 = vadd.f32 %v357, %v569
        %v571 = vpop.f32.mrb[0].mxu0
        %v572 = vpop.f32.mrb[0].mxu0
        %v573 = vadd.f32 %v357, %v572
        %v574 = vpop.f32.mrb[0].mxu0
        %575 = vmatprep.mubr.bf16.mxu0 0
        %576 = vmatmul.mubr.bf16.gmra.mrb[0].mxu0 %v332
        %v577 = vpop.f32.mrb[0].mxu0
        %v578 = vadd.f32 %v357, %v577
        %v579 = vpop.f32.mrb[0].mxu0
        %v580 = vpop.f32.mrb[0].mxu0
        %v581 = vadd.f32 %v357, %v580
        %v582 = vpop.f32.mrb[0].mxu0
        %583 = vmatprep.mubr.bf16.mxu0 0
        %584 = vmatmul.mubr.bf16.gmra.mrb[0].mxu0 %v333
        %v585 = vpop.f32.mrb[0].mxu0
        %v586 = vadd.f32 %v357, %v585
        %v587 = vpop.f32.mrb[0].mxu0
        %v588 = vpop.f32.mrb[0].mxu0
        %v589 = vadd.f32 %v357, %v588
        %v590 = vpop.f32.mrb[0].mxu0
        %591 = vmatprep.mubr.bf16.mxu0 0
        %592 = vmatmul.mubr.bf16.gmra.mrb[0].mxu0 %v334
        %v593 = vpop.f32.mrb[0].mxu0
        %v594 = vadd.f32 %v357, %v593
        %v595 = vpop.f32.mrb[0].mxu0
        %v596 = vpop.f32.mrb[0].mxu0
        %v597 = vadd.f32 %v357, %v596
        %v598 = vpop.f32.mrb[0].mxu0
        %599 = vmatprep.mubr.bf16.mxu0 0
        %600 = vmatmul.mubr.bf16.gmra.mrb[0].mxu0 %v335
        %v601 = vpop.f32.mrb[0].mxu0
        %v602 = vadd.f32 %v357, %v601
        %v603 = vpop.f32.mrb[0].mxu0
        %v604 = vpop.f32.mrb[0].mxu0
        %v605 = vadd.f32 %v357, %v604
        %v606 = vpop.f32.mrb[0].mxu0
        %607 = vdwg.mxu0
        %vm608 = vcmp.gt.f32.partialorder %v442, 0.0
        %vm609 = vcmp.gt.f32.partialorder %v445, 0.0
        %vm610 = vcmp.gt.f32.partialorder %v450, 0.0
        %vm611 = vcmp.gt.f32.partialorder %v453, 0.0
        %vm612 = vcmp.gt.f32.partialorder %v458, 0.0
        %vm613 = vcmp.gt.f32.partialorder %v461, 0.0
        %vm614 = vcmp.gt.f32.partialorder %v466, 0.0
        %vm615 = vcmp.gt.f32.partialorder %v469, 0.0
        %vm616 = vcmp.gt.f32.partialorder %v474, 0.0
        %vm617 = vcmp.gt.f32.partialorder %v477, 0.0
        %vm618 = vcmp.gt.f32.partialorder %v482, 0.0
        %vm619 = vcmp.gt.f32.partialorder %v485, 0.0
        %vm620 = vcmp.gt.f32.partialorder %v490, 0.0
        %vm621 = vcmp.gt.f32.partialorder %v493, 0.0
        %vm622 = vcmp.gt.f32.partialorder %v498, 0.0
        %vm623 = vcmp.gt.f32.partialorder %v501, 0.0
        %vm624 = vcmp.gt.f32.partialorder %v506, 0.0
        %vm625 = vcmp.gt.f32.partialorder %v509, 0.0
        %vm626 = vcmp.gt.f32.partialorder %v514, 0.0
        %vm627 = vcmp.gt.f32.partialorder %v517, 0.0
        %vm628 = vcmp.gt.f32.partialorder %v522, 0.0
        %vm629 = vcmp.gt.f32.partialorder %v525, 0.0
        %vm630 = vcmp.gt.f32.partialorder %v530, 0.0
        %vm631 = vcmp.gt.f32.partialorder %v533, 0.0
        %vm632 = vcmp.gt.f32.partialorder %v538, 0.0
        %vm633 = vcmp.gt.f32.partialorder %v541, 0.0
        %vm634 = vcmp.gt.f32.partialorder %v546, 0.0
        %vm635 = vcmp.gt.f32.partialorder %v549, 0.0
        %vm636 = vcmp.gt.f32.partialorder %v554, 0.0
        %vm637 = vcmp.gt.f32.partialorder %v557, 0.0
        %vm638 = vcmp.gt.f32.partialorder %v562, 0.0
        %vm639 = vcmp.gt.f32.partialorder %v565, 0.0
        %vm640 = vcmp.gt.f32.partialorder %v570, 0.0
        %vm641 = vcmp.gt.f32.partialorder %v573, 0.0
        %vm642 = vcmp.gt.f32.partialorder %v578, 0.0
        %vm643 = vcmp.gt.f32.partialorder %v581, 0.0
        %vm644 = vcmp.gt.f32.partialorder %v586, 0.0
        %vm645 = vcmp.gt.f32.partialorder %v589, 0.0
        %vm646 = vcmp.gt.f32.partialorder %v594, 0.0
        %vm647 = vcmp.gt.f32.partialorder %v597, 0.0
        %vm648 = vcmp.gt.f32.partialorder %v602, 0.0
        %vm649 = vcmp.gt.f32.partialorder %v605, 0.0
        %v650 = vmul.f32 %v442, 0.1
        %v651 = vmul.f32 %v445, 0.1
        %v652 = vmul.f32 %v450, 0.1
        %v653 = vmul.f32 %v453, 0.1
        %v654 = vmul.f32 %v458, 0.1
        %v655 = vmul.f32 %v461, 0.1
        %v656 = vmul.f32 %v466, 0.1
        %v657 = vmul.f32 %v469, 0.1
        %v658 = vmul.f32 %v474, 0.1
        %v659 = vmul.f32 %v477, 0.1
        %v660 = vmul.f32 %v482, 0.1
        %v661 = vmul.f32 %v485, 0.1
        %v662 = vmul.f32 %v490, 0.1
        %v663 = vmul.f32 %v493, 0.1
        %v664 = vmul.f32 %v498, 0.1
        %v665 = vmul.f32 %v501, 0.1
        %v666 = vmul.f32 %v506, 0.1
        %v667 = vmul.f32 %v509, 0.1
        %v668 = vmul.f32 %v514, 0.1
        %v669 = vmul.f32 %v517, 0.1
        %v670 = vmul.f32 %v522, 0.1
        %v671 = vmul.f32 %v525, 0.1
        %v672 = vmul.f32 %v530, 0.1
        %v673 = vmul.f32 %v533, 0.1
        %v674 = vmul.f32 %v538, 0.1
        %v675 = vmul.f32 %v541, 0.1
        %v676 = vmul.f32 %v546, 0.1
        %v677 = vmul.f32 %v549, 0.1
        %v678 = vmul.f32 %v554, 0.1
        %v679 = vmul.f32 %v557, 0.1
        %v680 = vmul.f32 %v562, 0.1
        %v681 = vmul.f32 %v565, 0.1
        %v682 = vmul.f32 %v570, 0.1
        %v683 = vmul.f32 %v573, 0.1
        %v684 = vmul.f32 %v578, 0.1
        %v685 = vmul.f32 %v581, 0.1
        %v686 = vmul.f32 %v586, 0.1
        %v687 = vmul.f32 %v589, 0.1
        %v688 = vmul.f32 %v594, 0.1
        %v689 = vmul.f32 %v597, 0.1
        %v690 = vmul.f32 %v602, 0.1
        %v691 = vmul.f32 %v605, 0.1
        %v692 = vsel %vm608, %v442, %v650
        %v693 = vsel %vm609, %v445, %v651
        %v694 = vsel %vm610, %v450, %v652
        %v695 = vsel %vm611, %v453, %v653
        %v696 = vsel %vm612, %v458, %v654
        %v697 = vsel %vm613, %v461, %v655
        %v698 = vsel %vm614, %v466, %v656
        %v699 = vsel %vm615, %v469, %v657
        %v700 = vsel %vm616, %v474, %v658
        %v701 = vsel %vm617, %v477, %v659
        %v702 = vsel %vm618, %v482, %v660
        %v703 = vsel %vm619, %v485, %v661
        %v704 = vsel %vm620, %v490, %v662
        %v705 = vsel %vm621, %v493, %v663
        %v706 = vsel %vm622, %v498, %v664
        %v707 = vsel %vm623, %v501, %v665
        %v708 = vsel %vm624, %v506, %v666
        %v709 = vsel %vm625, %v509, %v667
        %v710 = vsel %vm626, %v514, %v668
        %v711 = vsel %vm627, %v517, %v669
        %v712 = vsel %vm628, %v522, %v670
        %v713 = vsel %vm629, %v525, %v671
        %v714 = vsel %vm630, %v530, %v672
        %v715 = vsel %vm631, %v533, %v673
        %v716 = vsel %vm632, %v538, %v674
        %v717 = vsel %vm633, %v541, %v675
        %v718 = vsel %vm634, %v546, %v676
        %v719 = vsel %vm635, %v549, %v677
        %v720 = vsel %vm636, %v554, %v678
        %v721 = vsel %vm637, %v557, %v679
        %v722 = vsel %vm638, %v562, %v680
        %v723 = vsel %vm639, %v565, %v681
        %v724 = vsel %vm640, %v570, %v682
        %v725 = vsel %vm641, %v573, %v683
        %v726 = vsel %vm642, %v578, %v684
        %v727 = vsel %vm643, %v581, %v685
        %v728 = vsel %vm644, %v586, %v686
        %v729 = vsel %vm645, %v589, %v687
        %v730 = vsel %vm646, %v594, %v688
        %v731 = vsel %vm647, %v597, %v689
        %v732 = vsel %vm648, %v602, %v690
        %v733 = vsel %vm649, %v605, %v691
        %v734 = vlaneseq
        %v735 = vshrl.u32 %v734, 7
        %v736 = vadd.s32 %v735, 8
        %v737 = vadd.s32 %v735, 16
        %v738 = vadd.s32 %v735, 24
        %v739 = vadd.s32 %v735, 32
        %v740 = vadd.s32 %v735, 40
        %v741 = vadd.s32 %v735, 48
        %v742 = vadd.s32 %v735, 56
        %v743 = vadd.s32 %v735, 64
        %v744 = vadd.s32 %v735, 72
        %v745 = vadd.s32 %v735, 80
        %v746 = vadd.s32 %v735, 88
        %v747 = vadd.s32 %v735, 96
        %v748 = vadd.s32 %v735, 104
        %v749 = vadd.s32 %v735, 112
        %v750 = vadd.s32 %v735, 120
        %v751 = vadd.s32 %v735, 128
        %v752 = vadd.s32 %v735, 136
        %v753 = vadd.s32 %v735, 144
        %v754 = vadd.s32 %v735, 152
        %v755 = vadd.s32 %v735, 160
        %v756 = vadd.s32 %v735, 168
        %v757 = vadd.s32 %v735, 176
        %v758 = vadd.s32 %v735, 184
        %v759 = vadd.s32 %v735, 192
        %v760 = vadd.s32 %v735, 200
        %v761 = vadd.s32 %v735, 208
        %v762 = vadd.s32 %v735, 216
        %v763 = vadd.s32 %v735, 224
        %v764 = vadd.s32 %v735, 232
        %v765 = vadd.s32 %v735, 240
        %v766 = vadd.s32 %v735, 248
        %v767 = vadd.s32 %v735, 256
        %v768 = vadd.s32 %v735, 264
        %v769 = vadd.s32 %v735, 272
        %v770 = vadd.s32 %v735, 280
        %v771 = vadd.s32 %v735, 288
        %v772 = vadd.s32 %v735, 296
        %v773 = vadd.s32 %v735, 304
        %v774 = vadd.s32 %v735, 312
        %v775 = vadd.s32 %v735, 320
        %v776 = vadd.s32 %v735, 328
        %v777 = vcvt.s32.f32 %v735
        %v778 = vcvt.s32.f32 %v736
        %v779 = vcvt.s32.f32 %v737
        %v780 = vcvt.s32.f32 %v738
        %v781 = vcvt.s32.f32 %v739
        %v782 = vcvt.s32.f32 %v740
        %v783 = vcvt.s32.f32 %v741
        %v784 = vcvt.s32.f32 %v742
        %v785 = vcvt.s32.f32 %v743
        %v786 = vcvt.s32.f32 %v744
        %v787 = vcvt.s32.f32 %v745
        %v788 = vcvt.s32.f32 %v746
        %v789 = vcvt.s32.f32 %v747
        %v790 = vcvt.s32.f32 %v748
        %v791 = vcvt.s32.f32 %v749
        %v792 = vcvt.s32.f32 %v750
        %v793 = vcvt.s32.f32 %v751
        %v794 = vcvt.s32.f32 %v752
        %v795 = vcvt.s32.f32 %v753
        %v796 = vcvt.s32.f32 %v754
        %v797 = vcvt.s32.f32 %v755
        %v798 = vcvt.s32.f32 %v756
        %v799 = vcvt.s32.f32 %v757
        %v800 = vcvt.s32.f32 %v758
        %v801 = vcvt.s32.f32 %v759
        %v802 = vcvt.s32.f32 %v760
        %v803 = vcvt.s32.f32 %v761
        %v804 = vcvt.s32.f32 %v762
        %v805 = vcvt.s32.f32 %v763
        %v806 = vcvt.s32.f32 %v764
        %v807 = vcvt.s32.f32 %v765
        %v808 = vcvt.s32.f32 %v766
        %v809 = vcvt.s32.f32 %v767
        %v810 = vcvt.s32.f32 %v768
        %v811 = vcvt.s32.f32 %v769
        %v812 = vcvt.s32.f32 %v770
        %v813 = vcvt.s32.f32 %v771
        %v814 = vcvt.s32.f32 %v772
        %v815 = vcvt.s32.f32 %v773
        %v816 = vcvt.s32.f32 %v774
        %v817 = vcvt.s32.f32 %v775
        %v818 = vcvt.s32.f32 %v776
        %v819 = vadd.f32 %v777, 0.5
        %v820 = vadd.f32 %v778, 0.5
        %v821 = vadd.f32 %v779, 0.5
        %v822 = vadd.f32 %v780, 0.5
        %v823 = vadd.f32 %v781, 0.5
        %v824 = vadd.f32 %v782, 0.5
        %v825 = vadd.f32 %v783, 0.5
        %v826 = vadd.f32 %v784, 0.5
        %v827 = vadd.f32 %v785, 0.5
        %v828 = vadd.f32 %v786, 0.5
        %v829 = vadd.f32 %v787, 0.5
        %v830 = vadd.f32 %v788, 0.5
        %v831 = vadd.f32 %v789, 0.5
        %v832 = vadd.f32 %v790, 0.5
        %v833 = vadd.f32 %v791, 0.5
        %v834 = vadd.f32 %v792, 0.5
        %v835 = vadd.f32 %v793, 0.5
        %v836 = vadd.f32 %v794, 0.5
        %v837 = vadd.f32 %v795, 0.5
        %v838 = vadd.f32 %v796, 0.5
        %v839 = vadd.f32 %v797, 0.5
        %v840 = vadd.f32 %v798, 0.5
        %v841 = vadd.f32 %v799, 0.5
        %v842 = vadd.f32 %v800, 0.5
        %v843 = vadd.f32 %v801, 0.5
        %v844 = vadd.f32 %v802, 0.5
        %v845 = vadd.f32 %v803, 0.5
        %v846 = vadd.f32 %v804, 0.5
        %v847 = vadd.f32 %v805, 0.5
        %v848 = vadd.f32 %v806, 0.5
        %v849 = vadd.f32 %v807, 0.5
        %v850 = vadd.f32 %v808, 0.5
        %v851 = vadd.f32 %v809, 0.5
        %v852 = vadd.f32 %v810, 0.5
        %v853 = vadd.f32 %v811, 0.5
        %v854 = vadd.f32 %v812, 0.5
        %v855 = vadd.f32 %v813, 0.5
        %v856 = vadd.f32 %v814, 0.5
        %v857 = vadd.f32 %v815, 0.5
        %v858 = vadd.f32 %v816, 0.5
        %v859 = vadd.f32 %v817, 0.5
        %v860 = vadd.f32 %v818, 0.5
        %v861 = vmul.f32 %v819, 0.055555556
        %v862 = vmul.f32 %v820, 0.055555556
        %v863 = vmul.f32 %v821, 0.055555556
        %v864 = vmul.f32 %v822, 0.055555556
        %v865 = vmul.f32 %v823, 0.055555556
        %v866 = vmul.f32 %v824, 0.055555556
        %v867 = vmul.f32 %v825, 0.055555556
        %v868 = vmul.f32 %v826, 0.055555556
        %v869 = vmul.f32 %v827, 0.055555556
        %v870 = vmul.f32 %v828, 0.055555556
        %v871 = vmul.f32 %v829, 0.055555556
        %v872 = vmul.f32 %v830, 0.055555556
        %v873 = vmul.f32 %v831, 0.055555556
        %v874 = vmul.f32 %v832, 0.055555556
        %v875 = vmul.f32 %v833, 0.055555556
        %v876 = vmul.f32 %v834, 0.055555556
        %v877 = vmul.f32 %v835, 0.055555556
        %v878 = vmul.f32 %v836, 0.055555556
        %v879 = vmul.f32 %v837, 0.055555556
        %v880 = vmul.f32 %v838, 0.055555556
        %v881 = vmul.f32 %v839, 0.055555556
        %v882 = vmul.f32 %v840, 0.055555556
        %v883 = vmul.f32 %v841, 0.055555556
        %v884 = vmul.f32 %v842, 0.055555556
        %v885 = vmul.f32 %v843, 0.055555556
        %v886 = vmul.f32 %v844, 0.055555556
        %v887 = vmul.f32 %v845, 0.055555556
        %v888 = vmul.f32 %v846, 0.055555556
        %v889 = vmul.f32 %v847, 0.055555556
        %v890 = vmul.f32 %v848, 0.055555556
        %v891 = vmul.f32 %v849, 0.055555556
        %v892 = vmul.f32 %v850, 0.055555556
        %v893 = vmul.f32 %v851, 0.055555556
        %v894 = vmul.f32 %v852, 0.055555556
        %v895 = vmul.f32 %v853, 0.055555556
        %v896 = vmul.f32 %v854, 0.055555556
        %v897 = vmul.f32 %v855, 0.055555556
        %v898 = vmul.f32 %v856, 0.055555556
        %v899 = vmul.f32 %v857, 0.055555556
        %v900 = vmul.f32 %v858, 0.055555556
        %v901 = vmul.f32 %v859, 0.055555556
        %v902 = vmul.f32 %v860, 0.055555556
        %v903 = vfloor.f32 %v861
        %v904 = vfloor.f32 %v862
        %v905 = vfloor.f32 %v863
        %v906 = vfloor.f32 %v864
        %v907 = vfloor.f32 %v865
        %v908 = vfloor.f32 %v866
        %v909 = vfloor.f32 %v867
        %v910 = vfloor.f32 %v868
        %v911 = vfloor.f32 %v869
        %v912 = vfloor.f32 %v870
        %v913 = vfloor.f32 %v871
        %v914 = vfloor.f32 %v872
        %v915 = vfloor.f32 %v873
        %v916 = vfloor.f32 %v874
        %v917 = vfloor.f32 %v875
        %v918 = vfloor.f32 %v876
        %v919 = vfloor.f32 %v877
        %v920 = vfloor.f32 %v878
        %v921 = vfloor.f32 %v879
        %v922 = vfloor.f32 %v880
        %v923 = vfloor.f32 %v881
        %v924 = vfloor.f32 %v882
        %v925 = vfloor.f32 %v883
        %v926 = vfloor.f32 %v884
        %v927 = vfloor.f32 %v885
        %v928 = vfloor.f32 %v886
        %v929 = vfloor.f32 %v887
        %v930 = vfloor.f32 %v888
        %v931 = vfloor.f32 %v889
        %v932 = vfloor.f32 %v890
        %v933 = vfloor.f32 %v891
        %v934 = vfloor.f32 %v892
        %v935 = vfloor.f32 %v893
        %v936 = vfloor.f32 %v894
        %v937 = vfloor.f32 %v895
        %v938 = vfloor.f32 %v896
        %v939 = vfloor.f32 %v897
        %v940 = vfloor.f32 %v898
        %v941 = vfloor.f32 %v899
        %v942 = vfloor.f32 %v900
        %v943 = vfloor.f32 %v901
        %v944 = vfloor.f32 %v902
        %v945 = vmul.f32 %v903, 18.0
        %v946 = vmul.f32 %v904, 18.0
        %v947 = vmul.f32 %v905, 18.0
        %v948 = vmul.f32 %v906, 18.0
        %v949 = vmul.f32 %v907, 18.0
        %v950 = vmul.f32 %v908, 18.0
        %v951 = vmul.f32 %v909, 18.0
        %v952 = vmul.f32 %v910, 18.0
        %v953 = vmul.f32 %v911, 18.0
        %v954 = vmul.f32 %v912, 18.0
        %v955 = vmul.f32 %v913, 18.0
        %v956 = vmul.f32 %v914, 18.0
        %v957 = vmul.f32 %v915, 18.0
        %v958 = vmul.f32 %v916, 18.0
        %v959 = vmul.f32 %v917, 18.0
        %v960 = vmul.f32 %v918, 18.0
        %v961 = vmul.f32 %v919, 18.0
        %v962 = vmul.f32 %v920, 18.0
        %v963 = vmul.f32 %v921, 18.0
        %v964 = vmul.f32 %v922, 18.0
        %v965 = vmul.f32 %v923, 18.0
        %v966 = vmul.f32 %v924, 18.0
        %v967 = vmul.f32 %v925, 18.0
        %v968 = vmul.f32 %v926, 18.0
        %v969 = vmul.f32 %v927, 18.0
        %v970 = vmul.f32 %v928, 18.0
        %v971 = vmul.f32 %v929, 18.0
        %v972 = vmul.f32 %v930, 18.0
        %v973 = vmul.f32 %v931, 18.0
        %v974 = vmul.f32 %v932, 18.0
        %v975 = vmul.f32 %v933, 18.0
        %v976 = vmul.f32 %v934, 18.0
        %v977 = vmul.f32 %v935, 18.0
        %v978 = vmul.f32 %v936, 18.0
        %v979 = vmul.f32 %v937, 18.0
        %v980 = vmul.f32 %v938, 18.0
        %v981 = vmul.f32 %v939, 18.0
        %v982 = vmul.f32 %v940, 18.0
        %v983 = vmul.f32 %v941, 18.0
        %v984 = vmul.f32 %v942, 18.0
        %v985 = vmul.f32 %v943, 18.0
        %v986 = vmul.f32 %v944, 18.0
        %v987 = vsub.f32 %v777, %v945
        %v988 = vsub.f32 %v778, %v946
        %v989 = vsub.f32 %v779, %v947
        %v990 = vsub.f32 %v780, %v948
        %v991 = vsub.f32 %v781, %v949
        %v992 = vsub.f32 %v782, %v950
        %v993 = vsub.f32 %v783, %v951
        %v994 = vsub.f32 %v784, %v952
        %v995 = vsub.f32 %v785, %v953
        %v996 = vsub.f32 %v786, %v954
        %v997 = vsub.f32 %v787, %v955
        %v998 = vsub.f32 %v788, %v956
        %v999 = vsub.f32 %v789, %v957
        %v1000 = vsub.f32 %v790, %v958
        %v1001 = vsub.f32 %v791, %v959
        %v1002 = vsub.f32 %v792, %v960
        %v1003 = vsub.f32 %v793, %v961
        %v1004 = vsub.f32 %v794, %v962
        %v1005 = vsub.f32 %v795, %v963
        %v1006 = vsub.f32 %v796, %v964
        %v1007 = vsub.f32 %v797, %v965
        %v1008 = vsub.f32 %v798, %v966
        %v1009 = vsub.f32 %v799, %v967
        %v1010 = vsub.f32 %v800, %v968
        %v1011 = vsub.f32 %v801, %v969
        %v1012 = vsub.f32 %v802, %v970
        %v1013 = vsub.f32 %v803, %v971
        %v1014 = vsub.f32 %v804, %v972
        %v1015 = vsub.f32 %v805, %v973
        %v1016 = vsub.f32 %v806, %v974
        %v1017 = vsub.f32 %v807, %v975
        %v1018 = vsub.f32 %v808, %v976
        %v1019 = vsub.f32 %v809, %v977
        %v1020 = vsub.f32 %v810, %v978
        %v1021 = vsub.f32 %v811, %v979
        %v1022 = vsub.f32 %v812, %v980
        %v1023 = vsub.f32 %v813, %v981
        %v1024 = vsub.f32 %v814, %v982
        %v1025 = vsub.f32 %v815, %v983
        %v1026 = vsub.f32 %v816, %v984
        %v1027 = vsub.f32 %v817, %v985
        %v1028 = vsub.f32 %v818, %v986
        %vm1029 = vcmp.ge.f32.partialorder %v903, 1.0
        %vm1030 = vcmp.ge.f32.partialorder %v904, 1.0
        %vm1031 = vcmp.ge.f32.partialorder %v905, 1.0
        %vm1032 = vcmp.ge.f32.partialorder %v906, 1.0
        %vm1033 = vcmp.ge.f32.partialorder %v907, 1.0
        %vm1034 = vcmp.ge.f32.partialorder %v908, 1.0
        %vm1035 = vcmp.ge.f32.partialorder %v909, 1.0
        %vm1036 = vcmp.ge.f32.partialorder %v910, 1.0
        %vm1037 = vcmp.ge.f32.partialorder %v911, 1.0
        %vm1038 = vcmp.ge.f32.partialorder %v912, 1.0
        %vm1039 = vcmp.ge.f32.partialorder %v913, 1.0
        %vm1040 = vcmp.ge.f32.partialorder %v914, 1.0
        %vm1041 = vcmp.ge.f32.partialorder %v915, 1.0
        %vm1042 = vcmp.ge.f32.partialorder %v916, 1.0
        %vm1043 = vcmp.ge.f32.partialorder %v917, 1.0
        %vm1044 = vcmp.ge.f32.partialorder %v918, 1.0
        %vm1045 = vcmp.ge.f32.partialorder %v919, 1.0
        %vm1046 = vcmp.ge.f32.partialorder %v920, 1.0
        %vm1047 = vcmp.ge.f32.partialorder %v921, 1.0
        %vm1048 = vcmp.ge.f32.partialorder %v922, 1.0
        %vm1049 = vcmp.ge.f32.partialorder %v923, 1.0
        %vm1050 = vcmp.ge.f32.partialorder %v924, 1.0
        %vm1051 = vcmp.ge.f32.partialorder %v925, 1.0
        %vm1052 = vcmp.ge.f32.partialorder %v926, 1.0
        %vm1053 = vcmp.ge.f32.partialorder %v927, 1.0
        %vm1054 = vcmp.ge.f32.partialorder %v928, 1.0
        %vm1055 = vcmp.ge.f32.partialorder %v929, 1.0
        %vm1056 = vcmp.ge.f32.partialorder %v930, 1.0
        %vm1057 = vcmp.ge.f32.partialorder %v931, 1.0
        %vm1058 = vcmp.ge.f32.partialorder %v932, 1.0
        %vm1059 = vcmp.ge.f32.partialorder %v933, 1.0
        %vm1060 = vcmp.ge.f32.partialorder %v934, 1.0
        %vm1061 = vcmp.ge.f32.partialorder %v935, 1.0
        %vm1062 = vcmp.ge.f32.partialorder %v936, 1.0
        %vm1063 = vcmp.ge.f32.partialorder %v937, 1.0
        %vm1064 = vcmp.ge.f32.partialorder %v938, 1.0
        %vm1065 = vcmp.ge.f32.partialorder %v939, 1.0
        %vm1066 = vcmp.ge.f32.partialorder %v940, 1.0
        %vm1067 = vcmp.ge.f32.partialorder %v941, 1.0
        %vm1068 = vcmp.ge.f32.partialorder %v942, 1.0
        %vm1069 = vcmp.ge.f32.partialorder %v943, 1.0
        %vm1070 = vcmp.ge.f32.partialorder %v944, 1.0
        %vm1071 = vcmp.le.f32.partialorder %v903, 16.0
        %vm1072 = vcmp.le.f32.partialorder %v904, 16.0
        %vm1073 = vcmp.le.f32.partialorder %v905, 16.0
        %vm1074 = vcmp.le.f32.partialorder %v906, 16.0
        %vm1075 = vcmp.le.f32.partialorder %v907, 16.0
        %vm1076 = vcmp.le.f32.partialorder %v908, 16.0
        %vm1077 = vcmp.le.f32.partialorder %v909, 16.0
        %vm1078 = vcmp.le.f32.partialorder %v910, 16.0
        %vm1079 = vcmp.le.f32.partialorder %v911, 16.0
        %vm1080 = vcmp.le.f32.partialorder %v912, 16.0
        %vm1081 = vcmp.le.f32.partialorder %v913, 16.0
        %vm1082 = vcmp.le.f32.partialorder %v914, 16.0
        %vm1083 = vcmp.le.f32.partialorder %v915, 16.0
        %vm1084 = vcmp.le.f32.partialorder %v916, 16.0
        %vm1085 = vcmp.le.f32.partialorder %v917, 16.0
        %vm1086 = vcmp.le.f32.partialorder %v918, 16.0
        %vm1087 = vcmp.le.f32.partialorder %v919, 16.0
        %vm1088 = vcmp.le.f32.partialorder %v920, 16.0
        %vm1089 = vcmp.le.f32.partialorder %v921, 16.0
        %vm1090 = vcmp.le.f32.partialorder %v922, 16.0
        %vm1091 = vcmp.le.f32.partialorder %v923, 16.0
        %vm1092 = vcmp.le.f32.partialorder %v924, 16.0
        %vm1093 = vcmp.le.f32.partialorder %v925, 16.0
        %vm1094 = vcmp.le.f32.partialorder %v926, 16.0
        %vm1095 = vcmp.le.f32.partialorder %v927, 16.0
        %vm1096 = vcmp.le.f32.partialorder %v928, 16.0
        %vm1097 = vcmp.le.f32.partialorder %v929, 16.0
        %vm1098 = vcmp.le.f32.partialorder %v930, 16.0
        %vm1099 = vcmp.le.f32.partialorder %v931, 16.0
        %vm1100 = vcmp.le.f32.partialorder %v932, 16.0
        %vm1101 = vcmp.le.f32.partialorder %v933, 16.0
        %vm1102 = vcmp.le.f32.partialorder %v934, 16.0
        %vm1103 = vcmp.le.f32.partialorder %v935, 16.0
        %vm1104 = vcmp.le.f32.partialorder %v936, 16.0
        %vm1105 = vcmp.le.f32.partialorder %v937, 16.0
        %vm1106 = vcmp.le.f32.partialorder %v938, 16.0
        %vm1107 = vcmp.le.f32.partialorder %v939, 16.0
        %vm1108 = vcmp.le.f32.partialorder %v940, 16.0
        %vm1109 = vcmp.le.f32.partialorder %v941, 16.0
        %vm1110 = vcmp.le.f32.partialorder %v942, 16.0
        %vm1111 = vcmp.le.f32.partialorder %v943, 16.0
        %vm1112 = vcmp.le.f32.partialorder %v944, 16.0
        %vm1113 = vmand %vm1029, %vm1071
        %vm1114 = vmand %vm1030, %vm1072
        %vm1115 = vmand %vm1031, %vm1073
        %vm1116 = vmand %vm1032, %vm1074
        %vm1117 = vmand %vm1033, %vm1075
        %vm1118 = vmand %vm1034, %vm1076
        %vm1119 = vmand %vm1035, %vm1077
        %vm1120 = vmand %vm1036, %vm1078
        %vm1121 = vmand %vm1037, %vm1079
        %vm1122 = vmand %vm1038, %vm1080
        %vm1123 = vmand %vm1039, %vm1081
        %vm1124 = vmand %vm1040, %vm1082
        %vm1125 = vmand %vm1041, %vm1083
        %vm1126 = vmand %vm1042, %vm1084
        %vm1127 = vmand %vm1043, %vm1085
        %vm1128 = vmand %vm1044, %vm1086
        %vm1129 = vmand %vm1045, %vm1087
        %vm1130 = vmand %vm1046, %vm1088
        %vm1131 = vmand %vm1047, %vm1089
        %vm1132 = vmand %vm1048, %vm1090
        %vm1133 = vmand %vm1049, %vm1091
        %vm1134 = vmand %vm1050, %vm1092
        %vm1135 = vmand %vm1051, %vm1093
        %vm1136 = vmand %vm1052, %vm1094
        %vm1137 = vmand %vm1053, %vm1095
        %vm1138 = vmand %vm1054, %vm1096
        %vm1139 = vmand %vm1055, %vm1097
        %vm1140 = vmand %vm1056, %vm1098
        %vm1141 = vmand %vm1057, %vm1099
        %vm1142 = vmand %vm1058, %vm1100
        %vm1143 = vmand %vm1059, %vm1101
        %vm1144 = vmand %vm1060, %vm1102
        %vm1145 = vmand %vm1061, %vm1103
        %vm1146 = vmand %vm1062, %vm1104
        %vm1147 = vmand %vm1063, %vm1105
        %vm1148 = vmand %vm1064, %vm1106
        %vm1149 = vmand %vm1065, %vm1107
        %vm1150 = vmand %vm1066, %vm1108
        %vm1151 = vmand %vm1067, %vm1109
        %vm1152 = vmand %vm1068, %vm1110
        %vm1153 = vmand %vm1069, %vm1111
        %vm1154 = vmand %vm1070, %vm1112
        %vm1155 = vcmp.ge.f32.partialorder %v987, 1.0
        %vm1156 = vcmp.ge.f32.partialorder %v988, 1.0
        %vm1157 = vcmp.ge.f32.partialorder %v989, 1.0
        %vm1158 = vcmp.ge.f32.partialorder %v990, 1.0
        %vm1159 = vcmp.ge.f32.partialorder %v991, 1.0
        %vm1160 = vcmp.ge.f32.partialorder %v992, 1.0
        %vm1161 = vcmp.ge.f32.partialorder %v993, 1.0
        %vm1162 = vcmp.ge.f32.partialorder %v994, 1.0
        %vm1163 = vcmp.ge.f32.partialorder %v995, 1.0
        %vm1164 = vcmp.ge.f32.partialorder %v996, 1.0
        %vm1165 = vcmp.ge.f32.partialorder %v997, 1.0
        %vm1166 = vcmp.ge.f32.partialorder %v998, 1.0
        %vm1167 = vcmp.ge.f32.partialorder %v999, 1.0
        %vm1168 = vcmp.ge.f32.partialorder %v1000, 1.0
        %vm1169 = vcmp.ge.f32.partialorder %v1001, 1.0
        %vm1170 = vcmp.ge.f32.partialorder %v1002, 1.0
        %vm1171 = vcmp.ge.f32.partialorder %v1003, 1.0
        %vm1172 = vcmp.ge.f32.partialorder %v1004, 1.0
        %vm1173 = vcmp.ge.f32.partialorder %v1005, 1.0
        %vm1174 = vcmp.ge.f32.partialorder %v1006, 1.0
        %vm1175 = vcmp.ge.f32.partialorder %v1007, 1.0
        %vm1176 = vcmp.ge.f32.partialorder %v1008, 1.0
        %vm1177 = vcmp.ge.f32.partialorder %v1009, 1.0
        %vm1178 = vcmp.ge.f32.partialorder %v1010, 1.0
        %vm1179 = vcmp.ge.f32.partialorder %v1011, 1.0
        %vm1180 = vcmp.ge.f32.partialorder %v1012, 1.0
        %vm1181 = vcmp.ge.f32.partialorder %v1013, 1.0
        %vm1182 = vcmp.ge.f32.partialorder %v1014, 1.0
        %vm1183 = vcmp.ge.f32.partialorder %v1015, 1.0
        %vm1184 = vcmp.ge.f32.partialorder %v1016, 1.0
        %vm1185 = vcmp.ge.f32.partialorder %v1017, 1.0
        %vm1186 = vcmp.ge.f32.partialorder %v1018, 1.0
        %vm1187 = vcmp.ge.f32.partialorder %v1019, 1.0
        %vm1188 = vcmp.ge.f32.partialorder %v1020, 1.0
        %vm1189 = vcmp.ge.f32.partialorder %v1021, 1.0
        %vm1190 = vcmp.ge.f32.partialorder %v1022, 1.0
        %vm1191 = vcmp.ge.f32.partialorder %v1023, 1.0
        %vm1192 = vcmp.ge.f32.partialorder %v1024, 1.0
        %vm1193 = vcmp.ge.f32.partialorder %v1025, 1.0
        %vm1194 = vcmp.ge.f32.partialorder %v1026, 1.0
        %vm1195 = vcmp.ge.f32.partialorder %v1027, 1.0
        %vm1196 = vcmp.ge.f32.partialorder %v1028, 1.0
        %vm1197 = vmand %vm1113, %vm1155
        %vm1198 = vmand %vm1114, %vm1156
        %vm1199 = vmand %vm1115, %vm1157
        %vm1200 = vmand %vm1116, %vm1158
        %vm1201 = vmand %vm1117, %vm1159
        %vm1202 = vmand %vm1118, %vm1160
        %vm1203 = vmand %vm1119, %vm1161
        %vm1204 = vmand %vm1120, %vm1162
        %vm1205 = vmand %vm1121, %vm1163
        %vm1206 = vmand %vm1122, %vm1164
        %vm1207 = vmand %vm1123, %vm1165
        %vm1208 = vmand %vm1124, %vm1166
        %vm1209 = vmand %vm1125, %vm1167
        %vm1210 = vmand %vm1126, %vm1168
        %vm1211 = vmand %vm1127, %vm1169
        %vm1212 = vmand %vm1128, %vm1170
        %vm1213 = vmand %vm1129, %vm1171
        %vm1214 = vmand %vm1130, %vm1172
        %vm1215 = vmand %vm1131, %vm1173
        %vm1216 = vmand %vm1132, %vm1174
        %vm1217 = vmand %vm1133, %vm1175
        %vm1218 = vmand %vm1134, %vm1176
        %vm1219 = vmand %vm1135, %vm1177
        %vm1220 = vmand %vm1136, %vm1178
        %vm1221 = vmand %vm1137, %vm1179
        %vm1222 = vmand %vm1138, %vm1180
        %vm1223 = vmand %vm1139, %vm1181
        %vm1224 = vmand %vm1140, %vm1182
        %vm1225 = vmand %vm1141, %vm1183
        %vm1226 = vmand %vm1142, %vm1184
        %vm1227 = vmand %vm1143, %vm1185
        %vm1228 = vmand %vm1144, %vm1186
        %vm1229 = vmand %vm1145, %vm1187
        %vm1230 = vmand %vm1146, %vm1188
        %vm1231 = vmand %vm1147, %vm1189
        %vm1232 = vmand %vm1148, %vm1190
        %vm1233 = vmand %vm1149, %vm1191
        %vm1234 = vmand %vm1150, %vm1192
        %vm1235 = vmand %vm1151, %vm1193
        %vm1236 = vmand %vm1152, %vm1194
        %vm1237 = vmand %vm1153, %vm1195
        %vm1238 = vmand %vm1154, %vm1196
        %vm1239 = vcmp.le.f32.partialorder %v987, 16.0
        %vm1240 = vcmp.le.f32.partialorder %v988, 16.0
        %vm1241 = vcmp.le.f32.partialorder %v989, 16.0
        %vm1242 = vcmp.le.f32.partialorder %v990, 16.0
        %vm1243 = vcmp.le.f32.partialorder %v991, 16.0
        %vm1244 = vcmp.le.f32.partialorder %v992, 16.0
        %vm1245 = vcmp.le.f32.partialorder %v993, 16.0
        %vm1246 = vcmp.le.f32.partialorder %v994, 16.0
        %vm1247 = vcmp.le.f32.partialorder %v995, 16.0
        %vm1248 = vcmp.le.f32.partialorder %v996, 16.0
        %vm1249 = vcmp.le.f32.partialorder %v997, 16.0
        %vm1250 = vcmp.le.f32.partialorder %v998, 16.0
        %vm1251 = vcmp.le.f32.partialorder %v999, 16.0
        %vm1252 = vcmp.le.f32.partialorder %v1000, 16.0
        %vm1253 = vcmp.le.f32.partialorder %v1001, 16.0
        %vm1254 = vcmp.le.f32.partialorder %v1002, 16.0
        %vm1255 = vcmp.le.f32.partialorder %v1003, 16.0
        %vm1256 = vcmp.le.f32.partialorder %v1004, 16.0
        %vm1257 = vcmp.le.f32.partialorder %v1005, 16.0
        %vm1258 = vcmp.le.f32.partialorder %v1006, 16.0
        %vm1259 = vcmp.le.f32.partialorder %v1007, 16.0
        %vm1260 = vcmp.le.f32.partialorder %v1008, 16.0
        %vm1261 = vcmp.le.f32.partialorder %v1009, 16.0
        %vm1262 = vcmp.le.f32.partialorder %v1010, 16.0
        %vm1263 = vcmp.le.f32.partialorder %v1011, 16.0
        %vm1264 = vcmp.le.f32.partialorder %v1012, 16.0
        %vm1265 = vcmp.le.f32.partialorder %v1013, 16.0
        %vm1266 = vcmp.le.f32.partialorder %v1014, 16.0
        %vm1267 = vcmp.le.f32.partialorder %v1015, 16.0
        %vm1268 = vcmp.le.f32.partialorder %v1016, 16.0
        %vm1269 = vcmp.le.f32.partialorder %v1017, 16.0
        %vm1270 = vcmp.le.f32.partialorder %v1018, 16.0
        %vm1271 = vcmp.le.f32.partialorder %v1019, 16.0
        %vm1272 = vcmp.le.f32.partialorder %v1020, 16.0
        %vm1273 = vcmp.le.f32.partialorder %v1021, 16.0
        %vm1274 = vcmp.le.f32.partialorder %v1022, 16.0
        %vm1275 = vcmp.le.f32.partialorder %v1023, 16.0
        %vm1276 = vcmp.le.f32.partialorder %v1024, 16.0
        %vm1277 = vcmp.le.f32.partialorder %v1025, 16.0
        %vm1278 = vcmp.le.f32.partialorder %v1026, 16.0
        %vm1279 = vcmp.le.f32.partialorder %v1027, 16.0
        %vm1280 = vcmp.le.f32.partialorder %v1028, 16.0
        %vm1281 = vmand %vm1197, %vm1239
        %vm1282 = vmand %vm1198, %vm1240
        %vm1283 = vmand %vm1199, %vm1241
        %vm1284 = vmand %vm1200, %vm1242
        %vm1285 = vmand %vm1201, %vm1243
        %vm1286 = vmand %vm1202, %vm1244
        %vm1287 = vmand %vm1203, %vm1245
        %vm1288 = vmand %vm1204, %vm1246
        %vm1289 = vmand %vm1205, %vm1247
        %vm1290 = vmand %vm1206, %vm1248
        %vm1291 = vmand %vm1207, %vm1249
        %vm1292 = vmand %vm1208, %vm1250
        %vm1293 = vmand %vm1209, %vm1251
        %vm1294 = vmand %vm1210, %vm1252
        %vm1295 = vmand %vm1211, %vm1253
        %vm1296 = vmand %vm1212, %vm1254
        %vm1297 = vmand %vm1213, %vm1255
        %vm1298 = vmand %vm1214, %vm1256
        %vm1299 = vmand %vm1215, %vm1257
        %vm1300 = vmand %vm1216, %vm1258
        %vm1301 = vmand %vm1217, %vm1259
        %vm1302 = vmand %vm1218, %vm1260
        %vm1303 = vmand %vm1219, %vm1261
        %vm1304 = vmand %vm1220, %vm1262
        %vm1305 = vmand %vm1221, %vm1263
        %vm1306 = vmand %vm1222, %vm1264
        %vm1307 = vmand %vm1223, %vm1265
        %vm1308 = vmand %vm1224, %vm1266
        %vm1309 = vmand %vm1225, %vm1267
        %vm1310 = vmand %vm1226, %vm1268
        %vm1311 = vmand %vm1227, %vm1269
        %vm1312 = vmand %vm1228, %vm1270
        %vm1313 = vmand %vm1229, %vm1271
        %vm1314 = vmand %vm1230, %vm1272
        %vm1315 = vmand %vm1231, %vm1273
        %vm1316 = vmand %vm1232, %vm1274
        %vm1317 = vmand %vm1233, %vm1275
        %vm1318 = vmand %vm1234, %vm1276
        %vm1319 = vmand %vm1235, %vm1277
        %vm1320 = vmand %vm1236, %vm1278
        %vm1321 = vmand %vm1237, %vm1279
        %vm1322 = vmand %vm1238, %vm1280
        %v1323 = vsel %vm1281, 1, 0
        %v1324 = vsel %vm1282, 1, 0
        %v1325 = vsel %vm1283, 1, 0
        %v1326 = vsel %vm1284, 1, 0
        %v1327 = vsel %vm1285, 1, 0
        %v1328 = vsel %vm1286, 1, 0
        %v1329 = vsel %vm1287, 1, 0
        %v1330 = vsel %vm1288, 1, 0
        %v1331 = vsel %vm1289, 1, 0
        %v1332 = vsel %vm1290, 1, 0
        %v1333 = vsel %vm1291, 1, 0
        %v1334 = vsel %vm1292, 1, 0
        %v1335 = vsel %vm1293, 1, 0
        %v1336 = vsel %vm1294, 1, 0
        %v1337 = vsel %vm1295, 1, 0
        %v1338 = vsel %vm1296, 1, 0
        %v1339 = vsel %vm1297, 1, 0
        %v1340 = vsel %vm1298, 1, 0
        %v1341 = vsel %vm1299, 1, 0
        %v1342 = vsel %vm1300, 1, 0
        %v1343 = vsel %vm1301, 1, 0
        %v1344 = vsel %vm1302, 1, 0
        %v1345 = vsel %vm1303, 1, 0
        %v1346 = vsel %vm1304, 1, 0
        %v1347 = vsel %vm1305, 1, 0
        %v1348 = vsel %vm1306, 1, 0
        %v1349 = vsel %vm1307, 1, 0
        %v1350 = vsel %vm1308, 1, 0
        %v1351 = vsel %vm1309, 1, 0
        %v1352 = vsel %vm1310, 1, 0
        %v1353 = vsel %vm1311, 1, 0
        %v1354 = vsel %vm1312, 1, 0
        %v1355 = vsel %vm1313, 1, 0
        %v1356 = vsel %vm1314, 1, 0
        %v1357 = vsel %vm1315, 1, 0
        %v1358 = vsel %vm1316, 1, 0
        %v1359 = vsel %vm1317, 1, 0
        %v1360 = vsel %vm1318, 1, 0
        %v1361 = vsel %vm1319, 1, 0
        %v1362 = vsel %vm1320, 1, 0
        %v1363 = vsel %vm1321, 1, 0
        %v1364 = vsel %vm1322, 1, 0
        %v1365 = vcvt.s32.f32 %v1323
        %v1366 = vcvt.s32.f32 %v1324
        %v1367 = vcvt.s32.f32 %v1325
        %v1368 = vcvt.s32.f32 %v1326
        %v1369 = vcvt.s32.f32 %v1327
        %v1370 = vcvt.s32.f32 %v1328
        %v1371 = vcvt.s32.f32 %v1329
        %v1372 = vcvt.s32.f32 %v1330
        %v1373 = vcvt.s32.f32 %v1331
        %v1374 = vcvt.s32.f32 %v1332
        %v1375 = vcvt.s32.f32 %v1333
        %v1376 = vcvt.s32.f32 %v1334
        %v1377 = vcvt.s32.f32 %v1335
        %v1378 = vcvt.s32.f32 %v1336
        %v1379 = vcvt.s32.f32 %v1337
        %v1380 = vcvt.s32.f32 %v1338
        %v1381 = vcvt.s32.f32 %v1339
        %v1382 = vcvt.s32.f32 %v1340
        %v1383 = vcvt.s32.f32 %v1341
        %v1384 = vcvt.s32.f32 %v1342
        %v1385 = vcvt.s32.f32 %v1343
        %v1386 = vcvt.s32.f32 %v1344
        %v1387 = vcvt.s32.f32 %v1345
        %v1388 = vcvt.s32.f32 %v1346
        %v1389 = vcvt.s32.f32 %v1347
        %v1390 = vcvt.s32.f32 %v1348
        %v1391 = vcvt.s32.f32 %v1349
        %v1392 = vcvt.s32.f32 %v1350
        %v1393 = vcvt.s32.f32 %v1351
        %v1394 = vcvt.s32.f32 %v1352
        %v1395 = vcvt.s32.f32 %v1353
        %v1396 = vcvt.s32.f32 %v1354
        %v1397 = vcvt.s32.f32 %v1355
        %v1398 = vcvt.s32.f32 %v1356
        %v1399 = vcvt.s32.f32 %v1357
        %v1400 = vcvt.s32.f32 %v1358
        %v1401 = vcvt.s32.f32 %v1359
        %v1402 = vcvt.s32.f32 %v1360
        %v1403 = vcvt.s32.f32 %v1361
        %v1404 = vcvt.s32.f32 %v1362
        %v1405 = vcvt.s32.f32 %v1363
        %v1406 = vcvt.s32.f32 %v1364
        %v1407 = vmul.f32 %v692, %v1365
        %v1408 = vmul.f32 %v693, %v1366
        %v1409 = vmul.f32 %v694, %v1367
        %v1410 = vmul.f32 %v695, %v1368
        %v1411 = vmul.f32 %v696, %v1369
        %v1412 = vmul.f32 %v697, %v1370
        %v1413 = vmul.f32 %v698, %v1371
        %v1414 = vmul.f32 %v699, %v1372
        %v1415 = vmul.f32 %v700, %v1373
        %v1416 = vmul.f32 %v701, %v1374
        %v1417 = vmul.f32 %v702, %v1375
        %v1418 = vmul.f32 %v703, %v1376
        %v1419 = vmul.f32 %v704, %v1377
        %v1420 = vmul.f32 %v705, %v1378
        %v1421 = vmul.f32 %v706, %v1379
        %v1422 = vmul.f32 %v707, %v1380
        %v1423 = vmul.f32 %v708, %v1381
        %v1424 = vmul.f32 %v709, %v1382
        %v1425 = vmul.f32 %v710, %v1383
        %v1426 = vmul.f32 %v711, %v1384
        %v1427 = vmul.f32 %v712, %v1385
        %v1428 = vmul.f32 %v713, %v1386
        %v1429 = vmul.f32 %v714, %v1387
        %v1430 = vmul.f32 %v715, %v1388
        %v1431 = vmul.f32 %v716, %v1389
        %v1432 = vmul.f32 %v717, %v1390
        %v1433 = vmul.f32 %v718, %v1391
        %v1434 = vmul.f32 %v719, %v1392
        %v1435 = vmul.f32 %v720, %v1393
        %v1436 = vmul.f32 %v721, %v1394
        %v1437 = vmul.f32 %v722, %v1395
        %v1438 = vmul.f32 %v723, %v1396
        %v1439 = vmul.f32 %v724, %v1397
        %v1440 = vmul.f32 %v725, %v1398
        %v1441 = vmul.f32 %v726, %v1399
        %v1442 = vmul.f32 %v727, %v1400
        %v1443 = vmul.f32 %v728, %v1401
        %v1444 = vmul.f32 %v729, %v1402
        %v1445 = vmul.f32 %v730, %v1403
        %v1446 = vmul.f32 %v731, %v1404
        %v1447 = vmul.f32 %v732, %v1405
        %v1448 = vmul.f32 %v733, %v1406
        %v1449 = vpack.c.bf16 %v1408, %v1407
        %v1450 = vpack.c.bf16 %v1410, %v1409
        %v1451 = vpack.c.bf16 %v1412, %v1411
        %v1452 = vpack.c.bf16 %v1414, %v1413
        %v1453 = vpack.c.bf16 %v1416, %v1415
        %v1454 = vpack.c.bf16 %v1418, %v1417
        %v1455 = vpack.c.bf16 %v1420, %v1419
        %v1456 = vpack.c.bf16 %v1422, %v1421
        %v1457 = vpack.c.bf16 %v1424, %v1423
        %v1458 = vpack.c.bf16 %v1426, %v1425
        %v1459 = vpack.c.bf16 %v1428, %v1427
        %v1460 = vpack.c.bf16 %v1430, %v1429
        %v1461 = vpack.c.bf16 %v1432, %v1431
        %v1462 = vpack.c.bf16 %v1434, %v1433
        %v1463 = vpack.c.bf16 %v1436, %v1435
        %v1464 = vpack.c.bf16 %v1438, %v1437
        %v1465 = vpack.c.bf16 %v1440, %v1439
        %v1466 = vpack.c.bf16 %v1442, %v1441
        %v1467 = vpack.c.bf16 %v1444, %v1443
        %v1468 = vpack.c.bf16 %v1446, %v1445
        %v1469 = vpack.c.bf16 %v1448, %v1447
        %1470 = vst [vmem:[#allocation2 + $0x10] sm:$0xff] %v1449
        %1471 = vst [vmem:[#allocation2 + $0x18] sm:$0xff] %v1450
        %1472 = vst [vmem:[#allocation2 + $0x20] sm:$0xff] %v1451
        %1473 = vst [vmem:[#allocation2 + $0x28] sm:$0xff] %v1452
        %1474 = vst [vmem:[#allocation2 + $0x30] sm:$0xff] %v1453
        %1475 = vst [vmem:[#allocation2 + $0x38] sm:$0xff] %v1454
        %1476 = vst [vmem:[#allocation2 + $0x40] sm:$0xff] %v1455
        %1477 = vst [vmem:[#allocation2 + $0x48] sm:$0xff] %v1456
        %1478 = vst [vmem:[#allocation2 + $0x50] sm:$0xff] %v1457
        %1479 = vst [vmem:[#allocation2 + $0x58] sm:$0xff] %v1458
        %1480 = vst [vmem:[#allocation2 + $0x60] sm:$0xff] %v1459
        %1481 = vst [vmem:[#allocation2 + $0x68] sm:$0xff] %v1460
        %1482 = vst [vmem:[#allocation2 + $0x70] sm:$0xff] %v1461
        %1483 = vst [vmem:[#allocation2 + $0x78] sm:$0xff] %v1462
        %1484 = vst [vmem:[#allocation2 + $0x80] sm:$0xff] %v1463
        %1485 = vst [vmem:[#allocation2 + $0x88] sm:$0xff] %v1464
        %1486 = vst [vmem:[#allocation2 + $0x90] sm:$0xff] %v1465
        %1487 = vst [vmem:[#allocation2 + $0x98] sm:$0xff] %v1466
        %1488 = vst [vmem:[#allocation2 + $0xa0] sm:$0xff] %v1467
        %1489 = vst [vmem:[#allocation2 + $0xa8] sm:$0xff] %v1468
        %1490 = vst [vmem:[#allocation2 + $0xb0] sm:$0xff] %v1469
        %v1491 = vld [vmem:[#allocation2] sm:$0xc0]
        %v1492 = vld [vmem:[#allocation2 + $0x8] sm:$0xff]
        %v1493 = vld [vmem:[#allocation2 + $0x10] sm:$0xff]
        %v1494 = vld [vmem:[#allocation2 + $0x18] sm:$0xff]
        %v1495 = vld [vmem:[#allocation2 + $0x20] sm:$0xff]
        %v1496 = vld [vmem:[#allocation2 + $0x28] sm:$0xff]
        %v1497 = vld [vmem:[#allocation2 + $0x30] sm:$0xff]
        %v1498 = vld [vmem:[#allocation2 + $0x38] sm:$0xff]
        %v1499 = vld [vmem:[#allocation2 + $0x40] sm:$0xff]
        %v1500 = vld [vmem:[#allocation2 + $0x48] sm:$0xff]
        %v1501 = vld [vmem:[#allocation2 + $0x50] sm:$0xff]
        %v1502 = vld [vmem:[#allocation2 + $0x58] sm:$0xff]
        %v1503 = vld [vmem:[#allocation2 + $0x60] sm:$0xff]
        %v1504 = vld [vmem:[#allocation2 + $0x68] sm:$0xff]
        %v1505 = vld [vmem:[#allocation2 + $0x70] sm:$0xff]
        %v1506 = vld [vmem:[#allocation2 + $0x78] sm:$0xff]
        %v1507 = vld [vmem:[#allocation2 + $0x80] sm:$0xff]
        %v1508 = vld [vmem:[#allocation2 + $0x88] sm:$0xff]
        %v1509 = vld [vmem:[#allocation2 + $0x90] sm:$0xff]
        %v1510 = vld [vmem:[#allocation2 + $0x98] sm:$0xff]
        %v1511 = vld [vmem:[#allocation2 + $0xa0] sm:$0xff]
        %v1512 = vld [vmem:[#allocation2 + $0xa8] sm:$0x7f]
        %v1513 = vld [vmem:[#allocation9] sm:$0xf]
        %v1514 = vld [vmem:[#allocation9 + $0x4] sm:$0xf]
        %v1515 = vld [vmem:[#allocation9 + $0x8] sm:$0xf]
        %v1516 = vld [vmem:[#allocation9 + $0xc] sm:$0xf]
        %v1517 = vld [vmem:[#allocation9 + $0x10] sm:$0xf]
        %v1518 = vld [vmem:[#allocation9 + $0x14] sm:$0xf]
        %v1519 = vld [vmem:[#allocation9 + $0x18] sm:$0xf]
        %v1520 = vld [vmem:[#allocation9 + $0x1c] sm:$0xf]
        %v1521 = vld [vmem:[#allocation9 + $0x20] sm:$0xf]
        %v1522 = vld [vmem:[#allocation9 + $0x24] sm:$0xf]
        %v1523 = vld [vmem:[#allocation9 + $0x28] sm:$0xf]
        %v1524 = vld [vmem:[#allocation9 + $0x2c] sm:$0xf]
        %v1525 = vld [vmem:[#allocation9 + $0x30] sm:$0xf]
        %v1526 = vld [vmem:[#allocation9 + $0x34] sm:$0xf]
        %v1527 = vld [vmem:[#allocation9 + $0x38] sm:$0xf]
        %v1528 = vld [vmem:[#allocation9 + $0x3c] sm:$0xf]
        %vm1529 = vsmask.f32 1280
        %v1531 = vshrl.u32 %v1491, 16
        %v1533 = vrot.slane %v1531, 6
        %v1534 = vshll.u32 %v1491, 16
        %v1536 = vrot.slane %v1534, 7
        %v1537 = vor.u32 %v1533, %v1536
        %v1539 = vshrl.u32 %v1492, 16
        %v1541 = vrot.slane %v1539, 6
        %v1542 = vshll.u32 %v1492, 16
        %v1544 = vrot.slane %v1542, 7
        %v1545 = vor.u32 %v1541, %v1544
        %v1546 = vsel %vm1529, %v1537, %v1545
        %v1548 = vshrl.u32 %v1493, 16
        %v1550 = vrot.slane %v1548, 6
        %v1551 = vshll.u32 %v1493, 16
        %v1553 = vrot.slane %v1551, 7
        %v1554 = vor.u32 %v1550, %v1553
        %v1555 = vsel %vm1529, %v1545, %v1554
        %v1557 = vshrl.u32 %v1494, 16
        %v1559 = vrot.slane %v1557, 6
        %v1560 = vshll.u32 %v1494, 16
        %v1562 = vrot.slane %v1560, 7
        %v1563 = vor.u32 %v1559, %v1562
        %v1564 = vsel %vm1529, %v1554, %v1563
        %v1566 = vshrl.u32 %v1495, 16
        %v1568 = vrot.slane %v1566, 6
        %v1569 = vshll.u32 %v1495, 16
        %v1571 = vrot.slane %v1569, 7
        %v1572 = vor.u32 %v1568, %v1571
        %v1573 = vsel %vm1529, %v1563, %v1572
        %v1575 = vshrl.u32 %v1496, 16
        %v1577 = vrot.slane %v1575, 6
        %v1578 = vshll.u32 %v1496, 16
        %v1580 = vrot.slane %v1578, 7
        %v1581 = vor.u32 %v1577, %v1580
        %v1582 = vsel %vm1529, %v1572, %v1581
        %v1584 = vshrl.u32 %v1497, 16
        %v1586 = vrot.slane %v1584, 6
        %v1587 = vshll.u32 %v1497, 16
        %v1589 = vrot.slane %v1587, 7
        %v1590 = vor.u32 %v1586, %v1589
        %v1591 = vsel %vm1529, %v1581, %v1590
        %v1593 = vshrl.u32 %v1498, 16
        %v1595 = vrot.slane %v1593, 6
        %v1596 = vshll.u32 %v1498, 16
        %v1598 = vrot.slane %v1596, 7
        %v1599 = vor.u32 %v1595, %v1598
        %v1600 = vsel %vm1529, %v1590, %v1599
        %v1602 = vshrl.u32 %v1499, 16
        %v1604 = vrot.slane %v1602, 6
        %v1605 = vshll.u32 %v1499, 16
        %v1607 = vrot.slane %v1605, 7
        %v1608 = vor.u32 %v1604, %v1607
        %v1609 = vsel %vm1529, %v1599, %v1608
        %v1611 = vshrl.u32 %v1500, 16
        %v1613 = vrot.slane %v1611, 6
        %v1614 = vshll.u32 %v1500, 16
        %v1616 = vrot.slane %v1614, 7
        %v1617 = vor.u32 %v1613, %v1616
        %v1618 = vsel %vm1529, %v1608, %v1617
        %v1620 = vshrl.u32 %v1501, 16
        %v1622 = vrot.slane %v1620, 6
        %v1623 = vshll.u32 %v1501, 16
        %v1625 = vrot.slane %v1623, 7
        %v1626 = vor.u32 %v1622, %v1625
        %v1627 = vsel %vm1529, %v1617, %v1626
        %v1629 = vshrl.u32 %v1502, 16
        %v1631 = vrot.slane %v1629, 6
        %v1632 = vshll.u32 %v1502, 16
        %v1634 = vrot.slane %v1632, 7
        %v1635 = vor.u32 %v1631, %v1634
        %v1636 = vsel %vm1529, %v1626, %v1635
        %v1638 = vshrl.u32 %v1503, 16
        %v1640 = vrot.slane %v1638, 6
        %v1641 = vshll.u32 %v1503, 16
        %v1643 = vrot.slane %v1641, 7
        %v1644 = vor.u32 %v1640, %v1643
        %v1645 = vsel %vm1529, %v1635, %v1644
        %v1647 = vshrl.u32 %v1504, 16
        %v1649 = vrot.slane %v1647, 6
        %v1650 = vshll.u32 %v1504, 16
        %v1652 = vrot.slane %v1650, 7
        %v1653 = vor.u32 %v1649, %v1652
        %v1654 = vsel %vm1529, %v1644, %v1653
        %v1656 = vshrl.u32 %v1505, 16
        %v1658 = vrot.slane %v1656, 6
        %v1659 = vshll.u32 %v1505, 16
        %v1661 = vrot.slane %v1659, 7
        %v1662 = vor.u32 %v1658, %v1661
        %v1663 = vsel %vm1529, %v1653, %v1662
        %v1665 = vshrl.u32 %v1506, 16
        %v1667 = vrot.slane %v1665, 6
        %v1668 = vshll.u32 %v1506, 16
        %v1670 = vrot.slane %v1668, 7
        %v1671 = vor.u32 %v1667, %v1670
        %v1672 = vsel %vm1529, %v1662, %v1671
        %v1674 = vshrl.u32 %v1507, 16
        %v1676 = vrot.slane %v1674, 6
        %v1677 = vshll.u32 %v1507, 16
        %v1679 = vrot.slane %v1677, 7
        %v1680 = vor.u32 %v1676, %v1679
        %v1681 = vsel %vm1529, %v1671, %v1680
        %v1683 = vshrl.u32 %v1508, 16
        %v1685 = vrot.slane %v1683, 6
        %v1686 = vshll.u32 %v1508, 16
        %v1688 = vrot.slane %v1686, 7
        %v1689 = vor.u32 %v1685, %v1688
        %v1690 = vsel %vm1529, %v1680, %v1689
        %v1692 = vshrl.u32 %v1509, 16
        %v1694 = vrot.slane %v1692, 6
        %v1695 = vshll.u32 %v1509, 16
        %v1697 = vrot.slane %v1695, 7
        %v1698 = vor.u32 %v1694, %v1697
        %v1699 = vsel %vm1529, %v1689, %v1698
        %v1701 = vshrl.u32 %v1510, 16
        %v1703 = vrot.slane %v1701, 6
        %v1704 = vshll.u32 %v1510, 16
        %v1706 = vrot.slane %v1704, 7
        %v1707 = vor.u32 %v1703, %v1706
        %v1708 = vsel %vm1529, %v1698, %v1707
        %v1710 = vshrl.u32 %v1511, 16
        %v1712 = vrot.slane %v1710, 6
        %v1713 = vshll.u32 %v1511, 16
        %v1715 = vrot.slane %v1713, 7
        %v1716 = vor.u32 %v1712, %v1715
        %v1717 = vsel %vm1529, %v1707, %v1716
        %v1719 = vshrl.u32 %v1512, 16
        %v1721 = vrot.slane %v1719, 6
        %v1722 = vshll.u32 %v1512, 16
        %v1724 = vrot.slane %v1722, 7
        %v1725 = vor.u32 %v1721, %v1724
        %v1726 = vsel %vm1529, %v1716, %v1725
        %v1764 = vunpack.c.l.b16 %v1513
        %v1765 = vunpack.c.l.b16 %v1514
        %v1766 = vunpack.c.l.b16 %v1515
        %v1767 = vunpack.c.l.b16 %v1516
        %v1768 = vunpack.c.l.b16 %v1517
        %v1769 = vunpack.c.l.b16 %v1518
        %v1770 = vunpack.c.l.b16 %v1519
        %v1771 = vunpack.c.l.b16 %v1520
        %v1772 = vunpack.c.l.b16 %v1521
        %v1773 = vunpack.c.l.b16 %v1522
        %v1774 = vunpack.c.l.b16 %v1523
        %v1775 = vunpack.c.l.b16 %v1524
        %v1776 = vunpack.c.l.b16 %v1525
        %v1777 = vunpack.c.l.b16 %v1526
        %v1778 = vunpack.c.l.b16 %v1527
        %v1779 = vunpack.c.l.b16 %v1528
        %v1780 = vpack.c.b16 %v1765, %v1764
        %v1781 = vpack.c.b16 %v1767, %v1766
        %v1782 = vpack.c.b16 %v1769, %v1768
        %v1783 = vpack.c.b16 %v1771, %v1770
        %v1784 = vpack.c.b16 %v1773, %v1772
        %v1785 = vpack.c.b16 %v1775, %v1774
        %v1786 = vpack.c.b16 %v1777, %v1776
        %v1787 = vpack.c.b16 %v1779, %v1778
        %1796 = vmatprep.subr.bf16.mxu0 0
        %1797 = vmatpush1.bf16.msra.mxu0 %v1780
        %1798 = vmatprep.subr.bf16.mxu0 0
        %1799 = vmatpush1.bf16.msra.mxu0 %v1781
        %1800 = vmatprep.subr.bf16.mxu0 0
        %1801 = vmatpush1.bf16.msra.mxu0 %v1782
        %1802 = vmatprep.subr.bf16.mxu0 0
        %1803 = vmatpush1.bf16.msra.mxu0 %v1783
        %1804 = vmatprep.subr.bf16.mxu0 0
        %1805 = vmatpush1.bf16.msra.mxu0 %v1784
        %1806 = vmatprep.subr.bf16.mxu0 0
        %1807 = vmatpush1.bf16.msra.mxu0 %v1785
        %1808 = vmatprep.subr.bf16.mxu0 0
        %1809 = vmatpush1.bf16.msra.mxu0 %v1786
        %1810 = vmatprep.subr.bf16.mxu0 0
        %1811 = vmatpush1.bf16.msra.mxu0 %v1787
        %1812 = vmatprep.subr.bf16.mxu0 0
        %1813 = vmatpush1.bf16.msra.mxu0 0
        %1814 = vmatprep.subr.bf16.mxu0 0
        %1815 = vmatpush1.bf16.msra.mxu0 0
        %1816 = vmatprep.subr.bf16.mxu0 0
        %1817 = vmatpush1.bf16.msra.mxu0 0
        %1818 = vmatprep.subr.bf16.mxu0 0
        %1819 = vmatpush1.bf16.msra.mxu0 0
        %1820 = vmatprep.subr.bf16.mxu0 0
        %1821 = vmatpush1.bf16.msra.mxu0 0
        %1822 = vmatprep.subr.bf16.mxu0 0
        %1823 = vmatpush1.bf16.msra.mxu0 0
        %1824 = vmatprep.subr.bf16.mxu0 0
        %1825 = vmatpush1.bf16.msra.mxu0 0
        %1826 = vmatprep.subr.bf16.mxu0 0
        %1827 = vmatpush1.bf16.msra.mxu0 0
        %1828 = vmatprep.mubr.bf16.mxu0 0
        %1829 = vmatmul.mubr.bf16.gmra.mrb[0].mxu0 %v1546
        %v1830 = vpop.f32.mrb[0].mxu0
        %v1831 = vadd.f32 0.0, %v1830
        %v1832 = vpop.f32.mrb[0].mxu0
        %v1833 = vpop.f32.mrb[0].mxu0
        %v1834 = vadd.f32 0.0, %v1833
        %v1835 = vpop.f32.mrb[0].mxu0
        %1836 = vmatprep.mubr.bf16.mxu0 0
        %1837 = vmatmul.mubr.bf16.gmra.mrb[0].mxu0 %v1555
        %v1838 = vpop.f32.mrb[0].mxu0
        %v1839 = vadd.f32 0.0, %v1838
        %v1840 = vpop.f32.mrb[0].mxu0
        %v1841 = vpop.f32.mrb[0].mxu0
        %v1842 = vadd.f32 0.0, %v1841
        %v1843 = vpop.f32.mrb[0].mxu0
        %1844 = vmatprep.mubr.bf16.mxu0 0
        %1845 = vmatmul.mubr.bf16.gmra.mrb[0].mxu0 %v1564
        %v1846 = vpop.f32.mrb[0].mxu0
        %v1847 = vadd.f32 0.0, %v1846
        %v1848 = vpop.f32.mrb[0].mxu0
        %v1849 = vpop.f32.mrb[0].mxu0
        %v1850 = vadd.f32 0.0, %v1849
        %v1851 = vpop.f32.mrb[0].mxu0
        %1852 = vmatprep.mubr.bf16.mxu0 0
        %1853 = vmatmul.mubr.bf16.gmra.mrb[0].mxu0 %v1573
        %v1854 = vpop.f32.mrb[0].mxu0
        %v1855 = vadd.f32 0.0, %v1854
        %v1856 = vpop.f32.mrb[0].mxu0
        %v1857 = vpop.f32.mrb[0].mxu0
        %v1858 = vadd.f32 0.0, %v1857
        %v1859 = vpop.f32.mrb[0].mxu0
        %1860 = vmatprep.mubr.bf16.mxu0 0
        %1861 = vmatmul.mubr.bf16.gmra.mrb[0].mxu0 %v1582
        %v1862 = vpop.f32.mrb[0].mxu0
        %v1863 = vadd.f32 0.0, %v1862
        %v1864 = vpop.f32.mrb[0].mxu0
        %v1865 = vpop.f32.mrb[0].mxu0
        %v1866 = vadd.f32 0.0, %v1865
        %v1867 = vpop.f32.mrb[0].mxu0
        %1868 = vmatprep.mubr.bf16.mxu0 0
        %1869 = vmatmul.mubr.bf16.gmra.mrb[0].mxu0 %v1591
        %v1870 = vpop.f32.mrb[0].mxu0
        %v1871 = vadd.f32 0.0, %v1870
        %v1872 = vpop.f32.mrb[0].mxu0
        %v1873 = vpop.f32.mrb[0].mxu0
        %v1874 = vadd.f32 0.0, %v1873
        %v1875 = vpop.f32.mrb[0].mxu0
        %1876 = vmatprep.mubr.bf16.mxu0 0
        %1877 = vmatmul.mubr.bf16.gmra.mrb[0].mxu0 %v1600
        %v1878 = vpop.f32.mrb[0].mxu0
        %v1879 = vadd.f32 0.0, %v1878
        %v1880 = vpop.f32.mrb[0].mxu0
        %v1881 = vpop.f32.mrb[0].mxu0
        %v1882 = vadd.f32 0.0, %v1881
        %v1883 = vpop.f32.mrb[0].mxu0
        %1884 = vmatprep.mubr.bf16.mxu0 0
        %1885 = vmatmul.mubr.bf16.gmra.mrb[0].mxu0 %v1609
        %v1886 = vpop.f32.mrb[0].mxu0
        %v1887 = vadd.f32 0.0, %v1886
        %v1888 = vpop.f32.mrb[0].mxu0
        %v1889 = vpop.f32.mrb[0].mxu0
        %v1890 = vadd.f32 0.0, %v1889
        %v1891 = vpop.f32.mrb[0].mxu0
        %1892 = vmatprep.mubr.bf16.mxu0 0
        %1893 = vmatmul.mubr.bf16.gmra.mrb[0].mxu0 %v1618
        %v1894 = vpop.f32.mrb[0].mxu0
        %v1895 = vadd.f32 0.0, %v1894
        %v1896 = vpop.f32.mrb[0].mxu0
        %v1897 = vpop.f32.mrb[0].mxu0
        %v1898 = vadd.f32 0.0, %v1897
        %v1899 = vpop.f32.mrb[0].mxu0
        %1900 = vmatprep.mubr.bf16.mxu0 0
        %1901 = vmatmul.mubr.bf16.gmra.mrb[0].mxu0 %v1627
        %v1902 = vpop.f32.mrb[0].mxu0
        %v1903 = vadd.f32 0.0, %v1902
        %v1904 = vpop.f32.mrb[0].mxu0
        %v1905 = vpop.f32.mrb[0].mxu0
        %v1906 = vadd.f32 0.0, %v1905
        %v1907 = vpop.f32.mrb[0].mxu0
        %1908 = vmatprep.mubr.bf16.mxu0 0
        %1909 = vmatmul.mubr.bf16.gmra.mrb[0].mxu0 %v1636
        %v1910 = vpop.f32.mrb[0].mxu0
        %v1911 = vadd.f32 0.0, %v1910
        %v1912 = vpop.f32.mrb[0].mxu0
        %v1913 = vpop.f32.mrb[0].mxu0
        %v1914 = vadd.f32 0.0, %v1913
        %v1915 = vpop.f32.mrb[0].mxu0
        %1916 = vmatprep.mubr.bf16.mxu0 0
        %1917 = vmatmul.mubr.bf16.gmra.mrb[0].mxu0 %v1645
        %v1918 = vpop.f32.mrb[0].mxu0
        %v1919 = vadd.f32 0.0, %v1918
        %v1920 = vpop.f32.mrb[0].mxu0
        %v1921 = vpop.f32.mrb[0].mxu0
        %v1922 = vadd.f32 0.0, %v1921
        %v1923 = vpop.f32.mrb[0].mxu0
        %1924 = vmatprep.mubr.bf16.mxu0 0
        %1925 = vmatmul.mubr.bf16.gmra.mrb[0].mxu0 %v1654
        %v1926 = vpop.f32.mrb[0].mxu0
        %v1927 = vadd.f32 0.0, %v1926
        %v1928 = vpop.f32.mrb[0].mxu0
        %v1929 = vpop.f32.mrb[0].mxu0
        %v1930 = vadd.f32 0.0, %v1929
        %v1931 = vpop.f32.mrb[0].mxu0
        %1932 = vmatprep.mubr.bf16.mxu0 0
        %1933 = vmatmul.mubr.bf16.gmra.mrb[0].mxu0 %v1663
        %v1934 = vpop.f32.mrb[0].mxu0
        %v1935 = vadd.f32 0.0, %v1934
        %v1936 = vpop.f32.mrb[0].mxu0
        %v1937 = vpop.f32.mrb[0].mxu0
        %v1938 = vadd.f32 0.0, %v1937
        %v1939 = vpop.f32.mrb[0].mxu0
        %1940 = vmatprep.mubr.bf16.mxu0 0
        %1941 = vmatmul.mubr.bf16.gmra.mrb[0].mxu0 %v1672
        %v1942 = vpop.f32.mrb[0].mxu0
        %v1943 = vadd.f32 0.0, %v1942
        %v1944 = vpop.f32.mrb[0].mxu0
        %v1945 = vpop.f32.mrb[0].mxu0
        %v1946 = vadd.f32 0.0, %v1945
        %v1947 = vpop.f32.mrb[0].mxu0
        %1948 = vmatprep.mubr.bf16.mxu0 0
        %1949 = vmatmul.mubr.bf16.gmra.mrb[0].mxu0 %v1681
        %v1950 = vpop.f32.mrb[0].mxu0
        %v1951 = vadd.f32 0.0, %v1950
        %v1952 = vpop.f32.mrb[0].mxu0
        %v1953 = vpop.f32.mrb[0].mxu0
        %v1954 = vadd.f32 0.0, %v1953
        %v1955 = vpop.f32.mrb[0].mxu0
        %1956 = vmatprep.mubr.bf16.mxu0 0
        %1957 = vmatmul.mubr.bf16.gmra.mrb[0].mxu0 %v1690
        %v1958 = vpop.f32.mrb[0].mxu0
        %v1959 = vadd.f32 0.0, %v1958
        %v1960 = vpop.f32.mrb[0].mxu0
        %v1961 = vpop.f32.mrb[0].mxu0
        %v1962 = vadd.f32 0.0, %v1961
        %v1963 = vpop.f32.mrb[0].mxu0
        %1964 = vmatprep.mubr.bf16.mxu0 0
        %1965 = vmatmul.mubr.bf16.gmra.mrb[0].mxu0 %v1699
        %v1966 = vpop.f32.mrb[0].mxu0
        %v1967 = vadd.f32 0.0, %v1966
        %v1968 = vpop.f32.mrb[0].mxu0
        %v1969 = vpop.f32.mrb[0].mxu0
        %v1970 = vadd.f32 0.0, %v1969
        %v1971 = vpop.f32.mrb[0].mxu0
        %1972 = vmatprep.mubr.bf16.mxu0 0
        %1973 = vmatmul.mubr.bf16.gmra.mrb[0].mxu0 %v1708
        %v1974 = vpop.f32.mrb[0].mxu0
        %v1975 = vadd.f32 0.0, %v1974
        %v1976 = vpop.f32.mrb[0].mxu0
        %v1977 = vpop.f32.mrb[0].mxu0
        %v1978 = vadd.f32 0.0, %v1977
        %v1979 = vpop.f32.mrb[0].mxu0
        %1980 = vmatprep.mubr.bf16.mxu0 0
        %1981 = vmatmul.mubr.bf16.gmra.mrb[0].mxu0 %v1717
        %v1982 = vpop.f32.mrb[0].mxu0
        %v1983 = vadd.f32 0.0, %v1982
        %v1984 = vpop.f32.mrb[0].mxu0
        %v1985 = vpop.f32.mrb[0].mxu0
        %v1986 = vadd.f32 0.0, %v1985
        %v1987 = vpop.f32.mrb[0].mxu0
        %1988 = vmatprep.mubr.bf16.mxu0 0
        %1989 = vmatmul.mubr.bf16.gmra.mrb[0].mxu0 %v1726
        %v1990 = vpop.f32.mrb[0].mxu0
        %v1991 = vadd.f32 0.0, %v1990
        %v1992 = vpop.f32.mrb[0].mxu0
        %v1993 = vpop.f32.mrb[0].mxu0
        %v1994 = vadd.f32 0.0, %v1993
        %v1995 = vpop.f32.mrb[0].mxu0
        %1996 = vdwg.mxu0
        %1997 = vst [vmem:[#allocation3] sm:$0xff] %v1831
        %1998 = vst [vmem:[#allocation3 + $0x8] sm:$0xff] %v1834
        %1999 = vst [vmem:[#allocation3 + $0x10] sm:$0xff] %v1839
        %2000 = vst [vmem:[#allocation3 + $0x18] sm:$0xff] %v1842
        %2001 = vst [vmem:[#allocation3 + $0x20] sm:$0xff] %v1847
        %2002 = vst [vmem:[#allocation3 + $0x28] sm:$0xff] %v1850
        %2003 = vst [vmem:[#allocation3 + $0x30] sm:$0xff] %v1855
        %2004 = vst [vmem:[#allocation3 + $0x38] sm:$0xff] %v1858
        %2005 = vst [vmem:[#allocation3 + $0x40] sm:$0xff] %v1863
        %2006 = vst [vmem:[#allocation3 + $0x48] sm:$0xff] %v1866
        %2007 = vst [vmem:[#allocation3 + $0x50] sm:$0xff] %v1871
        %2008 = vst [vmem:[#allocation3 + $0x58] sm:$0xff] %v1874
        %2009 = vst [vmem:[#allocation3 + $0x60] sm:$0xff] %v1879
        %2010 = vst [vmem:[#allocation3 + $0x68] sm:$0xff] %v1882
        %2011 = vst [vmem:[#allocation3 + $0x70] sm:$0xff] %v1887
        %2012 = vst [vmem:[#allocation3 + $0x78] sm:$0xff] %v1890
        %2013 = vst [vmem:[#allocation3 + $0x80] sm:$0xff] %v1895
        %2014 = vst [vmem:[#allocation3 + $0x88] sm:$0xff] %v1898
        %2015 = vst [vmem:[#allocation3 + $0x90] sm:$0xff] %v1903
        %2016 = vst [vmem:[#allocation3 + $0x98] sm:$0xff] %v1906
        %2017 = vst [vmem:[#allocation3 + $0xa0] sm:$0xff] %v1911
        %2018 = vst [vmem:[#allocation3 + $0xa8] sm:$0xff] %v1914
        %2019 = vst [vmem:[#allocation3 + $0xb0] sm:$0xff] %v1919
        %2020 = vst [vmem:[#allocation3 + $0xb8] sm:$0xff] %v1922
        %2021 = vst [vmem:[#allocation3 + $0xc0] sm:$0xff] %v1927
        %2022 = vst [vmem:[#allocation3 + $0xc8] sm:$0xff] %v1930
        %2023 = vst [vmem:[#allocation3 + $0xd0] sm:$0xff] %v1935
        %2024 = vst [vmem:[#allocation3 + $0xd8] sm:$0xff] %v1938
        %2025 = vst [vmem:[#allocation3 + $0xe0] sm:$0xff] %v1943
        %2026 = vst [vmem:[#allocation3 + $0xe8] sm:$0xff] %v1946
        %2027 = vst [vmem:[#allocation3 + $0xf0] sm:$0xff] %v1951
        %2028 = vst [vmem:[#allocation3 + $0xf8] sm:$0xff] %v1954
        %2029 = vst [vmem:[#allocation3 + $0x100] sm:$0xff] %v1959
        %2030 = vst [vmem:[#allocation3 + $0x108] sm:$0xff] %v1962
        %2031 = vst [vmem:[#allocation3 + $0x110] sm:$0xff] %v1967
        %2032 = vst [vmem:[#allocation3 + $0x118] sm:$0xff] %v1970
        %2033 = vst [vmem:[#allocation3 + $0x120] sm:$0xff] %v1975
        %2034 = vst [vmem:[#allocation3 + $0x128] sm:$0xff] %v1978
        %2035 = vst [vmem:[#allocation3 + $0x130] sm:$0xff] %v1983
        %2036 = vst [vmem:[#allocation3 + $0x138] sm:$0xff] %v1986
        %2037 = vst [vmem:[#allocation3 + $0x140] sm:$0xff] %v1991
        %2038 = vst [vmem:[#allocation3 + $0x148] sm:$0xff] %v1994
        %v2039 = vld [vmem:[#allocation2] sm:$0x80]
        %v2040 = vld [vmem:[#allocation2 + $0x8] sm:$0xff]
        %v2041 = vld [vmem:[#allocation2 + $0x10] sm:$0xff]
        %v2042 = vld [vmem:[#allocation2 + $0x18] sm:$0xff]
        %v2043 = vld [vmem:[#allocation2 + $0x20] sm:$0xff]
        %v2044 = vld [vmem:[#allocation2 + $0x28] sm:$0xff]
        %v2045 = vld [vmem:[#allocation2 + $0x30] sm:$0xff]
        %v2046 = vld [vmem:[#allocation2 + $0x38] sm:$0xff]
        %v2047 = vld [vmem:[#allocation2 + $0x40] sm:$0xff]
        %v2048 = vld [vmem:[#allocation2 + $0x48] sm:$0xff]
        %v2049 = vld [vmem:[#allocation2 + $0x50] sm:$0xff]
        %v2050 = vld [vmem:[#allocation2 + $0x58] sm:$0xff]
        %v2051 = vld [vmem:[#allocation2 + $0x60] sm:$0xff]
        %v2052 = vld [vmem:[#allocation2 + $0x68] sm:$0xff]
        %v2053 = vld [vmem:[#allocation2 + $0x70] sm:$0xff]
        %v2054 = vld [vmem:[#allocation2 + $0x78] sm:$0xff]
        %v2055 = vld [vmem:[#allocation2 + $0x80] sm:$0xff]
        %v2056 = vld [vmem:[#allocation2 + $0x88] sm:$0xff]
        %v2057 = vld [vmem:[#allocation2 + $0x90] sm:$0xff]
        %v2058 = vld [vmem:[#allocation2 + $0x98] sm:$0xff]
        %v2059 = vld [vmem:[#allocation2 + $0xa0] sm:$0xff]
        %v2060 = vld [vmem:[#allocation2 + $0xa8] sm:$0x7f]
        %v2061 = vld [vmem:[#allocation9 + $0x40] sm:$0xf]
        %v2062 = vld [vmem:[#allocation9 + $0x44] sm:$0xf]
        %v2063 = vld [vmem:[#allocation9 + $0x48] sm:$0xf]
        %v2064 = vld [vmem:[#allocation9 + $0x4c] sm:$0xf]
        %v2065 = vld [vmem:[#allocation9 + $0x50] sm:$0xf]
        %v2066 = vld [vmem:[#allocation9 + $0x54] sm:$0xf]
        %v2067 = vld [vmem:[#allocation9 + $0x58] sm:$0xf]
        %v2068 = vld [vmem:[#allocation9 + $0x5c] sm:$0xf]
        %v2069 = vld [vmem:[#allocation9 + $0x60] sm:$0xf]
        %v2070 = vld [vmem:[#allocation9 + $0x64] sm:$0xf]
        %v2071 = vld [vmem:[#allocation9 + $0x68] sm:$0xf]
        %v2072 = vld [vmem:[#allocation9 + $0x6c] sm:$0xf]
        %v2073 = vld [vmem:[#allocation9 + $0x70] sm:$0xf]
        %v2074 = vld [vmem:[#allocation9 + $0x74] sm:$0xf]
        %v2075 = vld [vmem:[#allocation9 + $0x78] sm:$0xf]
        %v2076 = vld [vmem:[#allocation9 + $0x7c] sm:$0xf]
        %vm2099 = vcmask 1040384
        %v2100 = vrot.slane %v2039, 7
        %v2101 = vrot.slane %v2040, 7
        %v2102 = vsel %vm2099, %v2100, %v2101
        %v2103 = vrot.slane %v2041, 7
        %v2104 = vsel %vm2099, %v2101, %v2103
        %v2105 = vrot.slane %v2042, 7
        %v2106 = vsel %vm2099, %v2103, %v2105
        %v2107 = vrot.slane %v2043, 7
        %v2108 = vsel %vm2099, %v2105, %v2107
        %v2109 = vrot.slane %v2044, 7
        %v2110 = vsel %vm2099, %v2107, %v2109
        %v2111 = vrot.slane %v2045, 7
        %v2112 = vsel %vm2099, %v2109, %v2111
        %v2113 = vrot.slane %v2046, 7
        %v2114 = vsel %vm2099, %v2111, %v2113
        %v2115 = vrot.slane %v2047, 7
        %v2116 = vsel %vm2099, %v2113, %v2115
        %v2117 = vrot.slane %v2048, 7
        %v2118 = vsel %vm2099, %v2115, %v2117
        %v2119 = vrot.slane %v2049, 7
        %v2120 = vsel %vm2099, %v2117, %v2119
        %v2121 = vrot.slane %v2050, 7
        %v2122 = vsel %vm2099, %v2119, %v2121
        %v2123 = vrot.slane %v2051, 7
        %v2124 = vsel %vm2099, %v2121, %v2123
        %v2125 = vrot.slane %v2052, 7
        %v2126 = vsel %vm2099, %v2123, %v2125
        %v2127 = vrot.slane %v2053, 7
        %v2128 = vsel %vm2099, %v2125, %v2127
        %v2129 = vrot.slane %v2054, 7
        %v2130 = vsel %vm2099, %v2127, %v2129
        %v2131 = vrot.slane %v2055, 7
        %v2132 = vsel %vm2099, %v2129, %v2131
        %v2133 = vrot.slane %v2056, 7
        %v2134 = vsel %vm2099, %v2131, %v2133
        %v2135 = vrot.slane %v2057, 7
        %v2136 = vsel %vm2099, %v2133, %v2135
        %v2137 = vrot.slane %v2058, 7
        %v2138 = vsel %vm2099, %v2135, %v2137
        %v2139 = vrot.slane %v2059, 7
        %v2140 = vsel %vm2099, %v2137, %v2139
        %v2141 = vrot.slane %v2060, 7
        %v2142 = vsel %vm2099, %v2139, %v2141
        %v2180 = vunpack.c.l.b16 %v2061
        %v2181 = vunpack.c.l.b16 %v2062
        %v2182 = vunpack.c.l.b16 %v2063
        %v2183 = vunpack.c.l.b16 %v2064
        %v2184 = vunpack.c.l.b16 %v2065
        %v2185 = vunpack.c.l.b16 %v2066
        %v2186 = vunpack.c.l.b16 %v2067
        %v2187 = vunpack.c.l.b16 %v2068
        %v2188 = vunpack.c.l.b16 %v2069
        %v2189 = vunpack.c.l.b16 %v2070
        %v2190 = vunpack.c.l.b16 %v2071
        %v2191 = vunpack.c.l.b16 %v2072
        %v2192 = vunpack.c.l.b16 %v2073
        %v2193 = vunpack.c.l.b16 %v2074
        %v2194 = vunpack.c.l.b16 %v2075
        %v2195 = vunpack.c.l.b16 %v2076
        %v2196 = vpack.c.b16 %v2181, %v2180
        %v2197 = vpack.c.b16 %v2183, %v2182
        %v2198 = vpack.c.b16 %v2185, %v2184
        %v2199 = vpack.c.b16 %v2187, %v2186
        %v2200 = vpack.c.b16 %v2189, %v2188
        %v2201 = vpack.c.b16 %v2191, %v2190
        %v2202 = vpack.c.b16 %v2193, %v2192
        %v2203 = vpack.c.b16 %v2195, %v2194
        %2212 = vmatprep.subr.bf16.mxu0 0
        %2213 = vmatpush1.bf16.msra.mxu0 %v2196
        %2214 = vmatprep.subr.bf16.mxu0 0
        %2215 = vmatpush1.bf16.msra.mxu0 %v2197
        %2216 = vmatprep.subr.bf16.mxu0 0
        %2217 = vmatpush1.bf16.msra.mxu0 %v2198
        %2218 = vmatprep.subr.bf16.mxu0 0
        %2219 = vmatpush1.bf16.msra.mxu0 %v2199
        %2220 = vmatprep.subr.bf16.mxu0 0
        %2221 = vmatpush1.bf16.msra.mxu0 %v2200
        %2222 = vmatprep.subr.bf16.mxu0 0
        %2223 = vmatpush1.bf16.msra.mxu0 %v2201
        %2224 = vmatprep.subr.bf16.mxu0 0
        %2225 = vmatpush1.bf16.msra.mxu0 %v2202
        %2226 = vmatprep.subr.bf16.mxu0 0
        %2227 = vmatpush1.bf16.msra.mxu0 %v2203
        %2228 = vmatprep.subr.bf16.mxu0 0
        %2229 = vmatpush1.bf16.msra.mxu0 0
        %2230 = vmatprep.subr.bf16.mxu0 0
        %2231 = vmatpush1.bf16.msra.mxu0 0
        %2232 = vmatprep.subr.bf16.mxu0 0
        %2233 = vmatpush1.bf16.msra.mxu0 0
        %2234 = vmatprep.subr.bf16.mxu0 0
        %2235 = vmatpush1.bf16.msra.mxu0 0
        %2236 = vmatprep.subr.bf16.mxu0 0
        %2237 = vmatpush1.bf16.msra.mxu0 0
        %2238 = vmatprep.subr.bf16.mxu0 0
        %2239 = vmatpush1.bf16.msra.mxu0 0
        %2240 = vmatprep.subr.bf16.mxu0 0
        %2241 = vmatpush1.bf16.msra.mxu0 0
        %2242 = vmatprep.subr.bf16.mxu0 0
        %2243 = vmatpush1.bf16.msra.mxu0 0
        %2244 = vmatprep.mubr.bf16.mxu0 0
        %2245 = vmatmul.mubr.bf16.gmra.mrb[0].mxu0 %v2102
        %v2246 = vpop.f32.mrb[0].mxu0
        %v2247 = vadd.f32 0.0, %v2246
        %v2248 = vpop.f32.mrb[0].mxu0
        %v2249 = vpop.f32.mrb[0].mxu0
        %v2250 = vadd.f32 0.0, %v2249
        %v2251 = vpop.f32.mrb[0].mxu0
        %2252 = vmatprep.mubr.bf16.mxu0 0
        %2253 = vmatmul.mubr.bf16.gmra.mrb[0].mxu0 %v2104
        %v2254 = vpop.f32.mrb[0].mxu0
        %v2255 = vadd.f32 0.0, %v2254
        %v2256 = vpop.f32.mrb[0].mxu0
        %v2257 = vpop.f32.mrb[0].mxu0
        %v2258 = vadd.f32 0.0, %v2257
        %v2259 = vpop.f32.mrb[0].mxu0
        %2260 = vmatprep.mubr.bf16.mxu0 0
        %2261 = vmatmul.mubr.bf16.gmra.mrb[0].mxu0 %v2106
        %v2262 = vpop.f32.mrb[0].mxu0
        %v2263 = vadd.f32 0.0, %v2262
        %v2264 = vpop.f32.mrb[0].mxu0
        %v2265 = vpop.f32.mrb[0].mxu0
        %v2266 = vadd.f32 0.0, %v2265
        %v2267 = vpop.f32.mrb[0].mxu0
        %2268 = vmatprep.mubr.bf16.mxu0 0
        %2269 = vmatmul.mubr.bf16.gmra.mrb[0].mxu0 %v2108
        %v2270 = vpop.f32.mrb[0].mxu0
        %v2271 = vadd.f32 0.0, %v2270
        %v2272 = vpop.f32.mrb[0].mxu0
        %v2273 = vpop.f32.mrb[0].mxu0
        %v2274 = vadd.f32 0.0, %v2273
        %v2275 = vpop.f32.mrb[0].mxu0
        %2276 = vmatprep.mubr.bf16.mxu0 0
        %2277 = vmatmul.mubr.bf16.gmra.mrb[0].mxu0 %v2110
        %v2278 = vpop.f32.mrb[0].mxu0
        %v2279 = vadd.f32 0.0, %v2278
        %v2280 = vpop.f32.mrb[0].mxu0
        %v2281 = vpop.f32.mrb[0].mxu0
        %v2282 = vadd.f32 0.0, %v2281
        %v2283 = vpop.f32.mrb[0].mxu0
        %2284 = vmatprep.mubr.bf16.mxu0 0
        %2285 = vmatmul.mubr.bf16.gmra.mrb[0].mxu0 %v2112
        %v2286 = vpop.f32.mrb[0].mxu0
        %v2287 = vadd.f32 0.0, %v2286
        %v2288 = vpop.f32.mrb[0].mxu0
        %v2289 = vpop.f32.mrb[0].mxu0
        %v2290 = vadd.f32 0.0, %v2289
        %v2291 = vpop.f32.mrb[0].mxu0
        %2292 = vmatprep.mubr.bf16.mxu0 0
        %2293 = vmatmul.mubr.bf16.gmra.mrb[0].mxu0 %v2114
        %v2294 = vpop.f32.mrb[0].mxu0
        %v2295 = vadd.f32 0.0, %v2294
        %v2296 = vpop.f32.mrb[0].mxu0
        %v2297 = vpop.f32.mrb[0].mxu0
        %v2298 = vadd.f32 0.0, %v2297
        %v2299 = vpop.f32.mrb[0].mxu0
        %2300 = vmatprep.mubr.bf16.mxu0 0
        %2301 = vmatmul.mubr.bf16.gmra.mrb[0].mxu0 %v2116
        %v2302 = vpop.f32.mrb[0].mxu0
        %v2303 = vadd.f32 0.0, %v2302
        %v2304 = vpop.f32.mrb[0].mxu0
        %v2305 = vpop.f32.mrb[0].mxu0
        %v2306 = vadd.f32 0.0, %v2305
        %v2307 = vpop.f32.mrb[0].mxu0
        %2308 = vmatprep.mubr.bf16.mxu0 0
        %2309 = vmatmul.mubr.bf16.gmra.mrb[0].mxu0 %v2118
        %v2310 = vpop.f32.mrb[0].mxu0
        %v2311 = vadd.f32 0.0, %v2310
        %v2312 = vpop.f32.mrb[0].mxu0
        %v2313 = vpop.f32.mrb[0].mxu0
        %v2314 = vadd.f32 0.0, %v2313
        %v2315 = vpop.f32.mrb[0].mxu0
        %2316 = vmatprep.mubr.bf16.mxu0 0
        %2317 = vmatmul.mubr.bf16.gmra.mrb[0].mxu0 %v2120
        %v2318 = vpop.f32.mrb[0].mxu0
        %v2319 = vadd.f32 0.0, %v2318
        %v2320 = vpop.f32.mrb[0].mxu0
        %v2321 = vpop.f32.mrb[0].mxu0
        %v2322 = vadd.f32 0.0, %v2321
        %v2323 = vpop.f32.mrb[0].mxu0
        %2324 = vmatprep.mubr.bf16.mxu0 0
        %2325 = vmatmul.mubr.bf16.gmra.mrb[0].mxu0 %v2122
        %v2326 = vpop.f32.mrb[0].mxu0
        %v2327 = vadd.f32 0.0, %v2326
        %v2328 = vpop.f32.mrb[0].mxu0
        %v2329 = vpop.f32.mrb[0].mxu0
        %v2330 = vadd.f32 0.0, %v2329
        %v2331 = vpop.f32.mrb[0].mxu0
        %2332 = vmatprep.mubr.bf16.mxu0 0
        %2333 = vmatmul.mubr.bf16.gmra.mrb[0].mxu0 %v2124
        %v2334 = vpop.f32.mrb[0].mxu0
        %v2335 = vadd.f32 0.0, %v2334
        %v2336 = vpop.f32.mrb[0].mxu0
        %v2337 = vpop.f32.mrb[0].mxu0
        %v2338 = vadd.f32 0.0, %v2337
        %v2339 = vpop.f32.mrb[0].mxu0
        %2340 = vmatprep.mubr.bf16.mxu0 0
        %2341 = vmatmul.mubr.bf16.gmra.mrb[0].mxu0 %v2126
        %v2342 = vpop.f32.mrb[0].mxu0
        %v2343 = vadd.f32 0.0, %v2342
        %v2344 = vpop.f32.mrb[0].mxu0
        %v2345 = vpop.f32.mrb[0].mxu0
        %v2346 = vadd.f32 0.0, %v2345
        %v2347 = vpop.f32.mrb[0].mxu0
        %2348 = vmatprep.mubr.bf16.mxu0 0
        %2349 = vmatmul.mubr.bf16.gmra.mrb[0].mxu0 %v2128
        %v2350 = vpop.f32.mrb[0].mxu0
        %v2351 = vadd.f32 0.0, %v2350
        %v2352 = vpop.f32.mrb[0].mxu0
        %v2353 = vpop.f32.mrb[0].mxu0
        %v2354 = vadd.f32 0.0, %v2353
        %v2355 = vpop.f32.mrb[0].mxu0
        %2356 = vmatprep.mubr.bf16.mxu0 0
        %2357 = vmatmul.mubr.bf16.gmra.mrb[0].mxu0 %v2130
        %v2358 = vpop.f32.mrb[0].mxu0
        %v2359 = vadd.f32 0.0, %v2358
        %v2360 = vpop.f32.mrb[0].mxu0
        %v2361 = vpop.f32.mrb[0].mxu0
        %v2362 = vadd.f32 0.0, %v2361
        %v2363 = vpop.f32.mrb[0].mxu0
        %2364 = vmatprep.mubr.bf16.mxu0 0
        %2365 = vmatmul.mubr.bf16.gmra.mrb[0].mxu0 %v2132
        %v2366 = vpop.f32.mrb[0].mxu0
        %v2367 = vadd.f32 0.0, %v2366
        %v2368 = vpop.f32.mrb[0].mxu0
        %v2369 = vpop.f32.mrb[0].mxu0
        %v2370 = vadd.f32 0.0, %v2369
        %v2371 = vpop.f32.mrb[0].mxu0
        %2372 = vmatprep.mubr.bf16.mxu0 0
        %2373 = vmatmul.mubr.bf16.gmra.mrb[0].mxu0 %v2134
        %v2374 = vpop.f32.mrb[0].mxu0
        %v2375 = vadd.f32 0.0, %v2374
        %v2376 = vpop.f32.mrb[0].mxu0
        %v2377 = vpop.f32.mrb[0].mxu0
        %v2378 = vadd.f32 0.0, %v2377
        %v2379 = vpop.f32.mrb[0].mxu0
        %2380 = vmatprep.mubr.bf16.mxu0 0
        %2381 = vmatmul.mubr.bf16.gmra.mrb[0].mxu0 %v2136
        %v2382 = vpop.f32.mrb[0].mxu0
        %v2383 = vadd.f32 0.0, %v2382
        %v2384 = vpop.f32.mrb[0].mxu0
        %v2385 = vpop.f32.mrb[0].mxu0
        %v2386 = vadd.f32 0.0, %v2385
        %v2387 = vpop.f32.mrb[0].mxu0
        %2388 = vmatprep.mubr.bf16.mxu0 0
        %2389 = vmatmul.mubr.bf16.gmra.mrb[0].mxu0 %v2138
        %v2390 = vpop.f32.mrb[0].mxu0
        %v2391 = vadd.f32 0.0, %v2390
        %v2392 = vpop.f32.mrb[0].mxu0
        %v2393 = vpop.f32.mrb[0].mxu0
        %v2394 = vadd.f32 0.0, %v2393
        %v2395 = vpop.f32.mrb[0].mxu0
        %2396 = vmatprep.mubr.bf16.mxu0 0
        %2397 = vmatmul.mubr.bf16.gmra.mrb[0].mxu0 %v2140
        %v2398 = vpop.f32.mrb[0].mxu0
        %v2399 = vadd.f32 0.0, %v2398
        %v2400 = vpop.f32.mrb[0].mxu0
        %v2401 = vpop.f32.mrb[0].mxu0
        %v2402 = vadd.f32 0.0, %v2401
        %v2403 = vpop.f32.mrb[0].mxu0
        %2404 = vmatprep.mubr.bf16.mxu0 0
        %2405 = vmatmul.mubr.bf16.gmra.mrb[0].mxu0 %v2142
        %v2406 = vpop.f32.mrb[0].mxu0
        %v2407 = vadd.f32 0.0, %v2406
        %v2408 = vpop.f32.mrb[0].mxu0
        %v2409 = vpop.f32.mrb[0].mxu0
        %v2410 = vadd.f32 0.0, %v2409
        %v2411 = vpop.f32.mrb[0].mxu0
        %2412 = vdwg.mxu0
        %v2413 = vld [vmem:[#allocation3] sm:$0xff]
        %v2414 = vld [vmem:[#allocation3 + $0x8] sm:$0xff]
        %v2415 = vld [vmem:[#allocation3 + $0x10] sm:$0xff]
        %v2416 = vld [vmem:[#allocation3 + $0x18] sm:$0xff]
        %v2417 = vld [vmem:[#allocation3 + $0x20] sm:$0xff]
        %v2418 = vld [vmem:[#allocation3 + $0x28] sm:$0xff]
        %v2419 = vld [vmem:[#allocation3 + $0x30] sm:$0xff]
        %v2420 = vld [vmem:[#allocation3 + $0x38] sm:$0xff]
        %v2421 = vld [vmem:[#allocation3 + $0x40] sm:$0xff]
        %v2422 = vld [vmem:[#allocation3 + $0x48] sm:$0xff]
        %v2423 = vld [vmem:[#allocation3 + $0x50] sm:$0xff]
        %v2424 = vld [vmem:[#allocation3 + $0x58] sm:$0xff]
        %v2425 = vld [vmem:[#allocation3 + $0x60] sm:$0xff]
        %v2426 = vld [vmem:[#allocation3 + $0x68] sm:$0xff]
        %v2427 = vld [vmem:[#allocation3 + $0x70] sm:$0xff]
        %v2428 = vld [vmem:[#allocation3 + $0x78] sm:$0xff]
        %v2429 = vld [vmem:[#allocation3 + $0x80] sm:$0xff]
        %v2430 = vld [vmem:[#allocation3 + $0x88] sm:$0xff]
        %v2431 = vld [vmem:[#allocation3 + $0x90] sm:$0xff]
        %v2432 = vld [vmem:[#allocation3 + $0x98] sm:$0xff]
        %v2433 = vld [vmem:[#allocation3 + $0xa0] sm:$0xff]
        %v2434 = vld [vmem:[#allocation3 + $0xa8] sm:$0xff]
        %v2435 = vld [vmem:[#allocation3 + $0xb0] sm:$0xff]
        %v2436 = vld [vmem:[#allocation3 + $0xb8] sm:$0xff]
        %v2437 = vld [vmem:[#allocation3 + $0xc0] sm:$0xff]
        %v2438 = vld [vmem:[#allocation3 + $0xc8] sm:$0xff]
        %v2439 = vld [vmem:[#allocation3 + $0xd0] sm:$0xff]
        %v2440 = vld [vmem:[#allocation3 + $0xd8] sm:$0xff]
        %v2441 = vld [vmem:[#allocation3 + $0xe0] sm:$0xff]
        %v2442 = vld [vmem:[#allocation3 + $0xe8] sm:$0xff]
        %v2443 = vld [vmem:[#allocation3 + $0xf0] sm:$0xff]
        %v2444 = vld [vmem:[#allocation3 + $0xf8] sm:$0xff]
        %v2445 = vld [vmem:[#allocation3 + $0x100] sm:$0xff]
        %v2446 = vld [vmem:[#allocation3 + $0x108] sm:$0xff]
        %v2447 = vld [vmem:[#allocation3 + $0x110] sm:$0xff]
        %v2448 = vld [vmem:[#allocation3 + $0x118] sm:$0xff]
        %v2449 = vld [vmem:[#allocation3 + $0x120] sm:$0xff]
        %v2450 = vld [vmem:[#allocation3 + $0x128] sm:$0xff]
        %v2451 = vld [vmem:[#allocation3 + $0x130] sm:$0xff]
        %v2452 = vld [vmem:[#allocation3 + $0x138] sm:$0xff]
        %v2453 = vld [vmem:[#allocation3 + $0x140] sm:$0xff]
        %v2454 = vld [vmem:[#allocation3 + $0x148] sm:$0xff]
        %v2455 = vadd.f32 %v2413, %v2247
        %v2456 = vadd.f32 %v2414, %v2250
        %v2457 = vadd.f32 %v2415, %v2255
        %v2458 = vadd.f32 %v2416, %v2258
        %v2459 = vadd.f32 %v2417, %v2263
        %v2460 = vadd.f32 %v2418, %v2266
        %v2461 = vadd.f32 %v2419, %v2271
        %v2462 = vadd.f32 %v2420, %v2274
        %v2463 = vadd.f32 %v2421, %v2279
        %v2464 = vadd.f32 %v2422, %v2282
        %v2465 = vadd.f32 %v2423, %v2287
        %v2466 = vadd.f32 %v2424, %v2290
        %v2467 = vadd.f32 %v2425, %v2295
        %v2468 = vadd.f32 %v2426, %v2298
        %v2469 = vadd.f32 %v2427, %v2303
        %v2470 = vadd.f32 %v2428, %v2306
        %v2471 = vadd.f32 %v2429, %v2311
        %v2472 = vadd.f32 %v2430, %v2314
        %v2473 = vadd.f32 %v2431, %v2319
        %v2474 = vadd.f32 %v2432, %v2322
        %v2475 = vadd.f32 %v2433, %v2327
        %v2476 = vadd.f32 %v2434, %v2330
        %v2477 = vadd.f32 %v2435, %v2335
        %v2478 = vadd.f32 %v2436, %v2338
        %v2479 = vadd.f32 %v2437, %v2343
        %v2480 = vadd.f32 %v2438, %v2346
        %v2481 = vadd.f32 %v2439, %v2351
        %v2482 = vadd.f32 %v2440, %v2354
        %v2483 = vadd.f32 %v2441, %v2359
        %v2484 = vadd.f32 %v2442, %v2362
        %v2485 = vadd.f32 %v2443, %v2367
        %v2486 = vadd.f32 %v2444, %v2370
        %v2487 = vadd.f32 %v2445, %v2375
        %v2488 = vadd.f32 %v2446, %v2378
        %v2489 = vadd.f32 %v2447, %v2383
        %v2490 = vadd.f32 %v2448, %v2386
        %v2491 = vadd.f32 %v2449, %v2391
        %v2492 = vadd.f32 %v2450, %v2394
        %v2493 = vadd.f32 %v2451, %v2399
        %v2494 = vadd.f32 %v2452, %v2402
        %v2495 = vadd.f32 %v2453, %v2407
        %v2496 = vadd.f32 %v2454, %v2410
        %2497 = vst [vmem:[#allocation3] sm:$0xff] %v2455
        %2498 = vst [vmem:[#allocation3 + $0x8] sm:$0xff] %v2456
        %2499 = vst [vmem:[#allocation3 + $0x10] sm:$0xff] %v2457
        %2500 = vst [vmem:[#allocation3 + $0x18] sm:$0xff] %v2458
        %2501 = vst [vmem:[#allocation3 + $0x20] sm:$0xff] %v2459
        %2502 = vst [vmem:[#allocation3 + $0x28] sm:$0xff] %v2460
        %2503 = vst [vmem:[#allocation3 + $0x30] sm:$0xff] %v2461
        %2504 = vst [vmem:[#allocation3 + $0x38] sm:$0xff] %v2462
        %2505 = vst [vmem:[#allocation3 + $0x40] sm:$0xff] %v2463
        %2506 = vst [vmem:[#allocation3 + $0x48] sm:$0xff] %v2464
        %2507 = vst [vmem:[#allocation3 + $0x50] sm:$0xff] %v2465
        %2508 = vst [vmem:[#allocation3 + $0x58] sm:$0xff] %v2466
        %2509 = vst [vmem:[#allocation3 + $0x60] sm:$0xff] %v2467
        %2510 = vst [vmem:[#allocation3 + $0x68] sm:$0xff] %v2468
        %2511 = vst [vmem:[#allocation3 + $0x70] sm:$0xff] %v2469
        %2512 = vst [vmem:[#allocation3 + $0x78] sm:$0xff] %v2470
        %2513 = vst [vmem:[#allocation3 + $0x80] sm:$0xff] %v2471
        %2514 = vst [vmem:[#allocation3 + $0x88] sm:$0xff] %v2472
        %2515 = vst [vmem:[#allocation3 + $0x90] sm:$0xff] %v2473
        %2516 = vst [vmem:[#allocation3 + $0x98] sm:$0xff] %v2474
        %2517 = vst [vmem:[#allocation3 + $0xa0] sm:$0xff] %v2475
        %2518 = vst [vmem:[#allocation3 + $0xa8] sm:$0xff] %v2476
        %2519 = vst [vmem:[#allocation3 + $0xb0] sm:$0xff] %v2477
        %2520 = vst [vmem:[#allocation3 + $0xb8] sm:$0xff] %v2478
        %2521 = vst [vmem:[#allocation3 + $0xc0] sm:$0xff] %v2479
        %2522 = vst [vmem:[#allocation3 + $0xc8] sm:$0xff] %v2480
        %2523 = vst [vmem:[#allocation3 + $0xd0] sm:$0xff] %v2481
        %2524 = vst [vmem:[#allocation3 + $0xd8] sm:$0xff] %v2482
        %2525 = vst [vmem:[#allocation3 + $0xe0] sm:$0xff] %v2483
        %2526 = vst [vmem:[#allocation3 + $0xe8] sm:$0xff] %v2484
        %2527 = vst [vmem:[#allocation3 + $0xf0] sm:$0xff] %v2485
        %2528 = vst [vmem:[#allocation3 + $0xf8] sm:$0xff] %v2486
        %2529 = vst [vmem:[#allocation3 + $0x100] sm:$0xff] %v2487
        %2530 = vst [vmem:[#allocation3 + $0x108] sm:$0xff] %v2488
        %2531 = vst [vmem:[#allocation3 + $0x110] sm:$0xff] %v2489
        %2532 = vst [vmem:[#allocation3 + $0x118] sm:$0xff] %v2490
        %2533 = vst [vmem:[#allocation3 + $0x120] sm:$0xff] %v2491
        %2534 = vst [vmem:[#allocation3 + $0x128] sm:$0xff] %v2492
        %2535 = vst [vmem:[#allocation3 + $0x130] sm:$0xff] %v2493
        %2536 = vst [vmem:[#allocation3 + $0x138] sm:$0xff] %v2494
        %2537 = vst [vmem:[#allocation3 + $0x140] sm:$0xff] %v2495
        %2538 = vst [vmem:[#allocation3 + $0x148] sm:$0xff] %v2496
        %v2539 = vld [vmem:[#allocation2] sm:$0x80]
        %v2540 = vld [vmem:[#allocation2 + $0x8] sm:$0xff]
        %v2541 = vld [vmem:[#allocation2 + $0x10] sm:$0xff]
        %v2542 = vld [vmem:[#allocation2 + $0x18] sm:$0xff]
        %v2543 = vld [vmem:[#allocation2 + $0x20] sm:$0xff]
        %v2544 = vld [vmem:[#allocation2 + $0x28] sm:$0xff]
        %v2545 = vld [vmem:[#allocation2 + $0x30] sm:$0xff]
        %v2546 = vld [vmem:[#allocation2 + $0x38] sm:$0xff]
        %v2547 = vld [vmem:[#allocation2 + $0x40] sm:$0xff]
        %v2548 = vld [vmem:[#allocation2 + $0x48] sm:$0xff]
        %v2549 = vld [vmem:[#allocation2 + $0x50] sm:$0xff]
        %v2550 = vld [vmem:[#allocation2 + $0x58] sm:$0xff]
        %v2551 = vld [vmem:[#allocation2 + $0x60] sm:$0xff]
        %v2552 = vld [vmem:[#allocation2 + $0x68] sm:$0xff]
        %v2553 = vld [vmem:[#allocation2 + $0x70] sm:$0xff]
        %v2554 = vld [vmem:[#allocation2 + $0x78] sm:$0xff]
        %v2555 = vld [vmem:[#allocation2 + $0x80] sm:$0xff]
        %v2556 = vld [vmem:[#allocation2 + $0x88] sm:$0xff]
        %v2557 = vld [vmem:[#allocation2 + $0x90] sm:$0xff]
        %v2558 = vld [vmem:[#allocation2 + $0x98] sm:$0xff]
        %v2559 = vld [vmem:[#allocation2 + $0xa0] sm:$0xff]
        %v2560 = vld [vmem:[#allocation2 + $0xa8] sm:$0xff]
        %v2561 = vld [vmem:[#allocation9 + $0x80] sm:$0xf]
        %v2562 = vld [vmem:[#allocation9 + $0x84] sm:$0xf]
        %v2563 = vld [vmem:[#allocation9 + $0x88] sm:$0xf]
        %v2564 = vld [vmem:[#allocation9 + $0x8c] sm:$0xf]
        %v2565 = vld [vmem:[#allocation9 + $0x90] sm:$0xf]
        %v2566 = vld [vmem:[#allocation9 + $0x94] sm:$0xf]
        %v2567 = vld [vmem:[#allocation9 + $0x98] sm:$0xf]
        %v2568 = vld [vmem:[#allocation9 + $0x9c] sm:$0xf]
        %v2569 = vld [vmem:[#allocation9 + $0xa0] sm:$0xf]
        %v2570 = vld [vmem:[#allocation9 + $0xa4] sm:$0xf]
        %v2571 = vld [vmem:[#allocation9 + $0xa8] sm:$0xf]
        %v2572 = vld [vmem:[#allocation9 + $0xac] sm:$0xf]
        %v2573 = vld [vmem:[#allocation9 + $0xb0] sm:$0xf]
        %v2574 = vld [vmem:[#allocation9 + $0xb4] sm:$0xf]
        %v2575 = vld [vmem:[#allocation9 + $0xb8] sm:$0xf]
        %v2576 = vld [vmem:[#allocation9 + $0xbc] sm:$0xf]
        %vm2577 = vsmask.f32 256
        %v2579 = vshrl.u32 %v2539, 16
        %v2581 = vrot.slane %v2579, 7
        %v2583 = vshrl.u32 %v2540, 16
        %v2585 = vrot.slane %v2583, 7
        %v2586 = vshll.u32 %v2540, 16
        %v2588 = vor.u32 %v2585, %v2586
        %v2589 = vsel %vm2577, %v2581, %v2588
        %v2591 = vshrl.u32 %v2541, 16
        %v2593 = vrot.slane %v2591, 7
        %v2594 = vshll.u32 %v2541, 16
        %v2596 = vor.u32 %v2593, %v2594
        %v2597 = vsel %vm2577, %v2585, %v2596
        %v2599 = vshrl.u32 %v2542, 16
        %v2601 = vrot.slane %v2599, 7
        %v2602 = vshll.u32 %v2542, 16
        %v2604 = vor.u32 %v2601, %v2602
        %v2605 = vsel %vm2577, %v2593, %v2604
        %v2607 = vshrl.u32 %v2543, 16
        %v2609 = vrot.slane %v2607, 7
        %v2610 = vshll.u32 %v2543, 16
        %v2612 = vor.u32 %v2609, %v2610
        %v2613 = vsel %vm2577, %v2601, %v2612
        %v2615 = vshrl.u32 %v2544, 16
        %v2617 = vrot.slane %v2615, 7
        %v2618 = vshll.u32 %v2544, 16
        %v2620 = vor.u32 %v2617, %v2618
        %v2621 = vsel %vm2577, %v2609, %v2620
        %v2623 = vshrl.u32 %v2545, 16
        %v2625 = vrot.slane %v2623, 7
        %v2626 = vshll.u32 %v2545, 16
        %v2628 = vor.u32 %v2625, %v2626
        %v2629 = vsel %vm2577, %v2617, %v2628
        %v2631 = vshrl.u32 %v2546, 16
        %v2633 = vrot.slane %v2631, 7
        %v2634 = vshll.u32 %v2546, 16
        %v2636 = vor.u32 %v2633, %v2634
        %v2637 = vsel %vm2577, %v2625, %v2636
        %v2639 = vshrl.u32 %v2547, 16
        %v2641 = vrot.slane %v2639, 7
        %v2642 = vshll.u32 %v2547, 16
        %v2644 = vor.u32 %v2641, %v2642
        %v2645 = vsel %vm2577, %v2633, %v2644
        %v2647 = vshrl.u32 %v2548, 16
        %v2649 = vrot.slane %v2647, 7
        %v2650 = vshll.u32 %v2548, 16
        %v2652 = vor.u32 %v2649, %v2650
        %v2653 = vsel %vm2577, %v2641, %v2652
        %v2655 = vshrl.u32 %v2549, 16
        %v2657 = vrot.slane %v2655, 7
        %v2658 = vshll.u32 %v2549, 16
        %v2660 = vor.u32 %v2657, %v2658
        %v2661 = vsel %vm2577, %v2649, %v2660
        %v2663 = vshrl.u32 %v2550, 16
        %v2665 = vrot.slane %v2663, 7
        %v2666 = vshll.u32 %v2550, 16
        %v2668 = vor.u32 %v2665, %v2666
        %v2669 = vsel %vm2577, %v2657, %v2668
        %v2671 = vshrl.u32 %v2551, 16
        %v2673 = vrot.slane %v2671, 7
        %v2674 = vshll.u32 %v2551, 16
        %v2676 = vor.u32 %v2673, %v2674
        %v2677 = vsel %vm2577, %v2665, %v2676
        %v2679 = vshrl.u32 %v2552, 16
        %v2681 = vrot.slane %v2679, 7
        %v2682 = vshll.u32 %v2552, 16
        %v2684 = vor.u32 %v2681, %v2682
        %v2685 = vsel %vm2577, %v2673, %v2684
        %v2687 = vshrl.u32 %v2553, 16
        %v2689 = vrot.slane %v2687, 7
        %v2690 = vshll.u32 %v2553, 16
        %v2692 = vor.u32 %v2689, %v2690
        %v2693 = vsel %vm2577, %v2681, %v2692
        %v2695 = vshrl.u32 %v2554, 16
        %v2697 = vrot.slane %v2695, 7
        %v2698 = vshll.u32 %v2554, 16
        %v2700 = vor.u32 %v2697, %v2698
        %v2701 = vsel %vm2577, %v2689, %v2700
        %v2703 = vshrl.u32 %v2555, 16
        %v2705 = vrot.slane %v2703, 7
        %v2706 = vshll.u32 %v2555, 16
        %v2708 = vor.u32 %v2705, %v2706
        %v2709 = vsel %vm2577, %v2697, %v2708
        %v2711 = vshrl.u32 %v2556, 16
        %v2713 = vrot.slane %v2711, 7
        %v2714 = vshll.u32 %v2556, 16
        %v2716 = vor.u32 %v2713, %v2714
        %v2717 = vsel %vm2577, %v2705, %v2716
        %v2719 = vshrl.u32 %v2557, 16
        %v2721 = vrot.slane %v2719, 7
        %v2722 = vshll.u32 %v2557, 16
        %v2724 = vor.u32 %v2721, %v2722
        %v2725 = vsel %vm2577, %v2713, %v2724
        %v2727 = vshrl.u32 %v2558, 16
        %v2729 = vrot.slane %v2727, 7
        %v2730 = vshll.u32 %v2558, 16
        %v2732 = vor.u32 %v2729, %v2730
        %v2733 = vsel %vm2577, %v2721, %v2732
        %v2735 = vshrl.u32 %v2559, 16
        %v2737 = vrot.slane %v2735, 7
        %v2738 = vshll.u32 %v2559, 16
        %v2740 = vor.u32 %v2737, %v2738
        %v2741 = vsel %vm2577, %v2729, %v2740
        %v2743 = vshrl.u32 %v2560, 16
        %v2745 = vrot.slane %v2743, 7
        %v2746 = vshll.u32 %v2560, 16
        %v2748 = vor.u32 %v2745, %v2746
        %v2749 = vsel %vm2577, %v2737, %v2748
        %v2787 = vunpack.c.l.b16 %v2561
        %v2788 = vunpack.c.l.b16 %v2562
        %v2789 = vunpack.c.l.b16 %v2563
        %v2790 = vunpack.c.l.b16 %v2564
        %v2791 = vunpack.c.l.b16 %v2565
        %v2792 = vunpack.c.l.b16 %v2566
        %v2793 = vunpack.c.l.b16 %v2567
        %v2794 = vunpack.c.l.b16 %v2568
        %v2795 = vunpack.c.l.b16 %v2569
        %v2796 = vunpack.c.l.b16 %v2570
        %v2797 = vunpack.c.l.b16 %v2571
        %v2798 = vunpack.c.l.b16 %v2572
        %v2799 = vunpack.c.l.b16 %v2573
        %v2800 = vunpack.c.l.b16 %v2574
        %v2801 = vunpack.c.l.b16 %v2575
        %v2802 = vunpack.c.l.b16 %v2576
        %v2803 = vpack.c.b16 %v2788, %v2787
        %v2804 = vpack.c.b16 %v2790, %v2789
        %v2805 = vpack.c.b16 %v2792, %v2791
        %v2806 = vpack.c.b16 %v2794, %v2793
        %v2807 = vpack.c.b16 %v2796, %v2795
        %v2808 = vpack.c.b16 %v2798, %v2797
        %v2809 = vpack.c.b16 %v2800, %v2799
        %v2810 = vpack.c.b16 %v2802, %v2801
        %2819 = vmatprep.subr.bf16.mxu0 0
        %2820 = vmatpush1.bf16.msra.mxu0 %v2803
        %2821 = vmatprep.subr.bf16.mxu0 0
        %2822 = vmatpush1.bf16.msra.mxu0 %v2804
        %2823 = vmatprep.subr.bf16.mxu0 0
        %2824 = vmatpush1.bf16.msra.mxu0 %v2805
        %2825 = vmatprep.subr.bf16.mxu0 0
        %2826 = vmatpush1.bf16.msra.mxu0 %v2806
        %2827 = vmatprep.subr.bf16.mxu0 0
        %2828 = vmatpush1.bf16.msra.mxu0 %v2807
        %2829 = vmatprep.subr.bf16.mxu0 0
        %2830 = vmatpush1.bf16.msra.mxu0 %v2808
        %2831 = vmatprep.subr.bf16.mxu0 0
        %2832 = vmatpush1.bf16.msra.mxu0 %v2809
        %2833 = vmatprep.subr.bf16.mxu0 0
        %2834 = vmatpush1.bf16.msra.mxu0 %v2810
        %2835 = vmatprep.subr.bf16.mxu0 0
        %2836 = vmatpush1.bf16.msra.mxu0 0
        %2837 = vmatprep.subr.bf16.mxu0 0
        %2838 = vmatpush1.bf16.msra.mxu0 0
        %2839 = vmatprep.subr.bf16.mxu0 0
        %2840 = vmatpush1.bf16.msra.mxu0 0
        %2841 = vmatprep.subr.bf16.mxu0 0
        %2842 = vmatpush1.bf16.msra.mxu0 0
        %2843 = vmatprep.subr.bf16.mxu0 0
        %2844 = vmatpush1.bf16.msra.mxu0 0
        %2845 = vmatprep.subr.bf16.mxu0 0
        %2846 = vmatpush1.bf16.msra.mxu0 0
        %2847 = vmatprep.subr.bf16.mxu0 0
        %2848 = vmatpush1.bf16.msra.mxu0 0
        %2849 = vmatprep.subr.bf16.mxu0 0
        %2850 = vmatpush1.bf16.msra.mxu0 0
        %2851 = vmatprep.mubr.bf16.mxu0 0
        %2852 = vmatmul.mubr.bf16.gmra.mrb[0].mxu0 %v2589
        %v2853 = vpop.f32.mrb[0].mxu0
        %v2854 = vadd.f32 0.0, %v2853
        %v2855 = vpop.f32.mrb[0].mxu0
        %v2856 = vpop.f32.mrb[0].mxu0
        %v2857 = vadd.f32 0.0, %v2856
        %v2858 = vpop.f32.mrb[0].mxu0
        %2859 = vmatprep.mubr.bf16.mxu0 0
        %2860 = vmatmul.mubr.bf16.gmra.mrb[0].mxu0 %v2597
        %v2861 = vpop.f32.mrb[0].mxu0
        %v2862 = vadd.f32 0.0, %v2861
        %v2863 = vpop.f32.mrb[0].mxu0
        %v2864 = vpop.f32.mrb[0].mxu0
        %v2865 = vadd.f32 0.0, %v2864
        %v2866 = vpop.f32.mrb[0].mxu0
        %2867 = vmatprep.mubr.bf16.mxu0 0
        %2868 = vmatmul.mubr.bf16.gmra.mrb[0].mxu0 %v2605
        %v2869 = vpop.f32.mrb[0].mxu0
        %v2870 = vadd.f32 0.0, %v2869
        %v2871 = vpop.f32.mrb[0].mxu0
        %v2872 = vpop.f32.mrb[0].mxu0
        %v2873 = vadd.f32 0.0, %v2872
        %v2874 = vpop.f32.mrb[0].mxu0
        %2875 = vmatprep.mubr.bf16.mxu0 0
        %2876 = vmatmul.mubr.bf16.gmra.mrb[0].mxu0 %v2613
        %v2877 = vpop.f32.mrb[0].mxu0
        %v2878 = vadd.f32 0.0, %v2877
        %v2879 = vpop.f32.mrb[0].mxu0
        %v2880 = vpop.f32.mrb[0].mxu0
        %v2881 = vadd.f32 0.0, %v2880
        %v2882 = vpop.f32.mrb[0].mxu0
        %2883 = vmatprep.mubr.bf16.mxu0 0
        %2884 = vmatmul.mubr.bf16.gmra.mrb[0].mxu0 %v2621
        %v2885 = vpop.f32.mrb[0].mxu0
        %v2886 = vadd.f32 0.0, %v2885
        %v2887 = vpop.f32.mrb[0].mxu0
        %v2888 = vpop.f32.mrb[0].mxu0
        %v2889 = vadd.f32 0.0, %v2888
        %v2890 = vpop.f32.mrb[0].mxu0
        %2891 = vmatprep.mubr.bf16.mxu0 0
        %2892 = vmatmul.mubr.bf16.gmra.mrb[0].mxu0 %v2629
        %v2893 = vpop.f32.mrb[0].mxu0
        %v2894 = vadd.f32 0.0, %v2893
        %v2895 = vpop.f32.mrb[0].mxu0
        %v2896 = vpop.f32.mrb[0].mxu0
        %v2897 = vadd.f32 0.0, %v2896
        %v2898 = vpop.f32.mrb[0].mxu0
        %2899 = vmatprep.mubr.bf16.mxu0 0
        %2900 = vmatmul.mubr.bf16.gmra.mrb[0].mxu0 %v2637
        %v2901 = vpop.f32.mrb[0].mxu0
        %v2902 = vadd.f32 0.0, %v2901
        %v2903 = vpop.f32.mrb[0].mxu0
        %v2904 = vpop.f32.mrb[0].mxu0
        %v2905 = vadd.f32 0.0, %v2904
        %v2906 = vpop.f32.mrb[0].mxu0
        %2907 = vmatprep.mubr.bf16.mxu0 0
        %2908 = vmatmul.mubr.bf16.gmra.mrb[0].mxu0 %v2645
        %v2909 = vpop.f32.mrb[0].mxu0
        %v2910 = vadd.f32 0.0, %v2909
        %v2911 = vpop.f32.mrb[0].mxu0
        %v2912 = vpop.f32.mrb[0].mxu0
        %v2913 = vadd.f32 0.0, %v2912
        %v2914 = vpop.f32.mrb[0].mxu0
        %2915 = vmatprep.mubr.bf16.mxu0 0
        %2916 = vmatmul.mubr.bf16.gmra.mrb[0].mxu0 %v2653
        %v2917 = vpop.f32.mrb[0].mxu0
        %v2918 = vadd.f32 0.0, %v2917
        %v2919 = vpop.f32.mrb[0].mxu0
        %v2920 = vpop.f32.mrb[0].mxu0
        %v2921 = vadd.f32 0.0, %v2920
        %v2922 = vpop.f32.mrb[0].mxu0
        %2923 = vmatprep.mubr.bf16.mxu0 0
        %2924 = vmatmul.mubr.bf16.gmra.mrb[0].mxu0 %v2661
        %v2925 = vpop.f32.mrb[0].mxu0
        %v2926 = vadd.f32 0.0, %v2925
        %v2927 = vpop.f32.mrb[0].mxu0
        %v2928 = vpop.f32.mrb[0].mxu0
        %v2929 = vadd.f32 0.0, %v2928
        %v2930 = vpop.f32.mrb[0].mxu0
        %2931 = vmatprep.mubr.bf16.mxu0 0
        %2932 = vmatmul.mubr.bf16.gmra.mrb[0].mxu0 %v2669
        %v2933 = vpop.f32.mrb[0].mxu0
        %v2934 = vadd.f32 0.0, %v2933
        %v2935 = vpop.f32.mrb[0].mxu0
        %v2936 = vpop.f32.mrb[0].mxu0
        %v2937 = vadd.f32 0.0, %v2936
        %v2938 = vpop.f32.mrb[0].mxu0
        %2939 = vmatprep.mubr.bf16.mxu0 0
        %2940 = vmatmul.mubr.bf16.gmra.mrb[0].mxu0 %v2677
        %v2941 = vpop.f32.mrb[0].mxu0
        %v2942 = vadd.f32 0.0, %v2941
        %v2943 = vpop.f32.mrb[0].mxu0
        %v2944 = vpop.f32.mrb[0].mxu0
        %v2945 = vadd.f32 0.0, %v2944
        %v2946 = vpop.f32.mrb[0].mxu0
        %2947 = vmatprep.mubr.bf16.mxu0 0
        %2948 = vmatmul.mubr.bf16.gmra.mrb[0].mxu0 %v2685
        %v2949 = vpop.f32.mrb[0].mxu0
        %v2950 = vadd.f32 0.0, %v2949
        %v2951 = vpop.f32.mrb[0].mxu0
        %v2952 = vpop.f32.mrb[0].mxu0
        %v2953 = vadd.f32 0.0, %v2952
        %v2954 = vpop.f32.mrb[0].mxu0
        %2955 = vmatprep.mubr.bf16.mxu0 0
        %2956 = vmatmul.mubr.bf16.gmra.mrb[0].mxu0 %v2693
        %v2957 = vpop.f32.mrb[0].mxu0
        %v2958 = vadd.f32 0.0, %v2957
        %v2959 = vpop.f32.mrb[0].mxu0
        %v2960 = vpop.f32.mrb[0].mxu0
        %v2961 = vadd.f32 0.0, %v2960
        %v2962 = vpop.f32.mrb[0].mxu0
        %2963 = vmatprep.mubr.bf16.mxu0 0
        %2964 = vmatmul.mubr.bf16.gmra.mrb[0].mxu0 %v2701
        %v2965 = vpop.f32.mrb[0].mxu0
        %v2966 = vadd.f32 0.0, %v2965
        %v2967 = vpop.f32.mrb[0].mxu0
        %v2968 = vpop.f32.mrb[0].mxu0
        %v2969 = vadd.f32 0.0, %v2968
        %v2970 = vpop.f32.mrb[0].mxu0
        %2971 = vmatprep.mubr.bf16.mxu0 0
        %2972 = vmatmul.mubr.bf16.gmra.mrb[0].mxu0 %v2709
        %v2973 = vpop.f32.mrb[0].mxu0
        %v2974 = vadd.f32 0.0, %v2973
        %v2975 = vpop.f32.mrb[0].mxu0
        %v2976 = vpop.f32.mrb[0].mxu0
        %v2977 = vadd.f32 0.0, %v2976
        %v2978 = vpop.f32.mrb[0].mxu0
        %2979 = vmatprep.mubr.bf16.mxu0 0
        %2980 = vmatmul.mubr.bf16.gmra.mrb[0].mxu0 %v2717
        %v2981 = vpop.f32.mrb[0].mxu0
        %v2982 = vadd.f32 0.0, %v2981
        %v2983 = vpop.f32.mrb[0].mxu0
        %v2984 = vpop.f32.mrb[0].mxu0
        %v2985 = vadd.f32 0.0, %v2984
        %v2986 = vpop.f32.mrb[0].mxu0
        %2987 = vmatprep.mubr.bf16.mxu0 0
        %2988 = vmatmul.mubr.bf16.gmra.mrb[0].mxu0 %v2725
        %v2989 = vpop.f32.mrb[0].mxu0
        %v2990 = vadd.f32 0.0, %v2989
        %v2991 = vpop.f32.mrb[0].mxu0
        %v2992 = vpop.f32.mrb[0].mxu0
        %v2993 = vadd.f32 0.0, %v2992
        %v2994 = vpop.f32.mrb[0].mxu0
        %2995 = vmatprep.mubr.bf16.mxu0 0
        %2996 = vmatmul.mubr.bf16.gmra.mrb[0].mxu0 %v2733
        %v2997 = vpop.f32.mrb[0].mxu0
        %v2998 = vadd.f32 0.0, %v2997
        %v2999 = vpop.f32.mrb[0].mxu0
        %v3000 = vpop.f32.mrb[0].mxu0
        %v3001 = vadd.f32 0.0, %v3000
        %v3002 = vpop.f32.mrb[0].mxu0
        %3003 = vmatprep.mubr.bf16.mxu0 0
        %3004 = vmatmul.mubr.bf16.gmra.mrb[0].mxu0 %v2741
        %v3005 = vpop.f32.mrb[0].mxu0
        %v3006 = vadd.f32 0.0, %v3005
        %v3007 = vpop.f32.mrb[0].mxu0
        %v3008 = vpop.f32.mrb[0].mxu0
        %v3009 = vadd.f32 0.0, %v3008
        %v3010 = vpop.f32.mrb[0].mxu0
        %3011 = vmatprep.mubr.bf16.mxu0 0
        %3012 = vmatmul.mubr.bf16.gmra.mrb[0].mxu0 %v2749
        %v3013 = vpop.f32.mrb[0].mxu0
        %v3014 = vadd.f32 0.0, %v3013
        %v3015 = vpop.f32.mrb[0].mxu0
        %v3016 = vpop.f32.mrb[0].mxu0
        %v3017 = vadd.f32 0.0, %v3016
        %v3018 = vpop.f32.mrb[0].mxu0
        %3019 = vdwg.mxu0
        %v3020 = vld [vmem:[#allocation3] sm:$0xff]
        %v3021 = vld [vmem:[#allocation3 + $0x8] sm:$0xff]
        %v3022 = vld [vmem:[#allocation3 + $0x10] sm:$0xff]
        %v3023 = vld [vmem:[#allocation3 + $0x18] sm:$0xff]
        %v3024 = vld [vmem:[#allocation3 + $0x20] sm:$0xff]
        %v3025 = vld [vmem:[#allocation3 + $0x28] sm:$0xff]
        %v3026 = vld [vmem:[#allocation3 + $0x30] sm:$0xff]
        %v3027 = vld [vmem:[#allocation3 + $0x38] sm:$0xff]
        %v3028 = vld [vmem:[#allocation3 + $0x40] sm:$0xff]
        %v3029 = vld [vmem:[#allocation3 + $0x48] sm:$0xff]
        %v3030 = vld [vmem:[#allocation3 + $0x50] sm:$0xff]
        %v3031 = vld [vmem:[#allocation3 + $0x58] sm:$0xff]
        %v3032 = vld [vmem:[#allocation3 + $0x60] sm:$0xff]
        %v3033 = vld [vmem:[#allocation3 + $0x68] sm:$0xff]
        %v3034 = vld [vmem:[#allocation3 + $0x70] sm:$0xff]
        %v3035 = vld [vmem:[#allocation3 + $0x78] sm:$0xff]
        %v3036 = vld [vmem:[#allocation3 + $0x80] sm:$0xff]
        %v3037 = vld [vmem:[#allocation3 + $0x88] sm:$0xff]
        %v3038 = vld [vmem:[#allocation3 + $0x90] sm:$0xff]
        %v3039 = vld [vmem:[#allocation3 + $0x98] sm:$0xff]
        %v3040 = vld [vmem:[#allocation3 + $0xa0] sm:$0xff]
        %v3041 = vld [vmem:[#allocation3 + $0xa8] sm:$0xff]
        %v3042 = vld [vmem:[#allocation3 + $0xb0] sm:$0xff]
        %v3043 = vld [vmem:[#allocation3 + $0xb8] sm:$0xff]
        %v3044 = vld [vmem:[#allocation3 + $0xc0] sm:$0xff]
        %v3045 = vld [vmem:[#allocation3 + $0xc8] sm:$0xff]
        %v3046 = vld [vmem:[#allocation3 + $0xd0] sm:$0xff]
        %v3047 = vld [vmem:[#allocation3 + $0xd8] sm:$0xff]
        %v3048 = vld [vmem:[#allocation3 + $0xe0] sm:$0xff]
        %v3049 = vld [vmem:[#allocation3 + $0xe8] sm:$0xff]
        %v3050 = vld [vmem:[#allocation3 + $0xf0] sm:$0xff]
        %v3051 = vld [vmem:[#allocation3 + $0xf8] sm:$0xff]
        %v3052 = vld [vmem:[#allocation3 + $0x100] sm:$0xff]
        %v3053 = vld [vmem:[#allocation3 + $0x108] sm:$0xff]
        %v3054 = vld [vmem:[#allocation3 + $0x110] sm:$0xff]
        %v3055 = vld [vmem:[#allocation3 + $0x118] sm:$0xff]
        %v3056 = vld [vmem:[#allocation3 + $0x120] sm:$0xff]
        %v3057 = vld [vmem:[#allocation3 + $0x128] sm:$0xff]
        %v3058 = vld [vmem:[#allocation3 + $0x130] sm:$0xff]
        %v3059 = vld [vmem:[#allocation3 + $0x138] sm:$0xff]
        %v3060 = vld [vmem:[#allocation3 + $0x140] sm:$0xff]
        %v3061 = vld [vmem:[#allocation3 + $0x148] sm:$0xff]
        %v3062 = vadd.f32 %v3020, %v2854
        %v3063 = vadd.f32 %v3021, %v2857
        %v3064 = vadd.f32 %v3022, %v2862
        %v3065 = vadd.f32 %v3023, %v2865
        %v3066 = vadd.f32 %v3024, %v2870
        %v3067 = vadd.f32 %v3025, %v2873
        %v3068 = vadd.f32 %v3026, %v2878
        %v3069 = vadd.f32 %v3027, %v2881
        %v3070 = vadd.f32 %v3028, %v2886
        %v3071 = vadd.f32 %v3029, %v2889
        %v3072 = vadd.f32 %v3030, %v2894
        %v3073 = vadd.f32 %v3031, %v2897
        %v3074 = vadd.f32 %v3032, %v2902
        %v3075 = vadd.f32 %v3033, %v2905
        %v3076 = vadd.f32 %v3034, %v2910
        %v3077 = vadd.f32 %v3035, %v2913
        %v3078 = vadd.f32 %v3036, %v2918
        %v3079 = vadd.f32 %v3037, %v2921
        %v3080 = vadd.f32 %v3038, %v2926
        %v3081 = vadd.f32 %v3039, %v2929
        %v3082 = vadd.f32 %v3040, %v2934
        %v3083 = vadd.f32 %v3041, %v2937
        %v3084 = vadd.f32 %v3042, %v2942
        %v3085 = vadd.f32 %v3043, %v2945
        %v3086 = vadd.f32 %v3044, %v2950
        %v3087 = vadd.f32 %v3045, %v2953
        %v3088 = vadd.f32 %v3046, %v2958
        %v3089 = vadd.f32 %v3047, %v2961
        %v3090 = vadd.f32 %v3048, %v2966
        %v3091 = vadd.f32 %v3049, %v2969
        %v3092 = vadd.f32 %v3050, %v2974
        %v3093 = vadd.f32 %v3051, %v2977
        %v3094 = vadd.f32 %v3052, %v2982
        %v3095 = vadd.f32 %v3053, %v2985
        %v3096 = vadd.f32 %v3054, %v2990
        %v3097 = vadd.f32 %v3055, %v2993
        %v3098 = vadd.f32 %v3056, %v2998
        %v3099 = vadd.f32 %v3057, %v3001
        %v3100 = vadd.f32 %v3058, %v3006
        %v3101 = vadd.f32 %v3059, %v3009
        %v3102 = vadd.f32 %v3060, %v3014
        %v3103 = vadd.f32 %v3061, %v3017
        %3104 = vst [vmem:[#allocation3] sm:$0xff] %v3062
        %3105 = vst [vmem:[#allocation3 + $0x8] sm:$0xff] %v3063
        %3106 = vst [vmem:[#allocation3 + $0x10] sm:$0xff] %v3064
        %3107 = vst [vmem:[#allocation3 + $0x18] sm:$0xff] %v3065
        %3108 = vst [vmem:[#allocation3 + $0x20] sm:$0xff] %v3066
        %3109 = vst [vmem:[#allocation3 + $0x28] sm:$0xff] %v3067
        %3110 = vst [vmem:[#allocation3 + $0x30] sm:$0xff] %v3068
        %3111 = vst [vmem:[#allocation3 + $0x38] sm:$0xff] %v3069
        %3112 = vst [vmem:[#allocation3 + $0x40] sm:$0xff] %v3070
        %3113 = vst [vmem:[#allocation3 + $0x48] sm:$0xff] %v3071
        %3114 = vst [vmem:[#allocation3 + $0x50] sm:$0xff] %v3072
        %3115 = vst [vmem:[#allocation3 + $0x58] sm:$0xff] %v3073
        %3116 = vst [vmem:[#allocation3 + $0x60] sm:$0xff] %v3074
        %3117 = vst [vmem:[#allocation3 + $0x68] sm:$0xff] %v3075
        %3118 = vst [vmem:[#allocation3 + $0x70] sm:$0xff] %v3076
        %3119 = vst [vmem:[#allocation3 + $0x78] sm:$0xff] %v3077
        %3120 = vst [vmem:[#allocation3 + $0x80] sm:$0xff] %v3078
        %3121 = vst [vmem:[#allocation3 + $0x88] sm:$0xff] %v3079
        %3122 = vst [vmem:[#allocation3 + $0x90] sm:$0xff] %v3080
        %3123 = vst [vmem:[#allocation3 + $0x98] sm:$0xff] %v3081
        %3124 = vst [vmem:[#allocation3 + $0xa0] sm:$0xff] %v3082
        %3125 = vst [vmem:[#allocation3 + $0xa8] sm:$0xff] %v3083
        %3126 = vst [vmem:[#allocation3 + $0xb0] sm:$0xff] %v3084
        %3127 = vst [vmem:[#allocation3 + $0xb8] sm:$0xff] %v3085
        %3128 = vst [vmem:[#allocation3 + $0xc0] sm:$0xff] %v3086
        %3129 = vst [vmem:[#allocation3 + $0xc8] sm:$0xff] %v3087
        %3130 = vst [vmem:[#allocation3 + $0xd0] sm:$0xff] %v3088
        %3131 = vst [vmem:[#allocation3 + $0xd8] sm:$0xff] %v3089
        %3132 = vst [vmem:[#allocation3 + $0xe0] sm:$0xff] %v3090
        %3133 = vst [vmem:[#allocation3 + $0xe8] sm:$0xff] %v3091
        %3134 = vst [vmem:[#allocation3 + $0xf0] sm:$0xff] %v3092
        %3135 = vst [vmem:[#allocation3 + $0xf8] sm:$0xff] %v3093
        %3136 = vst [vmem:[#allocation3 + $0x100] sm:$0xff] %v3094
        %3137 = vst [vmem:[#allocation3 + $0x108] sm:$0xff] %v3095
        %3138 = vst [vmem:[#allocation3 + $0x110] sm:$0xff] %v3096
        %3139 = vst [vmem:[#allocation3 + $0x118] sm:$0xff] %v3097
        %3140 = vst [vmem:[#allocation3 + $0x120] sm:$0xff] %v3098
        %3141 = vst [vmem:[#allocation3 + $0x128] sm:$0xff] %v3099
        %3142 = vst [vmem:[#allocation3 + $0x130] sm:$0xff] %v3100
        %3143 = vst [vmem:[#allocation3 + $0x138] sm:$0xff] %v3101
        %3144 = vst [vmem:[#allocation3 + $0x140] sm:$0xff] %v3102
        %3145 = vst [vmem:[#allocation3 + $0x148] sm:$0xff] %v3103
        %v3146 = vld [vmem:[#allocation2 + $0x8] sm:$0x80]
        %v3147 = vld [vmem:[#allocation2 + $0x10] sm:$0xff]
        %v3148 = vld [vmem:[#allocation2 + $0x18] sm:$0xff]
        %v3149 = vld [vmem:[#allocation2 + $0x20] sm:$0xff]
        %v3150 = vld [vmem:[#allocation2 + $0x28] sm:$0xff]
        %v3151 = vld [vmem:[#allocation2 + $0x30] sm:$0xff]
        %v3152 = vld [vmem:[#allocation2 + $0x38] sm:$0xff]
        %v3153 = vld [vmem:[#allocation2 + $0x40] sm:$0xff]
        %v3154 = vld [vmem:[#allocation2 + $0x48] sm:$0xff]
        %v3155 = vld [vmem:[#allocation2 + $0x50] sm:$0xff]
        %v3156 = vld [vmem:[#allocation2 + $0x58] sm:$0xff]
        %v3157 = vld [vmem:[#allocation2 + $0x60] sm:$0xff]
        %v3158 = vld [vmem:[#allocation2 + $0x68] sm:$0xff]
        %v3159 = vld [vmem:[#allocation2 + $0x70] sm:$0xff]
        %v3160 = vld [vmem:[#allocation2 + $0x78] sm:$0xff]
        %v3161 = vld [vmem:[#allocation2 + $0x80] sm:$0xff]
        %v3162 = vld [vmem:[#allocation2 + $0x88] sm:$0xff]
        %v3163 = vld [vmem:[#allocation2 + $0x90] sm:$0xff]
        %v3164 = vld [vmem:[#allocation2 + $0x98] sm:$0xff]
        %v3165 = vld [vmem:[#allocation2 + $0xa0] sm:$0xff]
        %v3166 = vld [vmem:[#allocation2 + $0xa8] sm:$0xff]
        %v3167 = vld [vmem:[#allocation2 + $0xb0] sm:$0xff]
        %v3168 = vld [vmem:[#allocation9 + $0xc0] sm:$0xf]
        %v3169 = vld [vmem:[#allocation9 + $0xc4] sm:$0xf]
        %v3170 = vld [vmem:[#allocation9 + $0xc8] sm:$0xf]
        %v3171 = vld [vmem:[#allocation9 + $0xcc] sm:$0xf]
        %v3172 = vld [vmem:[#allocation9 + $0xd0] sm:$0xf]
        %v3173 = vld [vmem:[#allocation9 + $0xd4] sm:$0xf]
        %v3174 = vld [vmem:[#allocation9 + $0xd8] sm:$0xf]
        %v3175 = vld [vmem:[#allocation9 + $0xdc] sm:$0xf]
        %v3176 = vld [vmem:[#allocation9 + $0xe0] sm:$0xf]
        %v3177 = vld [vmem:[#allocation9 + $0xe4] sm:$0xf]
        %v3178 = vld [vmem:[#allocation9 + $0xe8] sm:$0xf]
        %v3179 = vld [vmem:[#allocation9 + $0xec] sm:$0xf]
        %v3180 = vld [vmem:[#allocation9 + $0xf0] sm:$0xf]
        %v3181 = vld [vmem:[#allocation9 + $0xf4] sm:$0xf]
        %v3182 = vld [vmem:[#allocation9 + $0xf8] sm:$0xf]
        %v3183 = vld [vmem:[#allocation9 + $0xfc] sm:$0xf]
        %v3185 = vshrl.u32 %v3146, 16
        %v3187 = vrot.slane %v3185, 7
        %v3189 = vshrl.u32 %v3147, 16
        %v3191 = vrot.slane %v3189, 7
        %v3192 = vshll.u32 %v3147, 16
        %v3194 = vor.u32 %v3191, %v3192
        %v3195 = vsel %vm2577, %v3187, %v3194
        %v3197 = vshrl.u32 %v3148, 16
        %v3199 = vrot.slane %v3197, 7
        %v3200 = vshll.u32 %v3148, 16
        %v3202 = vor.u32 %v3199, %v3200
        %v3203 = vsel %vm2577, %v3191, %v3202
        %v3205 = vshrl.u32 %v3149, 16
        %v3207 = vrot.slane %v3205, 7
        %v3208 = vshll.u32 %v3149, 16
        %v3210 = vor.u32 %v3207, %v3208
        %v3211 = vsel %vm2577, %v3199, %v3210
        %v3213 = vshrl.u32 %v3150, 16
        %v3215 = vrot.slane %v3213, 7
        %v3216 = vshll.u32 %v3150, 16
        %v3218 = vor.u32 %v3215, %v3216
        %v3219 = vsel %vm2577, %v3207, %v3218
        %v3221 = vshrl.u32 %v3151, 16
        %v3223 = vrot.slane %v3221, 7
        %v3224 = vshll.u32 %v3151, 16
        %v3226 = vor.u32 %v3223, %v3224
        %v3227 = vsel %vm2577, %v3215, %v3226
        %v3229 = vshrl.u32 %v3152, 16
        %v3231 = vrot.slane %v3229, 7
        %v3232 = vshll.u32 %v3152, 16
        %v3234 = vor.u32 %v3231, %v3232
        %v3235 = vsel %vm2577, %v3223, %v3234
        %v3237 = vshrl.u32 %v3153, 16
        %v3239 = vrot.slane %v3237, 7
        %v3240 = vshll.u32 %v3153, 16
        %v3242 = vor.u32 %v3239, %v3240
        %v3243 = vsel %vm2577, %v3231, %v3242
        %v3245 = vshrl.u32 %v3154, 16
        %v3247 = vrot.slane %v3245, 7
        %v3248 = vshll.u32 %v3154, 16
        %v3250 = vor.u32 %v3247, %v3248
        %v3251 = vsel %vm2577, %v3239, %v3250
        %v3253 = vshrl.u32 %v3155, 16
        %v3255 = vrot.slane %v3253, 7
        %v3256 = vshll.u32 %v3155, 16
        %v3258 = vor.u32 %v3255, %v3256
        %v3259 = vsel %vm2577, %v3247, %v3258
        %v3261 = vshrl.u32 %v3156, 16
        %v3263 = vrot.slane %v3261, 7
        %v3264 = vshll.u32 %v3156, 16
        %v3266 = vor.u32 %v3263, %v3264
        %v3267 = vsel %vm2577, %v3255, %v3266
        %v3269 = vshrl.u32 %v3157, 16
        %v3271 = vrot.slane %v3269, 7
        %v3272 = vshll.u32 %v3157, 16
        %v3274 = vor.u32 %v3271, %v3272
        %v3275 = vsel %vm2577, %v3263, %v3274
        %v3277 = vshrl.u32 %v3158, 16
        %v3279 = vrot.slane %v3277, 7
        %v3280 = vshll.u32 %v3158, 16
        %v3282 = vor.u32 %v3279, %v3280
        %v3283 = vsel %vm2577, %v3271, %v3282
        %v3285 = vshrl.u32 %v3159, 16
        %v3287 = vrot.slane %v3285, 7
        %v3288 = vshll.u32 %v3159, 16
        %v3290 = vor.u32 %v3287, %v3288
        %v3291 = vsel %vm2577, %v3279, %v3290
        %v3293 = vshrl.u32 %v3160, 16
        %v3295 = vrot.slane %v3293, 7
        %v3296 = vshll.u32 %v3160, 16
        %v3298 = vor.u32 %v3295, %v3296
        %v3299 = vsel %vm2577, %v3287, %v3298
        %v3301 = vshrl.u32 %v3161, 16
        %v3303 = vrot.slane %v3301, 7
        %v3304 = vshll.u32 %v3161, 16
        %v3306 = vor.u32 %v3303, %v3304
        %v3307 = vsel %vm2577, %v3295, %v3306
        %v3309 = vshrl.u32 %v3162, 16
        %v3311 = vrot.slane %v3309, 7
        %v3312 = vshll.u32 %v3162, 16
        %v3314 = vor.u32 %v3311, %v3312
        %v3315 = vsel %vm2577, %v3303, %v3314
        %v3317 = vshrl.u32 %v3163, 16
        %v3319 = vrot.slane %v3317, 7
        %v3320 = vshll.u32 %v3163, 16
        %v3322 = vor.u32 %v3319, %v3320
        %v3323 = vsel %vm2577, %v3311, %v3322
        %v3325 = vshrl.u32 %v3164, 16
        %v3327 = vrot.slane %v3325, 7
        %v3328 = vshll.u32 %v3164, 16
        %v3330 = vor.u32 %v3327, %v3328
        %v3331 = vsel %vm2577, %v3319, %v3330
        %v3333 = vshrl.u32 %v3165, 16
        %v3335 = vrot.slane %v3333, 7
        %v3336 = vshll.u32 %v3165, 16
        %v3338 = vor.u32 %v3335, %v3336
        %v3339 = vsel %vm2577, %v3327, %v3338
        %v3341 = vshrl.u32 %v3166, 16
        %v3343 = vrot.slane %v3341, 7
        %v3344 = vshll.u32 %v3166, 16
        %v3346 = vor.u32 %v3343, %v3344
        %v3347 = vsel %vm2577, %v3335, %v3346
        %v3349 = vshrl.u32 %v3167, 16
        %v3351 = vrot.slane %v3349, 7
        %v3352 = vshll.u32 %v3167, 16
        %v3354 = vor.u32 %v3351, %v3352
        %v3355 = vsel %vm2577, %v3343, %v3354
        %v3393 = vunpack.c.l.b16 %v3168
        %v3394 = vunpack.c.l.b16 %v3169
        %v3395 = vunpack.c.l.b16 %v3170
        %v3396 = vunpack.c.l.b16 %v3171
        %v3397 = vunpack.c.l.b16 %v3172
        %v3398 = vunpack.c.l.b16 %v3173
        %v3399 = vunpack.c.l.b16 %v3174
        %v3400 = vunpack.c.l.b16 %v3175
        %v3401 = vunpack.c.l.b16 %v3176
        %v3402 = vunpack.c.l.b16 %v3177
        %v3403 = vunpack.c.l.b16 %v3178
        %v3404 = vunpack.c.l.b16 %v3179
        %v3405 = vunpack.c.l.b16 %v3180
        %v3406 = vunpack.c.l.b16 %v3181
        %v3407 = vunpack.c.l.b16 %v3182
        %v3408 = vunpack.c.l.b16 %v3183
        %v3409 = vpack.c.b16 %v3394, %v3393
        %v3410 = vpack.c.b16 %v3396, %v3395
        %v3411 = vpack.c.b16 %v3398, %v3397
        %v3412 = vpack.c.b16 %v3400, %v3399
        %v3413 = vpack.c.b16 %v3402, %v3401
        %v3414 = vpack.c.b16 %v3404, %v3403
        %v3415 = vpack.c.b16 %v3406, %v3405
        %v3416 = vpack.c.b16 %v3408, %v3407
        %3425 = vmatprep.subr.bf16.mxu0 0
        %3426 = vmatpush1.bf16.msra.mxu0 %v3409
        %3427 = vmatprep.subr.bf16.mxu0 0
        %3428 = vmatpush1.bf16.msra.mxu0 %v3410
        %3429 = vmatprep.subr.bf16.mxu0 0
        %3430 = vmatpush1.bf16.msra.mxu0 %v3411
        %3431 = vmatprep.subr.bf16.mxu0 0
        %3432 = vmatpush1.bf16.msra.mxu0 %v3412
        %3433 = vmatprep.subr.bf16.mxu0 0
        %3434 = vmatpush1.bf16.msra.mxu0 %v3413
        %3435 = vmatprep.subr.bf16.mxu0 0
        %3436 = vmatpush1.bf16.msra.mxu0 %v3414
        %3437 = vmatprep.subr.bf16.mxu0 0
        %3438 = vmatpush1.bf16.msra.mxu0 %v3415
        %3439 = vmatprep.subr.bf16.mxu0 0
        %3440 = vmatpush1.bf16.msra.mxu0 %v3416
        %3441 = vmatprep.subr.bf16.mxu0 0
        %3442 = vmatpush1.bf16.msra.mxu0 0
        %3443 = vmatprep.subr.bf16.mxu0 0
        %3444 = vmatpush1.bf16.msra.mxu0 0
        %3445 = vmatprep.subr.bf16.mxu0 0
        %3446 = vmatpush1.bf16.msra.mxu0 0
        %3447 = vmatprep.subr.bf16.mxu0 0
        %3448 = vmatpush1.bf16.msra.mxu0 0
        %3449 = vmatprep.subr.bf16.mxu0 0
        %3450 = vmatpush1.bf16.msra.mxu0 0
        %3451 = vmatprep.subr.bf16.mxu0 0
        %3452 = vmatpush1.bf16.msra.mxu0 0
        %3453 = vmatprep.subr.bf16.mxu0 0
        %3454 = vmatpush1.bf16.msra.mxu0 0
        %3455 = vmatprep.subr.bf16.mxu0 0
        %3456 = vmatpush1.bf16.msra.mxu0 0
        %3457 = vmatprep.mubr.bf16.mxu0 0
        %3458 = vmatmul.mubr.bf16.gmra.mrb[0].mxu0 %v3195
        %v3459 = vpop.f32.mrb[0].mxu0
        %v3460 = vadd.f32 0.0, %v3459
        %v3461 = vpop.f32.mrb[0].mxu0
        %v3462 = vpop.f32.mrb[0].mxu0
        %v3463 = vadd.f32 0.0, %v3462
        %v3464 = vpop.f32.mrb[0].mxu0
        %3465 = vmatprep.mubr.bf16.mxu0 0
        %3466 = vmatmul.mubr.bf16.gmra.mrb[0].mxu0 %v3203
        %v3467 = vpop.f32.mrb[0].mxu0
        %v3468 = vadd.f32 0.0, %v3467
        %v3469 = vpop.f32.mrb[0].mxu0
        %v3470 = vpop.f32.mrb[0].mxu0
        %v3471 = vadd.f32 0.0, %v3470
        %v3472 = vpop.f32.mrb[0].mxu0
        %3473 = vmatprep.mubr.bf16.mxu0 0
        %3474 = vmatmul.mubr.bf16.gmra.mrb[0].mxu0 %v3211
        %v3475 = vpop.f32.mrb[0].mxu0
        %v3476 = vadd.f32 0.0, %v3475
        %v3477 = vpop.f32.mrb[0].mxu0
        %v3478 = vpop.f32.mrb[0].mxu0
        %v3479 = vadd.f32 0.0, %v3478
        %v3480 = vpop.f32.mrb[0].mxu0
        %3481 = vmatprep.mubr.bf16.mxu0 0
        %3482 = vmatmul.mubr.bf16.gmra.mrb[0].mxu0 %v3219
        %v3483 = vpop.f32.mrb[0].mxu0
        %v3484 = vadd.f32 0.0, %v3483
        %v3485 = vpop.f32.mrb[0].mxu0
        %v3486 = vpop.f32.mrb[0].mxu0
        %v3487 = vadd.f32 0.0, %v3486
        %v3488 = vpop.f32.mrb[0].mxu0
        %3489 = vmatprep.mubr.bf16.mxu0 0
        %3490 = vmatmul.mubr.bf16.gmra.mrb[0].mxu0 %v3227
        %v3491 = vpop.f32.mrb[0].mxu0
        %v3492 = vadd.f32 0.0, %v3491
        %v3493 = vpop.f32.mrb[0].mxu0
        %v3494 = vpop.f32.mrb[0].mxu0
        %v3495 = vadd.f32 0.0, %v3494
        %v3496 = vpop.f32.mrb[0].mxu0
        %3497 = vmatprep.mubr.bf16.mxu0 0
        %3498 = vmatmul.mubr.bf16.gmra.mrb[0].mxu0 %v3235
        %v3499 = vpop.f32.mrb[0].mxu0
        %v3500 = vadd.f32 0.0, %v3499
        %v3501 = vpop.f32.mrb[0].mxu0
        %v3502 = vpop.f32.mrb[0].mxu0
        %v3503 = vadd.f32 0.0, %v3502
        %v3504 = vpop.f32.mrb[0].mxu0
        %3505 = vmatprep.mubr.bf16.mxu0 0
        %3506 = vmatmul.mubr.bf16.gmra.mrb[0].mxu0 %v3243
        %v3507 = vpop.f32.mrb[0].mxu0
        %v3508 = vadd.f32 0.0, %v3507
        %v3509 = vpop.f32.mrb[0].mxu0
        %v3510 = vpop.f32.mrb[0].mxu0
        %v3511 = vadd.f32 0.0, %v3510
        %v3512 = vpop.f32.mrb[0].mxu0
        %3513 = vmatprep.mubr.bf16.mxu0 0
        %3514 = vmatmul.mubr.bf16.gmra.mrb[0].mxu0 %v3251
        %v3515 = vpop.f32.mrb[0].mxu0
        %v3516 = vadd.f32 0.0, %v3515
        %v3517 = vpop.f32.mrb[0].mxu0
        %v3518 = vpop.f32.mrb[0].mxu0
        %v3519 = vadd.f32 0.0, %v3518
        %v3520 = vpop.f32.mrb[0].mxu0
        %3521 = vmatprep.mubr.bf16.mxu0 0
        %3522 = vmatmul.mubr.bf16.gmra.mrb[0].mxu0 %v3259
        %v3523 = vpop.f32.mrb[0].mxu0
        %v3524 = vadd.f32 0.0, %v3523
        %v3525 = vpop.f32.mrb[0].mxu0
        %v3526 = vpop.f32.mrb[0].mxu0
        %v3527 = vadd.f32 0.0, %v3526
        %v3528 = vpop.f32.mrb[0].mxu0
        %3529 = vmatprep.mubr.bf16.mxu0 0
        %3530 = vmatmul.mubr.bf16.gmra.mrb[0].mxu0 %v3267
        %v3531 = vpop.f32.mrb[0].mxu0
        %v3532 = vadd.f32 0.0, %v3531
        %v3533 = vpop.f32.mrb[0].mxu0
        %v3534 = vpop.f32.mrb[0].mxu0
        %v3535 = vadd.f32 0.0, %v3534
        %v3536 = vpop.f32.mrb[0].mxu0
        %3537 = vmatprep.mubr.bf16.mxu0 0
        %3538 = vmatmul.mubr.bf16.gmra.mrb[0].mxu0 %v3275
        %v3539 = vpop.f32.mrb[0].mxu0
        %v3540 = vadd.f32 0.0, %v3539
        %v3541 = vpop.f32.mrb[0].mxu0
        %v3542 = vpop.f32.mrb[0].mxu0
        %v3543 = vadd.f32 0.0, %v3542
        %v3544 = vpop.f32.mrb[0].mxu0
        %3545 = vmatprep.mubr.bf16.mxu0 0
        %3546 = vmatmul.mubr.bf16.gmra.mrb[0].mxu0 %v3283
        %v3547 = vpop.f32.mrb[0].mxu0
        %v3548 = vadd.f32 0.0, %v3547
        %v3549 = vpop.f32.mrb[0].mxu0
        %v3550 = vpop.f32.mrb[0].mxu0
        %v3551 = vadd.f32 0.0, %v3550
        %v3552 = vpop.f32.mrb[0].mxu0
        %3553 = vmatprep.mubr.bf16.mxu0 0
        %3554 = vmatmul.mubr.bf16.gmra.mrb[0].mxu0 %v3291
        %v3555 = vpop.f32.mrb[0].mxu0
        %v3556 = vadd.f32 0.0, %v3555
        %v3557 = vpop.f32.mrb[0].mxu0
        %v3558 = vpop.f32.mrb[0].mxu0
        %v3559 = vadd.f32 0.0, %v3558
        %v3560 = vpop.f32.mrb[0].mxu0
        %3561 = vmatprep.mubr.bf16.mxu0 0
        %3562 = vmatmul.mubr.bf16.gmra.mrb[0].mxu0 %v3299
        %v3563 = vpop.f32.mrb[0].mxu0
        %v3564 = vadd.f32 0.0, %v3563
        %v3565 = vpop.f32.mrb[0].mxu0
        %v3566 = vpop.f32.mrb[0].mxu0
        %v3567 = vadd.f32 0.0, %v3566
        %v3568 = vpop.f32.mrb[0].mxu0
        %3569 = vmatprep.mubr.bf16.mxu0 0
        %3570 = vmatmul.mubr.bf16.gmra.mrb[0].mxu0 %v3307
        %v3571 = vpop.f32.mrb[0].mxu0
        %v3572 = vadd.f32 0.0, %v3571
        %v3573 = vpop.f32.mrb[0].mxu0
        %v3574 = vpop.f32.mrb[0].mxu0
        %v3575 = vadd.f32 0.0, %v3574
        %v3576 = vpop.f32.mrb[0].mxu0
        %3577 = vmatprep.mubr.bf16.mxu0 0
        %3578 = vmatmul.mubr.bf16.gmra.mrb[0].mxu0 %v3315
        %v3579 = vpop.f32.mrb[0].mxu0
        %v3580 = vadd.f32 0.0, %v3579
        %v3581 = vpop.f32.mrb[0].mxu0
        %v3582 = vpop.f32.mrb[0].mxu0
        %v3583 = vadd.f32 0.0, %v3582
        %v3584 = vpop.f32.mrb[0].mxu0
        %3585 = vmatprep.mubr.bf16.mxu0 0
        %3586 = vmatmul.mubr.bf16.gmra.mrb[0].mxu0 %v3323
        %v3587 = vpop.f32.mrb[0].mxu0
        %v3588 = vadd.f32 0.0, %v3587
        %v3589 = vpop.f32.mrb[0].mxu0
        %v3590 = vpop.f32.mrb[0].mxu0
        %v3591 = vadd.f32 0.0, %v3590
        %v3592 = vpop.f32.mrb[0].mxu0
        %3593 = vmatprep.mubr.bf16.mxu0 0
        %3594 = vmatmul.mubr.bf16.gmra.mrb[0].mxu0 %v3331
        %v3595 = vpop.f32.mrb[0].mxu0
        %v3596 = vadd.f32 0.0, %v3595
        %v3597 = vpop.f32.mrb[0].mxu0
        %v3598 = vpop.f32.mrb[0].mxu0
        %v3599 = vadd.f32 0.0, %v3598
        %v3600 = vpop.f32.mrb[0].mxu0
        %3601 = vmatprep.mubr.bf16.mxu0 0
        %3602 = vmatmul.mubr.bf16.gmra.mrb[0].mxu0 %v3339
        %v3603 = vpop.f32.mrb[0].mxu0
        %v3604 = vadd.f32 0.0, %v3603
        %v3605 = vpop.f32.mrb[0].mxu0
        %v3606 = vpop.f32.mrb[0].mxu0
        %v3607 = vadd.f32 0.0, %v3606
        %v3608 = vpop.f32.mrb[0].mxu0
        %3609 = vmatprep.mubr.bf16.mxu0 0
        %3610 = vmatmul.mubr.bf16.gmra.mrb[0].mxu0 %v3347
        %v3611 = vpop.f32.mrb[0].mxu0
        %v3612 = vadd.f32 0.0, %v3611
        %v3613 = vpop.f32.mrb[0].mxu0
        %v3614 = vpop.f32.mrb[0].mxu0
        %v3615 = vadd.f32 0.0, %v3614
        %v3616 = vpop.f32.mrb[0].mxu0
        %3617 = vmatprep.mubr.bf16.mxu0 0
        %3618 = vmatmul.mubr.bf16.gmra.mrb[0].mxu0 %v3355
        %v3619 = vpop.f32.mrb[0].mxu0
        %v3620 = vadd.f32 0.0, %v3619
        %v3621 = vpop.f32.mrb[0].mxu0
        %v3622 = vpop.f32.mrb[0].mxu0
        %v3623 = vadd.f32 0.0, %v3622
        %v3624 = vpop.f32.mrb[0].mxu0
        %3625 = vdwg.mxu0
        %v3626 = vld [vmem:[#allocation3] sm:$0xff]
        %v3627 = vld [vmem:[#allocation3 + $0x8] sm:$0xff]
        %v3628 = vld [vmem:[#allocation3 + $0x10] sm:$0xff]
        %v3629 = vld [vmem:[#allocation3 + $0x18] sm:$0xff]
        %v3630 = vld [vmem:[#allocation3 + $0x20] sm:$0xff]
        %v3631 = vld [vmem:[#allocation3 + $0x28] sm:$0xff]
        %v3632 = vld [vmem:[#allocation3 + $0x30] sm:$0xff]
        %v3633 = vld [vmem:[#allocation3 + $0x38] sm:$0xff]
        %v3634 = vld [vmem:[#allocation3 + $0x40] sm:$0xff]
        %v3635 = vld [vmem:[#allocation3 + $0x48] sm:$0xff]
        %v3636 = vld [vmem:[#allocation3 + $0x50] sm:$0xff]
        %v3637 = vld [vmem:[#allocation3 + $0x58] sm:$0xff]
        %v3638 = vld [vmem:[#allocation3 + $0x60] sm:$0xff]
        %v3639 = vld [vmem:[#allocation3 + $0x68] sm:$0xff]
        %v3640 = vld [vmem:[#allocation3 + $0x70] sm:$0xff]
        %v3641 = vld [vmem:[#allocation3 + $0x78] sm:$0xff]
        %v3642 = vld [vmem:[#allocation3 + $0x80] sm:$0xff]
        %v3643 = vld [vmem:[#allocation3 + $0x88] sm:$0xff]
        %v3644 = vld [vmem:[#allocation3 + $0x90] sm:$0xff]
        %v3645 = vld [vmem:[#allocation3 + $0x98] sm:$0xff]
        %v3646 = vld [vmem:[#allocation3 + $0xa0] sm:$0xff]
        %v3647 = vld [vmem:[#allocation3 + $0xa8] sm:$0xff]
        %v3648 = vld [vmem:[#allocation3 + $0xb0] sm:$0xff]
        %v3649 = vld [vmem:[#allocation3 + $0xb8] sm:$0xff]
        %v3650 = vld [vmem:[#allocation3 + $0xc0] sm:$0xff]
        %v3651 = vld [vmem:[#allocation3 + $0xc8] sm:$0xff]
        %v3652 = vld [vmem:[#allocation3 + $0xd0] sm:$0xff]
        %v3653 = vld [vmem:[#allocation3 + $0xd8] sm:$0xff]
        %v3654 = vld [vmem:[#allocation3 + $0xe0] sm:$0xff]
        %v3655 = vld [vmem:[#allocation3 + $0xe8] sm:$0xff]
        %v3656 = vld [vmem:[#allocation3 + $0xf0] sm:$0xff]
        %v3657 = vld [vmem:[#allocation3 + $0xf8] sm:$0xff]
        %v3658 = vld [vmem:[#allocation3 + $0x100] sm:$0xff]
        %v3659 = vld [vmem:[#allocation3 + $0x108] sm:$0xff]
        %v3660 = vld [vmem:[#allocation3 + $0x110] sm:$0xff]
        %v3661 = vld [vmem:[#allocation3 + $0x118] sm:$0xff]
        %v3662 = vld [vmem:[#allocation3 + $0x120] sm:$0xff]
        %v3663 = vld [vmem:[#allocation3 + $0x128] sm:$0xff]
        %v3664 = vld [vmem:[#allocation3 + $0x130] sm:$0xff]
        %v3665 = vld [vmem:[#allocation3 + $0x138] sm:$0xff]
        %v3666 = vld [vmem:[#allocation3 + $0x140] sm:$0xff]
        %v3667 = vld [vmem:[#allocation3 + $0x148] sm:$0xff]
        %v3668 = vadd.f32 %v3626, %v3460
        %v3669 = vadd.f32 %v3627, %v3463
        %v3670 = vadd.f32 %v3628, %v3468
        %v3671 = vadd.f32 %v3629, %v3471
        %v3672 = vadd.f32 %v3630, %v3476
        %v3673 = vadd.f32 %v3631, %v3479
        %v3674 = vadd.f32 %v3632, %v3484
        %v3675 = vadd.f32 %v3633, %v3487
        %v3676 = vadd.f32 %v3634, %v3492
        %v3677 = vadd.f32 %v3635, %v3495
        %v3678 = vadd.f32 %v3636, %v3500
        %v3679 = vadd.f32 %v3637, %v3503
        %v3680 = vadd.f32 %v3638, %v3508
        %v3681 = vadd.f32 %v3639, %v3511
        %v3682 = vadd.f32 %v3640, %v3516
        %v3683 = vadd.f32 %v3641, %v3519
        %v3684 = vadd.f32 %v3642, %v3524
        %v3685 = vadd.f32 %v3643, %v3527
        %v3686 = vadd.f32 %v3644, %v3532
        %v3687 = vadd.f32 %v3645, %v3535
        %v3688 = vadd.f32 %v3646, %v3540
        %v3689 = vadd.f32 %v3647, %v3543
        %v3690 = vadd.f32 %v3648, %v3548
        %v3691 = vadd.f32 %v3649, %v3551
        %v3692 = vadd.f32 %v3650, %v3556
        %v3693 = vadd.f32 %v3651, %v3559
        %v3694 = vadd.f32 %v3652, %v3564
        %v3695 = vadd.f32 %v3653, %v3567
        %v3696 = vadd.f32 %v3654, %v3572
        %v3697 = vadd.f32 %v3655, %v3575
        %v3698 = vadd.f32 %v3656, %v3580
        %v3699 = vadd.f32 %v3657, %v3583
        %v3700 = vadd.f32 %v3658, %v3588
        %v3701 = vadd.f32 %v3659, %v3591
        %v3702 = vadd.f32 %v3660, %v3596
        %v3703 = vadd.f32 %v3661, %v3599
        %v3704 = vadd.f32 %v3662, %v3604
        %v3705 = vadd.f32 %v3663, %v3607
        %v3706 = vadd.f32 %v3664, %v3612
        %v3707 = vadd.f32 %v3665, %v3615
        %v3708 = vadd.f32 %v3666, %v3620
        %v3709 = vadd.f32 %v3667, %v3623
        %3710 = vst [vmem:[#allocation3] sm:$0xff] %v3668
        %3711 = vst [vmem:[#allocation3 + $0x8] sm:$0xff] %v3669
        %3712 = vst [vmem:[#allocation3 + $0x10] sm:$0xff] %v3670
        %3713 = vst [vmem:[#allocation3 + $0x18] sm:$0xff] %v3671
        %3714 = vst [vmem:[#allocation3 + $0x20] sm:$0xff] %v3672
        %3715 = vst [vmem:[#allocation3 + $0x28] sm:$0xff] %v3673
        %3716 = vst [vmem:[#allocation3 + $0x30] sm:$0xff] %v3674
        %3717 = vst [vmem:[#allocation3 + $0x38] sm:$0xff] %v3675
        %3718 = vst [vmem:[#allocation3 + $0x40] sm:$0xff] %v3676
        %3719 = vst [vmem:[#allocation3 + $0x48] sm:$0xff] %v3677
        %3720 = vst [vmem:[#allocation3 + $0x50] sm:$0xff] %v3678
        %3721 = vst [vmem:[#allocation3 + $0x58] sm:$0xff] %v3679
        %3722 = vst [vmem:[#allocation3 + $0x60] sm:$0xff] %v3680
        %3723 = vst [vmem:[#allocation3 + $0x68] sm:$0xff] %v3681
        %3724 = vst [vmem:[#allocation3 + $0x70] sm:$0xff] %v3682
        %3725 = vst [vmem:[#allocation3 + $0x78] sm:$0xff] %v3683
        %3726 = vst [vmem:[#allocation3 + $0x80] sm:$0xff] %v3684
        %3727 = vst [vmem:[#allocation3 + $0x88] sm:$0xff] %v3685
        %3728 = vst [vmem:[#allocation3 + $0x90] sm:$0xff] %v3686
        %3729 = vst [vmem:[#allocation3 + $0x98] sm:$0xff] %v3687
        %3730 = vst [vmem:[#allocation3 + $0xa0] sm:$0xff] %v3688
        %3731 = vst [vmem:[#allocation3 + $0xa8] sm:$0xff] %v3689
        %3732 = vst [vmem:[#allocation3 + $0xb0] sm:$0xff] %v3690
        %3733 = vst [vmem:[#allocation3 + $0xb8] sm:$0xff] %v3691
        %3734 = vst [vmem:[#allocation3 + $0xc0] sm:$0xff] %v3692
        %3735 = vst [vmem:[#allocation3 + $0xc8] sm:$0xff] %v3693
        %3736 = vst [vmem:[#allocation3 + $0xd0] sm:$0xff] %v3694
        %3737 = vst [vmem:[#allocation3 + $0xd8] sm:$0xff] %v3695
        %3738 = vst [vmem:[#allocation3 + $0xe0] sm:$0xff] %v3696
        %3739 = vst [vmem:[#allocation3 + $0xe8] sm:$0xff] %v3697
        %3740 = vst [vmem:[#allocation3 + $0xf0] sm:$0xff] %v3698
        %3741 = vst [vmem:[#allocation3 + $0xf8] sm:$0xff] %v3699
        %3742 = vst [vmem:[#allocation3 + $0x100] sm:$0xff] %v3700
        %3743 = vst [vmem:[#allocation3 + $0x108] sm:$0xff] %v3701
        %3744 = vst [vmem:[#allocation3 + $0x110] sm:$0xff] %v3702
        %3745 = vst [vmem:[#allocation3 + $0x118] sm:$0xff] %v3703
        %3746 = vst [vmem:[#allocation3 + $0x120] sm:$0xff] %v3704
        %3747 = vst [vmem:[#allocation3 + $0x128] sm:$0xff] %v3705
        %3748 = vst [vmem:[#allocation3 + $0x130] sm:$0xff] %v3706
        %3749 = vst [vmem:[#allocation3 + $0x138] sm:$0xff] %v3707
        %3750 = vst [vmem:[#allocation3 + $0x140] sm:$0xff] %v3708
        %3751 = vst [vmem:[#allocation3 + $0x148] sm:$0xff] %v3709
        %v3752 = vld [vmem:[#allocation2 + $0x10] sm:$0xff]
        %v3753 = vld [vmem:[#allocation2 + $0x18] sm:$0xff]
        %v3754 = vld [vmem:[#allocation2 + $0x20] sm:$0xff]
        %v3755 = vld [vmem:[#allocation2 + $0x28] sm:$0xff]
        %v3756 = vld [vmem:[#allocation2 + $0x30] sm:$0xff]
        %v3757 = vld [vmem:[#allocation2 + $0x38] sm:$0xff]
        %v3758 = vld [vmem:[#allocation2 + $0x40] sm:$0xff]
        %v3759 = vld [vmem:[#allocation2 + $0x48] sm:$0xff]
        %v3760 = vld [vmem:[#allocation2 + $0x50] sm:$0xff]
        %v3761 = vld [vmem:[#allocation2 + $0x58] sm:$0xff]
        %v3762 = vld [vmem:[#allocation2 + $0x60] sm:$0xff]
        %v3763 = vld [vmem:[#allocation2 + $0x68] sm:$0xff]
        %v3764 = vld [vmem:[#allocation2 + $0x70] sm:$0xff]
        %v3765 = vld [vmem:[#allocation2 + $0x78] sm:$0xff]
        %v3766 = vld [vmem:[#allocation2 + $0x80] sm:$0xff]
        %v3767 = vld [vmem:[#allocation2 + $0x88] sm:$0xff]
        %v3768 = vld [vmem:[#allocation2 + $0x90] sm:$0xff]
        %v3769 = vld [vmem:[#allocation2 + $0x98] sm:$0xff]
        %v3770 = vld [vmem:[#allocation2 + $0xa0] sm:$0xff]
        %v3771 = vld [vmem:[#allocation2 + $0xa8] sm:$0xff]
        %v3772 = vld [vmem:[#allocation2 + $0xb0] sm:$0xff]
        %v3773 = vld [vmem:[#allocation9 + $0x100] sm:$0xf]
        %v3774 = vld [vmem:[#allocation9 + $0x104] sm:$0xf]
        %v3775 = vld [vmem:[#allocation9 + $0x108] sm:$0xf]
        %v3776 = vld [vmem:[#allocation9 + $0x10c] sm:$0xf]
        %v3777 = vld [vmem:[#allocation9 + $0x110] sm:$0xf]
        %v3778 = vld [vmem:[#allocation9 + $0x114] sm:$0xf]
        %v3779 = vld [vmem:[#allocation9 + $0x118] sm:$0xf]
        %v3780 = vld [vmem:[#allocation9 + $0x11c] sm:$0xf]
        %v3781 = vld [vmem:[#allocation9 + $0x120] sm:$0xf]
        %v3782 = vld [vmem:[#allocation9 + $0x124] sm:$0xf]
        %v3783 = vld [vmem:[#allocation9 + $0x128] sm:$0xf]
        %v3784 = vld [vmem:[#allocation9 + $0x12c] sm:$0xf]
        %v3785 = vld [vmem:[#allocation9 + $0x130] sm:$0xf]
        %v3786 = vld [vmem:[#allocation9 + $0x134] sm:$0xf]
        %v3787 = vld [vmem:[#allocation9 + $0x138] sm:$0xf]
        %v3788 = vld [vmem:[#allocation9 + $0x13c] sm:$0xf]
        %v3805 = vunpack.c.l.b16 %v3773
        %v3806 = vunpack.c.l.b16 %v3774
        %v3807 = vunpack.c.l.b16 %v3775
        %v3808 = vunpack.c.l.b16 %v3776
        %v3809 = vunpack.c.l.b16 %v3777
        %v3810 = vunpack.c.l.b16 %v3778
        %v3811 = vunpack.c.l.b16 %v3779
        %v3812 = vunpack.c.l.b16 %v3780
        %v3813 = vunpack.c.l.b16 %v3781
        %v3814 = vunpack.c.l.b16 %v3782
        %v3815 = vunpack.c.l.b16 %v3783
        %v3816 = vunpack.c.l.b16 %v3784
        %v3817 = vunpack.c.l.b16 %v3785
        %v3818 = vunpack.c.l.b16 %v3786
        %v3819 = vunpack.c.l.b16 %v3787
        %v3820 = vunpack.c.l.b16 %v3788
        %v3821 = vpack.c.b16 %v3806, %v3805
        %v3822 = vpack.c.b16 %v3808, %v3807
        %v3823 = vpack.c.b16 %v3810, %v3809
        %v3824 = vpack.c.b16 %v3812, %v3811
        %v3825 = vpack.c.b16 %v3814, %v3813
        %v3826 = vpack.c.b16 %v3816, %v3815
        %v3827 = vpack.c.b16 %v3818, %v3817
        %v3828 = vpack.c.b16 %v3820, %v3819
        %3837 = vmatprep.subr.bf16.mxu0 0
        %3838 = vmatpush1.bf16.msra.mxu0 %v3821
        %3839 = vmatprep.subr.bf16.mxu0 0
        %3840 = vmatpush1.bf16.msra.mxu0 %v3822
        %3841 = vmatprep.subr.bf16.mxu0 0
        %3842 = vmatpush1.bf16.msra.mxu0 %v3823
        %3843 = vmatprep.subr.bf16.mxu0 0
        %3844 = vmatpush1.bf16.msra.mxu0 %v3824
        %3845 = vmatprep.subr.bf16.mxu0 0
        %3846 = vmatpush1.bf16.msra.mxu0 %v3825
        %3847 = vmatprep.subr.bf16.mxu0 0
        %3848 = vmatpush1.bf16.msra.mxu0 %v3826
        %3849 = vmatprep.subr.bf16.mxu0 0
        %3850 = vmatpush1.bf16.msra.mxu0 %v3827
        %3851 = vmatprep.subr.bf16.mxu0 0
        %3852 = vmatpush1.bf16.msra.mxu0 %v3828
        %3853 = vmatprep.subr.bf16.mxu0 0
        %3854 = vmatpush1.bf16.msra.mxu0 0
        %3855 = vmatprep.subr.bf16.mxu0 0
        %3856 = vmatpush1.bf16.msra.mxu0 0
        %3857 = vmatprep.subr.bf16.mxu0 0
        %3858 = vmatpush1.bf16.msra.mxu0 0
        %3859 = vmatprep.subr.bf16.mxu0 0
        %3860 = vmatpush1.bf16.msra.mxu0 0
        %3861 = vmatprep.subr.bf16.mxu0 0
        %3862 = vmatpush1.bf16.msra.mxu0 0
        %3863 = vmatprep.subr.bf16.mxu0 0
        %3864 = vmatpush1.bf16.msra.mxu0 0
        %3865 = vmatprep.subr.bf16.mxu0 0
        %3866 = vmatpush1.bf16.msra.mxu0 0
        %3867 = vmatprep.subr.bf16.mxu0 0
        %3868 = vmatpush1.bf16.msra.mxu0 0
        %3869 = vmatprep.mubr.bf16.mxu0 0
        %3870 = vmatmul.mubr.bf16.gmra.mrb[0].mxu0 %v3752
        %v3871 = vpop.f32.mrb[0].mxu0
        %v3872 = vadd.f32 0.0, %v3871
        %v3873 = vpop.f32.mrb[0].mxu0
        %v3874 = vpop.f32.mrb[0].mxu0
        %v3875 = vadd.f32 0.0, %v3874
        %v3876 = vpop.f32.mrb[0].mxu0
        %3877 = vmatprep.mubr.bf16.mxu0 0
        %3878 = vmatmul.mubr.bf16.gmra.mrb[0].mxu0 %v3753
        %v3879 = vpop.f32.mrb[0].mxu0
        %v3880 = vadd.f32 0.0, %v3879
        %v3881 = vpop.f32.mrb[0].mxu0
        %v3882 = vpop.f32.mrb[0].mxu0
        %v3883 = vadd.f32 0.0, %v3882
        %v3884 = vpop.f32.mrb[0].mxu0
        %3885 = vmatprep.mubr.bf16.mxu0 0
        %3886 = vmatmul.mubr.bf16.gmra.mrb[0].mxu0 %v3754
        %v3887 = vpop.f32.mrb[0].mxu0
        %v3888 = vadd.f32 0.0, %v3887
        %v3889 = vpop.f32.mrb[0].mxu0
        %v3890 = vpop.f32.mrb[0].mxu0
        %v3891 = vadd.f32 0.0, %v3890
        %v3892 = vpop.f32.mrb[0].mxu0
        %3893 = vmatprep.mubr.bf16.mxu0 0
        %3894 = vmatmul.mubr.bf16.gmra.mrb[0].mxu0 %v3755
        %v3895 = vpop.f32.mrb[0].mxu0
        %v3896 = vadd.f32 0.0, %v3895
        %v3897 = vpop.f32.mrb[0].mxu0
        %v3898 = vpop.f32.mrb[0].mxu0
        %v3899 = vadd.f32 0.0, %v3898
        %v3900 = vpop.f32.mrb[0].mxu0
        %3901 = vmatprep.mubr.bf16.mxu0 0
        %3902 = vmatmul.mubr.bf16.gmra.mrb[0].mxu0 %v3756
        %v3903 = vpop.f32.mrb[0].mxu0
        %v3904 = vadd.f32 0.0, %v3903
        %v3905 = vpop.f32.mrb[0].mxu0
        %v3906 = vpop.f32.mrb[0].mxu0
        %v3907 = vadd.f32 0.0, %v3906
        %v3908 = vpop.f32.mrb[0].mxu0
        %3909 = vmatprep.mubr.bf16.mxu0 0
        %3910 = vmatmul.mubr.bf16.gmra.mrb[0].mxu0 %v3757
        %v3911 = vpop.f32.mrb[0].mxu0
        %v3912 = vadd.f32 0.0, %v3911
        %v3913 = vpop.f32.mrb[0].mxu0
        %v3914 = vpop.f32.mrb[0].mxu0
        %v3915 = vadd.f32 0.0, %v3914
        %v3916 = vpop.f32.mrb[0].mxu0
        %3917 = vmatprep.mubr.bf16.mxu0 0
        %3918 = vmatmul.mubr.bf16.gmra.mrb[0].mxu0 %v3758
        %v3919 = vpop.f32.mrb[0].mxu0
        %v3920 = vadd.f32 0.0, %v3919
        %v3921 = vpop.f32.mrb[0].mxu0
        %v3922 = vpop.f32.mrb[0].mxu0
        %v3923 = vadd.f32 0.0, %v3922
        %v3924 = vpop.f32.mrb[0].mxu0
        %3925 = vmatprep.mubr.bf16.mxu0 0
        %3926 = vmatmul.mubr.bf16.gmra.mrb[0].mxu0 %v3759
        %v3927 = vpop.f32.mrb[0].mxu0
        %v3928 = vadd.f32 0.0, %v3927
        %v3929 = vpop.f32.mrb[0].mxu0
        %v3930 = vpop.f32.mrb[0].mxu0
        %v3931 = vadd.f32 0.0, %v3930
        %v3932 = vpop.f32.mrb[0].mxu0
        %3933 = vmatprep.mubr.bf16.mxu0 0
        %3934 = vmatmul.mubr.bf16.gmra.mrb[0].mxu0 %v3760
        %v3935 = vpop.f32.mrb[0].mxu0
        %v3936 = vadd.f32 0.0, %v3935
        %v3937 = vpop.f32.mrb[0].mxu0
        %v3938 = vpop.f32.mrb[0].mxu0
        %v3939 = vadd.f32 0.0, %v3938
        %v3940 = vpop.f32.mrb[0].mxu0
        %3941 = vmatprep.mubr.bf16.mxu0 0
        %3942 = vmatmul.mubr.bf16.gmra.mrb[0].mxu0 %v3761
        %v3943 = vpop.f32.mrb[0].mxu0
        %v3944 = vadd.f32 0.0, %v3943
        %v3945 = vpop.f32.mrb[0].mxu0
        %v3946 = vpop.f32.mrb[0].mxu0
        %v3947 = vadd.f32 0.0, %v3946
        %v3948 = vpop.f32.mrb[0].mxu0
        %3949 = vmatprep.mubr.bf16.mxu0 0
        %3950 = vmatmul.mubr.bf16.gmra.mrb[0].mxu0 %v3762
        %v3951 = vpop.f32.mrb[0].mxu0
        %v3952 = vadd.f32 0.0, %v3951
        %v3953 = vpop.f32.mrb[0].mxu0
        %v3954 = vpop.f32.mrb[0].mxu0
        %v3955 = vadd.f32 0.0, %v3954
        %v3956 = vpop.f32.mrb[0].mxu0
        %3957 = vmatprep.mubr.bf16.mxu0 0
        %3958 = vmatmul.mubr.bf16.gmra.mrb[0].mxu0 %v3763
        %v3959 = vpop.f32.mrb[0].mxu0
        %v3960 = vadd.f32 0.0, %v3959
        %v3961 = vpop.f32.mrb[0].mxu0
        %v3962 = vpop.f32.mrb[0].mxu0
        %v3963 = vadd.f32 0.0, %v3962
        %v3964 = vpop.f32.mrb[0].mxu0
        %3965 = vmatprep.mubr.bf16.mxu0 0
        %3966 = vmatmul.mubr.bf16.gmra.mrb[0].mxu0 %v3764
        %v3967 = vpop.f32.mrb[0].mxu0
        %v3968 = vadd.f32 0.0, %v3967
        %v3969 = vpop.f32.mrb[0].mxu0
        %v3970 = vpop.f32.mrb[0].mxu0
        %v3971 = vadd.f32 0.0, %v3970
        %v3972 = vpop.f32.mrb[0].mxu0
        %3973 = vmatprep.mubr.bf16.mxu0 0
        %3974 = vmatmul.mubr.bf16.gmra.mrb[0].mxu0 %v3765
        %v3975 = vpop.f32.mrb[0].mxu0
        %v3976 = vadd.f32 0.0, %v3975
        %v3977 = vpop.f32.mrb[0].mxu0
        %v3978 = vpop.f32.mrb[0].mxu0
        %v3979 = vadd.f32 0.0, %v3978
        %v3980 = vpop.f32.mrb[0].mxu0
        %3981 = vmatprep.mubr.bf16.mxu0 0
        %3982 = vmatmul.mubr.bf16.gmra.mrb[0].mxu0 %v3766
        %v3983 = vpop.f32.mrb[0].mxu0
        %v3984 = vadd.f32 0.0, %v3983
        %v3985 = vpop.f32.mrb[0].mxu0
        %v3986 = vpop.f32.mrb[0].mxu0
        %v3987 = vadd.f32 0.0, %v3986
        %v3988 = vpop.f32.mrb[0].mxu0
        %3989 = vmatprep.mubr.bf16.mxu0 0
        %3990 = vmatmul.mubr.bf16.gmra.mrb[0].mxu0 %v3767
        %v3991 = vpop.f32.mrb[0].mxu0
        %v3992 = vadd.f32 0.0, %v3991
        %v3993 = vpop.f32.mrb[0].mxu0
        %v3994 = vpop.f32.mrb[0].mxu0
        %v3995 = vadd.f32 0.0, %v3994
        %v3996 = vpop.f32.mrb[0].mxu0
        %3997 = vmatprep.mubr.bf16.mxu0 0
        %3998 = vmatmul.mubr.bf16.gmra.mrb[0].mxu0 %v3768
        %v3999 = vpop.f32.mrb[0].mxu0
        %v4000 = vadd.f32 0.0, %v3999
        %v4001 = vpop.f32.mrb[0].mxu0
        %v4002 = vpop.f32.mrb[0].mxu0
        %v4003 = vadd.f32 0.0, %v4002
        %v4004 = vpop.f32.mrb[0].mxu0
        %4005 = vmatprep.mubr.bf16.mxu0 0
        %4006 = vmatmul.mubr.bf16.gmra.mrb[0].mxu0 %v3769
        %v4007 = vpop.f32.mrb[0].mxu0
        %v4008 = vadd.f32 0.0, %v4007
        %v4009 = vpop.f32.mrb[0].mxu0
        %v4010 = vpop.f32.mrb[0].mxu0
        %v4011 = vadd.f32 0.0, %v4010
        %v4012 = vpop.f32.mrb[0].mxu0
        %4013 = vmatprep.mubr.bf16.mxu0 0
        %4014 = vmatmul.mubr.bf16.gmra.mrb[0].mxu0 %v3770
        %v4015 = vpop.f32.mrb[0].mxu0
        %v4016 = vadd.f32 0.0, %v4015
        %v4017 = vpop.f32.mrb[0].mxu0
        %v4018 = vpop.f32.mrb[0].mxu0
        %v4019 = vadd.f32 0.0, %v4018
        %v4020 = vpop.f32.mrb[0].mxu0
        %4021 = vmatprep.mubr.bf16.mxu0 0
        %4022 = vmatmul.mubr.bf16.gmra.mrb[0].mxu0 %v3771
        %v4023 = vpop.f32.mrb[0].mxu0
        %v4024 = vadd.f32 0.0, %v4023
        %v4025 = vpop.f32.mrb[0].mxu0
        %v4026 = vpop.f32.mrb[0].mxu0
        %v4027 = vadd.f32 0.0, %v4026
        %v4028 = vpop.f32.mrb[0].mxu0
        %4029 = vmatprep.mubr.bf16.mxu0 0
        %4030 = vmatmul.mubr.bf16.gmra.mrb[0].mxu0 %v3772
        %v4031 = vpop.f32.mrb[0].mxu0
        %v4032 = vadd.f32 0.0, %v4031
        %v4033 = vpop.f32.mrb[0].mxu0
        %v4034 = vpop.f32.mrb[0].mxu0
        %v4035 = vadd.f32 0.0, %v4034
        %v4036 = vpop.f32.mrb[0].mxu0
        %4037 = vdwg.mxu0
        %v4038 = vld [vmem:[#allocation3] sm:$0xff]
        %v4039 = vld [vmem:[#allocation3 + $0x8] sm:$0xff]
        %v4040 = vld [vmem:[#allocation3 + $0x10] sm:$0xff]
        %v4041 = vld [vmem:[#allocation3 + $0x18] sm:$0xff]
        %v4042 = vld [vmem:[#allocation3 + $0x20] sm:$0xff]
        %v4043 = vld [vmem:[#allocation3 + $0x28] sm:$0xff]
        %v4044 = vld [vmem:[#allocation3 + $0x30] sm:$0xff]
        %v4045 = vld [vmem:[#allocation3 + $0x38] sm:$0xff]
        %v4046 = vld [vmem:[#allocation3 + $0x40] sm:$0xff]
        %v4047 = vld [vmem:[#allocation3 + $0x48] sm:$0xff]
        %v4048 = vld [vmem:[#allocation3 + $0x50] sm:$0xff]
        %v4049 = vld [vmem:[#allocation3 + $0x58] sm:$0xff]
        %v4050 = vld [vmem:[#allocation3 + $0x60] sm:$0xff]
        %v4051 = vld [vmem:[#allocation3 + $0x68] sm:$0xff]
        %v4052 = vld [vmem:[#allocation3 + $0x70] sm:$0xff]
        %v4053 = vld [vmem:[#allocation3 + $0x78] sm:$0xff]
        %v4054 = vld [vmem:[#allocation3 + $0x80] sm:$0xff]
        %v4055 = vld [vmem:[#allocation3 + $0x88] sm:$0xff]
        %v4056 = vld [vmem:[#allocation3 + $0x90] sm:$0xff]
        %v4057 = vld [vmem:[#allocation3 + $0x98] sm:$0xff]
        %v4058 = vld [vmem:[#allocation3 + $0xa0] sm:$0xff]
        %v4059 = vld [vmem:[#allocation3 + $0xa8] sm:$0xff]
        %v4060 = vld [vmem:[#allocation3 + $0xb0] sm:$0xff]
        %v4061 = vld [vmem:[#allocation3 + $0xb8] sm:$0xff]
        %v4062 = vld [vmem:[#allocation3 + $0xc0] sm:$0xff]
        %v4063 = vld [vmem:[#allocation3 + $0xc8] sm:$0xff]
        %v4064 = vld [vmem:[#allocation3 + $0xd0] sm:$0xff]
        %v4065 = vld [vmem:[#allocation3 + $0xd8] sm:$0xff]
        %v4066 = vld [vmem:[#allocation3 + $0xe0] sm:$0xff]
        %v4067 = vld [vmem:[#allocation3 + $0xe8] sm:$0xff]
        %v4068 = vld [vmem:[#allocation3 + $0xf0] sm:$0xff]
        %v4069 = vld [vmem:[#allocation3 + $0xf8] sm:$0xff]
        %v4070 = vld [vmem:[#allocation3 + $0x100] sm:$0xff]
        %v4071 = vld [vmem:[#allocation3 + $0x108] sm:$0xff]
        %v4072 = vld [vmem:[#allocation3 + $0x110] sm:$0xff]
        %v4073 = vld [vmem:[#allocation3 + $0x118] sm:$0xff]
        %v4074 = vld [vmem:[#allocation3 + $0x120] sm:$0xff]
        %v4075 = vld [vmem:[#allocation3 + $0x128] sm:$0xff]
        %v4076 = vld [vmem:[#allocation3 + $0x130] sm:$0xff]
        %v4077 = vld [vmem:[#allocation3 + $0x138] sm:$0xff]
        %v4078 = vld [vmem:[#allocation3 + $0x140] sm:$0xff]
        %v4079 = vld [vmem:[#allocation3 + $0x148] sm:$0xff]
        %v4080 = vadd.f32 %v4038, %v3872
        %v4081 = vadd.f32 %v4039, %v3875
        %v4082 = vadd.f32 %v4040, %v3880
        %v4083 = vadd.f32 %v4041, %v3883
        %v4084 = vadd.f32 %v4042, %v3888
        %v4085 = vadd.f32 %v4043, %v3891
        %v4086 = vadd.f32 %v4044, %v3896
        %v4087 = vadd.f32 %v4045, %v3899
        %v4088 = vadd.f32 %v4046, %v3904
        %v4089 = vadd.f32 %v4047, %v3907
        %v4090 = vadd.f32 %v4048, %v3912
        %v4091 = vadd.f32 %v4049, %v3915
        %v4092 = vadd.f32 %v4050, %v3920
        %v4093 = vadd.f32 %v4051, %v3923
        %v4094 = vadd.f32 %v4052, %v3928
        %v4095 = vadd.f32 %v4053, %v3931
        %v4096 = vadd.f32 %v4054, %v3936
        %v4097 = vadd.f32 %v4055, %v3939
        %v4098 = vadd.f32 %v4056, %v3944
        %v4099 = vadd.f32 %v4057, %v3947
        %v4100 = vadd.f32 %v4058, %v3952
        %v4101 = vadd.f32 %v4059, %v3955
        %v4102 = vadd.f32 %v4060, %v3960
        %v4103 = vadd.f32 %v4061, %v3963
        %v4104 = vadd.f32 %v4062, %v3968
        %v4105 = vadd.f32 %v4063, %v3971
        %v4106 = vadd.f32 %v4064, %v3976
        %v4107 = vadd.f32 %v4065, %v3979
        %v4108 = vadd.f32 %v4066, %v3984
        %v4109 = vadd.f32 %v4067, %v3987
        %v4110 = vadd.f32 %v4068, %v3992
        %v4111 = vadd.f32 %v4069, %v3995
        %v4112 = vadd.f32 %v4070, %v4000
        %v4113 = vadd.f32 %v4071, %v4003
        %v4114 = vadd.f32 %v4072, %v4008
        %v4115 = vadd.f32 %v4073, %v4011
        %v4116 = vadd.f32 %v4074, %v4016
        %v4117 = vadd.f32 %v4075, %v4019
        %v4118 = vadd.f32 %v4076, %v4024
        %v4119 = vadd.f32 %v4077, %v4027
        %v4120 = vadd.f32 %v4078, %v4032
        %v4121 = vadd.f32 %v4079, %v4035
        %4122 = vst [vmem:[#allocation3] sm:$0xff] %v4080
        %4123 = vst [vmem:[#allocation3 + $0x8] sm:$0xff] %v4081
        %4124 = vst [vmem:[#allocation3 + $0x10] sm:$0xff] %v4082
        %4125 = vst [vmem:[#allocation3 + $0x18] sm:$0xff] %v4083
        %4126 = vst [vmem:[#allocation3 + $0x20] sm:$0xff] %v4084
        %4127 = vst [vmem:[#allocation3 + $0x28] sm:$0xff] %v4085
        %4128 = vst [vmem:[#allocation3 + $0x30] sm:$0xff] %v4086
        %4129 = vst [vmem:[#allocation3 + $0x38] sm:$0xff] %v4087
        %4130 = vst [vmem:[#allocation3 + $0x40] sm:$0xff] %v4088
        %4131 = vst [vmem:[#allocation3 + $0x48] sm:$0xff] %v4089
        %4132 = vst [vmem:[#allocation3 + $0x50] sm:$0xff] %v4090
        %4133 = vst [vmem:[#allocation3 + $0x58] sm:$0xff] %v4091
        %4134 = vst [vmem:[#allocation3 + $0x60] sm:$0xff] %v4092
        %4135 = vst [vmem:[#allocation3 + $0x68] sm:$0xff] %v4093
        %4136 = vst [vmem:[#allocation3 + $0x70] sm:$0xff] %v4094
        %4137 = vst [vmem:[#allocation3 + $0x78] sm:$0xff] %v4095
        %4138 = vst [vmem:[#allocation3 + $0x80] sm:$0xff] %v4096
        %4139 = vst [vmem:[#allocation3 + $0x88] sm:$0xff] %v4097
        %4140 = vst [vmem:[#allocation3 + $0x90] sm:$0xff] %v4098
        %4141 = vst [vmem:[#allocation3 + $0x98] sm:$0xff] %v4099
        %4142 = vst [vmem:[#allocation3 + $0xa0] sm:$0xff] %v4100
        %4143 = vst [vmem:[#allocation3 + $0xa8] sm:$0xff] %v4101
        %4144 = vst [vmem:[#allocation3 + $0xb0] sm:$0xff] %v4102
        %4145 = vst [vmem:[#allocation3 + $0xb8] sm:$0xff] %v4103
        %4146 = vst [vmem:[#allocation3 + $0xc0] sm:$0xff] %v4104
        %4147 = vst [vmem:[#allocation3 + $0xc8] sm:$0xff] %v4105
        %4148 = vst [vmem:[#allocation3 + $0xd0] sm:$0xff] %v4106
        %4149 = vst [vmem:[#allocation3 + $0xd8] sm:$0xff] %v4107
        %4150 = vst [vmem:[#allocation3 + $0xe0] sm:$0xff] %v4108
        %4151 = vst [vmem:[#allocation3 + $0xe8] sm:$0xff] %v4109
        %4152 = vst [vmem:[#allocation3 + $0xf0] sm:$0xff] %v4110
        %4153 = vst [vmem:[#allocation3 + $0xf8] sm:$0xff] %v4111
        %4154 = vst [vmem:[#allocation3 + $0x100] sm:$0xff] %v4112
        %4155 = vst [vmem:[#allocation3 + $0x108] sm:$0xff] %v4113
        %4156 = vst [vmem:[#allocation3 + $0x110] sm:$0xff] %v4114
        %4157 = vst [vmem:[#allocation3 + $0x118] sm:$0xff] %v4115
        %4158 = vst [vmem:[#allocation3 + $0x120] sm:$0xff] %v4116
        %4159 = vst [vmem:[#allocation3 + $0x128] sm:$0xff] %v4117
        %4160 = vst [vmem:[#allocation3 + $0x130] sm:$0xff] %v4118
        %4161 = vst [vmem:[#allocation3 + $0x138] sm:$0xff] %v4119
        %4162 = vst [vmem:[#allocation3 + $0x140] sm:$0xff] %v4120
        %4163 = vst [vmem:[#allocation3 + $0x148] sm:$0xff] %v4121
        %v4164 = vld [vmem:[#allocation2 + $0x10] sm:$0xff]
        %v4165 = vld [vmem:[#allocation2 + $0x18] sm:$0xff]
        %v4166 = vld [vmem:[#allocation2 + $0x20] sm:$0xff]
        %v4167 = vld [vmem:[#allocation2 + $0x28] sm:$0xff]
        %v4168 = vld [vmem:[#allocation2 + $0x30] sm:$0xff]
        %v4169 = vld [vmem:[#allocation2 + $0x38] sm:$0xff]
        %v4170 = vld [vmem:[#allocation2 + $0x40] sm:$0xff]
        %v4171 = vld [vmem:[#allocation2 + $0x48] sm:$0xff]
        %v4172 = vld [vmem:[#allocation2 + $0x50] sm:$0xff]
        %v4173 = vld [vmem:[#allocation2 + $0x58] sm:$0xff]
        %v4174 = vld [vmem:[#allocation2 + $0x60] sm:$0xff]
        %v4175 = vld [vmem:[#allocation2 + $0x68] sm:$0xff]
        %v4176 = vld [vmem:[#allocation2 + $0x70] sm:$0xff]
        %v4177 = vld [vmem:[#allocation2 + $0x78] sm:$0xff]
        %v4178 = vld [vmem:[#allocation2 + $0x80] sm:$0xff]
        %v4179 = vld [vmem:[#allocation2 + $0x88] sm:$0xff]
        %v4180 = vld [vmem:[#allocation2 + $0x90] sm:$0xff]
        %v4181 = vld [vmem:[#allocation2 + $0x98] sm:$0xff]
        %v4182 = vld [vmem:[#allocation2 + $0xa0] sm:$0xff]
        %v4183 = vld [vmem:[#allocation2 + $0xa8] sm:$0xff]
        %v4184 = vld [vmem:[#allocation2 + $0xb0] sm:$0xff]
        %v4185 = vld [vmem:[#allocation2 + $0xb8] sm:$0x1]
        %v4186 = vld [vmem:[#allocation9 + $0x140] sm:$0xf]
        %v4187 = vld [vmem:[#allocation9 + $0x144] sm:$0xf]
        %v4188 = vld [vmem:[#allocation9 + $0x148] sm:$0xf]
        %v4189 = vld [vmem:[#allocation9 + $0x14c] sm:$0xf]
        %v4190 = vld [vmem:[#allocation9 + $0x150] sm:$0xf]
        %v4191 = vld [vmem:[#allocation9 + $0x154] sm:$0xf]
        %v4192 = vld [vmem:[#allocation9 + $0x158] sm:$0xf]
        %v4193 = vld [vmem:[#allocation9 + $0x15c] sm:$0xf]
        %v4194 = vld [vmem:[#allocation9 + $0x160] sm:$0xf]
        %v4195 = vld [vmem:[#allocation9 + $0x164] sm:$0xf]
        %v4196 = vld [vmem:[#allocation9 + $0x168] sm:$0xf]
        %v4197 = vld [vmem:[#allocation9 + $0x16c] sm:$0xf]
        %v4198 = vld [vmem:[#allocation9 + $0x170] sm:$0xf]
        %v4199 = vld [vmem:[#allocation9 + $0x174] sm:$0xf]
        %v4200 = vld [vmem:[#allocation9 + $0x178] sm:$0xf]
        %v4201 = vld [vmem:[#allocation9 + $0x17c] sm:$0xf]
        %vm4202 = vsmask.f32 7424
        %v4204 = vshrl.u32 %v4164, 16
        %v4206 = vshll.u32 %v4164, 16
        %v4208 = vrot.slane %v4206, 1
        %v4209 = vor.u32 %v4204, %v4208
        %v4211 = vshll.u32 %v4165, 16
        %v4213 = vrot.slane %v4211, 1
        %v4214 = vsel %vm4202, %v4209, %v4213
        %v4215 = vshrl.u32 %v4165, 16
        %v4217 = vor.u32 %v4215, %v4213
        %v4219 = vshll.u32 %v4166, 16
        %v4221 = vrot.slane %v4219, 1
        %v4222 = vsel %vm4202, %v4217, %v4221
        %v4223 = vshrl.u32 %v4166, 16
        %v4225 = vor.u32 %v4223, %v4221
        %v4227 = vshll.u32 %v4167, 16
        %v4229 = vrot.slane %v4227, 1
        %v4230 = vsel %vm4202, %v4225, %v4229
        %v4231 = vshrl.u32 %v4167, 16
        %v4233 = vor.u32 %v4231, %v4229
        %v4235 = vshll.u32 %v4168, 16
        %v4237 = vrot.slane %v4235, 1
        %v4238 = vsel %vm4202, %v4233, %v4237
        %v4239 = vshrl.u32 %v4168, 16
        %v4241 = vor.u32 %v4239, %v4237
        %v4243 = vshll.u32 %v4169, 16
        %v4245 = vrot.slane %v4243, 1
        %v4246 = vsel %vm4202, %v4241, %v4245
        %v4247 = vshrl.u32 %v4169, 16
        %v4249 = vor.u32 %v4247, %v4245
        %v4251 = vshll.u32 %v4170, 16
        %v4253 = vrot.slane %v4251, 1
        %v4254 = vsel %vm4202, %v4249, %v4253
        %v4255 = vshrl.u32 %v4170, 16
        %v4257 = vor.u32 %v4255, %v4253
        %v4259 = vshll.u32 %v4171, 16
        %v4261 = vrot.slane %v4259, 1
        %v4262 = vsel %vm4202, %v4257, %v4261
        %v4263 = vshrl.u32 %v4171, 16
        %v4265 = vor.u32 %v4263, %v4261
        %v4267 = vshll.u32 %v4172, 16
        %v4269 = vrot.slane %v4267, 1
        %v4270 = vsel %vm4202, %v4265, %v4269
        %v4271 = vshrl.u32 %v4172, 16
        %v4273 = vor.u32 %v4271, %v4269
        %v4275 = vshll.u32 %v4173, 16
        %v4277 = vrot.slane %v4275, 1
        %v4278 = vsel %vm4202, %v4273, %v4277
        %v4279 = vshrl.u32 %v4173, 16
        %v4281 = vor.u32 %v4279, %v4277
        %v4283 = vshll.u32 %v4174, 16
        %v4285 = vrot.slane %v4283, 1
        %v4286 = vsel %vm4202, %v4281, %v4285
        %v4287 = vshrl.u32 %v4174, 16
        %v4289 = vor.u32 %v4287, %v4285
        %v4291 = vshll.u32 %v4175, 16
        %v4293 = vrot.slane %v4291, 1
        %v4294 = vsel %vm4202, %v4289, %v4293
        %v4295 = vshrl.u32 %v4175, 16
        %v4297 = vor.u32 %v4295, %v4293
        %v4299 = vshll.u32 %v4176, 16
        %v4301 = vrot.slane %v4299, 1
        %v4302 = vsel %vm4202, %v4297, %v4301
        %v4303 = vshrl.u32 %v4176, 16
        %v4305 = vor.u32 %v4303, %v4301
        %v4307 = vshll.u32 %v4177, 16
        %v4309 = vrot.slane %v4307, 1
        %v4310 = vsel %vm4202, %v4305, %v4309
        %v4311 = vshrl.u32 %v4177, 16
        %v4313 = vor.u32 %v4311, %v4309
        %v4315 = vshll.u32 %v4178, 16
        %v4317 = vrot.slane %v4315, 1
        %v4318 = vsel %vm4202, %v4313, %v4317
        %v4319 = vshrl.u32 %v4178, 16
        %v4321 = vor.u32 %v4319, %v4317
        %v4323 = vshll.u32 %v4179, 16
        %v4325 = vrot.slane %v4323, 1
        %v4326 = vsel %vm4202, %v4321, %v4325
        %v4327 = vshrl.u32 %v4179, 16
        %v4329 = vor.u32 %v4327, %v4325
        %v4331 = vshll.u32 %v4180, 16
        %v4333 = vrot.slane %v4331, 1
        %v4334 = vsel %vm4202, %v4329, %v4333
        %v4335 = vshrl.u32 %v4180, 16
        %v4337 = vor.u32 %v4335, %v4333
        %v4339 = vshll.u32 %v4181, 16
        %v4341 = vrot.slane %v4339, 1
        %v4342 = vsel %vm4202, %v4337, %v4341
        %v4343 = vshrl.u32 %v4181, 16
        %v4345 = vor.u32 %v4343, %v4341
        %v4347 = vshll.u32 %v4182, 16
        %v4349 = vrot.slane %v4347, 1
        %v4350 = vsel %vm4202, %v4345, %v4349
        %v4351 = vshrl.u32 %v4182, 16
        %v4353 = vor.u32 %v4351, %v4349
        %v4355 = vshll.u32 %v4183, 16
        %v4357 = vrot.slane %v4355, 1
        %v4358 = vsel %vm4202, %v4353, %v4357
        %v4359 = vshrl.u32 %v4183, 16
        %v4361 = vor.u32 %v4359, %v4357
        %v4363 = vshll.u32 %v4184, 16
        %v4365 = vrot.slane %v4363, 1
        %v4366 = vsel %vm4202, %v4361, %v4365
        %v4367 = vshrl.u32 %v4184, 16
        %v4369 = vor.u32 %v4367, %v4365
        %v4371 = vshll.u32 %v4185, 16
        %v4373 = vrot.slane %v4371, 1
        %v4374 = vsel %vm4202, %v4369, %v4373
        %v4412 = vunpack.c.l.b16 %v4186
        %v4413 = vunpack.c.l.b16 %v4187
        %v4414 = vunpack.c.l.b16 %v4188
        %v4415 = vunpack.c.l.b16 %v4189
        %v4416 = vunpack.c.l.b16 %v4190
        %v4417 = vunpack.c.l.b16 %v4191
        %v4418 = vunpack.c.l.b16 %v4192
        %v4419 = vunpack.c.l.b16 %v4193
        %v4420 = vunpack.c.l.b16 %v4194
        %v4421 = vunpack.c.l.b16 %v4195
        %v4422 = vunpack.c.l.b16 %v4196
        %v4423 = vunpack.c.l.b16 %v4197
        %v4424 = vunpack.c.l.b16 %v4198
        %v4425 = vunpack.c.l.b16 %v4199
        %v4426 = vunpack.c.l.b16 %v4200
        %v4427 = vunpack.c.l.b16 %v4201
        %v4428 = vpack.c.b16 %v4413, %v4412
        %v4429 = vpack.c.b16 %v4415, %v4414
        %v4430 = vpack.c.b16 %v4417, %v4416
        %v4431 = vpack.c.b16 %v4419, %v4418
        %v4432 = vpack.c.b16 %v4421, %v4420
        %v4433 = vpack.c.b16 %v4423, %v4422
        %v4434 = vpack.c.b16 %v4425, %v4424
        %v4435 = vpack.c.b16 %v4427, %v4426
        %4444 = vmatprep.subr.bf16.mxu0 0
        %4445 = vmatpush1.bf16.msra.mxu0 %v4428
        %4446 = vmatprep.subr.bf16.mxu0 0
        %4447 = vmatpush1.bf16.msra.mxu0 %v4429
        %4448 = vmatprep.subr.bf16.mxu0 0
        %4449 = vmatpush1.bf16.msra.mxu0 %v4430
        %4450 = vmatprep.subr.bf16.mxu0 0
        %4451 = vmatpush1.bf16.msra.mxu0 %v4431
        %4452 = vmatprep.subr.bf16.mxu0 0
        %4453 = vmatpush1.bf16.msra.mxu0 %v4432
        %4454 = vmatprep.subr.bf16.mxu0 0
        %4455 = vmatpush1.bf16.msra.mxu0 %v4433
        %4456 = vmatprep.subr.bf16.mxu0 0
        %4457 = vmatpush1.bf16.msra.mxu0 %v4434
        %4458 = vmatprep.subr.bf16.mxu0 0
        %4459 = vmatpush1.bf16.msra.mxu0 %v4435
        %4460 = vmatprep.subr.bf16.mxu0 0
        %4461 = vmatpush1.bf16.msra.mxu0 0
        %4462 = vmatprep.subr.bf16.mxu0 0
        %4463 = vmatpush1.bf16.msra.mxu0 0
        %4464 = vmatprep.subr.bf16.mxu0 0
        %4465 = vmatpush1.bf16.msra.mxu0 0
        %4466 = vmatprep.subr.bf16.mxu0 0
        %4467 = vmatpush1.bf16.msra.mxu0 0
        %4468 = vmatprep.subr.bf16.mxu0 0
        %4469 = vmatpush1.bf16.msra.mxu0 0
        %4470 = vmatprep.subr.bf16.mxu0 0
        %4471 = vmatpush1.bf16.msra.mxu0 0
        %4472 = vmatprep.subr.bf16.mxu0 0
        %4473 = vmatpush1.bf16.msra.mxu0 0
        %4474 = vmatprep.subr.bf16.mxu0 0
        %4475 = vmatpush1.bf16.msra.mxu0 0
        %4476 = vmatprep.mubr.bf16.mxu0 0
        %4477 = vmatmul.mubr.bf16.gmra.mrb[0].mxu0 %v4214
        %v4478 = vpop.f32.mrb[0].mxu0
        %v4479 = vadd.f32 0.0, %v4478
        %v4480 = vpop.f32.mrb[0].mxu0
        %v4481 = vpop.f32.mrb[0].mxu0
        %v4482 = vadd.f32 0.0, %v4481
        %v4483 = vpop.f32.mrb[0].mxu0
        %4484 = vmatprep.mubr.bf16.mxu0 0
        %4485 = vmatmul.mubr.bf16.gmra.mrb[0].mxu0 %v4222
        %v4486 = vpop.f32.mrb[0].mxu0
        %v4487 = vadd.f32 0.0, %v4486
        %v4488 = vpop.f32.mrb[0].mxu0
        %v4489 = vpop.f32.mrb[0].mxu0
        %v4490 = vadd.f32 0.0, %v4489
        %v4491 = vpop.f32.mrb[0].mxu0
        %4492 = vmatprep.mubr.bf16.mxu0 0
        %4493 = vmatmul.mubr.bf16.gmra.mrb[0].mxu0 %v4230
        %v4494 = vpop.f32.mrb[0].mxu0
        %v4495 = vadd.f32 0.0, %v4494
        %v4496 = vpop.f32.mrb[0].mxu0
        %v4497 = vpop.f32.mrb[0].mxu0
        %v4498 = vadd.f32 0.0, %v4497
        %v4499 = vpop.f32.mrb[0].mxu0
        %4500 = vmatprep.mubr.bf16.mxu0 0
        %4501 = vmatmul.mubr.bf16.gmra.mrb[0].mxu0 %v4238
        %v4502 = vpop.f32.mrb[0].mxu0
        %v4503 = vadd.f32 0.0, %v4502
        %v4504 = vpop.f32.mrb[0].mxu0
        %v4505 = vpop.f32.mrb[0].mxu0
        %v4506 = vadd.f32 0.0, %v4505
        %v4507 = vpop.f32.mrb[0].mxu0
        %4508 = vmatprep.mubr.bf16.mxu0 0
        %4509 = vmatmul.mubr.bf16.gmra.mrb[0].mxu0 %v4246
        %v4510 = vpop.f32.mrb[0].mxu0
        %v4511 = vadd.f32 0.0, %v4510
        %v4512 = vpop.f32.mrb[0].mxu0
        %v4513 = vpop.f32.mrb[0].mxu0
        %v4514 = vadd.f32 0.0, %v4513
        %v4515 = vpop.f32.mrb[0].mxu0
        %4516 = vmatprep.mubr.bf16.mxu0 0
        %4517 = vmatmul.mubr.bf16.gmra.mrb[0].mxu0 %v4254
        %v4518 = vpop.f32.mrb[0].mxu0
        %v4519 = vadd.f32 0.0, %v4518
        %v4520 = vpop.f32.mrb[0].mxu0
        %v4521 = vpop.f32.mrb[0].mxu0
        %v4522 = vadd.f32 0.0, %v4521
        %v4523 = vpop.f32.mrb[0].mxu0
        %4524 = vmatprep.mubr.bf16.mxu0 0
        %4525 = vmatmul.mubr.bf16.gmra.mrb[0].mxu0 %v4262
        %v4526 = vpop.f32.mrb[0].mxu0
        %v4527 = vadd.f32 0.0, %v4526
        %v4528 = vpop.f32.mrb[0].mxu0
        %v4529 = vpop.f32.mrb[0].mxu0
        %v4530 = vadd.f32 0.0, %v4529
        %v4531 = vpop.f32.mrb[0].mxu0
        %4532 = vmatprep.mubr.bf16.mxu0 0
        %4533 = vmatmul.mubr.bf16.gmra.mrb[0].mxu0 %v4270
        %v4534 = vpop.f32.mrb[0].mxu0
        %v4535 = vadd.f32 0.0, %v4534
        %v4536 = vpop.f32.mrb[0].mxu0
        %v4537 = vpop.f32.mrb[0].mxu0
        %v4538 = vadd.f32 0.0, %v4537
        %v4539 = vpop.f32.mrb[0].mxu0
        %4540 = vmatprep.mubr.bf16.mxu0 0
        %4541 = vmatmul.mubr.bf16.gmra.mrb[0].mxu0 %v4278
        %v4542 = vpop.f32.mrb[0].mxu0
        %v4543 = vadd.f32 0.0, %v4542
        %v4544 = vpop.f32.mrb[0].mxu0
        %v4545 = vpop.f32.mrb[0].mxu0
        %v4546 = vadd.f32 0.0, %v4545
        %v4547 = vpop.f32.mrb[0].mxu0
        %4548 = vmatprep.mubr.bf16.mxu0 0
        %4549 = vmatmul.mubr.bf16.gmra.mrb[0].mxu0 %v4286
        %v4550 = vpop.f32.mrb[0].mxu0
        %v4551 = vadd.f32 0.0, %v4550
        %v4552 = vpop.f32.mrb[0].mxu0
        %v4553 = vpop.f32.mrb[0].mxu0
        %v4554 = vadd.f32 0.0, %v4553
        %v4555 = vpop.f32.mrb[0].mxu0
        %4556 = vmatprep.mubr.bf16.mxu0 0
        %4557 = vmatmul.mubr.bf16.gmra.mrb[0].mxu0 %v4294
        %v4558 = vpop.f32.mrb[0].mxu0
        %v4559 = vadd.f32 0.0, %v4558
        %v4560 = vpop.f32.mrb[0].mxu0
        %v4561 = vpop.f32.mrb[0].mxu0
        %v4562 = vadd.f32 0.0, %v4561
        %v4563 = vpop.f32.mrb[0].mxu0
        %4564 = vmatprep.mubr.bf16.mxu0 0
        %4565 = vmatmul.mubr.bf16.gmra.mrb[0].mxu0 %v4302
        %v4566 = vpop.f32.mrb[0].mxu0
        %v4567 = vadd.f32 0.0, %v4566
        %v4568 = vpop.f32.mrb[0].mxu0
        %v4569 = vpop.f32.mrb[0].mxu0
        %v4570 = vadd.f32 0.0, %v4569
        %v4571 = vpop.f32.mrb[0].mxu0
        %4572 = vmatprep.mubr.bf16.mxu0 0
        %4573 = vmatmul.mubr.bf16.gmra.mrb[0].mxu0 %v4310
        %v4574 = vpop.f32.mrb[0].mxu0
        %v4575 = vadd.f32 0.0, %v4574
        %v4576 = vpop.f32.mrb[0].mxu0
        %v4577 = vpop.f32.mrb[0].mxu0
        %v4578 = vadd.f32 0.0, %v4577
        %v4579 = vpop.f32.mrb[0].mxu0
        %4580 = vmatprep.mubr.bf16.mxu0 0
        %4581 = vmatmul.mubr.bf16.gmra.mrb[0].mxu0 %v4318
        %v4582 = vpop.f32.mrb[0].mxu0
        %v4583 = vadd.f32 0.0, %v4582
        %v4584 = vpop.f32.mrb[0].mxu0
        %v4585 = vpop.f32.mrb[0].mxu0
        %v4586 = vadd.f32 0.0, %v4585
        %v4587 = vpop.f32.mrb[0].mxu0
        %4588 = vmatprep.mubr.bf16.mxu0 0
        %4589 = vmatmul.mubr.bf16.gmra.mrb[0].mxu0 %v4326
        %v4590 = vpop.f32.mrb[0].mxu0
        %v4591 = vadd.f32 0.0, %v4590
        %v4592 = vpop.f32.mrb[0].mxu0
        %v4593 = vpop.f32.mrb[0].mxu0
        %v4594 = vadd.f32 0.0, %v4593
        %v4595 = vpop.f32.mrb[0].mxu0
        %4596 = vmatprep.mubr.bf16.mxu0 0
        %4597 = vmatmul.mubr.bf16.gmra.mrb[0].mxu0 %v4334
        %v4598 = vpop.f32.mrb[0].mxu0
        %v4599 = vadd.f32 0.0, %v4598
        %v4600 = vpop.f32.mrb[0].mxu0
        %v4601 = vpop.f32.mrb[0].mxu0
        %v4602 = vadd.f32 0.0, %v4601
        %v4603 = vpop.f32.mrb[0].mxu0
        %4604 = vmatprep.mubr.bf16.mxu0 0
        %4605 = vmatmul.mubr.bf16.gmra.mrb[0].mxu0 %v4342
        %v4606 = vpop.f32.mrb[0].mxu0
        %v4607 = vadd.f32 0.0, %v4606
        %v4608 = vpop.f32.mrb[0].mxu0
        %v4609 = vpop.f32.mrb[0].mxu0
        %v4610 = vadd.f32 0.0, %v4609
        %v4611 = vpop.f32.mrb[0].mxu0
        %4612 = vmatprep.mubr.bf16.mxu0 0
        %4613 = vmatmul.mubr.bf16.gmra.mrb[0].mxu0 %v4350
        %v4614 = vpop.f32.mrb[0].mxu0
        %v4615 = vadd.f32 0.0, %v4614
        %v4616 = vpop.f32.mrb[0].mxu0
        %v4617 = vpop.f32.mrb[0].mxu0
        %v4618 = vadd.f32 0.0, %v4617
        %v4619 = vpop.f32.mrb[0].mxu0
        %4620 = vmatprep.mubr.bf16.mxu0 0
        %4621 = vmatmul.mubr.bf16.gmra.mrb[0].mxu0 %v4358
        %v4622 = vpop.f32.mrb[0].mxu0
        %v4623 = vadd.f32 0.0, %v4622
        %v4624 = vpop.f32.mrb[0].mxu0
        %v4625 = vpop.f32.mrb[0].mxu0
        %v4626 = vadd.f32 0.0, %v4625
        %v4627 = vpop.f32.mrb[0].mxu0
        %4628 = vmatprep.mubr.bf16.mxu0 0
        %4629 = vmatmul.mubr.bf16.gmra.mrb[0].mxu0 %v4366
        %v4630 = vpop.f32.mrb[0].mxu0
        %v4631 = vadd.f32 0.0, %v4630
        %v4632 = vpop.f32.mrb[0].mxu0
        %v4633 = vpop.f32.mrb[0].mxu0
        %v4634 = vadd.f32 0.0, %v4633
        %v4635 = vpop.f32.mrb[0].mxu0
        %4636 = vmatprep.mubr.bf16.mxu0 0
        %4637 = vmatmul.mubr.bf16.gmra.mrb[0].mxu0 %v4374
        %v4638 = vpop.f32.mrb[0].mxu0
        %v4639 = vadd.f32 0.0, %v4638
        %v4640 = vpop.f32.mrb[0].mxu0
        %v4641 = vpop.f32.mrb[0].mxu0
        %v4642 = vadd.f32 0.0, %v4641
        %v4643 = vpop.f32.mrb[0].mxu0
        %4644 = vdwg.mxu0
        %v4645 = vld [vmem:[#allocation3] sm:$0xff]
        %v4646 = vld [vmem:[#allocation3 + $0x8] sm:$0xff]
        %v4647 = vld [vmem:[#allocation3 + $0x10] sm:$0xff]
        %v4648 = vld [vmem:[#allocation3 + $0x18] sm:$0xff]
        %v4649 = vld [vmem:[#allocation3 + $0x20] sm:$0xff]
        %v4650 = vld [vmem:[#allocation3 + $0x28] sm:$0xff]
        %v4651 = vld [vmem:[#allocation3 + $0x30] sm:$0xff]
        %v4652 = vld [vmem:[#allocation3 + $0x38] sm:$0xff]
        %v4653 = vld [vmem:[#allocation3 + $0x40] sm:$0xff]
        %v4654 = vld [vmem:[#allocation3 + $0x48] sm:$0xff]
        %v4655 = vld [vmem:[#allocation3 + $0x50] sm:$0xff]
        %v4656 = vld [vmem:[#allocation3 + $0x58] sm:$0xff]
        %v4657 = vld [vmem:[#allocation3 + $0x60] sm:$0xff]
        %v4658 = vld [vmem:[#allocation3 + $0x68] sm:$0xff]
        %v4659 = vld [vmem:[#allocation3 + $0x70] sm:$0xff]
        %v4660 = vld [vmem:[#allocation3 + $0x78] sm:$0xff]
        %v4661 = vld [vmem:[#allocation3 + $0x80] sm:$0xff]
        %v4662 = vld [vmem:[#allocation3 + $0x88] sm:$0xff]
        %v4663 = vld [vmem:[#allocation3 + $0x90] sm:$0xff]
        %v4664 = vld [vmem:[#allocation3 + $0x98] sm:$0xff]
        %v4665 = vld [vmem:[#allocation3 + $0xa0] sm:$0xff]
        %v4666 = vld [vmem:[#allocation3 + $0xa8] sm:$0xff]
        %v4667 = vld [vmem:[#allocation3 + $0xb0] sm:$0xff]
        %v4668 = vld [vmem:[#allocation3 + $0xb8] sm:$0xff]
        %v4669 = vld [vmem:[#allocation3 + $0xc0] sm:$0xff]
        %v4670 = vld [vmem:[#allocation3 + $0xc8] sm:$0xff]
        %v4671 = vld [vmem:[#allocation3 + $0xd0] sm:$0xff]
        %v4672 = vld [vmem:[#allocation3 + $0xd8] sm:$0xff]
        %v4673 = vld [vmem:[#allocation3 + $0xe0] sm:$0xff]
        %v4674 = vld [vmem:[#allocation3 + $0xe8] sm:$0xff]
        %v4675 = vld [vmem:[#allocation3 + $0xf0] sm:$0xff]
        %v4676 = vld [vmem:[#allocation3 + $0xf8] sm:$0xff]
        %v4677 = vld [vmem:[#allocation3 + $0x100] sm:$0xff]
        %v4678 = vld [vmem:[#allocation3 + $0x108] sm:$0xff]
        %v4679 = vld [vmem:[#allocation3 + $0x110] sm:$0xff]
        %v4680 = vld [vmem:[#allocation3 + $0x118] sm:$0xff]
        %v4681 = vld [vmem:[#allocation3 + $0x120] sm:$0xff]
        %v4682 = vld [vmem:[#allocation3 + $0x128] sm:$0xff]
        %v4683 = vld [vmem:[#allocation3 + $0x130] sm:$0xff]
        %v4684 = vld [vmem:[#allocation3 + $0x138] sm:$0xff]
        %v4685 = vld [vmem:[#allocation3 + $0x140] sm:$0xff]
        %v4686 = vld [vmem:[#allocation3 + $0x148] sm:$0xff]
        %v4687 = vadd.f32 %v4645, %v4479
        %v4688 = vadd.f32 %v4646, %v4482
        %v4689 = vadd.f32 %v4647, %v4487
        %v4690 = vadd.f32 %v4648, %v4490
        %v4691 = vadd.f32 %v4649, %v4495
        %v4692 = vadd.f32 %v4650, %v4498
        %v4693 = vadd.f32 %v4651, %v4503
        %v4694 = vadd.f32 %v4652, %v4506
        %v4695 = vadd.f32 %v4653, %v4511
        %v4696 = vadd.f32 %v4654, %v4514
        %v4697 = vadd.f32 %v4655, %v4519
        %v4698 = vadd.f32 %v4656, %v4522
        %v4699 = vadd.f32 %v4657, %v4527
        %v4700 = vadd.f32 %v4658, %v4530
        %v4701 = vadd.f32 %v4659, %v4535
        %v4702 = vadd.f32 %v4660, %v4538
        %v4703 = vadd.f32 %v4661, %v4543
        %v4704 = vadd.f32 %v4662, %v4546
        %v4705 = vadd.f32 %v4663, %v4551
        %v4706 = vadd.f32 %v4664, %v4554
        %v4707 = vadd.f32 %v4665, %v4559
        %v4708 = vadd.f32 %v4666, %v4562
        %v4709 = vadd.f32 %v4667, %v4567
        %v4710 = vadd.f32 %v4668, %v4570
        %v4711 = vadd.f32 %v4669, %v4575
        %v4712 = vadd.f32 %v4670, %v4578
        %v4713 = vadd.f32 %v4671, %v4583
        %v4714 = vadd.f32 %v4672, %v4586
        %v4715 = vadd.f32 %v4673, %v4591
        %v4716 = vadd.f32 %v4674, %v4594
        %v4717 = vadd.f32 %v4675, %v4599
        %v4718 = vadd.f32 %v4676, %v4602
        %v4719 = vadd.f32 %v4677, %v4607
        %v4720 = vadd.f32 %v4678, %v4610
        %v4721 = vadd.f32 %v4679, %v4615
        %v4722 = vadd.f32 %v4680, %v4618
        %v4723 = vadd.f32 %v4681, %v4623
        %v4724 = vadd.f32 %v4682, %v4626
        %v4725 = vadd.f32 %v4683, %v4631
        %v4726 = vadd.f32 %v4684, %v4634
        %v4727 = vadd.f32 %v4685, %v4639
        %v4728 = vadd.f32 %v4686, %v4642
        %4729 = vst [vmem:[#allocation3] sm:$0xff] %v4687
        %4730 = vst [vmem:[#allocation3 + $0x8] sm:$0xff] %v4688
        %4731 = vst [vmem:[#allocation3 + $0x10] sm:$0xff] %v4689
        %4732 = vst [vmem:[#allocation3 + $0x18] sm:$0xff] %v4690
        %4733 = vst [vmem:[#allocation3 + $0x20] sm:$0xff] %v4691
        %4734 = vst [vmem:[#allocation3 + $0x28] sm:$0xff] %v4692
        %4735 = vst [vmem:[#allocation3 + $0x30] sm:$0xff] %v4693
        %4736 = vst [vmem:[#allocation3 + $0x38] sm:$0xff] %v4694
        %4737 = vst [vmem:[#allocation3 + $0x40] sm:$0xff] %v4695
        %4738 = vst [vmem:[#allocation3 + $0x48] sm:$0xff] %v4696
        %4739 = vst [vmem:[#allocation3 + $0x50] sm:$0xff] %v4697
        %4740 = vst [vmem:[#allocation3 + $0x58] sm:$0xff] %v4698
        %4741 = vst [vmem:[#allocation3 + $0x60] sm:$0xff] %v4699
        %4742 = vst [vmem:[#allocation3 + $0x68] sm:$0xff] %v4700
        %4743 = vst [vmem:[#allocation3 + $0x70] sm:$0xff] %v4701
        %4744 = vst [vmem:[#allocation3 + $0x78] sm:$0xff] %v4702
        %4745 = vst [vmem:[#allocation3 + $0x80] sm:$0xff] %v4703
        %4746 = vst [vmem:[#allocation3 + $0x88] sm:$0xff] %v4704
        %4747 = vst [vmem:[#allocation3 + $0x90] sm:$0xff] %v4705
        %4748 = vst [vmem:[#allocation3 + $0x98] sm:$0xff] %v4706
        %4749 = vst [vmem:[#allocation3 + $0xa0] sm:$0xff] %v4707
        %4750 = vst [vmem:[#allocation3 + $0xa8] sm:$0xff] %v4708
        %4751 = vst [vmem:[#allocation3 + $0xb0] sm:$0xff] %v4709
        %4752 = vst [vmem:[#allocation3 + $0xb8] sm:$0xff] %v4710
        %4753 = vst [vmem:[#allocation3 + $0xc0] sm:$0xff] %v4711
        %4754 = vst [vmem:[#allocation3 + $0xc8] sm:$0xff] %v4712
        %4755 = vst [vmem:[#allocation3 + $0xd0] sm:$0xff] %v4713
        %4756 = vst [vmem:[#allocation3 + $0xd8] sm:$0xff] %v4714
        %4757 = vst [vmem:[#allocation3 + $0xe0] sm:$0xff] %v4715
        %4758 = vst [vmem:[#allocation3 + $0xe8] sm:$0xff] %v4716
        %4759 = vst [vmem:[#allocation3 + $0xf0] sm:$0xff] %v4717
        %4760 = vst [vmem:[#allocation3 + $0xf8] sm:$0xff] %v4718
        %4761 = vst [vmem:[#allocation3 + $0x100] sm:$0xff] %v4719
        %4762 = vst [vmem:[#allocation3 + $0x108] sm:$0xff] %v4720
        %4763 = vst [vmem:[#allocation3 + $0x110] sm:$0xff] %v4721
        %4764 = vst [vmem:[#allocation3 + $0x118] sm:$0xff] %v4722
        %4765 = vst [vmem:[#allocation3 + $0x120] sm:$0xff] %v4723
        %4766 = vst [vmem:[#allocation3 + $0x128] sm:$0xff] %v4724
        %4767 = vst [vmem:[#allocation3 + $0x130] sm:$0xff] %v4725
        %4768 = vst [vmem:[#allocation3 + $0x138] sm:$0xff] %v4726
        %4769 = vst [vmem:[#allocation3 + $0x140] sm:$0xff] %v4727
        %4770 = vst [vmem:[#allocation3 + $0x148] sm:$0xff] %v4728
        %v4771 = vld [vmem:[#allocation2 + $0x18] sm:$0xff]
        %v4772 = vld [vmem:[#allocation2 + $0x20] sm:$0xff]
        %v4773 = vld [vmem:[#allocation2 + $0x28] sm:$0xff]
        %v4774 = vld [vmem:[#allocation2 + $0x30] sm:$0xff]
        %v4775 = vld [vmem:[#allocation2 + $0x38] sm:$0xff]
        %v4776 = vld [vmem:[#allocation2 + $0x40] sm:$0xff]
        %v4777 = vld [vmem:[#allocation2 + $0x48] sm:$0xff]
        %v4778 = vld [vmem:[#allocation2 + $0x50] sm:$0xff]
        %v4779 = vld [vmem:[#allocation2 + $0x58] sm:$0xff]
        %v4780 = vld [vmem:[#allocation2 + $0x60] sm:$0xff]
        %v4781 = vld [vmem:[#allocation2 + $0x68] sm:$0xff]
        %v4782 = vld [vmem:[#allocation2 + $0x70] sm:$0xff]
        %v4783 = vld [vmem:[#allocation2 + $0x78] sm:$0xff]
        %v4784 = vld [vmem:[#allocation2 + $0x80] sm:$0xff]
        %v4785 = vld [vmem:[#allocation2 + $0x88] sm:$0xff]
        %v4786 = vld [vmem:[#allocation2 + $0x90] sm:$0xff]
        %v4787 = vld [vmem:[#allocation2 + $0x98] sm:$0xff]
        %v4788 = vld [vmem:[#allocation2 + $0xa0] sm:$0xff]
        %v4789 = vld [vmem:[#allocation2 + $0xa8] sm:$0xff]
        %v4790 = vld [vmem:[#allocation2 + $0xb0] sm:$0xff]
        %v4791 = vld [vmem:[#allocation2 + $0xb8] sm:$0xff]
        %v4792 = vld [vmem:[#allocation2 + $0xc0] sm:$0x1]
        %v4793 = vld [vmem:[#allocation9 + $0x180] sm:$0xf]
        %v4794 = vld [vmem:[#allocation9 + $0x184] sm:$0xf]
        %v4795 = vld [vmem:[#allocation9 + $0x188] sm:$0xf]
        %v4796 = vld [vmem:[#allocation9 + $0x18c] sm:$0xf]
        %v4797 = vld [vmem:[#allocation9 + $0x190] sm:$0xf]
        %v4798 = vld [vmem:[#allocation9 + $0x194] sm:$0xf]
        %v4799 = vld [vmem:[#allocation9 + $0x198] sm:$0xf]
        %v4800 = vld [vmem:[#allocation9 + $0x19c] sm:$0xf]
        %v4801 = vld [vmem:[#allocation9 + $0x1a0] sm:$0xf]
        %v4802 = vld [vmem:[#allocation9 + $0x1a4] sm:$0xf]
        %v4803 = vld [vmem:[#allocation9 + $0x1a8] sm:$0xf]
        %v4804 = vld [vmem:[#allocation9 + $0x1ac] sm:$0xf]
        %v4805 = vld [vmem:[#allocation9 + $0x1b0] sm:$0xf]
        %v4806 = vld [vmem:[#allocation9 + $0x1b4] sm:$0xf]
        %v4807 = vld [vmem:[#allocation9 + $0x1b8] sm:$0xf]
        %v4808 = vld [vmem:[#allocation9 + $0x1bc] sm:$0xf]
        %v4810 = vshrl.u32 %v4771, 16
        %v4812 = vshll.u32 %v4771, 16
        %v4814 = vrot.slane %v4812, 1
        %v4815 = vor.u32 %v4810, %v4814
        %v4817 = vshll.u32 %v4772, 16
        %v4819 = vrot.slane %v4817, 1
        %v4820 = vsel %vm4202, %v4815, %v4819
        %v4821 = vshrl.u32 %v4772, 16
        %v4823 = vor.u32 %v4821, %v4819
        %v4825 = vshll.u32 %v4773, 16
        %v4827 = vrot.slane %v4825, 1
        %v4828 = vsel %vm4202, %v4823, %v4827
        %v4829 = vshrl.u32 %v4773, 16
        %v4831 = vor.u32 %v4829, %v4827
        %v4833 = vshll.u32 %v4774, 16
        %v4835 = vrot.slane %v4833, 1
        %v4836 = vsel %vm4202, %v4831, %v4835
        %v4837 = vshrl.u32 %v4774, 16
        %v4839 = vor.u32 %v4837, %v4835
        %v4841 = vshll.u32 %v4775, 16
        %v4843 = vrot.slane %v4841, 1
        %v4844 = vsel %vm4202, %v4839, %v4843
        %v4845 = vshrl.u32 %v4775, 16
        %v4847 = vor.u32 %v4845, %v4843
        %v4849 = vshll.u32 %v4776, 16
        %v4851 = vrot.slane %v4849, 1
        %v4852 = vsel %vm4202, %v4847, %v4851
        %v4853 = vshrl.u32 %v4776, 16
        %v4855 = vor.u32 %v4853, %v4851
        %v4857 = vshll.u32 %v4777, 16
        %v4859 = vrot.slane %v4857, 1
        %v4860 = vsel %vm4202, %v4855, %v4859
        %v4861 = vshrl.u32 %v4777, 16
        %v4863 = vor.u32 %v4861, %v4859
        %v4865 = vshll.u32 %v4778, 16
        %v4867 = vrot.slane %v4865, 1
        %v4868 = vsel %vm4202, %v4863, %v4867
        %v4869 = vshrl.u32 %v4778, 16
        %v4871 = vor.u32 %v4869, %v4867
        %v4873 = vshll.u32 %v4779, 16
        %v4875 = vrot.slane %v4873, 1
        %v4876 = vsel %vm4202, %v4871, %v4875
        %v4877 = vshrl.u32 %v4779, 16
        %v4879 = vor.u32 %v4877, %v4875
        %v4881 = vshll.u32 %v4780, 16
        %v4883 = vrot.slane %v4881, 1
        %v4884 = vsel %vm4202, %v4879, %v4883
        %v4885 = vshrl.u32 %v4780, 16
        %v4887 = vor.u32 %v4885, %v4883
        %v4889 = vshll.u32 %v4781, 16
        %v4891 = vrot.slane %v4889, 1
        %v4892 = vsel %vm4202, %v4887, %v4891
        %v4893 = vshrl.u32 %v4781, 16
        %v4895 = vor.u32 %v4893, %v4891
        %v4897 = vshll.u32 %v4782, 16
        %v4899 = vrot.slane %v4897, 1
        %v4900 = vsel %vm4202, %v4895, %v4899
        %v4901 = vshrl.u32 %v4782, 16
        %v4903 = vor.u32 %v4901, %v4899
        %v4905 = vshll.u32 %v4783, 16
        %v4907 = vrot.slane %v4905, 1
        %v4908 = vsel %vm4202, %v4903, %v4907
        %v4909 = vshrl.u32 %v4783, 16
        %v4911 = vor.u32 %v4909, %v4907
        %v4913 = vshll.u32 %v4784, 16
        %v4915 = vrot.slane %v4913, 1
        %v4916 = vsel %vm4202, %v4911, %v4915
        %v4917 = vshrl.u32 %v4784, 16
        %v4919 = vor.u32 %v4917, %v4915
        %v4921 = vshll.u32 %v4785, 16
        %v4923 = vrot.slane %v4921, 1
        %v4924 = vsel %vm4202, %v4919, %v4923
        %v4925 = vshrl.u32 %v4785, 16
        %v4927 = vor.u32 %v4925, %v4923
        %v4929 = vshll.u32 %v4786, 16
        %v4931 = vrot.slane %v4929, 1
        %v4932 = vsel %vm4202, %v4927, %v4931
        %v4933 = vshrl.u32 %v4786, 16
        %v4935 = vor.u32 %v4933, %v4931
        %v4937 = vshll.u32 %v4787, 16
        %v4939 = vrot.slane %v4937, 1
        %v4940 = vsel %vm4202, %v4935, %v4939
        %v4941 = vshrl.u32 %v4787, 16
        %v4943 = vor.u32 %v4941, %v4939
        %v4945 = vshll.u32 %v4788, 16
        %v4947 = vrot.slane %v4945, 1
        %v4948 = vsel %vm4202, %v4943, %v4947
        %v4949 = vshrl.u32 %v4788, 16
        %v4951 = vor.u32 %v4949, %v4947
        %v4953 = vshll.u32 %v4789, 16
        %v4955 = vrot.slane %v4953, 1
        %v4956 = vsel %vm4202, %v4951, %v4955
        %v4957 = vshrl.u32 %v4789, 16
        %v4959 = vor.u32 %v4957, %v4955
        %v4961 = vshll.u32 %v4790, 16
        %v4963 = vrot.slane %v4961, 1
        %v4964 = vsel %vm4202, %v4959, %v4963
        %v4965 = vshrl.u32 %v4790, 16
        %v4967 = vor.u32 %v4965, %v4963
        %v4969 = vshll.u32 %v4791, 16
        %v4971 = vrot.slane %v4969, 1
        %v4972 = vsel %vm4202, %v4967, %v4971
        %v4973 = vshrl.u32 %v4791, 16
        %v4975 = vor.u32 %v4973, %v4971
        %v4977 = vshll.u32 %v4792, 16
        %v4979 = vrot.slane %v4977, 1
        %v4980 = vsel %vm4202, %v4975, %v4979
        %v5018 = vunpack.c.l.b16 %v4793
        %v5019 = vunpack.c.l.b16 %v4794
        %v5020 = vunpack.c.l.b16 %v4795
        %v5021 = vunpack.c.l.b16 %v4796
        %v5022 = vunpack.c.l.b16 %v4797
        %v5023 = vunpack.c.l.b16 %v4798
        %v5024 = vunpack.c.l.b16 %v4799
        %v5025 = vunpack.c.l.b16 %v4800
        %v5026 = vunpack.c.l.b16 %v4801
        %v5027 = vunpack.c.l.b16 %v4802
        %v5028 = vunpack.c.l.b16 %v4803
        %v5029 = vunpack.c.l.b16 %v4804
        %v5030 = vunpack.c.l.b16 %v4805
        %v5031 = vunpack.c.l.b16 %v4806
        %v5032 = vunpack.c.l.b16 %v4807
        %v5033 = vunpack.c.l.b16 %v4808
        %v5034 = vpack.c.b16 %v5019, %v5018
        %v5035 = vpack.c.b16 %v5021, %v5020
        %v5036 = vpack.c.b16 %v5023, %v5022
        %v5037 = vpack.c.b16 %v5025, %v5024
        %v5038 = vpack.c.b16 %v5027, %v5026
        %v5039 = vpack.c.b16 %v5029, %v5028
        %v5040 = vpack.c.b16 %v5031, %v5030
        %v5041 = vpack.c.b16 %v5033, %v5032
        %5050 = vmatprep.subr.bf16.mxu0 0
        %5051 = vmatpush1.bf16.msra.mxu0 %v5034
        %5052 = vmatprep.subr.bf16.mxu0 0
        %5053 = vmatpush1.bf16.msra.mxu0 %v5035
        %5054 = vmatprep.subr.bf16.mxu0 0
        %5055 = vmatpush1.bf16.msra.mxu0 %v5036
        %5056 = vmatprep.subr.bf16.mxu0 0
        %5057 = vmatpush1.bf16.msra.mxu0 %v5037
        %5058 = vmatprep.subr.bf16.mxu0 0
        %5059 = vmatpush1.bf16.msra.mxu0 %v5038
        %5060 = vmatprep.subr.bf16.mxu0 0
        %5061 = vmatpush1.bf16.msra.mxu0 %v5039
        %5062 = vmatprep.subr.bf16.mxu0 0
        %5063 = vmatpush1.bf16.msra.mxu0 %v5040
        %5064 = vmatprep.subr.bf16.mxu0 0
        %5065 = vmatpush1.bf16.msra.mxu0 %v5041
        %5066 = vmatprep.subr.bf16.mxu0 0
        %5067 = vmatpush1.bf16.msra.mxu0 0
        %5068 = vmatprep.subr.bf16.mxu0 0
        %5069 = vmatpush1.bf16.msra.mxu0 0
        %5070 = vmatprep.subr.bf16.mxu0 0
        %5071 = vmatpush1.bf16.msra.mxu0 0
        %5072 = vmatprep.subr.bf16.mxu0 0
        %5073 = vmatpush1.bf16.msra.mxu0 0
        %5074 = vmatprep.subr.bf16.mxu0 0
        %5075 = vmatpush1.bf16.msra.mxu0 0
        %5076 = vmatprep.subr.bf16.mxu0 0
        %5077 = vmatpush1.bf16.msra.mxu0 0
        %5078 = vmatprep.subr.bf16.mxu0 0
        %5079 = vmatpush1.bf16.msra.mxu0 0
        %5080 = vmatprep.subr.bf16.mxu0 0
        %5081 = vmatpush1.bf16.msra.mxu0 0
        %5082 = vmatprep.mubr.bf16.mxu0 0
        %5083 = vmatmul.mubr.bf16.gmra.mrb[0].mxu0 %v4820
        %v5084 = vpop.f32.mrb[0].mxu0
        %v5085 = vadd.f32 0.0, %v5084
        %v5086 = vpop.f32.mrb[0].mxu0
        %v5087 = vpop.f32.mrb[0].mxu0
        %v5088 = vadd.f32 0.0, %v5087
        %v5089 = vpop.f32.mrb[0].mxu0
        %5090 = vmatprep.mubr.bf16.mxu0 0
        %5091 = vmatmul.mubr.bf16.gmra.mrb[0].mxu0 %v4828
        %v5092 = vpop.f32.mrb[0].mxu0
        %v5093 = vadd.f32 0.0, %v5092
        %v5094 = vpop.f32.mrb[0].mxu0
        %v5095 = vpop.f32.mrb[0].mxu0
        %v5096 = vadd.f32 0.0, %v5095
        %v5097 = vpop.f32.mrb[0].mxu0
        %5098 = vmatprep.mubr.bf16.mxu0 0
        %5099 = vmatmul.mubr.bf16.gmra.mrb[0].mxu0 %v4836
        %v5100 = vpop.f32.mrb[0].mxu0
        %v5101 = vadd.f32 0.0, %v5100
        %v5102 = vpop.f32.mrb[0].mxu0
        %v5103 = vpop.f32.mrb[0].mxu0
        %v5104 = vadd.f32 0.0, %v5103
        %v5105 = vpop.f32.mrb[0].mxu0
        %5106 = vmatprep.mubr.bf16.mxu0 0
        %5107 = vmatmul.mubr.bf16.gmra.mrb[0].mxu0 %v4844
        %v5108 = vpop.f32.mrb[0].mxu0
        %v5109 = vadd.f32 0.0, %v5108
        %v5110 = vpop.f32.mrb[0].mxu0
        %v5111 = vpop.f32.mrb[0].mxu0
        %v5112 = vadd.f32 0.0, %v5111
        %v5113 = vpop.f32.mrb[0].mxu0
        %5114 = vmatprep.mubr.bf16.mxu0 0
        %5115 = vmatmul.mubr.bf16.gmra.mrb[0].mxu0 %v4852
        %v5116 = vpop.f32.mrb[0].mxu0
        %v5117 = vadd.f32 0.0, %v5116
        %v5118 = vpop.f32.mrb[0].mxu0
        %v5119 = vpop.f32.mrb[0].mxu0
        %v5120 = vadd.f32 0.0, %v5119
        %v5121 = vpop.f32.mrb[0].mxu0
        %5122 = vmatprep.mubr.bf16.mxu0 0
        %5123 = vmatmul.mubr.bf16.gmra.mrb[0].mxu0 %v4860
        %v5124 = vpop.f32.mrb[0].mxu0
        %v5125 = vadd.f32 0.0, %v5124
        %v5126 = vpop.f32.mrb[0].mxu0
        %v5127 = vpop.f32.mrb[0].mxu0
        %v5128 = vadd.f32 0.0, %v5127
        %v5129 = vpop.f32.mrb[0].mxu0
        %5130 = vmatprep.mubr.bf16.mxu0 0
        %5131 = vmatmul.mubr.bf16.gmra.mrb[0].mxu0 %v4868
        %v5132 = vpop.f32.mrb[0].mxu0
        %v5133 = vadd.f32 0.0, %v5132
        %v5134 = vpop.f32.mrb[0].mxu0
        %v5135 = vpop.f32.mrb[0].mxu0
        %v5136 = vadd.f32 0.0, %v5135
        %v5137 = vpop.f32.mrb[0].mxu0
        %5138 = vmatprep.mubr.bf16.mxu0 0
        %5139 = vmatmul.mubr.bf16.gmra.mrb[0].mxu0 %v4876
        %v5140 = vpop.f32.mrb[0].mxu0
        %v5141 = vadd.f32 0.0, %v5140
        %v5142 = vpop.f32.mrb[0].mxu0
        %v5143 = vpop.f32.mrb[0].mxu0
        %v5144 = vadd.f32 0.0, %v5143
        %v5145 = vpop.f32.mrb[0].mxu0
        %5146 = vmatprep.mubr.bf16.mxu0 0
        %5147 = vmatmul.mubr.bf16.gmra.mrb[0].mxu0 %v4884
        %v5148 = vpop.f32.mrb[0].mxu0
        %v5149 = vadd.f32 0.0, %v5148
        %v5150 = vpop.f32.mrb[0].mxu0
        %v5151 = vpop.f32.mrb[0].mxu0
        %v5152 = vadd.f32 0.0, %v5151
        %v5153 = vpop.f32.mrb[0].mxu0
        %5154 = vmatprep.mubr.bf16.mxu0 0
        %5155 = vmatmul.mubr.bf16.gmra.mrb[0].mxu0 %v4892
        %v5156 = vpop.f32.mrb[0].mxu0
        %v5157 = vadd.f32 0.0, %v5156
        %v5158 = vpop.f32.mrb[0].mxu0
        %v5159 = vpop.f32.mrb[0].mxu0
        %v5160 = vadd.f32 0.0, %v5159
        %v5161 = vpop.f32.mrb[0].mxu0
        %5162 = vmatprep.mubr.bf16.mxu0 0
        %5163 = vmatmul.mubr.bf16.gmra.mrb[0].mxu0 %v4900
        %v5164 = vpop.f32.mrb[0].mxu0
        %v5165 = vadd.f32 0.0, %v5164
        %v5166 = vpop.f32.mrb[0].mxu0
        %v5167 = vpop.f32.mrb[0].mxu0
        %v5168 = vadd.f32 0.0, %v5167
        %v5169 = vpop.f32.mrb[0].mxu0
        %5170 = vmatprep.mubr.bf16.mxu0 0
        %5171 = vmatmul.mubr.bf16.gmra.mrb[0].mxu0 %v4908
        %v5172 = vpop.f32.mrb[0].mxu0
        %v5173 = vadd.f32 0.0, %v5172
        %v5174 = vpop.f32.mrb[0].mxu0
        %v5175 = vpop.f32.mrb[0].mxu0
        %v5176 = vadd.f32 0.0, %v5175
        %v5177 = vpop.f32.mrb[0].mxu0
        %5178 = vmatprep.mubr.bf16.mxu0 0
        %5179 = vmatmul.mubr.bf16.gmra.mrb[0].mxu0 %v4916
        %v5180 = vpop.f32.mrb[0].mxu0
        %v5181 = vadd.f32 0.0, %v5180
        %v5182 = vpop.f32.mrb[0].mxu0
        %v5183 = vpop.f32.mrb[0].mxu0
        %v5184 = vadd.f32 0.0, %v5183
        %v5185 = vpop.f32.mrb[0].mxu0
        %5186 = vmatprep.mubr.bf16.mxu0 0
        %5187 = vmatmul.mubr.bf16.gmra.mrb[0].mxu0 %v4924
        %v5188 = vpop.f32.mrb[0].mxu0
        %v5189 = vadd.f32 0.0, %v5188
        %v5190 = vpop.f32.mrb[0].mxu0
        %v5191 = vpop.f32.mrb[0].mxu0
        %v5192 = vadd.f32 0.0, %v5191
        %v5193 = vpop.f32.mrb[0].mxu0
        %5194 = vmatprep.mubr.bf16.mxu0 0
        %5195 = vmatmul.mubr.bf16.gmra.mrb[0].mxu0 %v4932
        %v5196 = vpop.f32.mrb[0].mxu0
        %v5197 = vadd.f32 0.0, %v5196
        %v5198 = vpop.f32.mrb[0].mxu0
        %v5199 = vpop.f32.mrb[0].mxu0
        %v5200 = vadd.f32 0.0, %v5199
        %v5201 = vpop.f32.mrb[0].mxu0
        %5202 = vmatprep.mubr.bf16.mxu0 0
        %5203 = vmatmul.mubr.bf16.gmra.mrb[0].mxu0 %v4940
        %v5204 = vpop.f32.mrb[0].mxu0
        %v5205 = vadd.f32 0.0, %v5204
        %v5206 = vpop.f32.mrb[0].mxu0
        %v5207 = vpop.f32.mrb[0].mxu0
        %v5208 = vadd.f32 0.0, %v5207
        %v5209 = vpop.f32.mrb[0].mxu0
        %5210 = vmatprep.mubr.bf16.mxu0 0
        %5211 = vmatmul.mubr.bf16.gmra.mrb[0].mxu0 %v4948
        %v5212 = vpop.f32.mrb[0].mxu0
        %v5213 = vadd.f32 0.0, %v5212
        %v5214 = vpop.f32.mrb[0].mxu0
        %v5215 = vpop.f32.mrb[0].mxu0
        %v5216 = vadd.f32 0.0, %v5215
        %v5217 = vpop.f32.mrb[0].mxu0
        %5218 = vmatprep.mubr.bf16.mxu0 0
        %5219 = vmatmul.mubr.bf16.gmra.mrb[0].mxu0 %v4956
        %v5220 = vpop.f32.mrb[0].mxu0
        %v5221 = vadd.f32 0.0, %v5220
        %v5222 = vpop.f32.mrb[0].mxu0
        %v5223 = vpop.f32.mrb[0].mxu0
        %v5224 = vadd.f32 0.0, %v5223
        %v5225 = vpop.f32.mrb[0].mxu0
        %5226 = vmatprep.mubr.bf16.mxu0 0
        %5227 = vmatmul.mubr.bf16.gmra.mrb[0].mxu0 %v4964
        %v5228 = vpop.f32.mrb[0].mxu0
        %v5229 = vadd.f32 0.0, %v5228
        %v5230 = vpop.f32.mrb[0].mxu0
        %v5231 = vpop.f32.mrb[0].mxu0
        %v5232 = vadd.f32 0.0, %v5231
        %v5233 = vpop.f32.mrb[0].mxu0
        %5234 = vmatprep.mubr.bf16.mxu0 0
        %5235 = vmatmul.mubr.bf16.gmra.mrb[0].mxu0 %v4972
        %v5236 = vpop.f32.mrb[0].mxu0
        %v5237 = vadd.f32 0.0, %v5236
        %v5238 = vpop.f32.mrb[0].mxu0
        %v5239 = vpop.f32.mrb[0].mxu0
        %v5240 = vadd.f32 0.0, %v5239
        %v5241 = vpop.f32.mrb[0].mxu0
        %5242 = vmatprep.mubr.bf16.mxu0 0
        %5243 = vmatmul.mubr.bf16.gmra.mrb[0].mxu0 %v4980
        %v5244 = vpop.f32.mrb[0].mxu0
        %v5245 = vadd.f32 0.0, %v5244
        %v5246 = vpop.f32.mrb[0].mxu0
        %v5247 = vpop.f32.mrb[0].mxu0
        %v5248 = vadd.f32 0.0, %v5247
        %v5249 = vpop.f32.mrb[0].mxu0
        %5250 = vdwg.mxu0
        %v5251 = vld [vmem:[#allocation3] sm:$0xff]
        %v5252 = vld [vmem:[#allocation3 + $0x8] sm:$0xff]
        %v5253 = vld [vmem:[#allocation3 + $0x10] sm:$0xff]
        %v5254 = vld [vmem:[#allocation3 + $0x18] sm:$0xff]
        %v5255 = vld [vmem:[#allocation3 + $0x20] sm:$0xff]
        %v5256 = vld [vmem:[#allocation3 + $0x28] sm:$0xff]
        %v5257 = vld [vmem:[#allocation3 + $0x30] sm:$0xff]
        %v5258 = vld [vmem:[#allocation3 + $0x38] sm:$0xff]
        %v5259 = vld [vmem:[#allocation3 + $0x40] sm:$0xff]
        %v5260 = vld [vmem:[#allocation3 + $0x48] sm:$0xff]
        %v5261 = vld [vmem:[#allocation3 + $0x50] sm:$0xff]
        %v5262 = vld [vmem:[#allocation3 + $0x58] sm:$0xff]
        %v5263 = vld [vmem:[#allocation3 + $0x60] sm:$0xff]
        %v5264 = vld [vmem:[#allocation3 + $0x68] sm:$0xff]
        %v5265 = vld [vmem:[#allocation3 + $0x70] sm:$0xff]
        %v5266 = vld [vmem:[#allocation3 + $0x78] sm:$0xff]
        %v5267 = vld [vmem:[#allocation3 + $0x80] sm:$0xff]
        %v5268 = vld [vmem:[#allocation3 + $0x88] sm:$0xff]
        %v5269 = vld [vmem:[#allocation3 + $0x90] sm:$0xff]
        %v5270 = vld [vmem:[#allocation3 + $0x98] sm:$0xff]
        %v5271 = vld [vmem:[#allocation3 + $0xa0] sm:$0xff]
        %v5272 = vld [vmem:[#allocation3 + $0xa8] sm:$0xff]
        %v5273 = vld [vmem:[#allocation3 + $0xb0] sm:$0xff]
        %v5274 = vld [vmem:[#allocation3 + $0xb8] sm:$0xff]
        %v5275 = vld [vmem:[#allocation3 + $0xc0] sm:$0xff]
        %v5276 = vld [vmem:[#allocation3 + $0xc8] sm:$0xff]
        %v5277 = vld [vmem:[#allocation3 + $0xd0] sm:$0xff]
        %v5278 = vld [vmem:[#allocation3 + $0xd8] sm:$0xff]
        %v5279 = vld [vmem:[#allocation3 + $0xe0] sm:$0xff]
        %v5280 = vld [vmem:[#allocation3 + $0xe8] sm:$0xff]
        %v5281 = vld [vmem:[#allocation3 + $0xf0] sm:$0xff]
        %v5282 = vld [vmem:[#allocation3 + $0xf8] sm:$0xff]
        %v5283 = vld [vmem:[#allocation3 + $0x100] sm:$0xff]
        %v5284 = vld [vmem:[#allocation3 + $0x108] sm:$0xff]
        %v5285 = vld [vmem:[#allocation3 + $0x110] sm:$0xff]
        %v5286 = vld [vmem:[#allocation3 + $0x118] sm:$0xff]
        %v5287 = vld [vmem:[#allocation3 + $0x120] sm:$0xff]
        %v5288 = vld [vmem:[#allocation3 + $0x128] sm:$0xff]
        %v5289 = vld [vmem:[#allocation3 + $0x130] sm:$0xff]
        %v5290 = vld [vmem:[#allocation3 + $0x138] sm:$0xff]
        %v5291 = vld [vmem:[#allocation3 + $0x140] sm:$0xff]
        %v5292 = vld [vmem:[#allocation3 + $0x148] sm:$0xff]
        %v5293 = vadd.f32 %v5251, %v5085
        %v5294 = vadd.f32 %v5252, %v5088
        %v5295 = vadd.f32 %v5253, %v5093
        %v5296 = vadd.f32 %v5254, %v5096
        %v5297 = vadd.f32 %v5255, %v5101
        %v5298 = vadd.f32 %v5256, %v5104
        %v5299 = vadd.f32 %v5257, %v5109
        %v5300 = vadd.f32 %v5258, %v5112
        %v5301 = vadd.f32 %v5259, %v5117
        %v5302 = vadd.f32 %v5260, %v5120
        %v5303 = vadd.f32 %v5261, %v5125
        %v5304 = vadd.f32 %v5262, %v5128
        %v5305 = vadd.f32 %v5263, %v5133
        %v5306 = vadd.f32 %v5264, %v5136
        %v5307 = vadd.f32 %v5265, %v5141
        %v5308 = vadd.f32 %v5266, %v5144
        %v5309 = vadd.f32 %v5267, %v5149
        %v5310 = vadd.f32 %v5268, %v5152
        %v5311 = vadd.f32 %v5269, %v5157
        %v5312 = vadd.f32 %v5270, %v5160
        %v5313 = vadd.f32 %v5271, %v5165
        %v5314 = vadd.f32 %v5272, %v5168
        %v5315 = vadd.f32 %v5273, %v5173
        %v5316 = vadd.f32 %v5274, %v5176
        %v5317 = vadd.f32 %v5275, %v5181
        %v5318 = vadd.f32 %v5276, %v5184
        %v5319 = vadd.f32 %v5277, %v5189
        %v5320 = vadd.f32 %v5278, %v5192
        %v5321 = vadd.f32 %v5279, %v5197
        %v5322 = vadd.f32 %v5280, %v5200
        %v5323 = vadd.f32 %v5281, %v5205
        %v5324 = vadd.f32 %v5282, %v5208
        %v5325 = vadd.f32 %v5283, %v5213
        %v5326 = vadd.f32 %v5284, %v5216
        %v5327 = vadd.f32 %v5285, %v5221
        %v5328 = vadd.f32 %v5286, %v5224
        %v5329 = vadd.f32 %v5287, %v5229
        %v5330 = vadd.f32 %v5288, %v5232
        %v5331 = vadd.f32 %v5289, %v5237
        %v5332 = vadd.f32 %v5290, %v5240
        %v5333 = vadd.f32 %v5291, %v5245
        %v5334 = vadd.f32 %v5292, %v5248
        %5335 = vst [vmem:[#allocation3] sm:$0xff] %v5293
        %5336 = vst [vmem:[#allocation3 + $0x8] sm:$0xff] %v5294
        %5337 = vst [vmem:[#allocation3 + $0x10] sm:$0xff] %v5295
        %5338 = vst [vmem:[#allocation3 + $0x18] sm:$0xff] %v5296
        %5339 = vst [vmem:[#allocation3 + $0x20] sm:$0xff] %v5297
        %5340 = vst [vmem:[#allocation3 + $0x28] sm:$0xff] %v5298
        %5341 = vst [vmem:[#allocation3 + $0x30] sm:$0xff] %v5299
        %5342 = vst [vmem:[#allocation3 + $0x38] sm:$0xff] %v5300
        %5343 = vst [vmem:[#allocation3 + $0x40] sm:$0xff] %v5301
        %5344 = vst [vmem:[#allocation3 + $0x48] sm:$0xff] %v5302
        %5345 = vst [vmem:[#allocation3 + $0x50] sm:$0xff] %v5303
        %5346 = vst [vmem:[#allocation3 + $0x58] sm:$0xff] %v5304
        %5347 = vst [vmem:[#allocation3 + $0x60] sm:$0xff] %v5305
        %5348 = vst [vmem:[#allocation3 + $0x68] sm:$0xff] %v5306
        %5349 = vst [vmem:[#allocation3 + $0x70] sm:$0xff] %v5307
        %5350 = vst [vmem:[#allocation3 + $0x78] sm:$0xff] %v5308
        %5351 = vst [vmem:[#allocation3 + $0x80] sm:$0xff] %v5309
        %5352 = vst [vmem:[#allocation3 + $0x88] sm:$0xff] %v5310
        %5353 = vst [vmem:[#allocation3 + $0x90] sm:$0xff] %v5311
        %5354 = vst [vmem:[#allocation3 + $0x98] sm:$0xff] %v5312
        %5355 = vst [vmem:[#allocation3 + $0xa0] sm:$0xff] %v5313
        %5356 = vst [vmem:[#allocation3 + $0xa8] sm:$0xff] %v5314
        %5357 = vst [vmem:[#allocation3 + $0xb0] sm:$0xff] %v5315
        %5358 = vst [vmem:[#allocation3 + $0xb8] sm:$0xff] %v5316
        %5359 = vst [vmem:[#allocation3 + $0xc0] sm:$0xff] %v5317
        %5360 = vst [vmem:[#allocation3 + $0xc8] sm:$0xff] %v5318
        %5361 = vst [vmem:[#allocation3 + $0xd0] sm:$0xff] %v5319
        %5362 = vst [vmem:[#allocation3 + $0xd8] sm:$0xff] %v5320
        %5363 = vst [vmem:[#allocation3 + $0xe0] sm:$0xff] %v5321
        %5364 = vst [vmem:[#allocation3 + $0xe8] sm:$0xff] %v5322
        %5365 = vst [vmem:[#allocation3 + $0xf0] sm:$0xff] %v5323
        %5366 = vst [vmem:[#allocation3 + $0xf8] sm:$0xff] %v5324
        %5367 = vst [vmem:[#allocation3 + $0x100] sm:$0xff] %v5325
        %5368 = vst [vmem:[#allocation3 + $0x108] sm:$0xff] %v5326
        %5369 = vst [vmem:[#allocation3 + $0x110] sm:$0xff] %v5327
        %5370 = vst [vmem:[#allocation3 + $0x118] sm:$0xff] %v5328
        %5371 = vst [vmem:[#allocation3 + $0x120] sm:$0xff] %v5329
        %5372 = vst [vmem:[#allocation3 + $0x128] sm:$0xff] %v5330
        %5373 = vst [vmem:[#allocation3 + $0x130] sm:$0xff] %v5331
        %5374 = vst [vmem:[#allocation3 + $0x138] sm:$0xff] %v5332
        %5375 = vst [vmem:[#allocation3 + $0x140] sm:$0xff] %v5333
        %5376 = vst [vmem:[#allocation3 + $0x148] sm:$0xff] %v5334
        %v5377 = vld [vmem:[#allocation2 + $0x18] sm:$0xfe]
        %v5378 = vld [vmem:[#allocation2 + $0x20] sm:$0xff]
        %v5379 = vld [vmem:[#allocation2 + $0x28] sm:$0xff]
        %v5380 = vld [vmem:[#allocation2 + $0x30] sm:$0xff]
        %v5381 = vld [vmem:[#allocation2 + $0x38] sm:$0xff]
        %v5382 = vld [vmem:[#allocation2 + $0x40] sm:$0xff]
        %v5383 = vld [vmem:[#allocation2 + $0x48] sm:$0xff]
        %v5384 = vld [vmem:[#allocation2 + $0x50] sm:$0xff]
        %v5385 = vld [vmem:[#allocation2 + $0x58] sm:$0xff]
        %v5386 = vld [vmem:[#allocation2 + $0x60] sm:$0xff]
        %v5387 = vld [vmem:[#allocation2 + $0x68] sm:$0xff]
        %v5388 = vld [vmem:[#allocation2 + $0x70] sm:$0xff]
        %v5389 = vld [vmem:[#allocation2 + $0x78] sm:$0xff]
        %v5390 = vld [vmem:[#allocation2 + $0x80] sm:$0xff]
        %v5391 = vld [vmem:[#allocation2 + $0x88] sm:$0xff]
        %v5392 = vld [vmem:[#allocation2 + $0x90] sm:$0xff]
        %v5393 = vld [vmem:[#allocation2 + $0x98] sm:$0xff]
        %v5394 = vld [vmem:[#allocation2 + $0xa0] sm:$0xff]
        %v5395 = vld [vmem:[#allocation2 + $0xa8] sm:$0xff]
        %v5396 = vld [vmem:[#allocation2 + $0xb0] sm:$0xff]
        %v5397 = vld [vmem:[#allocation2 + $0xb8] sm:$0xff]
        %v5398 = vld [vmem:[#allocation2 + $0xc0] sm:$0x1]
        %v5399 = vld [vmem:[#allocation9 + $0x1c0] sm:$0xf]
        %v5400 = vld [vmem:[#allocation9 + $0x1c4] sm:$0xf]
        %v5401 = vld [vmem:[#allocation9 + $0x1c8] sm:$0xf]
        %v5402 = vld [vmem:[#allocation9 + $0x1cc] sm:$0xf]
        %v5403 = vld [vmem:[#allocation9 + $0x1d0] sm:$0xf]
        %v5404 = vld [vmem:[#allocation9 + $0x1d4] sm:$0xf]
        %v5405 = vld [vmem:[#allocation9 + $0x1d8] sm:$0xf]
        %v5406 = vld [vmem:[#allocation9 + $0x1dc] sm:$0xf]
        %v5407 = vld [vmem:[#allocation9 + $0x1e0] sm:$0xf]
        %v5408 = vld [vmem:[#allocation9 + $0x1e4] sm:$0xf]
        %v5409 = vld [vmem:[#allocation9 + $0x1e8] sm:$0xf]
        %v5410 = vld [vmem:[#allocation9 + $0x1ec] sm:$0xf]
        %v5411 = vld [vmem:[#allocation9 + $0x1f0] sm:$0xf]
        %v5412 = vld [vmem:[#allocation9 + $0x1f4] sm:$0xf]
        %v5413 = vld [vmem:[#allocation9 + $0x1f8] sm:$0xf]
        %v5414 = vld [vmem:[#allocation9 + $0x1fc] sm:$0xf]
        %vm5437 = vcmask 1046528
        %v5438 = vrot.slane %v5377, 1
        %v5439 = vrot.slane %v5378, 1
        %v5440 = vsel %vm5437, %v5438, %v5439
        %v5441 = vrot.slane %v5379, 1
        %v5442 = vsel %vm5437, %v5439, %v5441
        %v5443 = vrot.slane %v5380, 1
        %v5444 = vsel %vm5437, %v5441, %v5443
        %v5445 = vrot.slane %v5381, 1
        %v5446 = vsel %vm5437, %v5443, %v5445
        %v5447 = vrot.slane %v5382, 1
        %v5448 = vsel %vm5437, %v5445, %v5447
        %v5449 = vrot.slane %v5383, 1
        %v5450 = vsel %vm5437, %v5447, %v5449
        %v5451 = vrot.slane %v5384, 1
        %v5452 = vsel %vm5437, %v5449, %v5451
        %v5453 = vrot.slane %v5385, 1
        %v5454 = vsel %vm5437, %v5451, %v5453
        %v5455 = vrot.slane %v5386, 1
        %v5456 = vsel %vm5437, %v5453, %v5455
        %v5457 = vrot.slane %v5387, 1
        %v5458 = vsel %vm5437, %v5455, %v5457
        %v5459 = vrot.slane %v5388, 1
        %v5460 = vsel %vm5437, %v5457, %v5459
        %v5461 = vrot.slane %v5389, 1
        %v5462 = vsel %vm5437, %v5459, %v5461
        %v5463 = vrot.slane %v5390, 1
        %v5464 = vsel %vm5437, %v5461, %v5463
        %v5465 = vrot.slane %v5391, 1
        %v5466 = vsel %vm5437, %v5463, %v5465
        %v5467 = vrot.slane %v5392, 1
        %v5468 = vsel %vm5437, %v5465, %v5467
        %v5469 = vrot.slane %v5393, 1
        %v5470 = vsel %vm5437, %v5467, %v5469
        %v5471 = vrot.slane %v5394, 1
        %v5472 = vsel %vm5437, %v5469, %v5471
        %v5473 = vrot.slane %v5395, 1
        %v5474 = vsel %vm5437, %v5471, %v5473
        %v5475 = vrot.slane %v5396, 1
        %v5476 = vsel %vm5437, %v5473, %v5475
        %v5477 = vrot.slane %v5397, 1
        %v5478 = vsel %vm5437, %v5475, %v5477
        %v5479 = vrot.slane %v5398, 1
        %v5480 = vsel %vm5437, %v5477, %v5479
        %v5518 = vunpack.c.l.b16 %v5399
        %v5519 = vunpack.c.l.b16 %v5400
        %v5520 = vunpack.c.l.b16 %v5401
        %v5521 = vunpack.c.l.b16 %v5402
        %v5522 = vunpack.c.l.b16 %v5403
        %v5523 = vunpack.c.l.b16 %v5404
        %v5524 = vunpack.c.l.b16 %v5405
        %v5525 = vunpack.c.l.b16 %v5406
        %v5526 = vunpack.c.l.b16 %v5407
        %v5527 = vunpack.c.l.b16 %v5408
        %v5528 = vunpack.c.l.b16 %v5409
        %v5529 = vunpack.c.l.b16 %v5410
        %v5530 = vunpack.c.l.b16 %v5411
        %v5531 = vunpack.c.l.b16 %v5412
        %v5532 = vunpack.c.l.b16 %v5413
        %v5533 = vunpack.c.l.b16 %v5414
        %v5534 = vpack.c.b16 %v5519, %v5518
        %v5535 = vpack.c.b16 %v5521, %v5520
        %v5536 = vpack.c.b16 %v5523, %v5522
        %v5537 = vpack.c.b16 %v5525, %v5524
        %v5538 = vpack.c.b16 %v5527, %v5526
        %v5539 = vpack.c.b16 %v5529, %v5528
        %v5540 = vpack.c.b16 %v5531, %v5530
        %v5541 = vpack.c.b16 %v5533, %v5532
        %5550 = vmatprep.subr.bf16.mxu0 0
        %5551 = vmatpush1.bf16.msra.mxu0 %v5534
        %5552 = vmatprep.subr.bf16.mxu0 0
        %5553 = vmatpush1.bf16.msra.mxu0 %v5535
        %5554 = vmatprep.subr.bf16.mxu0 0
        %5555 = vmatpush1.bf16.msra.mxu0 %v5536
        %5556 = vmatprep.subr.bf16.mxu0 0
        %5557 = vmatpush1.bf16.msra.mxu0 %v5537
        %5558 = vmatprep.subr.bf16.mxu0 0
        %5559 = vmatpush1.bf16.msra.mxu0 %v5538
        %5560 = vmatprep.subr.bf16.mxu0 0
        %5561 = vmatpush1.bf16.msra.mxu0 %v5539
        %5562 = vmatprep.subr.bf16.mxu0 0
        %5563 = vmatpush1.bf16.msra.mxu0 %v5540
        %5564 = vmatprep.subr.bf16.mxu0 0
        %5565 = vmatpush1.bf16.msra.mxu0 %v5541
        %5566 = vmatprep.subr.bf16.mxu0 0
        %5567 = vmatpush1.bf16.msra.mxu0 0
        %5568 = vmatprep.subr.bf16.mxu0 0
        %5569 = vmatpush1.bf16.msra.mxu0 0
        %5570 = vmatprep.subr.bf16.mxu0 0
        %5571 = vmatpush1.bf16.msra.mxu0 0
        %5572 = vmatprep.subr.bf16.mxu0 0
        %5573 = vmatpush1.bf16.msra.mxu0 0
        %5574 = vmatprep.subr.bf16.mxu0 0
        %5575 = vmatpush1.bf16.msra.mxu0 0
        %5576 = vmatprep.subr.bf16.mxu0 0
        %5577 = vmatpush1.bf16.msra.mxu0 0
        %5578 = vmatprep.subr.bf16.mxu0 0
        %5579 = vmatpush1.bf16.msra.mxu0 0
        %5580 = vmatprep.subr.bf16.mxu0 0
        %5581 = vmatpush1.bf16.msra.mxu0 0
        %5582 = vmatprep.mubr.bf16.mxu0 0
        %5583 = vmatmul.mubr.bf16.gmra.mrb[0].mxu0 %v5440
        %v5584 = vpop.f32.mrb[0].mxu0
        %v5585 = vadd.f32 0.0, %v5584
        %v5586 = vpop.f32.mrb[0].mxu0
        %v5587 = vpop.f32.mrb[0].mxu0
        %v5588 = vadd.f32 0.0, %v5587
        %v5589 = vpop.f32.mrb[0].mxu0
        %5590 = vmatprep.mubr.bf16.mxu0 0
        %5591 = vmatmul.mubr.bf16.gmra.mrb[0].mxu0 %v5442
        %v5592 = vpop.f32.mrb[0].mxu0
        %v5593 = vadd.f32 0.0, %v5592
        %v5594 = vpop.f32.mrb[0].mxu0
        %v5595 = vpop.f32.mrb[0].mxu0
        %v5596 = vadd.f32 0.0, %v5595
        %v5597 = vpop.f32.mrb[0].mxu0
        %5598 = vmatprep.mubr.bf16.mxu0 0
        %5599 = vmatmul.mubr.bf16.gmra.mrb[0].mxu0 %v5444
        %v5600 = vpop.f32.mrb[0].mxu0
        %v5601 = vadd.f32 0.0, %v5600
        %v5602 = vpop.f32.mrb[0].mxu0
        %v5603 = vpop.f32.mrb[0].mxu0
        %v5604 = vadd.f32 0.0, %v5603
        %v5605 = vpop.f32.mrb[0].mxu0
        %5606 = vmatprep.mubr.bf16.mxu0 0
        %5607 = vmatmul.mubr.bf16.gmra.mrb[0].mxu0 %v5446
        %v5608 = vpop.f32.mrb[0].mxu0
        %v5609 = vadd.f32 0.0, %v5608
        %v5610 = vpop.f32.mrb[0].mxu0
        %v5611 = vpop.f32.mrb[0].mxu0
        %v5612 = vadd.f32 0.0, %v5611
        %v5613 = vpop.f32.mrb[0].mxu0
        %5614 = vmatprep.mubr.bf16.mxu0 0
        %5615 = vmatmul.mubr.bf16.gmra.mrb[0].mxu0 %v5448
        %v5616 = vpop.f32.mrb[0].mxu0
        %v5617 = vadd.f32 0.0, %v5616
        %v5618 = vpop.f32.mrb[0].mxu0
        %v5619 = vpop.f32.mrb[0].mxu0
        %v5620 = vadd.f32 0.0, %v5619
        %v5621 = vpop.f32.mrb[0].mxu0
        %5622 = vmatprep.mubr.bf16.mxu0 0
        %5623 = vmatmul.mubr.bf16.gmra.mrb[0].mxu0 %v5450
        %v5624 = vpop.f32.mrb[0].mxu0
        %v5625 = vadd.f32 0.0, %v5624
        %v5626 = vpop.f32.mrb[0].mxu0
        %v5627 = vpop.f32.mrb[0].mxu0
        %v5628 = vadd.f32 0.0, %v5627
        %v5629 = vpop.f32.mrb[0].mxu0
        %5630 = vmatprep.mubr.bf16.mxu0 0
        %5631 = vmatmul.mubr.bf16.gmra.mrb[0].mxu0 %v5452
        %v5632 = vpop.f32.mrb[0].mxu0
        %v5633 = vadd.f32 0.0, %v5632
        %v5634 = vpop.f32.mrb[0].mxu0
        %v5635 = vpop.f32.mrb[0].mxu0
        %v5636 = vadd.f32 0.0, %v5635
        %v5637 = vpop.f32.mrb[0].mxu0
        %5638 = vmatprep.mubr.bf16.mxu0 0
        %5639 = vmatmul.mubr.bf16.gmra.mrb[0].mxu0 %v5454
        %v5640 = vpop.f32.mrb[0].mxu0
        %v5641 = vadd.f32 0.0, %v5640
        %v5642 = vpop.f32.mrb[0].mxu0
        %v5643 = vpop.f32.mrb[0].mxu0
        %v5644 = vadd.f32 0.0, %v5643
        %v5645 = vpop.f32.mrb[0].mxu0
        %5646 = vmatprep.mubr.bf16.mxu0 0
        %5647 = vmatmul.mubr.bf16.gmra.mrb[0].mxu0 %v5456
        %v5648 = vpop.f32.mrb[0].mxu0
        %v5649 = vadd.f32 0.0, %v5648
        %v5650 = vpop.f32.mrb[0].mxu0
        %v5651 = vpop.f32.mrb[0].mxu0
        %v5652 = vadd.f32 0.0, %v5651
        %v5653 = vpop.f32.mrb[0].mxu0
        %5654 = vmatprep.mubr.bf16.mxu0 0
        %5655 = vmatmul.mubr.bf16.gmra.mrb[0].mxu0 %v5458
        %v5656 = vpop.f32.mrb[0].mxu0
        %v5657 = vadd.f32 0.0, %v5656
        %v5658 = vpop.f32.mrb[0].mxu0
        %v5659 = vpop.f32.mrb[0].mxu0
        %v5660 = vadd.f32 0.0, %v5659
        %v5661 = vpop.f32.mrb[0].mxu0
        %5662 = vmatprep.mubr.bf16.mxu0 0
        %5663 = vmatmul.mubr.bf16.gmra.mrb[0].mxu0 %v5460
        %v5664 = vpop.f32.mrb[0].mxu0
        %v5665 = vadd.f32 0.0, %v5664
        %v5666 = vpop.f32.mrb[0].mxu0
        %v5667 = vpop.f32.mrb[0].mxu0
        %v5668 = vadd.f32 0.0, %v5667
        %v5669 = vpop.f32.mrb[0].mxu0
        %5670 = vmatprep.mubr.bf16.mxu0 0
        %5671 = vmatmul.mubr.bf16.gmra.mrb[0].mxu0 %v5462
        %v5672 = vpop.f32.mrb[0].mxu0
        %v5673 = vadd.f32 0.0, %v5672
        %v5674 = vpop.f32.mrb[0].mxu0
        %v5675 = vpop.f32.mrb[0].mxu0
        %v5676 = vadd.f32 0.0, %v5675
        %v5677 = vpop.f32.mrb[0].mxu0
        %5678 = vmatprep.mubr.bf16.mxu0 0
        %5679 = vmatmul.mubr.bf16.gmra.mrb[0].mxu0 %v5464
        %v5680 = vpop.f32.mrb[0].mxu0
        %v5681 = vadd.f32 0.0, %v5680
        %v5682 = vpop.f32.mrb[0].mxu0
        %v5683 = vpop.f32.mrb[0].mxu0
        %v5684 = vadd.f32 0.0, %v5683
        %v5685 = vpop.f32.mrb[0].mxu0
        %5686 = vmatprep.mubr.bf16.mxu0 0
        %5687 = vmatmul.mubr.bf16.gmra.mrb[0].mxu0 %v5466
        %v5688 = vpop.f32.mrb[0].mxu0
        %v5689 = vadd.f32 0.0, %v5688
        %v5690 = vpop.f32.mrb[0].mxu0
        %v5691 = vpop.f32.mrb[0].mxu0
        %v5692 = vadd.f32 0.0, %v5691
        %v5693 = vpop.f32.mrb[0].mxu0
        %5694 = vmatprep.mubr.bf16.mxu0 0
        %5695 = vmatmul.mubr.bf16.gmra.mrb[0].mxu0 %v5468
        %v5696 = vpop.f32.mrb[0].mxu0
        %v5697 = vadd.f32 0.0, %v5696
        %v5698 = vpop.f32.mrb[0].mxu0
        %v5699 = vpop.f32.mrb[0].mxu0
        %v5700 = vadd.f32 0.0, %v5699
        %v5701 = vpop.f32.mrb[0].mxu0
        %5702 = vmatprep.mubr.bf16.mxu0 0
        %5703 = vmatmul.mubr.bf16.gmra.mrb[0].mxu0 %v5470
        %v5704 = vpop.f32.mrb[0].mxu0
        %v5705 = vadd.f32 0.0, %v5704
        %v5706 = vpop.f32.mrb[0].mxu0
        %v5707 = vpop.f32.mrb[0].mxu0
        %v5708 = vadd.f32 0.0, %v5707
        %v5709 = vpop.f32.mrb[0].mxu0
        %5710 = vmatprep.mubr.bf16.mxu0 0
        %5711 = vmatmul.mubr.bf16.gmra.mrb[0].mxu0 %v5472
        %v5712 = vpop.f32.mrb[0].mxu0
        %v5713 = vadd.f32 0.0, %v5712
        %v5714 = vpop.f32.mrb[0].mxu0
        %v5715 = vpop.f32.mrb[0].mxu0
        %v5716 = vadd.f32 0.0, %v5715
        %v5717 = vpop.f32.mrb[0].mxu0
        %5718 = vmatprep.mubr.bf16.mxu0 0
        %5719 = vmatmul.mubr.bf16.gmra.mrb[0].mxu0 %v5474
        %v5720 = vpop.f32.mrb[0].mxu0
        %v5721 = vadd.f32 0.0, %v5720
        %v5722 = vpop.f32.mrb[0].mxu0
        %v5723 = vpop.f32.mrb[0].mxu0
        %v5724 = vadd.f32 0.0, %v5723
        %v5725 = vpop.f32.mrb[0].mxu0
        %5726 = vmatprep.mubr.bf16.mxu0 0
        %5727 = vmatmul.mubr.bf16.gmra.mrb[0].mxu0 %v5476
        %v5728 = vpop.f32.mrb[0].mxu0
        %v5729 = vadd.f32 0.0, %v5728
        %v5730 = vpop.f32.mrb[0].mxu0
        %v5731 = vpop.f32.mrb[0].mxu0
        %v5732 = vadd.f32 0.0, %v5731
        %v5733 = vpop.f32.mrb[0].mxu0
        %5734 = vmatprep.mubr.bf16.mxu0 0
        %5735 = vmatmul.mubr.bf16.gmra.mrb[0].mxu0 %v5478
        %v5736 = vpop.f32.mrb[0].mxu0
        %v5737 = vadd.f32 0.0, %v5736
        %v5738 = vpop.f32.mrb[0].mxu0
        %v5739 = vpop.f32.mrb[0].mxu0
        %v5740 = vadd.f32 0.0, %v5739
        %v5741 = vpop.f32.mrb[0].mxu0
        %5742 = vmatprep.mubr.bf16.mxu0 0
        %5743 = vmatmul.mubr.bf16.gmra.mrb[0].mxu0 %v5480
        %v5744 = vpop.f32.mrb[0].mxu0
        %v5745 = vadd.f32 0.0, %v5744
        %v5746 = vpop.f32.mrb[0].mxu0
        %v5747 = vpop.f32.mrb[0].mxu0
        %v5748 = vadd.f32 0.0, %v5747
        %v5749 = vpop.f32.mrb[0].mxu0
        %5750 = vdwg.mxu0
        %v5751 = vld [vmem:[#allocation3] sm:$0xff]
        %v5752 = vld [vmem:[#allocation3 + $0x8] sm:$0xff]
        %v5753 = vld [vmem:[#allocation3 + $0x10] sm:$0xff]
        %v5754 = vld [vmem:[#allocation3 + $0x18] sm:$0xff]
        %v5755 = vld [vmem:[#allocation3 + $0x20] sm:$0xff]
        %v5756 = vld [vmem:[#allocation3 + $0x28] sm:$0xff]
        %v5757 = vld [vmem:[#allocation3 + $0x30] sm:$0xff]
        %v5758 = vld [vmem:[#allocation3 + $0x38] sm:$0xff]
        %v5759 = vld [vmem:[#allocation3 + $0x40] sm:$0xff]
        %v5760 = vld [vmem:[#allocation3 + $0x48] sm:$0xff]
        %v5761 = vld [vmem:[#allocation3 + $0x50] sm:$0xff]
        %v5762 = vld [vmem:[#allocation3 + $0x58] sm:$0xff]
        %v5763 = vld [vmem:[#allocation3 + $0x60] sm:$0xff]
        %v5764 = vld [vmem:[#allocation3 + $0x68] sm:$0xff]
        %v5765 = vld [vmem:[#allocation3 + $0x70] sm:$0xff]
        %v5766 = vld [vmem:[#allocation3 + $0x78] sm:$0xff]
        %v5767 = vld [vmem:[#allocation3 + $0x80] sm:$0xff]
        %v5768 = vld [vmem:[#allocation3 + $0x88] sm:$0xff]
        %v5769 = vld [vmem:[#allocation3 + $0x90] sm:$0xff]
        %v5770 = vld [vmem:[#allocation3 + $0x98] sm:$0xff]
        %v5771 = vld [vmem:[#allocation3 + $0xa0] sm:$0xff]
        %v5772 = vld [vmem:[#allocation3 + $0xa8] sm:$0xff]
        %v5773 = vld [vmem:[#allocation3 + $0xb0] sm:$0xff]
        %v5774 = vld [vmem:[#allocation3 + $0xb8] sm:$0xff]
        %v5775 = vld [vmem:[#allocation3 + $0xc0] sm:$0xff]
        %v5776 = vld [vmem:[#allocation3 + $0xc8] sm:$0xff]
        %v5777 = vld [vmem:[#allocation3 + $0xd0] sm:$0xff]
        %v5778 = vld [vmem:[#allocation3 + $0xd8] sm:$0xff]
        %v5779 = vld [vmem:[#allocation3 + $0xe0] sm:$0xff]
        %v5780 = vld [vmem:[#allocation3 + $0xe8] sm:$0xff]
        %v5781 = vld [vmem:[#allocation3 + $0xf0] sm:$0xff]
        %v5782 = vld [vmem:[#allocation3 + $0xf8] sm:$0xff]
        %v5783 = vld [vmem:[#allocation3 + $0x100] sm:$0xff]
        %v5784 = vld [vmem:[#allocation3 + $0x108] sm:$0xff]
        %v5785 = vld [vmem:[#allocation3 + $0x110] sm:$0xff]
        %v5786 = vld [vmem:[#allocation3 + $0x118] sm:$0xff]
        %v5787 = vld [vmem:[#allocation3 + $0x120] sm:$0xff]
        %v5788 = vld [vmem:[#allocation3 + $0x128] sm:$0xff]
        %v5789 = vld [vmem:[#allocation3 + $0x130] sm:$0xff]
        %v5790 = vld [vmem:[#allocation3 + $0x138] sm:$0xff]
        %v5791 = vld [vmem:[#allocation3 + $0x140] sm:$0xff]
        %v5792 = vld [vmem:[#allocation3 + $0x148] sm:$0xff]
        %v5793 = vadd.f32 %v5751, %v5585
        %v5794 = vadd.f32 %v5752, %v5588
        %v5795 = vadd.f32 %v5753, %v5593
        %v5796 = vadd.f32 %v5754, %v5596
        %v5797 = vadd.f32 %v5755, %v5601
        %v5798 = vadd.f32 %v5756, %v5604
        %v5799 = vadd.f32 %v5757, %v5609
        %v5800 = vadd.f32 %v5758, %v5612
        %v5801 = vadd.f32 %v5759, %v5617
        %v5802 = vadd.f32 %v5760, %v5620
        %v5803 = vadd.f32 %v5761, %v5625
        %v5804 = vadd.f32 %v5762, %v5628
        %v5805 = vadd.f32 %v5763, %v5633
        %v5806 = vadd.f32 %v5764, %v5636
        %v5807 = vadd.f32 %v5765, %v5641
        %v5808 = vadd.f32 %v5766, %v5644
        %v5809 = vadd.f32 %v5767, %v5649
        %v5810 = vadd.f32 %v5768, %v5652
        %v5811 = vadd.f32 %v5769, %v5657
        %v5812 = vadd.f32 %v5770, %v5660
        %v5813 = vadd.f32 %v5771, %v5665
        %v5814 = vadd.f32 %v5772, %v5668
        %v5815 = vadd.f32 %v5773, %v5673
        %v5816 = vadd.f32 %v5774, %v5676
        %v5817 = vadd.f32 %v5775, %v5681
        %v5818 = vadd.f32 %v5776, %v5684
        %v5819 = vadd.f32 %v5777, %v5689
        %v5820 = vadd.f32 %v5778, %v5692
        %v5821 = vadd.f32 %v5779, %v5697
        %v5822 = vadd.f32 %v5780, %v5700
        %v5823 = vadd.f32 %v5781, %v5705
        %v5824 = vadd.f32 %v5782, %v5708
        %v5825 = vadd.f32 %v5783, %v5713
        %v5826 = vadd.f32 %v5784, %v5716
        %v5827 = vadd.f32 %v5785, %v5721
        %v5828 = vadd.f32 %v5786, %v5724
        %v5829 = vadd.f32 %v5787, %v5729
        %v5830 = vadd.f32 %v5788, %v5732
        %v5831 = vadd.f32 %v5789, %v5737
        %v5832 = vadd.f32 %v5790, %v5740
        %v5833 = vadd.f32 %v5791, %v5745
        %v5834 = vadd.f32 %v5792, %v5748
        %5835 = vst [vmem:[#allocation3] sm:$0xff] %v5793
        %5836 = vst [vmem:[#allocation3 + $0x8] sm:$0xff] %v5794
        %5837 = vst [vmem:[#allocation3 + $0x10] sm:$0xff] %v5795
        %5838 = vst [vmem:[#allocation3 + $0x18] sm:$0xff] %v5796
        %5839 = vst [vmem:[#allocation3 + $0x20] sm:$0xff] %v5797
        %5840 = vst [vmem:[#allocation3 + $0x28] sm:$0xff] %v5798
        %5841 = vst [vmem:[#allocation3 + $0x30] sm:$0xff] %v5799
        %5842 = vst [vmem:[#allocation3 + $0x38] sm:$0xff] %v5800
        %5843 = vst [vmem:[#allocation3 + $0x40] sm:$0xff] %v5801
        %5844 = vst [vmem:[#allocation3 + $0x48] sm:$0xff] %v5802
        %5845 = vst [vmem:[#allocation3 + $0x50] sm:$0xff] %v5803
        %5846 = vst [vmem:[#allocation3 + $0x58] sm:$0xff] %v5804
        %5847 = vst [vmem:[#allocation3 + $0x60] sm:$0xff] %v5805
        %5848 = vst [vmem:[#allocation3 + $0x68] sm:$0xff] %v5806
        %5849 = vst [vmem:[#allocation3 + $0x70] sm:$0xff] %v5807
        %5850 = vst [vmem:[#allocation3 + $0x78] sm:$0xff] %v5808
        %5851 = vst [vmem:[#allocation3 + $0x80] sm:$0xff] %v5809
        %5852 = vst [vmem:[#allocation3 + $0x88] sm:$0xff] %v5810
        %5853 = vst [vmem:[#allocation3 + $0x90] sm:$0xff] %v5811
        %5854 = vst [vmem:[#allocation3 + $0x98] sm:$0xff] %v5812
        %5855 = vst [vmem:[#allocation3 + $0xa0] sm:$0xff] %v5813
        %5856 = vst [vmem:[#allocation3 + $0xa8] sm:$0xff] %v5814
        %5857 = vst [vmem:[#allocation3 + $0xb0] sm:$0xff] %v5815
        %5858 = vst [vmem:[#allocation3 + $0xb8] sm:$0xff] %v5816
        %5859 = vst [vmem:[#allocation3 + $0xc0] sm:$0xff] %v5817
        %5860 = vst [vmem:[#allocation3 + $0xc8] sm:$0xff] %v5818
        %5861 = vst [vmem:[#allocation3 + $0xd0] sm:$0xff] %v5819
        %5862 = vst [vmem:[#allocation3 + $0xd8] sm:$0xff] %v5820
        %5863 = vst [vmem:[#allocation3 + $0xe0] sm:$0xff] %v5821
        %5864 = vst [vmem:[#allocation3 + $0xe8] sm:$0xff] %v5822
        %5865 = vst [vmem:[#allocation3 + $0xf0] sm:$0xff] %v5823
        %5866 = vst [vmem:[#allocation3 + $0xf8] sm:$0xff] %v5824
        %5867 = vst [vmem:[#allocation3 + $0x100] sm:$0xff] %v5825
        %5868 = vst [vmem:[#allocation3 + $0x108] sm:$0xff] %v5826
        %5869 = vst [vmem:[#allocation3 + $0x110] sm:$0xff] %v5827
        %5870 = vst [vmem:[#allocation3 + $0x118] sm:$0xff] %v5828
        %5871 = vst [vmem:[#allocation3 + $0x120] sm:$0xff] %v5829
        %5872 = vst [vmem:[#allocation3 + $0x128] sm:$0xff] %v5830
        %5873 = vst [vmem:[#allocation3 + $0x130] sm:$0xff] %v5831
        %5874 = vst [vmem:[#allocation3 + $0x138] sm:$0xff] %v5832
        %5875 = vst [vmem:[#allocation3 + $0x140] sm:$0xff] %v5833
        %5876 = vst [vmem:[#allocation3 + $0x148] sm:$0xff] %v5834
        %v5877 = vld [vmem:[#allocation2 + $0x18] sm:$0xfe]
        %v5878 = vld [vmem:[#allocation2 + $0x20] sm:$0xff]
        %v5879 = vld [vmem:[#allocation2 + $0x28] sm:$0xff]
        %v5880 = vld [vmem:[#allocation2 + $0x30] sm:$0xff]
        %v5881 = vld [vmem:[#allocation2 + $0x38] sm:$0xff]
        %v5882 = vld [vmem:[#allocation2 + $0x40] sm:$0xff]
        %v5883 = vld [vmem:[#allocation2 + $0x48] sm:$0xff]
        %v5884 = vld [vmem:[#allocation2 + $0x50] sm:$0xff]
        %v5885 = vld [vmem:[#allocation2 + $0x58] sm:$0xff]
        %v5886 = vld [vmem:[#allocation2 + $0x60] sm:$0xff]
        %v5887 = vld [vmem:[#allocation2 + $0x68] sm:$0xff]
        %v5888 = vld [vmem:[#allocation2 + $0x70] sm:$0xff]
        %v5889 = vld [vmem:[#allocation2 + $0x78] sm:$0xff]
        %v5890 = vld [vmem:[#allocation2 + $0x80] sm:$0xff]
        %v5891 = vld [vmem:[#allocation2 + $0x88] sm:$0xff]
        %v5892 = vld [vmem:[#allocation2 + $0x90] sm:$0xff]
        %v5893 = vld [vmem:[#allocation2 + $0x98] sm:$0xff]
        %v5894 = vld [vmem:[#allocation2 + $0xa0] sm:$0xff]
        %v5895 = vld [vmem:[#allocation2 + $0xa8] sm:$0xff]
        %v5896 = vld [vmem:[#allocation2 + $0xb0] sm:$0xff]
        %v5897 = vld [vmem:[#allocation2 + $0xb8] sm:$0xff]
        %v5898 = vld [vmem:[#allocation2 + $0xc0] sm:$0x3]
        %v5899 = vld [vmem:[#allocation9 + $0x200] sm:$0xf]
        %v5900 = vld [vmem:[#allocation9 + $0x204] sm:$0xf]
        %v5901 = vld [vmem:[#allocation9 + $0x208] sm:$0xf]
        %v5902 = vld [vmem:[#allocation9 + $0x20c] sm:$0xf]
        %v5903 = vld [vmem:[#allocation9 + $0x210] sm:$0xf]
        %v5904 = vld [vmem:[#allocation9 + $0x214] sm:$0xf]
        %v5905 = vld [vmem:[#allocation9 + $0x218] sm:$0xf]
        %v5906 = vld [vmem:[#allocation9 + $0x21c] sm:$0xf]
        %v5907 = vld [vmem:[#allocation9 + $0x220] sm:$0xf]
        %v5908 = vld [vmem:[#allocation9 + $0x224] sm:$0xf]
        %v5909 = vld [vmem:[#allocation9 + $0x228] sm:$0xf]
        %v5910 = vld [vmem:[#allocation9 + $0x22c] sm:$0xf]
        %v5911 = vld [vmem:[#allocation9 + $0x230] sm:$0xf]
        %v5912 = vld [vmem:[#allocation9 + $0x234] sm:$0xf]
        %v5913 = vld [vmem:[#allocation9 + $0x238] sm:$0xf]
        %v5914 = vld [vmem:[#allocation9 + $0x23c] sm:$0xf]
        %vm5915 = vsmask.f32 6400
        %v5917 = vshrl.u32 %v5877, 16
        %v5919 = vrot.slane %v5917, 1
        %v5920 = vshll.u32 %v5877, 16
        %v5922 = vrot.slane %v5920, 2
        %v5923 = vor.u32 %v5919, %v5922
        %v5925 = vshrl.u32 %v5878, 16
        %v5927 = vrot.slane %v5925, 1
        %v5928 = vshll.u32 %v5878, 16
        %v5930 = vrot.slane %v5928, 2
        %v5931 = vor.u32 %v5927, %v5930
        %v5932 = vsel %vm5915, %v5923, %v5931
        %v5934 = vshrl.u32 %v5879, 16
        %v5936 = vrot.slane %v5934, 1
        %v5937 = vshll.u32 %v5879, 16
        %v5939 = vrot.slane %v5937, 2
        %v5940 = vor.u32 %v5936, %v5939
        %v5941 = vsel %vm5915, %v5931, %v5940
        %v5943 = vshrl.u32 %v5880, 16
        %v5945 = vrot.slane %v5943, 1
        %v5946 = vshll.u32 %v5880, 16
        %v5948 = vrot.slane %v5946, 2
        %v5949 = vor.u32 %v5945, %v5948
        %v5950 = vsel %vm5915, %v5940, %v5949
        %v5952 = vshrl.u32 %v5881, 16
        %v5954 = vrot.slane %v5952, 1
        %v5955 = vshll.u32 %v5881, 16
        %v5957 = vrot.slane %v5955, 2
        %v5958 = vor.u32 %v5954, %v5957
        %v5959 = vsel %vm5915, %v5949, %v5958
        %v5961 = vshrl.u32 %v5882, 16
        %v5963 = vrot.slane %v5961, 1
        %v5964 = vshll.u32 %v5882, 16
        %v5966 = vrot.slane %v5964, 2
        %v5967 = vor.u32 %v5963, %v5966
        %v5968 = vsel %vm5915, %v5958, %v5967
        %v5970 = vshrl.u32 %v5883, 16
        %v5972 = vrot.slane %v5970, 1
        %v5973 = vshll.u32 %v5883, 16
        %v5975 = vrot.slane %v5973, 2
        %v5976 = vor.u32 %v5972, %v5975
        %v5977 = vsel %vm5915, %v5967, %v5976
        %v5979 = vshrl.u32 %v5884, 16
        %v5981 = vrot.slane %v5979, 1
        %v5982 = vshll.u32 %v5884, 16
        %v5984 = vrot.slane %v5982, 2
        %v5985 = vor.u32 %v5981, %v5984
        %v5986 = vsel %vm5915, %v5976, %v5985
        %v5988 = vshrl.u32 %v5885, 16
        %v5990 = vrot.slane %v5988, 1
        %v5991 = vshll.u32 %v5885, 16
        %v5993 = vrot.slane %v5991, 2
        %v5994 = vor.u32 %v5990, %v5993
        %v5995 = vsel %vm5915, %v5985, %v5994
        %v5997 = vshrl.u32 %v5886, 16
        %v5999 = vrot.slane %v5997, 1
        %v6000 = vshll.u32 %v5886, 16
        %v6002 = vrot.slane %v6000, 2
        %v6003 = vor.u32 %v5999, %v6002
        %v6004 = vsel %vm5915, %v5994, %v6003
        %v6006 = vshrl.u32 %v5887, 16
        %v6008 = vrot.slane %v6006, 1
        %v6009 = vshll.u32 %v5887, 16
        %v6011 = vrot.slane %v6009, 2
        %v6012 = vor.u32 %v6008, %v6011
        %v6013 = vsel %vm5915, %v6003, %v6012
        %v6015 = vshrl.u32 %v5888, 16
        %v6017 = vrot.slane %v6015, 1
        %v6018 = vshll.u32 %v5888, 16
        %v6020 = vrot.slane %v6018, 2
        %v6021 = vor.u32 %v6017, %v6020
        %v6022 = vsel %vm5915, %v6012, %v6021
        %v6024 = vshrl.u32 %v5889, 16
        %v6026 = vrot.slane %v6024, 1
        %v6027 = vshll.u32 %v5889, 16
        %v6029 = vrot.slane %v6027, 2
        %v6030 = vor.u32 %v6026, %v6029
        %v6031 = vsel %vm5915, %v6021, %v6030
        %v6033 = vshrl.u32 %v5890, 16
        %v6035 = vrot.slane %v6033, 1
        %v6036 = vshll.u32 %v5890, 16
        %v6038 = vrot.slane %v6036, 2
        %v6039 = vor.u32 %v6035, %v6038
        %v6040 = vsel %vm5915, %v6030, %v6039
        %v6042 = vshrl.u32 %v5891, 16
        %v6044 = vrot.slane %v6042, 1
        %v6045 = vshll.u32 %v5891, 16
        %v6047 = vrot.slane %v6045, 2
        %v6048 = vor.u32 %v6044, %v6047
        %v6049 = vsel %vm5915, %v6039, %v6048
        %v6051 = vshrl.u32 %v5892, 16
        %v6053 = vrot.slane %v6051, 1
        %v6054 = vshll.u32 %v5892, 16
        %v6056 = vrot.slane %v6054, 2
        %v6057 = vor.u32 %v6053, %v6056
        %v6058 = vsel %vm5915, %v6048, %v6057
        %v6060 = vshrl.u32 %v5893, 16
        %v6062 = vrot.slane %v6060, 1
        %v6063 = vshll.u32 %v5893, 16
        %v6065 = vrot.slane %v6063, 2
        %v6066 = vor.u32 %v6062, %v6065
        %v6067 = vsel %vm5915, %v6057, %v6066
        %v6069 = vshrl.u32 %v5894, 16
        %v6071 = vrot.slane %v6069, 1
        %v6072 = vshll.u32 %v5894, 16
        %v6074 = vrot.slane %v6072, 2
        %v6075 = vor.u32 %v6071, %v6074
        %v6076 = vsel %vm5915, %v6066, %v6075
        %v6078 = vshrl.u32 %v5895, 16
        %v6080 = vrot.slane %v6078, 1
        %v6081 = vshll.u32 %v5895, 16
        %v6083 = vrot.slane %v6081, 2
        %v6084 = vor.u32 %v6080, %v6083
        %v6085 = vsel %vm5915, %v6075, %v6084
        %v6087 = vshrl.u32 %v5896, 16
        %v6089 = vrot.slane %v6087, 1
        %v6090 = vshll.u32 %v5896, 16
        %v6092 = vrot.slane %v6090, 2
        %v6093 = vor.u32 %v6089, %v6092
        %v6094 = vsel %vm5915, %v6084, %v6093
        %v6096 = vshrl.u32 %v5897, 16
        %v6098 = vrot.slane %v6096, 1
        %v6099 = vshll.u32 %v5897, 16
        %v6101 = vrot.slane %v6099, 2
        %v6102 = vor.u32 %v6098, %v6101
        %v6103 = vsel %vm5915, %v6093, %v6102
        %v6105 = vshrl.u32 %v5898, 16
        %v6107 = vrot.slane %v6105, 1
        %v6108 = vshll.u32 %v5898, 16
        %v6110 = vrot.slane %v6108, 2
        %v6111 = vor.u32 %v6107, %v6110
        %v6112 = vsel %vm5915, %v6102, %v6111
        %v6150 = vunpack.c.l.b16 %v5899
        %v6151 = vunpack.c.l.b16 %v5900
        %v6152 = vunpack.c.l.b16 %v5901
        %v6153 = vunpack.c.l.b16 %v5902
        %v6154 = vunpack.c.l.b16 %v5903
        %v6155 = vunpack.c.l.b16 %v5904
        %v6156 = vunpack.c.l.b16 %v5905
        %v6157 = vunpack.c.l.b16 %v5906
        %v6158 = vunpack.c.l.b16 %v5907
        %v6159 = vunpack.c.l.b16 %v5908
        %v6160 = vunpack.c.l.b16 %v5909
        %v6161 = vunpack.c.l.b16 %v5910
        %v6162 = vunpack.c.l.b16 %v5911
        %v6163 = vunpack.c.l.b16 %v5912
        %v6164 = vunpack.c.l.b16 %v5913
        %v6165 = vunpack.c.l.b16 %v5914
        %v6166 = vpack.c.b16 %v6151, %v6150
        %v6167 = vpack.c.b16 %v6153, %v6152
        %v6168 = vpack.c.b16 %v6155, %v6154
        %v6169 = vpack.c.b16 %v6157, %v6156
        %v6170 = vpack.c.b16 %v6159, %v6158
        %v6171 = vpack.c.b16 %v6161, %v6160
        %v6172 = vpack.c.b16 %v6163, %v6162
        %v6173 = vpack.c.b16 %v6165, %v6164
        %6182 = vmatprep.subr.bf16.mxu0 0
        %6183 = vmatpush1.bf16.msra.mxu0 %v6166
        %6184 = vmatprep.subr.bf16.mxu0 0
        %6185 = vmatpush1.bf16.msra.mxu0 %v6167
        %6186 = vmatprep.subr.bf16.mxu0 0
        %6187 = vmatpush1.bf16.msra.mxu0 %v6168
        %6188 = vmatprep.subr.bf16.mxu0 0
        %6189 = vmatpush1.bf16.msra.mxu0 %v6169
        %6190 = vmatprep.subr.bf16.mxu0 0
        %6191 = vmatpush1.bf16.msra.mxu0 %v6170
        %6192 = vmatprep.subr.bf16.mxu0 0
        %6193 = vmatpush1.bf16.msra.mxu0 %v6171
        %6194 = vmatprep.subr.bf16.mxu0 0
        %6195 = vmatpush1.bf16.msra.mxu0 %v6172
        %6196 = vmatprep.subr.bf16.mxu0 0
        %6197 = vmatpush1.bf16.msra.mxu0 %v6173
        %6198 = vmatprep.subr.bf16.mxu0 0
        %6199 = vmatpush1.bf16.msra.mxu0 0
        %6200 = vmatprep.subr.bf16.mxu0 0
        %6201 = vmatpush1.bf16.msra.mxu0 0
        %6202 = vmatprep.subr.bf16.mxu0 0
        %6203 = vmatpush1.bf16.msra.mxu0 0
        %6204 = vmatprep.subr.bf16.mxu0 0
        %6205 = vmatpush1.bf16.msra.mxu0 0
        %6206 = vmatprep.subr.bf16.mxu0 0
        %6207 = vmatpush1.bf16.msra.mxu0 0
        %6208 = vmatprep.subr.bf16.mxu0 0
        %6209 = vmatpush1.bf16.msra.mxu0 0
        %6210 = vmatprep.subr.bf16.mxu0 0
        %6211 = vmatpush1.bf16.msra.mxu0 0
        %6212 = vmatprep.subr.bf16.mxu0 0
        %6213 = vmatpush1.bf16.msra.mxu0 0
        %6214 = vmatprep.mubr.bf16.mxu0 0
        %6215 = vmatmul.mubr.bf16.gmra.mrb[0].mxu0 %v5932
        %v6216 = vpop.f32.mrb[0].mxu0
        %v6217 = vadd.f32 0.0, %v6216
        %v6218 = vpop.f32.mrb[0].mxu0
        %v6219 = vpop.f32.mrb[0].mxu0
        %v6220 = vadd.f32 0.0, %v6219
        %v6221 = vpop.f32.mrb[0].mxu0
        %6222 = vmatprep.mubr.bf16.mxu0 0
        %6223 = vmatmul.mubr.bf16.gmra.mrb[0].mxu0 %v5941
        %v6224 = vpop.f32.mrb[0].mxu0
        %v6225 = vadd.f32 0.0, %v6224
        %v6226 = vpop.f32.mrb[0].mxu0
        %v6227 = vpop.f32.mrb[0].mxu0
        %v6228 = vadd.f32 0.0, %v6227
        %v6229 = vpop.f32.mrb[0].mxu0
        %6230 = vmatprep.mubr.bf16.mxu0 0
        %6231 = vmatmul.mubr.bf16.gmra.mrb[0].mxu0 %v5950
        %v6232 = vpop.f32.mrb[0].mxu0
        %v6233 = vadd.f32 0.0, %v6232
        %v6234 = vpop.f32.mrb[0].mxu0
        %v6235 = vpop.f32.mrb[0].mxu0
        %v6236 = vadd.f32 0.0, %v6235
        %v6237 = vpop.f32.mrb[0].mxu0
        %6238 = vmatprep.mubr.bf16.mxu0 0
        %6239 = vmatmul.mubr.bf16.gmra.mrb[0].mxu0 %v5959
        %v6240 = vpop.f32.mrb[0].mxu0
        %v6241 = vadd.f32 0.0, %v6240
        %v6242 = vpop.f32.mrb[0].mxu0
        %v6243 = vpop.f32.mrb[0].mxu0
        %v6244 = vadd.f32 0.0, %v6243
        %v6245 = vpop.f32.mrb[0].mxu0
        %6246 = vmatprep.mubr.bf16.mxu0 0
        %6247 = vmatmul.mubr.bf16.gmra.mrb[0].mxu0 %v5968
        %v6248 = vpop.f32.mrb[0].mxu0
        %v6249 = vadd.f32 0.0, %v6248
        %v6250 = vpop.f32.mrb[0].mxu0
        %v6251 = vpop.f32.mrb[0].mxu0
        %v6252 = vadd.f32 0.0, %v6251
        %v6253 = vpop.f32.mrb[0].mxu0
        %6254 = vmatprep.mubr.bf16.mxu0 0
        %6255 = vmatmul.mubr.bf16.gmra.mrb[0].mxu0 %v5977
        %v6256 = vpop.f32.mrb[0].mxu0
        %v6257 = vadd.f32 0.0, %v6256
        %v6258 = vpop.f32.mrb[0].mxu0
        %v6259 = vpop.f32.mrb[0].mxu0
        %v6260 = vadd.f32 0.0, %v6259
        %v6261 = vpop.f32.mrb[0].mxu0
        %6262 = vmatprep.mubr.bf16.mxu0 0
        %6263 = vmatmul.mubr.bf16.gmra.mrb[0].mxu0 %v5986
        %v6264 = vpop.f32.mrb[0].mxu0
        %v6265 = vadd.f32 0.0, %v6264
        %v6266 = vpop.f32.mrb[0].mxu0
        %v6267 = vpop.f32.mrb[0].mxu0
        %v6268 = vadd.f32 0.0, %v6267
        %v6269 = vpop.f32.mrb[0].mxu0
        %6270 = vmatprep.mubr.bf16.mxu0 0
        %6271 = vmatmul.mubr.bf16.gmra.mrb[0].mxu0 %v5995
        %v6272 = vpop.f32.mrb[0].mxu0
        %v6273 = vadd.f32 0.0, %v6272
        %v6274 = vpop.f32.mrb[0].mxu0
        %v6275 = vpop.f32.mrb[0].mxu0
        %v6276 = vadd.f32 0.0, %v6275
        %v6277 = vpop.f32.mrb[0].mxu0
        %6278 = vmatprep.mubr.bf16.mxu0 0
        %6279 = vmatmul.mubr.bf16.gmra.mrb[0].mxu0 %v6004
        %v6280 = vpop.f32.mrb[0].mxu0
        %v6281 = vadd.f32 0.0, %v6280
        %v6282 = vpop.f32.mrb[0].mxu0
        %v6283 = vpop.f32.mrb[0].mxu0
        %v6284 = vadd.f32 0.0, %v6283
        %v6285 = vpop.f32.mrb[0].mxu0
        %6286 = vmatprep.mubr.bf16.mxu0 0
        %6287 = vmatmul.mubr.bf16.gmra.mrb[0].mxu0 %v6013
        %v6288 = vpop.f32.mrb[0].mxu0
        %v6289 = vadd.f32 0.0, %v6288
        %v6290 = vpop.f32.mrb[0].mxu0
        %v6291 = vpop.f32.mrb[0].mxu0
        %v6292 = vadd.f32 0.0, %v6291
        %v6293 = vpop.f32.mrb[0].mxu0
        %6294 = vmatprep.mubr.bf16.mxu0 0
        %6295 = vmatmul.mubr.bf16.gmra.mrb[0].mxu0 %v6022
        %v6296 = vpop.f32.mrb[0].mxu0
        %v6297 = vadd.f32 0.0, %v6296
        %v6298 = vpop.f32.mrb[0].mxu0
        %v6299 = vpop.f32.mrb[0].mxu0
        %v6300 = vadd.f32 0.0, %v6299
        %v6301 = vpop.f32.mrb[0].mxu0
        %6302 = vmatprep.mubr.bf16.mxu0 0
        %6303 = vmatmul.mubr.bf16.gmra.mrb[0].mxu0 %v6031
        %v6304 = vpop.f32.mrb[0].mxu0
        %v6305 = vadd.f32 0.0, %v6304
        %v6306 = vpop.f32.mrb[0].mxu0
        %v6307 = vpop.f32.mrb[0].mxu0
        %v6308 = vadd.f32 0.0, %v6307
        %v6309 = vpop.f32.mrb[0].mxu0
        %6310 = vmatprep.mubr.bf16.mxu0 0
        %6311 = vmatmul.mubr.bf16.gmra.mrb[0].mxu0 %v6040
        %v6312 = vpop.f32.mrb[0].mxu0
        %v6313 = vadd.f32 0.0, %v6312
        %v6314 = vpop.f32.mrb[0].mxu0
        %v6315 = vpop.f32.mrb[0].mxu0
        %v6316 = vadd.f32 0.0, %v6315
        %v6317 = vpop.f32.mrb[0].mxu0
        %6318 = vmatprep.mubr.bf16.mxu0 0
        %6319 = vmatmul.mubr.bf16.gmra.mrb[0].mxu0 %v6049
        %v6320 = vpop.f32.mrb[0].mxu0
        %v6321 = vadd.f32 0.0, %v6320
        %v6322 = vpop.f32.mrb[0].mxu0
        %v6323 = vpop.f32.mrb[0].mxu0
        %v6324 = vadd.f32 0.0, %v6323
        %v6325 = vpop.f32.mrb[0].mxu0
        %6326 = vmatprep.mubr.bf16.mxu0 0
        %6327 = vmatmul.mubr.bf16.gmra.mrb[0].mxu0 %v6058
        %v6328 = vpop.f32.mrb[0].mxu0
        %v6329 = vadd.f32 0.0, %v6328
        %v6330 = vpop.f32.mrb[0].mxu0
        %v6331 = vpop.f32.mrb[0].mxu0
        %v6332 = vadd.f32 0.0, %v6331
        %v6333 = vpop.f32.mrb[0].mxu0
        %6334 = vmatprep.mubr.bf16.mxu0 0
        %6335 = vmatmul.mubr.bf16.gmra.mrb[0].mxu0 %v6067
        %v6336 = vpop.f32.mrb[0].mxu0
        %v6337 = vadd.f32 0.0, %v6336
        %v6338 = vpop.f32.mrb[0].mxu0
        %v6339 = vpop.f32.mrb[0].mxu0
        %v6340 = vadd.f32 0.0, %v6339
        %v6341 = vpop.f32.mrb[0].mxu0
        %6342 = vmatprep.mubr.bf16.mxu0 0
        %6343 = vmatmul.mubr.bf16.gmra.mrb[0].mxu0 %v6076
        %v6344 = vpop.f32.mrb[0].mxu0
        %v6345 = vadd.f32 0.0, %v6344
        %v6346 = vpop.f32.mrb[0].mxu0
        %v6347 = vpop.f32.mrb[0].mxu0
        %v6348 = vadd.f32 0.0, %v6347
        %v6349 = vpop.f32.mrb[0].mxu0
        %6350 = vmatprep.mubr.bf16.mxu0 0
        %6351 = vmatmul.mubr.bf16.gmra.mrb[0].mxu0 %v6085
        %v6352 = vpop.f32.mrb[0].mxu0
        %v6353 = vadd.f32 0.0, %v6352
        %v6354 = vpop.f32.mrb[0].mxu0
        %v6355 = vpop.f32.mrb[0].mxu0
        %v6356 = vadd.f32 0.0, %v6355
        %v6357 = vpop.f32.mrb[0].mxu0
        %6358 = vmatprep.mubr.bf16.mxu0 0
        %6359 = vmatmul.mubr.bf16.gmra.mrb[0].mxu0 %v6094
        %v6360 = vpop.f32.mrb[0].mxu0
        %v6361 = vadd.f32 0.0, %v6360
        %v6362 = vpop.f32.mrb[0].mxu0
        %v6363 = vpop.f32.mrb[0].mxu0
        %v6364 = vadd.f32 0.0, %v6363
        %v6365 = vpop.f32.mrb[0].mxu0
        %6366 = vmatprep.mubr.bf16.mxu0 0
        %6367 = vmatmul.mubr.bf16.gmra.mrb[0].mxu0 %v6103
        %v6368 = vpop.f32.mrb[0].mxu0
        %v6369 = vadd.f32 0.0, %v6368
        %v6370 = vpop.f32.mrb[0].mxu0
        %v6371 = vpop.f32.mrb[0].mxu0
        %v6372 = vadd.f32 0.0, %v6371
        %v6373 = vpop.f32.mrb[0].mxu0
        %6374 = vmatprep.mubr.bf16.mxu0 0
        %6375 = vmatmul.mubr.bf16.gmra.mrb[0].mxu0 %v6112
        %v6376 = vpop.f32.mrb[0].mxu0
        %v6377 = vadd.f32 0.0, %v6376
        %v6378 = vpop.f32.mrb[0].mxu0
        %v6379 = vpop.f32.mrb[0].mxu0
        %v6380 = vadd.f32 0.0, %v6379
        %v6381 = vpop.f32.mrb[0].mxu0
        %6382 = vdwg.mxu0
        %v6383 = vld [vmem:[#allocation3] sm:$0xff]
        %v6384 = vld [vmem:[#allocation3 + $0x8] sm:$0xff]
        %v6385 = vld [vmem:[#allocation3 + $0x10] sm:$0xff]
        %v6386 = vld [vmem:[#allocation3 + $0x18] sm:$0xff]
        %v6387 = vld [vmem:[#allocation3 + $0x20] sm:$0xff]
        %v6388 = vld [vmem:[#allocation3 + $0x28] sm:$0xff]
        %v6389 = vld [vmem:[#allocation3 + $0x30] sm:$0xff]
        %v6390 = vld [vmem:[#allocation3 + $0x38] sm:$0xff]
        %v6391 = vld [vmem:[#allocation3 + $0x40] sm:$0xff]
        %v6392 = vld [vmem:[#allocation3 + $0x48] sm:$0xff]
        %v6393 = vld [vmem:[#allocation3 + $0x50] sm:$0xff]
        %v6394 = vld [vmem:[#allocation3 + $0x58] sm:$0xff]
        %v6395 = vld [vmem:[#allocation3 + $0x60] sm:$0xff]
        %v6396 = vld [vmem:[#allocation3 + $0x68] sm:$0xff]
        %v6397 = vld [vmem:[#allocation3 + $0x70] sm:$0xff]
        %v6398 = vld [vmem:[#allocation3 + $0x78] sm:$0xff]
        %v6399 = vld [vmem:[#allocation3 + $0x80] sm:$0xff]
        %v6400 = vld [vmem:[#allocation3 + $0x88] sm:$0xff]
        %v6401 = vld [vmem:[#allocation3 + $0x90] sm:$0xff]
        %v6402 = vld [vmem:[#allocation3 + $0x98] sm:$0xff]
        %v6403 = vld [vmem:[#allocation3 + $0xa0] sm:$0xff]
        %v6404 = vld [vmem:[#allocation3 + $0xa8] sm:$0xff]
        %v6405 = vld [vmem:[#allocation3 + $0xb0] sm:$0xff]
        %v6406 = vld [vmem:[#allocation3 + $0xb8] sm:$0xff]
        %v6407 = vld [vmem:[#allocation3 + $0xc0] sm:$0xff]
        %v6408 = vld [vmem:[#allocation3 + $0xc8] sm:$0xff]
        %v6409 = vld [vmem:[#allocation3 + $0xd0] sm:$0xff]
        %v6410 = vld [vmem:[#allocation3 + $0xd8] sm:$0xff]
        %v6411 = vld [vmem:[#allocation3 + $0xe0] sm:$0xff]
        %v6412 = vld [vmem:[#allocation3 + $0xe8] sm:$0xff]
        %v6413 = vld [vmem:[#allocation3 + $0xf0] sm:$0xff]
        %v6414 = vld [vmem:[#allocation3 + $0xf8] sm:$0xff]
        %v6415 = vld [vmem:[#allocation3 + $0x100] sm:$0xff]
        %v6416 = vld [vmem:[#allocation3 + $0x108] sm:$0xff]
        %v6417 = vld [vmem:[#allocation3 + $0x110] sm:$0xff]
        %v6418 = vld [vmem:[#allocation3 + $0x118] sm:$0xff]
        %v6419 = vld [vmem:[#allocation3 + $0x120] sm:$0xff]
        %v6420 = vld [vmem:[#allocation3 + $0x128] sm:$0xff]
        %v6421 = vld [vmem:[#allocation3 + $0x130] sm:$0xff]
        %v6422 = vld [vmem:[#allocation3 + $0x138] sm:$0xff]
        %v6423 = vld [vmem:[#allocation3 + $0x140] sm:$0xff]
        %v6424 = vld [vmem:[#allocation3 + $0x148] sm:$0xff]
        %v6425 = vadd.f32 %v6383, %v6217
        %v6426 = vadd.f32 %v6384, %v6220
        %v6427 = vadd.f32 %v6385, %v6225
        %v6428 = vadd.f32 %v6386, %v6228
        %v6429 = vadd.f32 %v6387, %v6233
        %v6430 = vadd.f32 %v6388, %v6236
        %v6431 = vadd.f32 %v6389, %v6241
        %v6432 = vadd.f32 %v6390, %v6244
        %v6433 = vadd.f32 %v6391, %v6249
        %v6434 = vadd.f32 %v6392, %v6252
        %v6435 = vadd.f32 %v6393, %v6257
        %v6436 = vadd.f32 %v6394, %v6260
        %v6437 = vadd.f32 %v6395, %v6265
        %v6438 = vadd.f32 %v6396, %v6268
        %v6439 = vadd.f32 %v6397, %v6273
        %v6440 = vadd.f32 %v6398, %v6276
        %v6441 = vadd.f32 %v6399, %v6281
        %v6442 = vadd.f32 %v6400, %v6284
        %v6443 = vadd.f32 %v6401, %v6289
        %v6444 = vadd.f32 %v6402, %v6292
        %v6445 = vadd.f32 %v6403, %v6297
        %v6446 = vadd.f32 %v6404, %v6300
        %v6447 = vadd.f32 %v6405, %v6305
        %v6448 = vadd.f32 %v6406, %v6308
        %v6449 = vadd.f32 %v6407, %v6313
        %v6450 = vadd.f32 %v6408, %v6316
        %v6451 = vadd.f32 %v6409, %v6321
        %v6452 = vadd.f32 %v6410, %v6324
        %v6453 = vadd.f32 %v6411, %v6329
        %v6454 = vadd.f32 %v6412, %v6332
        %v6455 = vadd.f32 %v6413, %v6337
        %v6456 = vadd.f32 %v6414, %v6340
        %v6457 = vadd.f32 %v6415, %v6345
        %v6458 = vadd.f32 %v6416, %v6348
        %v6459 = vadd.f32 %v6417, %v6353
        %v6460 = vadd.f32 %v6418, %v6356
        %v6461 = vadd.f32 %v6419, %v6361
        %v6462 = vadd.f32 %v6420, %v6364
        %v6463 = vadd.f32 %v6421, %v6369
        %v6464 = vadd.f32 %v6422, %v6372
        %v6465 = vadd.f32 %v6423, %v6377
        %v6466 = vadd.f32 %v6424, %v6380
        %6467 = vst [vmem:[#allocation3] sm:$0xff] %v6425
        %6468 = vst [vmem:[#allocation3 + $0x8] sm:$0xff] %v6426
        %6469 = vst [vmem:[#allocation3 + $0x10] sm:$0xff] %v6427
        %6470 = vst [vmem:[#allocation3 + $0x18] sm:$0xff] %v6428
        %6471 = vst [vmem:[#allocation3 + $0x20] sm:$0xff] %v6429
        %6472 = vst [vmem:[#allocation3 + $0x28] sm:$0xff] %v6430
        %6473 = vst [vmem:[#allocation3 + $0x30] sm:$0xff] %v6431
        %6474 = vst [vmem:[#allocation3 + $0x38] sm:$0xff] %v6432
        %6475 = vst [vmem:[#allocation3 + $0x40] sm:$0xff] %v6433
        %6476 = vst [vmem:[#allocation3 + $0x48] sm:$0xff] %v6434
        %6477 = vst [vmem:[#allocation3 + $0x50] sm:$0xff] %v6435
        %6478 = vst [vmem:[#allocation3 + $0x58] sm:$0xff] %v6436
        %6479 = vst [vmem:[#allocation3 + $0x60] sm:$0xff] %v6437
        %6480 = vst [vmem:[#allocation3 + $0x68] sm:$0xff] %v6438
        %6481 = vst [vmem:[#allocation3 + $0x70] sm:$0xff] %v6439
        %6482 = vst [vmem:[#allocation3 + $0x78] sm:$0xff] %v6440
        %6483 = vst [vmem:[#allocation3 + $0x80] sm:$0xff] %v6441
        %6484 = vst [vmem:[#allocation3 + $0x88] sm:$0xff] %v6442
        %6485 = vst [vmem:[#allocation3 + $0x90] sm:$0xff] %v6443
        %6486 = vst [vmem:[#allocation3 + $0x98] sm:$0xff] %v6444
        %6487 = vst [vmem:[#allocation3 + $0xa0] sm:$0xff] %v6445
        %6488 = vst [vmem:[#allocation3 + $0xa8] sm:$0xff] %v6446
        %6489 = vst [vmem:[#allocation3 + $0xb0] sm:$0xff] %v6447
        %6490 = vst [vmem:[#allocation3 + $0xb8] sm:$0xff] %v6448
        %6491 = vst [vmem:[#allocation3 + $0xc0] sm:$0xff] %v6449
        %6492 = vst [vmem:[#allocation3 + $0xc8] sm:$0xff] %v6450
        %6493 = vst [vmem:[#allocation3 + $0xd0] sm:$0xff] %v6451
        %6494 = vst [vmem:[#allocation3 + $0xd8] sm:$0xff] %v6452
        %6495 = vst [vmem:[#allocation3 + $0xe0] sm:$0xff] %v6453
        %6496 = vst [vmem:[#allocation3 + $0xe8] sm:$0xff] %v6454
        %6497 = vst [vmem:[#allocation3 + $0xf0] sm:$0xff] %v6455
        %6498 = vst [vmem:[#allocation3 + $0xf8] sm:$0xff] %v6456
        %6499 = vst [vmem:[#allocation3 + $0x100] sm:$0xff] %v6457
        %6500 = vst [vmem:[#allocation3 + $0x108] sm:$0xff] %v6458
        %6501 = vst [vmem:[#allocation3 + $0x110] sm:$0xff] %v6459
        %6502 = vst [vmem:[#allocation3 + $0x118] sm:$0xff] %v6460
        %6503 = vst [vmem:[#allocation3 + $0x120] sm:$0xff] %v6461
        %6504 = vst [vmem:[#allocation3 + $0x128] sm:$0xff] %v6462
        %6505 = vst [vmem:[#allocation3 + $0x130] sm:$0xff] %v6463
        %6506 = vst [vmem:[#allocation3 + $0x138] sm:$0xff] %v6464
        %6507 = vst [vmem:[#allocation3 + $0x140] sm:$0xff] %v6465
        %6508 = vst [vmem:[#allocation3 + $0x148] sm:$0xff] %v6466
        %v6509 = vld [vmem:[#allocation3] sm:$0xff]
        %v6510 = vld [vmem:[#allocation3 + $0x8] sm:$0xff]
        %v6511 = vld [vmem:[#allocation3 + $0x10] sm:$0xff]
        %v6512 = vld [vmem:[#allocation3 + $0x18] sm:$0xff]
        %v6513 = vld [vmem:[#allocation3 + $0x20] sm:$0xff]
        %v6514 = vld [vmem:[#allocation3 + $0x28] sm:$0xff]
        %v6515 = vld [vmem:[#allocation3 + $0x30] sm:$0xff]
        %v6516 = vld [vmem:[#allocation3 + $0x38] sm:$0xff]
        %v6517 = vld [vmem:[#allocation3 + $0x40] sm:$0xff]
        %v6518 = vld [vmem:[#allocation3 + $0x48] sm:$0xff]
        %v6519 = vld [vmem:[#allocation3 + $0x50] sm:$0xff]
        %v6520 = vld [vmem:[#allocation3 + $0x58] sm:$0xff]
        %v6521 = vld [vmem:[#allocation3 + $0x60] sm:$0xff]
        %v6522 = vld [vmem:[#allocation3 + $0x68] sm:$0xff]
        %v6523 = vld [vmem:[#allocation3 + $0x70] sm:$0xff]
        %v6524 = vld [vmem:[#allocation3 + $0x78] sm:$0xff]
        %v6525 = vld [vmem:[#allocation3 + $0x80] sm:$0xff]
        %v6526 = vld [vmem:[#allocation3 + $0x88] sm:$0xff]
        %v6527 = vld [vmem:[#allocation3 + $0x90] sm:$0xff]
        %v6528 = vld [vmem:[#allocation3 + $0x98] sm:$0xff]
        %v6529 = vld [vmem:[#allocation3 + $0xa0] sm:$0xff]
        %v6530 = vld [vmem:[#allocation3 + $0xa8] sm:$0xff]
        %v6531 = vld [vmem:[#allocation3 + $0xb0] sm:$0xff]
        %v6532 = vld [vmem:[#allocation3 + $0xb8] sm:$0xff]
        %v6533 = vld [vmem:[#allocation3 + $0xc0] sm:$0xff]
        %v6534 = vld [vmem:[#allocation3 + $0xc8] sm:$0xff]
        %v6535 = vld [vmem:[#allocation3 + $0xd0] sm:$0xff]
        %v6536 = vld [vmem:[#allocation3 + $0xd8] sm:$0xff]
        %v6537 = vld [vmem:[#allocation3 + $0xe0] sm:$0xff]
        %v6538 = vld [vmem:[#allocation3 + $0xe8] sm:$0xff]
        %v6539 = vld [vmem:[#allocation3 + $0xf0] sm:$0xff]
        %v6540 = vld [vmem:[#allocation3 + $0xf8] sm:$0xff]
        %v6541 = vld [vmem:[#allocation3 + $0x100] sm:$0xff]
        %v6542 = vld [vmem:[#allocation3 + $0x108] sm:$0xff]
        %v6543 = vld [vmem:[#allocation3 + $0x110] sm:$0xff]
        %v6544 = vld [vmem:[#allocation3 + $0x118] sm:$0xff]
        %v6545 = vld [vmem:[#allocation3 + $0x120] sm:$0xff]
        %v6546 = vld [vmem:[#allocation3 + $0x128] sm:$0xff]
        %v6547 = vld [vmem:[#allocation3 + $0x130] sm:$0xff]
        %v6548 = vld [vmem:[#allocation3 + $0x138] sm:$0xff]
        %v6549 = vld [vmem:[#allocation3 + $0x140] sm:$0xff]
        %v6550 = vld [vmem:[#allocation3 + $0x148] sm:$0xff]
        %v6551 = vld [vmem:[%s4] sm:$0x1]
        %v6553 = vlaneseq
        %v6554 = vshrl.u32 %v6553, 7
        %v6555 = vsub.s32 0, %v6554
        %v6556 = vrot.slane %v6551, %v6555
        %v6558 = vadd.f32 %v6509, %v6556
        %v6559 = vadd.f32 %v6510, %v6556
        %v6560 = vadd.f32 %v6511, %v6556
        %v6561 = vadd.f32 %v6512, %v6556
        %v6562 = vadd.f32 %v6513, %v6556
        %v6563 = vadd.f32 %v6514, %v6556
        %v6564 = vadd.f32 %v6515, %v6556
        %v6565 = vadd.f32 %v6516, %v6556
        %v6566 = vadd.f32 %v6517, %v6556
        %v6567 = vadd.f32 %v6518, %v6556
        %v6568 = vadd.f32 %v6519, %v6556
        %v6569 = vadd.f32 %v6520, %v6556
        %v6570 = vadd.f32 %v6521, %v6556
        %v6571 = vadd.f32 %v6522, %v6556
        %v6572 = vadd.f32 %v6523, %v6556
        %v6573 = vadd.f32 %v6524, %v6556
        %v6574 = vadd.f32 %v6525, %v6556
        %v6575 = vadd.f32 %v6526, %v6556
        %v6576 = vadd.f32 %v6527, %v6556
        %v6577 = vadd.f32 %v6528, %v6556
        %v6578 = vadd.f32 %v6529, %v6556
        %v6579 = vadd.f32 %v6530, %v6556
        %v6580 = vadd.f32 %v6531, %v6556
        %v6581 = vadd.f32 %v6532, %v6556
        %v6582 = vadd.f32 %v6533, %v6556
        %v6583 = vadd.f32 %v6534, %v6556
        %v6584 = vadd.f32 %v6535, %v6556
        %v6585 = vadd.f32 %v6536, %v6556
        %v6586 = vadd.f32 %v6537, %v6556
        %v6587 = vadd.f32 %v6538, %v6556
        %v6588 = vadd.f32 %v6539, %v6556
        %v6589 = vadd.f32 %v6540, %v6556
        %v6590 = vadd.f32 %v6541, %v6556
        %v6591 = vadd.f32 %v6542, %v6556
        %v6592 = vadd.f32 %v6543, %v6556
        %v6593 = vadd.f32 %v6544, %v6556
        %v6594 = vadd.f32 %v6545, %v6556
        %v6595 = vadd.f32 %v6546, %v6556
        %v6596 = vadd.f32 %v6547, %v6556
        %v6597 = vadd.f32 %v6548, %v6556
        %v6598 = vadd.f32 %v6549, %v6556
        %v6599 = vadd.f32 %v6550, %v6556
        %vm6600 = vcmp.gt.f32.partialorder %v6558, 0.0
        %vm6601 = vcmp.gt.f32.partialorder %v6559, 0.0
        %vm6602 = vcmp.gt.f32.partialorder %v6560, 0.0
        %vm6603 = vcmp.gt.f32.partialorder %v6561, 0.0
        %vm6604 = vcmp.gt.f32.partialorder %v6562, 0.0
        %vm6605 = vcmp.gt.f32.partialorder %v6563, 0.0
        %vm6606 = vcmp.gt.f32.partialorder %v6564, 0.0
        %vm6607 = vcmp.gt.f32.partialorder %v6565, 0.0
        %vm6608 = vcmp.gt.f32.partialorder %v6566, 0.0
        %vm6609 = vcmp.gt.f32.partialorder %v6567, 0.0
        %vm6610 = vcmp.gt.f32.partialorder %v6568, 0.0
        %vm6611 = vcmp.gt.f32.partialorder %v6569, 0.0
        %vm6612 = vcmp.gt.f32.partialorder %v6570, 0.0
        %vm6613 = vcmp.gt.f32.partialorder %v6571, 0.0
        %vm6614 = vcmp.gt.f32.partialorder %v6572, 0.0
        %vm6615 = vcmp.gt.f32.partialorder %v6573, 0.0
        %vm6616 = vcmp.gt.f32.partialorder %v6574, 0.0
        %vm6617 = vcmp.gt.f32.partialorder %v6575, 0.0
        %vm6618 = vcmp.gt.f32.partialorder %v6576, 0.0
        %vm6619 = vcmp.gt.f32.partialorder %v6577, 0.0
        %vm6620 = vcmp.gt.f32.partialorder %v6578, 0.0
        %vm6621 = vcmp.gt.f32.partialorder %v6579, 0.0
        %vm6622 = vcmp.gt.f32.partialorder %v6580, 0.0
        %vm6623 = vcmp.gt.f32.partialorder %v6581, 0.0
        %vm6624 = vcmp.gt.f32.partialorder %v6582, 0.0
        %vm6625 = vcmp.gt.f32.partialorder %v6583, 0.0
        %vm6626 = vcmp.gt.f32.partialorder %v6584, 0.0
        %vm6627 = vcmp.gt.f32.partialorder %v6585, 0.0
        %vm6628 = vcmp.gt.f32.partialorder %v6586, 0.0
        %vm6629 = vcmp.gt.f32.partialorder %v6587, 0.0
        %vm6630 = vcmp.gt.f32.partialorder %v6588, 0.0
        %vm6631 = vcmp.gt.f32.partialorder %v6589, 0.0
        %vm6632 = vcmp.gt.f32.partialorder %v6590, 0.0
        %vm6633 = vcmp.gt.f32.partialorder %v6591, 0.0
        %vm6634 = vcmp.gt.f32.partialorder %v6592, 0.0
        %vm6635 = vcmp.gt.f32.partialorder %v6593, 0.0
        %vm6636 = vcmp.gt.f32.partialorder %v6594, 0.0
        %vm6637 = vcmp.gt.f32.partialorder %v6595, 0.0
        %vm6638 = vcmp.gt.f32.partialorder %v6596, 0.0
        %vm6639 = vcmp.gt.f32.partialorder %v6597, 0.0
        %vm6640 = vcmp.gt.f32.partialorder %v6598, 0.0
        %vm6641 = vcmp.gt.f32.partialorder %v6599, 0.0
        %v6642 = vmul.f32 %v6558, 0.1
        %v6643 = vmul.f32 %v6559, 0.1
        %v6644 = vmul.f32 %v6560, 0.1
        %v6645 = vmul.f32 %v6561, 0.1
        %v6646 = vmul.f32 %v6562, 0.1
        %v6647 = vmul.f32 %v6563, 0.1
        %v6648 = vmul.f32 %v6564, 0.1
        %v6649 = vmul.f32 %v6565, 0.1
        %v6650 = vmul.f32 %v6566, 0.1
        %v6651 = vmul.f32 %v6567, 0.1
        %v6652 = vmul.f32 %v6568, 0.1
        %v6653 = vmul.f32 %v6569, 0.1
        %v6654 = vmul.f32 %v6570, 0.1
        %v6655 = vmul.f32 %v6571, 0.1
        %v6656 = vmul.f32 %v6572, 0.1
        %v6657 = vmul.f32 %v6573, 0.1
        %v6658 = vmul.f32 %v6574, 0.1
        %v6659 = vmul.f32 %v6575, 0.1
        %v6660 = vmul.f32 %v6576, 0.1
        %v6661 = vmul.f32 %v6577, 0.1
        %v6662 = vmul.f32 %v6578, 0.1
        %v6663 = vmul.f32 %v6579, 0.1
        %v6664 = vmul.f32 %v6580, 0.1
        %v6665 = vmul.f32 %v6581, 0.1
        %v6666 = vmul.f32 %v6582, 0.1
        %v6667 = vmul.f32 %v6583, 0.1
        %v6668 = vmul.f32 %v6584, 0.1
        %v6669 = vmul.f32 %v6585, 0.1
        %v6670 = vmul.f32 %v6586, 0.1
        %v6671 = vmul.f32 %v6587, 0.1
        %v6672 = vmul.f32 %v6588, 0.1
        %v6673 = vmul.f32 %v6589, 0.1
        %v6674 = vmul.f32 %v6590, 0.1
        %v6675 = vmul.f32 %v6591, 0.1
        %v6676 = vmul.f32 %v6592, 0.1
        %v6677 = vmul.f32 %v6593, 0.1
        %v6678 = vmul.f32 %v6594, 0.1
        %v6679 = vmul.f32 %v6595, 0.1
        %v6680 = vmul.f32 %v6596, 0.1
        %v6681 = vmul.f32 %v6597, 0.1
        %v6682 = vmul.f32 %v6598, 0.1
        %v6683 = vmul.f32 %v6599, 0.1
        %v6684 = vsel %vm6600, %v6558, %v6642
        %v6685 = vsel %vm6601, %v6559, %v6643
        %v6686 = vsel %vm6602, %v6560, %v6644
        %v6687 = vsel %vm6603, %v6561, %v6645
        %v6688 = vsel %vm6604, %v6562, %v6646
        %v6689 = vsel %vm6605, %v6563, %v6647
        %v6690 = vsel %vm6606, %v6564, %v6648
        %v6691 = vsel %vm6607, %v6565, %v6649
        %v6692 = vsel %vm6608, %v6566, %v6650
        %v6693 = vsel %vm6609, %v6567, %v6651
        %v6694 = vsel %vm6610, %v6568, %v6652
        %v6695 = vsel %vm6611, %v6569, %v6653
        %v6696 = vsel %vm6612, %v6570, %v6654
        %v6697 = vsel %vm6613, %v6571, %v6655
        %v6698 = vsel %vm6614, %v6572, %v6656
        %v6699 = vsel %vm6615, %v6573, %v6657
        %v6700 = vsel %vm6616, %v6574, %v6658
        %v6701 = vsel %vm6617, %v6575, %v6659
        %v6702 = vsel %vm6618, %v6576, %v6660
        %v6703 = vsel %vm6619, %v6577, %v6661
        %v6704 = vsel %vm6620, %v6578, %v6662
        %v6705 = vsel %vm6621, %v6579, %v6663
        %v6706 = vsel %vm6622, %v6580, %v6664
        %v6707 = vsel %vm6623, %v6581, %v6665
        %v6708 = vsel %vm6624, %v6582, %v6666
        %v6709 = vsel %vm6625, %v6583, %v6667
        %v6710 = vsel %vm6626, %v6584, %v6668
        %v6711 = vsel %vm6627, %v6585, %v6669
        %v6712 = vsel %vm6628, %v6586, %v6670
        %v6713 = vsel %vm6629, %v6587, %v6671
        %v6714 = vsel %vm6630, %v6588, %v6672
        %v6715 = vsel %vm6631, %v6589, %v6673
        %v6716 = vsel %vm6632, %v6590, %v6674
        %v6717 = vsel %vm6633, %v6591, %v6675
        %v6718 = vsel %vm6634, %v6592, %v6676
        %v6719 = vsel %vm6635, %v6593, %v6677
        %v6720 = vsel %vm6636, %v6594, %v6678
        %v6721 = vsel %vm6637, %v6595, %v6679
        %v6722 = vsel %vm6638, %v6596, %v6680
        %v6723 = vsel %vm6639, %v6597, %v6681
        %v6724 = vsel %vm6640, %v6598, %v6682
        %v6725 = vsel %vm6641, %v6599, %v6683
        %v6726 = vld [vmem:[%s237] sm:$0xff]
        %v6727 = vld [vmem:[%s237 + $0x8] sm:$0xff]
        %v6728 = vld [vmem:[%s237 + $0x10] sm:$0xff]
        %v6729 = vld [vmem:[%s237 + $0x18] sm:$0xff]
        %v6730 = vld [vmem:[%s237 + $0x20] sm:$0xff]
        %v6731 = vld [vmem:[%s237 + $0x28] sm:$0xff]
        %v6732 = vld [vmem:[%s237 + $0x30] sm:$0xff]
        %v6733 = vld [vmem:[%s237 + $0x38] sm:$0xff]
        %v6734 = vld [vmem:[%s237 + $0x40] sm:$0xff]
        %v6735 = vld [vmem:[%s237 + $0x48] sm:$0xff]
        %v6736 = vld [vmem:[%s237 + $0x50] sm:$0xff]
        %v6737 = vld [vmem:[%s237 + $0x58] sm:$0xff]
        %v6738 = vld [vmem:[%s237 + $0x60] sm:$0xff]
        %v6739 = vld [vmem:[%s237 + $0x68] sm:$0xff]
        %v6740 = vld [vmem:[%s237 + $0x70] sm:$0xff]
        %v6741 = vld [vmem:[%s237 + $0x78] sm:$0xff]
        %v6742 = vld [vmem:[%s237 + $0x80] sm:$0xff]
        %v6743 = vld [vmem:[%s237 + $0x88] sm:$0xff]
        %v6744 = vld [vmem:[%s237 + $0x90] sm:$0xff]
        %v6745 = vld [vmem:[%s237 + $0x98] sm:$0xff]
        %v6746 = vld [vmem:[%s237 + $0xa0] sm:$0xff]
        %v6747 = vld [vmem:[%s237 + $0xa8] sm:$0xff]
        %v6748 = vld [vmem:[%s237 + $0xb0] sm:$0xff]
        %v6749 = vld [vmem:[%s237 + $0xb8] sm:$0xff]
        %v6750 = vld [vmem:[%s237 + $0xc0] sm:$0xff]
        %v6751 = vld [vmem:[%s237 + $0xc8] sm:$0xff]
        %v6752 = vld [vmem:[%s237 + $0xd0] sm:$0xff]
        %v6753 = vld [vmem:[%s237 + $0xd8] sm:$0xff]
        %v6754 = vld [vmem:[%s237 + $0xe0] sm:$0xff]
        %v6755 = vld [vmem:[%s237 + $0xe8] sm:$0xff]
        %v6756 = vld [vmem:[%s237 + $0xf0] sm:$0xff]
        %v6757 = vld [vmem:[%s237 + $0xf8] sm:$0xff]
        %v6758 = vld [vmem:[%s237 + $0x100] sm:$0xff]
        %v6759 = vld [vmem:[%s237 + $0x108] sm:$0xff]
        %v6760 = vld [vmem:[%s237 + $0x110] sm:$0xff]
        %v6761 = vld [vmem:[%s237 + $0x118] sm:$0xff]
        %v6762 = vld [vmem:[%s237 + $0x120] sm:$0xff]
        %v6763 = vld [vmem:[%s237 + $0x128] sm:$0xff]
        %v6764 = vld [vmem:[%s237 + $0x130] sm:$0xff]
        %v6765 = vld [vmem:[%s237 + $0x138] sm:$0xff]
        %v6766 = vld [vmem:[%s237 + $0x140] sm:$0xff]
        %v6767 = vld [vmem:[%s237 + $0x148] sm:$0xff]
        %v6768 = vadd.f32 %v6726, %v6684
        %v6769 = vadd.f32 %v6727, %v6685
        %v6770 = vadd.f32 %v6728, %v6686
        %v6771 = vadd.f32 %v6729, %v6687
        %v6772 = vadd.f32 %v6730, %v6688
        %v6773 = vadd.f32 %v6731, %v6689
        %v6774 = vadd.f32 %v6732, %v6690
        %v6775 = vadd.f32 %v6733, %v6691
        %v6776 = vadd.f32 %v6734, %v6692
        %v6777 = vadd.f32 %v6735, %v6693
        %v6778 = vadd.f32 %v6736, %v6694
        %v6779 = vadd.f32 %v6737, %v6695
        %v6780 = vadd.f32 %v6738, %v6696
        %v6781 = vadd.f32 %v6739, %v6697
        %v6782 = vadd.f32 %v6740, %v6698
        %v6783 = vadd.f32 %v6741, %v6699
        %v6784 = vadd.f32 %v6742, %v6700
        %v6785 = vadd.f32 %v6743, %v6701
        %v6786 = vadd.f32 %v6744, %v6702
        %v6787 = vadd.f32 %v6745, %v6703
        %v6788 = vadd.f32 %v6746, %v6704
        %v6789 = vadd.f32 %v6747, %v6705
        %v6790 = vadd.f32 %v6748, %v6706
        %v6791 = vadd.f32 %v6749, %v6707
        %v6792 = vadd.f32 %v6750, %v6708
        %v6793 = vadd.f32 %v6751, %v6709
        %v6794 = vadd.f32 %v6752, %v6710
        %v6795 = vadd.f32 %v6753, %v6711
        %v6796 = vadd.f32 %v6754, %v6712
        %v6797 = vadd.f32 %v6755, %v6713
        %v6798 = vadd.f32 %v6756, %v6714
        %v6799 = vadd.f32 %v6757, %v6715
        %v6800 = vadd.f32 %v6758, %v6716
        %v6801 = vadd.f32 %v6759, %v6717
        %v6802 = vadd.f32 %v6760, %v6718
        %v6803 = vadd.f32 %v6761, %v6719
        %v6804 = vadd.f32 %v6762, %v6720
        %v6805 = vadd.f32 %v6763, %v6721
        %v6806 = vadd.f32 %v6764, %v6722
        %v6807 = vadd.f32 %v6765, %v6723
        %v6808 = vadd.f32 %v6766, %v6724
        %v6809 = vadd.f32 %v6767, %v6725
        %6810 = vst [vmem:[%s271] sm:$0xff] %v6768
        %6811 = vst [vmem:[%s271 + $0x8] sm:$0xff] %v6769
        %6812 = vst [vmem:[%s271 + $0x10] sm:$0xff] %v6770
        %6813 = vst [vmem:[%s271 + $0x18] sm:$0xff] %v6771
        %6814 = vst [vmem:[%s271 + $0x20] sm:$0xff] %v6772
        %6815 = vst [vmem:[%s271 + $0x28] sm:$0xff] %v6773
        %6816 = vst [vmem:[%s271 + $0x30] sm:$0xff] %v6774
        %6817 = vst [vmem:[%s271 + $0x38] sm:$0xff] %v6775
        %6818 = vst [vmem:[%s271 + $0x40] sm:$0xff] %v6776
        %6819 = vst [vmem:[%s271 + $0x48] sm:$0xff] %v6777
        %6820 = vst [vmem:[%s271 + $0x50] sm:$0xff] %v6778
        %6821 = vst [vmem:[%s271 + $0x58] sm:$0xff] %v6779
        %6822 = vst [vmem:[%s271 + $0x60] sm:$0xff] %v6780
        %6823 = vst [vmem:[%s271 + $0x68] sm:$0xff] %v6781
        %6824 = vst [vmem:[%s271 + $0x70] sm:$0xff] %v6782
        %6825 = vst [vmem:[%s271 + $0x78] sm:$0xff] %v6783
        %6826 = vst [vmem:[%s271 + $0x80] sm:$0xff] %v6784
        %6827 = vst [vmem:[%s271 + $0x88] sm:$0xff] %v6785
        %6828 = vst [vmem:[%s271 + $0x90] sm:$0xff] %v6786
        %6829 = vst [vmem:[%s271 + $0x98] sm:$0xff] %v6787
        %6830 = vst [vmem:[%s271 + $0xa0] sm:$0xff] %v6788
        %6831 = vst [vmem:[%s271 + $0xa8] sm:$0xff] %v6789
        %6832 = vst [vmem:[%s271 + $0xb0] sm:$0xff] %v6790
        %6833 = vst [vmem:[%s271 + $0xb8] sm:$0xff] %v6791
        %6834 = vst [vmem:[%s271 + $0xc0] sm:$0xff] %v6792
        %6835 = vst [vmem:[%s271 + $0xc8] sm:$0xff] %v6793
        %6836 = vst [vmem:[%s271 + $0xd0] sm:$0xff] %v6794
        %6837 = vst [vmem:[%s271 + $0xd8] sm:$0xff] %v6795
        %6838 = vst [vmem:[%s271 + $0xe0] sm:$0xff] %v6796
        %6839 = vst [vmem:[%s271 + $0xe8] sm:$0xff] %v6797
        %6840 = vst [vmem:[%s271 + $0xf0] sm:$0xff] %v6798
        %6841 = vst [vmem:[%s271 + $0xf8] sm:$0xff] %v6799
        %6842 = vst [vmem:[%s271 + $0x100] sm:$0xff] %v6800
        %6843 = vst [vmem:[%s271 + $0x108] sm:$0xff] %v6801
        %6844 = vst [vmem:[%s271 + $0x110] sm:$0xff] %v6802
        %6845 = vst [vmem:[%s271 + $0x118] sm:$0xff] %v6803
        %6846 = vst [vmem:[%s271 + $0x120] sm:$0xff] %v6804
        %6847 = vst [vmem:[%s271 + $0x128] sm:$0xff] %v6805
        %6848 = vst [vmem:[%s271 + $0x130] sm:$0xff] %v6806
        %6849 = vst [vmem:[%s271 + $0x138] sm:$0xff] %v6807
        %6850 = vst [vmem:[%s271 + $0x140] sm:$0xff] %v6808
        %6851 = vst [vmem:[%s271 + $0x148] sm:$0xff] %v6809
        %s6852 = sand.u32 %s141, 1
        %s6853 = scalar_lea.sflag [#allocation6], %s6852
        %s6854 = sand.u32 %s141, 1
        %s6855 = smul.addr %s6854, 336
        %s6856 = scalar_lea.vmem [#allocation10], %s6855
        // Predicated region
        $region53: #{tpu_custom_call.1} parent=39 // pred_check
          %p6857 = pneg %p151
        $region54: #{tpu_custom_call.1} parent=39 // pred_check_branch
          %6859 = sbr.rel (%p6857) target = $region56
        $region55: #{tpu_custom_call.1} parent=39 // pred_region
          %s6861 = ssub.s32 5376, 5376
          %6862 = vsyncadd %s6853, %s6861
          %s6863 = smul.addr %s23, 42
          %s6864 = smul.addr %s6863, 128
          %s6865 = scalar_lea.hbm %s5, %s6864
          %s6866 = sshll.u32 %s6856, 4
          %s6867 = int_to_ptr.vmem [resolvable:$true] %s6866
          %6872 = dma.vmem_to_hbm [thread:$0]  %s6867, 5376, %s6865, %s6853, 128, 128, 8
        $region56: #{tpu_custom_call.1} parent=39 // pred_fallthru
          _
      $region40: #{tpu_custom_call.1} parent=5 // pred_fallthru
        _
      %p6873 = scmp.le.s32.totalorder 2, %s18
      // Predicated region
      $region57: #{tpu_custom_call.1} parent=5 // pred_check
        %p6874 = pneg %p6873
      $region58: #{tpu_custom_call.1} parent=5 // pred_check_branch
        %6876 = sbr.rel (%p6874) target = $region60
      $region59: #{tpu_custom_call.1} parent=5 // pred_region
        %s6877 = ssub.s32 %s18, 2
        // Predicated region
        $region61: #{tpu_custom_call.1} parent=59 // pred_check
          %p6878 = pneg %p157
        $region62: #{tpu_custom_call.1} parent=59 // pred_check_branch
          %6880 = sbr.rel (%p6878) target = $region64
        $region63: #{tpu_custom_call.1} parent=59 // pred_region
          %s6881 = sand.u32 %s142, 1
          %s6882 = scalar_lea.sflag [#allocation6], %s6881
          %s6883 = sand.u32 %s142, 1
          %s6884 = smul.addr %s6883, 336
          %s6885 = scalar_lea.vmem [#allocation10], %s6884
          %6886 = dma.done %s6882, 5376
        $region64: #{tpu_custom_call.1} parent=59 // pred_fallthru
          _
      $region60: #{tpu_custom_call.1} parent=5 // pred_fallthru
        _
    $region6: #{tpu_custom_call.1} parent=1 // loop_footer
      %s22 = sadd.s32 1, %s18
    $region7: #{tpu_custom_call.1} parent=1 // loop_footer_branch
      %17 = sbr.rel target = $region3
    $region8: #{tpu_custom_call.1} parent=1 // loop_exit
      _
    %6887 = vsyncpa [#allocation5], 1
    %s6888 = scalar_lea.sflag [#allocation5], 1
    %6889 = vsyncpa %s6888, 1
    %6890 = vsyncpa [#allocation8], 1
    %6891 = vsyncpa [#allocation6], 1
    %s6892 = scalar_lea.sflag [#allocation6], 1
    %6893 = vsyncpa %s6892, 1

</llo_original>
